<compile_context>
chip_gen: v7x
topology: tpu7x:2x2x1
jax: 0.10.0
libtpu: 0.0.40
codegen_flags: <defaults>
</compile_context>

<pallas_src>
import math

import jax
import jax.numpy as jnp
import numpy as np
from jax.experimental import pallas as pl
from jax.experimental.pallas import tpu as pltpu


def _round_up(x, m):
    return (x + m - 1) // m * m


# ----------------------------------------------------------------------------
# The fused Pallas kernel: the whole network for one batch tile.
# ----------------------------------------------------------------------------
def _fused_autoencoder_kernel(x_ref, w1_ref, b1_ref, w2_ref, b2_ref,
                              t1_ref, c1_ref, t2_ref, c2_ref, t3_ref, c3_ref,
                              o_ref):
    """x_ref:(Bt,784)  w1:(4,784,400)  w2:(4,400,32)  t1:(32,400)
    t2:(400,1800)  t3:(1800,784)  biases:(1,F)  o_ref:(Bt,784)."""
    f32 = jnp.float32
    x = x_ref[...]

    # Conv2d(1,16,3,s3,p1) + ReLU + MaxPool2d(2,s2)  -> (Bt, 5*5*16)
    z = jnp.dot(x, w1_ref[0], preferred_element_type=f32)
    for t in range(1, 4):
        z = jnp.maximum(z, jnp.dot(x, w1_ref[t], preferred_element_type=f32))
    a = jnp.maximum(z + b1_ref[...], 0.0)                      # (Bt, 400)

    # Conv2d(16,8,3,s2,p1) + ReLU + MaxPool2d(2,s1)  -> (Bt, 2*2*8)
    z = jnp.dot(a, w2_ref[0], preferred_element_type=f32)
    for t in range(1, 4):
        z = jnp.maximum(z, jnp.dot(a, w2_ref[t], preferred_element_type=f32))
    a = jnp.maximum(z + b2_ref[...], 0.0)                      # (Bt, 32)

    # ConvTranspose2d(8,16,3,s2) + ReLU               -> (Bt, 5*5*16)
    a = jnp.maximum(jnp.dot(a, t1_ref[...], preferred_element_type=f32)
                    + c1_ref[...], 0.0)                        # (Bt, 400)
    # ConvTranspose2d(16,8,5,s3,p1) + ReLU            -> (Bt, 15*15*8)
    a = jnp.maximum(jnp.dot(a, t2_ref[...], preferred_element_type=f32)
                    + c2_ref[...], 0.0)                        # (Bt, 1800)
    # ConvTranspose2d(8,1,2,s2,p1) + Tanh             -> (Bt, 28*28)
    y = jnp.tanh(jnp.dot(a, t3_ref[...], preferred_element_type=f32)
                 + c3_ref[...])                                # (Bt, 784)

    o_ref[...] = y.astype(o_ref.dtype)


# ----------------------------------------------------------------------------
# One-time parameter preparation (outside the hot path):
# lower each (transposed) conv to a dense matrix on HWC-flattened features,
# and fold the max-pools into per-tap weight slabs.
# ----------------------------------------------------------------------------
def _toeplitz_conv(w, Hin, Win, stride, pad, transposed):
    """Dense M (Hin*Win*Cin, Hout*Wout*Cout) with flat_hwc(out) = flat_hwc(in) @ M."""
    if transposed:
        Cin, Cout, kh, kw = w.shape
        Hout = (Hin - 1) * stride - 2 * pad + kh
        Wout = (Win - 1) * stride - 2 * pad + kw
    else:
        Cout, Cin, kh, kw = w.shape
        Hout = (Hin + 2 * pad - kh) // stride + 1
        Wout = (Win + 2 * pad - kw) // stride + 1

    rc = np.repeat(np.arange(Cin), Cout)   # ci per (ci,co) pair
    cc = np.tile(np.arange(Cout), Cin)     # co per (ci,co) pair
    rows, cols, widx = [], [], []
    for oh in range(Hout):
        for ow in range(Wout):
            for i in range(kh):
                for j in range(kw):
                    if transposed:
                        a = oh + pad - i
                        b = ow + pad - j
                        if a % stride or b % stride:
                            continue
                        ih, iw = a // stride, b // stride
                    else:
                        ih = oh * stride - pad + i
                        iw = ow * stride - pad + j
                    if not (0 <= ih < Hin and 0 <= iw < Win):
                        continue
                    rows.append((ih * Win + iw) * Cin + rc)
                    cols.append((oh * Wout + ow) * Cout + cc)
                    if transposed:      # w[ci, co, i, j]
                        widx.append(((rc * Cout + cc) * kh + i) * kw + j)
                    else:               # w[co, ci, i, j]
                        widx.append(((cc * Cin + rc) * kh + i) * kw + j)
    rows = np.concatenate(rows)
    cols = np.concatenate(cols)
    widx = np.concatenate(widx)
    vals = w.reshape(-1)[widx]
    mat = jnp.zeros((Hin * Win * Cin, Hout * Wout * Cout), jnp.float32)
    mat = mat.at[rows, cols].add(vals)
    return mat, Hout, Wout


def _pool_split(mat, Ho, Wo, C, kp, sp):
    """Split conv matrix columns into kp*kp pool-tap slabs -> (kp*kp, Fin, Hp*Wp*C)."""
    Hp = (Ho - kp) // sp + 1
    Wp = (Wo - kp) // sp + 1
    taps = []
    for di in range(kp):
        for dj in range(kp):
            oh = np.arange(Hp)[:, None, None] * sp + di
            ow = np.arange(Wp)[None, :, None] * sp + dj
            c = np.arange(C)[None, None, :]
            col = ((oh * Wo + ow) * C + c).reshape(-1)
            taps.append(mat[:, col])
    return jnp.stack(taps, axis=0), Hp, Wp


def prepare_params(params):
    """All weight preprocessing hoisted here (done once, reused every forward)."""
    w1, b1 = params["enc_conv1"]     # (16,1,3,3), (16,)
    w2, b2 = params["enc_conv2"]     # (8,16,3,3), (8,)
    wt1, c1 = params["dec_convt1"]   # (8,16,3,3), (16,)
    wt2, c2 = params["dec_convt2"]   # (16,8,5,5), (8,)
    wt3, c3 = params["dec_convt3"]   # (8,1,2,2), (1,)

    m1, Ho, Wo = _toeplitz_conv(w1, 28, 28, stride=3, pad=1, transposed=False)
    W1, Hp, Wp = _pool_split(m1, Ho, Wo, 16, kp=2, sp=2)       # (4, 784, 400)
    B1 = jnp.tile(b1, Hp * Wp).reshape(1, -1)                  # (1, 400)

    m2, Ho2, Wo2 = _toeplitz_conv(w2, Hp, Wp, stride=2, pad=1, transposed=False)
    W2, Hp2, Wp2 = _pool_split(m2, Ho2, Wo2, 8, kp=2, sp=1)    # (4, 400, 32)
    B2 = jnp.tile(b2, Hp2 * Wp2).reshape(1, -1)                # (1, 32)

    T1, H3, W3 = _toeplitz_conv(wt1, Hp2, Wp2, stride=2, pad=0, transposed=True)
    C1 = jnp.tile(c1, H3 * W3).reshape(1, -1)                  # (32, 400), (1, 400)

    T2, H4, W4 = _toeplitz_conv(wt2, H3, W3, stride=3, pad=1, transposed=True)
    C2 = jnp.tile(c2, H4 * W4).reshape(1, -1)                  # (400, 1800), (1, 1800)

    T3, H5, W5 = _toeplitz_conv(wt3, H4, W4, stride=2, pad=1, transposed=True)
    C3 = jnp.tile(c3, H5 * W5).reshape(1, -1)                  # (1800, 784), (1, 784)

    return (W1, B1, W2, B2, T1, C1, T2, C2, T3, C3)


# ----------------------------------------------------------------------------
# Forward pass: one fused pallas_call, grid over batch tiles only.
# ----------------------------------------------------------------------------
def autoencoder_forward(prep, x_nchw, block_b=128):
    (W1, B1, W2, B2, T1, C1, T2, C2, T3, C3) = prep
    N = x_nchw.shape[0]
    assert x_nchw.shape[1:] == (1, 28, 28), x_nchw.shape
    x = x_nchw.reshape(N, 28 * 28).astype(jnp.float32)

    Bt = min(block_b, _round_up(N, 8))
    Npad = _round_up(N, Bt)
    if Npad != N:
        x = jnp.pad(x, ((0, Npad - N), (0, 0)))

    def _full(arr):
        nd = arr.ndim
        return pl.BlockSpec(arr.shape, lambda i, _nd=nd: (0,) * _nd)

    out = pl.pallas_call(
        _fused_autoencoder_kernel,
        out_shape=jax.ShapeDtypeStruct((Npad, 28 * 28), jnp.float32),
        grid=(Npad // Bt,),
        in_specs=[pl.BlockSpec((Bt, 28 * 28), lambda i: (i, 0)),
                  _full(W1), _full(B1), _full(W2), _full(B2),
                  _full(T1), _full(C1), _full(T2), _full(C2),
                  _full(T3), _full(C3)],
        out_specs=pl.BlockSpec((Bt, 28 * 28), lambda i: (i, 0)),
        compiler_params=pltpu.CompilerParams(
            dimension_semantics=("parallel",),
            vmem_limit_bytes=44 * 1024 * 1024,
        ),
    )(x, W1, B1, W2, B2, T1, C1, T2, C2, T3, C3)

    return out[:N].reshape(N, 1, 28, 28)


# ----------------------------------------------------------------------------
# Parameters (deterministic, PyTorch-default-style uniform init)
# ----------------------------------------------------------------------------
def init_params(key):
    def conv_init(key, cout, cin, kh, kw):
        k1, k2 = jax.random.split(key)
        bound = 1.0 / math.sqrt(cin * kh * kw)
        w = jax.random.uniform(k1, (cout, cin, kh, kw), jnp.float32, -bound, bound)
        b = jax.random.uniform(k2, (cout,), jnp.float32, -bound, bound)
        return w, b

    def convt_init(key, cin, cout, kh, kw):
        k1, k2 = jax.random.split(key)
        bound = 1.0 / math.sqrt(cin * kh * kw)
        w = jax.random.uniform(k1, (cin, cout, kh, kw), jnp.float32, -bound, bound)
        b = jax.random.uniform(k2, (cout,), jnp.float32, -bound, bound)
        return w, b

    keys = jax.random.split(key, 5)
    return {
        "enc_conv1": conv_init(keys[0], 16, 1, 3, 3),
        "enc_conv2": conv_init(keys[1], 8, 16, 3, 3),
        "dec_convt1": convt_init(keys[2], 8, 16, 3, 3),
        "dec_convt2": convt_init(keys[3], 16, 8, 5, 5),
        "dec_convt3": convt_init(keys[4], 8, 1, 2, 2),
    }


# ----------------------------------------------------------------------------
# Plain-JAX reference (im2col / dilation formulation) used only for validation.
# ----------------------------------------------------------------------------
def _ref_conv2d(x, w_pt, b, stride, pad, act):
    Cout, Cin, kh, kw = w_pt.shape
    if pad > 0:
        x = jnp.pad(x, ((0, 0), (pad, pad), (pad, pad), (0, 0)))
    N, H, W, _ = x.shape
    Ho = (H - kh) // stride + 1
    Wo = (W - kw) // stride + 1
    cols = []
    for i in range(kh):
        for j in range(kw):
            cols.append(x[:, i:i + stride * Ho:stride, j:j + stride * Wo:stride, :])
    patches = jnp.stack(cols, axis=3).reshape(N * Ho * Wo, kh * kw * Cin)
    w_mat = jnp.transpose(w_pt, (2, 3, 1, 0)).reshape(kh * kw * Cin, Cout)
    y = (patches @ w_mat + b).reshape(N, Ho, Wo, Cout)
    if act == "relu":
        y = jnp.maximum(y, 0.0)
    elif act == "tanh":
        y = jnp.tanh(y)
    return y


def _ref_convt2d(x, w_pt, b, stride, pad, act):
    Cin, Cout, kh, kw = w_pt.shape
    N, H, W, _ = x.shape
    Hd = (H - 1) * stride + 1
    Wd = (W - 1) * stride + 1
    xd = jnp.zeros((N, Hd, Wd, Cin), x.dtype).at[:, ::stride, ::stride, :].set(x)
    xd = jnp.pad(xd, ((0, 0), (kh - 1 - pad,) * 2, (kw - 1 - pad,) * 2, (0, 0)))
    w_eff = jnp.transpose(jnp.flip(w_pt, axis=(2, 3)), (1, 0, 2, 3))
    return _ref_conv2d(xd, w_eff, b, 1, 0, act)


def _ref_maxpool(x, k, s):
    N, H, W, C = x.shape
    Ho = (H - k) // s + 1
    Wo = (W - k) // s + 1
    views = [x[:, i:i + s * Ho:s, j:j + s * Wo:s, :] for i in range(k) for j in range(k)]
    return jnp.max(jnp.stack(views, axis=0), axis=0)


def _reference_forward(params, x_nchw):
    x = jnp.transpose(x_nchw, (0, 2, 3, 1))
    w, b = params["enc_conv1"]
    x = _ref_conv2d(x, w, b, 3, 1, "relu")
    x = _ref_maxpool(x, 2, 2)
    w, b = params["enc_conv2"]
    x = _ref_conv2d(x, w, b, 2, 1, "relu")
    x = _ref_maxpool(x, 2, 1)
    w, b = params["dec_convt1"]
    x = _ref_convt2d(x, w, b, 2, 0, "relu")
    w, b = params["dec_convt2"]
    x = _ref_convt2d(x, w, b, 3, 1, "relu")
    w, b = params["dec_convt3"]
    x = _ref_convt2d(x, w, b, 2, 1, "tanh")
    return jnp.transpose(x, (0, 3, 1, 2))


if __name__ == "__main__":
    key = jax.random.PRNGKey(0)
    x = jax.random.normal(key, (2, 1, 28, 28), dtype=jnp.float32)
    params = init_params(jax.random.PRNGKey(42))

    prep = prepare_params(params)                 # one-time weight lowering
    fwd = jax.jit(autoencoder_forward)
    out = jax.block_until_ready(fwd(prep, x))

    ref = jax.block_until_ready(_reference_forward(params, x))

    assert out.shape == (2, 1, 28, 28), out.shape
    assert bool(jnp.all(jnp.isfinite(out)))
    assert bool(jnp.all(jnp.abs(out) <= 1.0 + 1e-6))   # tanh output range
    max_err = float(jnp.max(jnp.abs(out - ref)))
    assert max_err < 1e-3, f"mismatch vs plain-JAX reference: {max_err}"
    print("KERNEL_OK")
</pallas_src>

<mosaic_0001>
module attributes {stable_mosaic.version = 11 : i64} {
  func.func @_fused_autoencoder_kernel(%arg0: i32, %arg1: memref<8x784xf32, #tpu.memory_space<vmem>>, %arg2: memref<4x784x400xf32, #tpu.memory_space<vmem>>, %arg3: memref<1x400xf32, #tpu.memory_space<vmem>>, %arg4: memref<4x400x32xf32, #tpu.memory_space<vmem>>, %arg5: memref<1x32xf32, #tpu.memory_space<vmem>>, %arg6: memref<32x400xf32, #tpu.memory_space<vmem>>, %arg7: memref<1x400xf32, #tpu.memory_space<vmem>>, %arg8: memref<400x1800xf32, #tpu.memory_space<vmem>>, %arg9: memref<1x1800xf32, #tpu.memory_space<vmem>>, %arg10: memref<1800x784xf32, #tpu.memory_space<vmem>>, %arg11: memref<1x784xf32, #tpu.memory_space<vmem>>, %arg12: memref<8x784xf32, #tpu.memory_space<vmem>>) attributes {dimension_semantics = [#tpu.dimension_semantics<parallel>], iteration_bounds = array<i64: 1>, scalar_prefetch = 0 : i64, scratch_operands = 0 : i64, tpu.core_type = #tpu.core_type<tc>, window_params = [{transform_indices = @transform_0, window_bounds = array<i64: 8, 784>}, {pipeline_mode = #tpu.pipeline_mode<synchronous>, transform_indices = @transform_1, window_bounds = array<i64: 4, 784, 400>}, {pipeline_mode = #tpu.pipeline_mode<synchronous>, transform_indices = @transform_2, window_bounds = array<i64: 1, 400>}, {pipeline_mode = #tpu.pipeline_mode<synchronous>, transform_indices = @transform_3, window_bounds = array<i64: 4, 400, 32>}, {pipeline_mode = #tpu.pipeline_mode<synchronous>, transform_indices = @transform_4, window_bounds = array<i64: 1, 32>}, {pipeline_mode = #tpu.pipeline_mode<synchronous>, transform_indices = @transform_5, window_bounds = array<i64: 32, 400>}, {pipeline_mode = #tpu.pipeline_mode<synchronous>, transform_indices = @transform_6, window_bounds = array<i64: 1, 400>}, {pipeline_mode = #tpu.pipeline_mode<synchronous>, transform_indices = @transform_7, window_bounds = array<i64: 400, 1800>}, {pipeline_mode = #tpu.pipeline_mode<synchronous>, transform_indices = @transform_8, window_bounds = array<i64: 1, 1800>}, {pipeline_mode = #tpu.pipeline_mode<synchronous>, transform_indices = @transform_9, window_bounds = array<i64: 1800, 784>}, {pipeline_mode = #tpu.pipeline_mode<synchronous>, transform_indices = @transform_10, window_bounds = array<i64: 1, 784>}, {transform_indices = @transform_11, window_bounds = array<i64: 8, 784>}]} {
    %c0 = arith.constant 0 : index
    %c0_0 = arith.constant 0 : index
    %0 = vector.load %arg1[%c0, %c0_0] : memref<8x784xf32, #tpu.memory_space<vmem>>, vector<8x784xf32>
    %c0_1 = arith.constant 0 : index
    %c0_2 = arith.constant 0 : index
    %c0_3 = arith.constant 0 : index
    %1 = vector.load %arg2[%c0_1, %c0_2, %c0_3] : memref<4x784x400xf32, #tpu.memory_space<vmem>>, vector<1x784x400xf32>
    %2 = vector.shape_cast %1 : vector<1x784x400xf32> to vector<784x400xf32>
    %cst = arith.constant dense<0.000000e+00> : vector<8x400xf32>
    %3 = tpu.matmul %0, %2, %cst {dimension_numbers = #tpu.dot_dimension_numbers<[1], [0], [0], [1], [0, 0, 1, 1], [], []>} : vector<8x784xf32>, vector<784x400xf32>, vector<8x400xf32> -> vector<8x400xf32>
    %c1 = arith.constant 1 : index
    %c0_4 = arith.constant 0 : index
    %c0_5 = arith.constant 0 : index
    %4 = vector.load %arg2[%c1, %c0_4, %c0_5] : memref<4x784x400xf32, #tpu.memory_space<vmem>>, vector<1x784x400xf32>
    %5 = vector.shape_cast %4 : vector<1x784x400xf32> to vector<784x400xf32>
    %cst_6 = arith.constant dense<0.000000e+00> : vector<8x400xf32>
    %6 = tpu.matmul %0, %5, %cst_6 {dimension_numbers = #tpu.dot_dimension_numbers<[1], [0], [0], [1], [0, 0, 1, 1], [], []>} : vector<8x784xf32>, vector<784x400xf32>, vector<8x400xf32> -> vector<8x400xf32>
    %7 = arith.maximumf %3, %6 : vector<8x400xf32>
    %c2 = arith.constant 2 : index
    %c0_7 = arith.constant 0 : index
    %c0_8 = arith.constant 0 : index
    %8 = vector.load %arg2[%c2, %c0_7, %c0_8] : memref<4x784x400xf32, #tpu.memory_space<vmem>>, vector<1x784x400xf32>
    %9 = vector.shape_cast %8 : vector<1x784x400xf32> to vector<784x400xf32>
    %cst_9 = arith.constant dense<0.000000e+00> : vector<8x400xf32>
    %10 = tpu.matmul %0, %9, %cst_9 {dimension_numbers = #tpu.dot_dimension_numbers<[1], [0], [0], [1], [0, 0, 1, 1], [], []>} : vector<8x784xf32>, vector<784x400xf32>, vector<8x400xf32> -> vector<8x400xf32>
    %11 = arith.maximumf %7, %10 : vector<8x400xf32>
    %c3 = arith.constant 3 : index
    %c0_10 = arith.constant 0 : index
    %c0_11 = arith.constant 0 : index
    %12 = vector.load %arg2[%c3, %c0_10, %c0_11] : memref<4x784x400xf32, #tpu.memory_space<vmem>>, vector<1x784x400xf32>
    %13 = vector.shape_cast %12 : vector<1x784x400xf32> to vector<784x400xf32>
    %cst_12 = arith.constant dense<0.000000e+00> : vector<8x400xf32>
    %14 = tpu.matmul %0, %13, %cst_12 {dimension_numbers = #tpu.dot_dimension_numbers<[1], [0], [0], [1], [0, 0, 1, 1], [], []>} : vector<8x784xf32>, vector<784x400xf32>, vector<8x400xf32> -> vector<8x400xf32>
    %15 = arith.maximumf %11, %14 : vector<8x400xf32>
    %c0_13 = arith.constant 0 : index
    %c0_14 = arith.constant 0 : index
    %16 = vector.load %arg3[%c0_13, %c0_14] : memref<1x400xf32, #tpu.memory_space<vmem>>, vector<1x400xf32>
    %17 = vector.broadcast %16 : vector<1x400xf32> to vector<8x400xf32>
    %18 = arith.addf %15, %17 : vector<8x400xf32>
    %cst_15 = arith.constant 0.000000e+00 : f32
    %19 = vector.broadcast %cst_15 : f32 to vector<8x400xf32>
    %20 = arith.maximumf %18, %19 : vector<8x400xf32>
    %c0_16 = arith.constant 0 : index
    %c0_17 = arith.constant 0 : index
    %c0_18 = arith.constant 0 : index
    %21 = vector.load %arg4[%c0_16, %c0_17, %c0_18] : memref<4x400x32xf32, #tpu.memory_space<vmem>>, vector<1x400x32xf32>
    %22 = vector.shape_cast %21 : vector<1x400x32xf32> to vector<400x32xf32>
    %cst_19 = arith.constant dense<0.000000e+00> : vector<8x32xf32>
    %23 = tpu.matmul %20, %22, %cst_19 {dimension_numbers = #tpu.dot_dimension_numbers<[1], [0], [0], [1], [0, 0, 1, 1], [], []>} : vector<8x400xf32>, vector<400x32xf32>, vector<8x32xf32> -> vector<8x32xf32>
    %c1_20 = arith.constant 1 : index
    %c0_21 = arith.constant 0 : index
    %c0_22 = arith.constant 0 : index
    %24 = vector.load %arg4[%c1_20, %c0_21, %c0_22] : memref<4x400x32xf32, #tpu.memory_space<vmem>>, vector<1x400x32xf32>
    %25 = vector.shape_cast %24 : vector<1x400x32xf32> to vector<400x32xf32>
    %cst_23 = arith.constant dense<0.000000e+00> : vector<8x32xf32>
    %26 = tpu.matmul %20, %25, %cst_23 {dimension_numbers = #tpu.dot_dimension_numbers<[1], [0], [0], [1], [0, 0, 1, 1], [], []>} : vector<8x400xf32>, vector<400x32xf32>, vector<8x32xf32> -> vector<8x32xf32>
    %27 = arith.maximumf %23, %26 : vector<8x32xf32>
    %c2_24 = arith.constant 2 : index
    %c0_25 = arith.constant 0 : index
    %c0_26 = arith.constant 0 : index
    %28 = vector.load %arg4[%c2_24, %c0_25, %c0_26] : memref<4x400x32xf32, #tpu.memory_space<vmem>>, vector<1x400x32xf32>
    %29 = vector.shape_cast %28 : vector<1x400x32xf32> to vector<400x32xf32>
    %cst_27 = arith.constant dense<0.000000e+00> : vector<8x32xf32>
    %30 = tpu.matmul %20, %29, %cst_27 {dimension_numbers = #tpu.dot_dimension_numbers<[1], [0], [0], [1], [0, 0, 1, 1], [], []>} : vector<8x400xf32>, vector<400x32xf32>, vector<8x32xf32> -> vector<8x32xf32>
    %31 = arith.maximumf %27, %30 : vector<8x32xf32>
    %c3_28 = arith.constant 3 : index
    %c0_29 = arith.constant 0 : index
    %c0_30 = arith.constant 0 : index
    %32 = vector.load %arg4[%c3_28, %c0_29, %c0_30] : memref<4x400x32xf32, #tpu.memory_space<vmem>>, vector<1x400x32xf32>
    %33 = vector.shape_cast %32 : vector<1x400x32xf32> to vector<400x32xf32>
    %cst_31 = arith.constant dense<0.000000e+00> : vector<8x32xf32>
    %34 = tpu.matmul %20, %33, %cst_31 {dimension_numbers = #tpu.dot_dimension_numbers<[1], [0], [0], [1], [0, 0, 1, 1], [], []>} : vector<8x400xf32>, vector<400x32xf32>, vector<8x32xf32> -> vector<8x32xf32>
    %35 = arith.maximumf %31, %34 : vector<8x32xf32>
    %c0_32 = arith.constant 0 : index
    %c0_33 = arith.constant 0 : index
    %36 = vector.load %arg5[%c0_32, %c0_33] : memref<1x32xf32, #tpu.memory_space<vmem>>, vector<1x32xf32>
    %37 = vector.broadcast %36 : vector<1x32xf32> to vector<8x32xf32>
    %38 = arith.addf %35, %37 : vector<8x32xf32>
    %cst_34 = arith.constant 0.000000e+00 : f32
    %39 = vector.broadcast %cst_34 : f32 to vector<8x32xf32>
    %40 = arith.maximumf %38, %39 : vector<8x32xf32>
    %c0_35 = arith.constant 0 : index
    %c0_36 = arith.constant 0 : index
    %41 = vector.load %arg6[%c0_35, %c0_36] : memref<32x400xf32, #tpu.memory_space<vmem>>, vector<32x400xf32>
    %cst_37 = arith.constant dense<0.000000e+00> : vector<8x400xf32>
    %42 = tpu.matmul %40, %41, %cst_37 {dimension_numbers = #tpu.dot_dimension_numbers<[1], [0], [0], [1], [0, 0, 1, 1], [], []>} : vector<8x32xf32>, vector<32x400xf32>, vector<8x400xf32> -> vector<8x400xf32>
    %c0_38 = arith.constant 0 : index
    %c0_39 = arith.constant 0 : index
    %43 = vector.load %arg7[%c0_38, %c0_39] : memref<1x400xf32, #tpu.memory_space<vmem>>, vector<1x400xf32>
    %44 = vector.broadcast %43 : vector<1x400xf32> to vector<8x400xf32>
    %45 = arith.addf %42, %44 : vector<8x400xf32>
    %cst_40 = arith.constant 0.000000e+00 : f32
    %46 = vector.broadcast %cst_40 : f32 to vector<8x400xf32>
    %47 = arith.maximumf %45, %46 : vector<8x400xf32>
    %c0_41 = arith.constant 0 : index
    %c0_42 = arith.constant 0 : index
    %48 = vector.load %arg8[%c0_41, %c0_42] : memref<400x1800xf32, #tpu.memory_space<vmem>>, vector<400x1800xf32>
    %cst_43 = arith.constant dense<0.000000e+00> : vector<8x1800xf32>
    %49 = tpu.matmul %47, %48, %cst_43 {dimension_numbers = #tpu.dot_dimension_numbers<[1], [0], [0], [1], [0, 0, 1, 1], [], []>} : vector<8x400xf32>, vector<400x1800xf32>, vector<8x1800xf32> -> vector<8x1800xf32>
    %c0_44 = arith.constant 0 : index
    %c0_45 = arith.constant 0 : index
    %50 = vector.load %arg9[%c0_44, %c0_45] : memref<1x1800xf32, #tpu.memory_space<vmem>>, vector<1x1800xf32>
    %51 = vector.broadcast %50 : vector<1x1800xf32> to vector<8x1800xf32>
    %52 = arith.addf %49, %51 : vector<8x1800xf32>
    %cst_46 = arith.constant 0.000000e+00 : f32
    %53 = vector.broadcast %cst_46 : f32 to vector<8x1800xf32>
    %54 = arith.maximumf %52, %53 : vector<8x1800xf32>
    %c0_47 = arith.constant 0 : index
    %c0_48 = arith.constant 0 : index
    %55 = vector.load %arg10[%c0_47, %c0_48] : memref<1800x784xf32, #tpu.memory_space<vmem>>, vector<1800x784xf32>
    %cst_49 = arith.constant dense<0.000000e+00> : vector<8x784xf32>
    %56 = tpu.matmul %54, %55, %cst_49 {dimension_numbers = #tpu.dot_dimension_numbers<[1], [0], [0], [1], [0, 0, 1, 1], [], []>} : vector<8x1800xf32>, vector<1800x784xf32>, vector<8x784xf32> -> vector<8x784xf32>
    %c0_50 = arith.constant 0 : index
    %c0_51 = arith.constant 0 : index
    %57 = vector.load %arg11[%c0_50, %c0_51] : memref<1x784xf32, #tpu.memory_space<vmem>>, vector<1x784xf32>
    %58 = vector.broadcast %57 : vector<1x784xf32> to vector<8x784xf32>
    %59 = arith.addf %56, %58 : vector<8x784xf32>
    %60 = math.tanh %59 : vector<8x784xf32>
    %c0_52 = arith.constant 0 : index
    %c0_53 = arith.constant 0 : index
    %61 = vector.load %arg12[%c0_52, %c0_53] : memref<8x784xf32, #tpu.memory_space<vmem>>, vector<8x784xf32>
    tpu.vector_store %arg12[%c0_52, %c0_53], %60 {strides = array<i32>} : memref<8x784xf32, #tpu.memory_space<vmem>>, vector<8x784xf32>,
    return
  }
  func.func @transform_0(%arg0: i32) -> (i32, i32) {
    %c0_i32 = arith.constant 0 : i32
    %c0_i32_0 = arith.constant 0 : i32
    return %arg0, %c0_i32 : i32, i32
  }
  func.func @transform_1(%arg0: i32) -> (i32, i32, i32) {
    %c0_i32 = arith.constant 0 : i32
    %c0_i32_0 = arith.constant 0 : i32
    %c0_i32_1 = arith.constant 0 : i32
    %c0_i32_2 = arith.constant 0 : i32
    return %c0_i32, %c0_i32_0, %c0_i32_1 : i32, i32, i32
  }
  func.func @transform_2(%arg0: i32) -> (i32, i32) {
    %c0_i32 = arith.constant 0 : i32
    %c0_i32_0 = arith.constant 0 : i32
    %c0_i32_1 = arith.constant 0 : i32
    return %c0_i32, %c0_i32_0 : i32, i32
  }
  func.func @transform_3(%arg0: i32) -> (i32, i32, i32) {
    %c0_i32 = arith.constant 0 : i32
    %c0_i32_0 = arith.constant 0 : i32
    %c0_i32_1 = arith.constant 0 : i32
    %c0_i32_2 = arith.constant 0 : i32
    return %c0_i32, %c0_i32_0, %c0_i32_1 : i32, i32, i32
  }
  func.func @transform_4(%arg0: i32) -> (i32, i32) {
    %c0_i32 = arith.constant 0 : i32
    %c0_i32_0 = arith.constant 0 : i32
    %c0_i32_1 = arith.constant 0 : i32
    return %c0_i32, %c0_i32_0 : i32, i32
  }
  func.func @transform_5(%arg0: i32) -> (i32, i32) {
    %c0_i32 = arith.constant 0 : i32
    %c0_i32_0 = arith.constant 0 : i32
    %c0_i32_1 = arith.constant 0 : i32
    return %c0_i32, %c0_i32_0 : i32, i32
  }
  func.func @transform_6(%arg0: i32) -> (i32, i32) {
    %c0_i32 = arith.constant 0 : i32
    %c0_i32_0 = arith.constant 0 : i32
    %c0_i32_1 = arith.constant 0 : i32
    return %c0_i32, %c0_i32_0 : i32, i32
  }
  func.func @transform_7(%arg0: i32) -> (i32, i32) {
    %c0_i32 = arith.constant 0 : i32
    %c0_i32_0 = arith.constant 0 : i32
    %c0_i32_1 = arith.constant 0 : i32
    return %c0_i32, %c0_i32_0 : i32, i32
  }
  func.func @transform_8(%arg0: i32) -> (i32, i32) {
    %c0_i32 = arith.constant 0 : i32
    %c0_i32_0 = arith.constant 0 : i32
    %c0_i32_1 = arith.constant 0 : i32
    return %c0_i32, %c0_i32_0 : i32, i32
  }
  func.func @transform_9(%arg0: i32) -> (i32, i32) {
    %c0_i32 = arith.constant 0 : i32
    %c0_i32_0 = arith.constant 0 : i32
    %c0_i32_1 = arith.constant 0 : i32
    return %c0_i32, %c0_i32_0 : i32, i32
  }
  func.func @transform_10(%arg0: i32) -> (i32, i32) {
    %c0_i32 = arith.constant 0 : i32
    %c0_i32_0 = arith.constant 0 : i32
    %c0_i32_1 = arith.constant 0 : i32
    return %c0_i32, %c0_i32_0 : i32, i32
  }
  func.func @transform_11(%arg0: i32) -> (i32, i32) {
    %c0_i32 = arith.constant 0 : i32
    %c0_i32_0 = arith.constant 0 : i32
    return %arg0, %c0_i32 : i32, i32
  }
}

</mosaic_0001>

<llo_original>
// kernel: autoencoder_forward.1
$region0: #{autoencoder_forward.1}
  #allocation0 [shape = 'u32[]', space=smem, size = 0x4, offset = 0x4, fixed_abs, tag = 'smem constant byte address 0x4 - core index']
  #allocation1 [shape = 'u32[144,128]{1,0:T(1,128)}', space=vmem, size = 0x12000, scoped, tag = 'internal scratch']
  %s0 = inlined_call_operand.vmem [shape: f32[8,784], index: 0, kind: input, shape index: {}]
  %s1 = inlined_call_operand.vmem [shape: f32[4,784,400], index: 1, kind: input, shape index: {}]
  %s2 = inlined_call_operand.vmem [shape: f32[1,400], index: 2, kind: input, shape index: {}]
  %s3 = inlined_call_operand.vmem [shape: f32[4,400,32], index: 3, kind: input, shape index: {}]
  %s4 = inlined_call_operand.vmem [shape: f32[1,32], index: 4, kind: input, shape index: {}]
  %s5 = inlined_call_operand.vmem [shape: f32[32,400], index: 5, kind: input, shape index: {}]
  %s6 = inlined_call_operand.vmem [shape: f32[1,400], index: 6, kind: input, shape index: {}]
  %s7 = inlined_call_operand.vmem [shape: f32[400,1800], index: 7, kind: input, shape index: {}]
  %s8 = inlined_call_operand.vmem [shape: f32[1,1800], index: 8, kind: input, shape index: {}]
  %s9 = inlined_call_operand.vmem [shape: f32[1800,784], index: 9, kind: input, shape index: {}]
  %s10 = inlined_call_operand.vmem [shape: f32[1,784], index: 10, kind: input, shape index: {}]
  %s11 = inlined_call_operand.vmem [shape: f32[8,784], index: 11, kind: output, shape index: {}]
  %s12 = sld [smem:[#allocation0]]
  $region54: #{autoencoder_forward.1} parent=0
    _
  %s14 = ssub.s32 1, %s12
  %s15 = scalar_select 0, %s14, %s12
  // Predicated region
  $region2: #{autoencoder_forward.1} parent=0 // pred_check
    _
  $region3: #{autoencoder_forward.1} parent=0 // pred_check_branch
    %17 = sbr.rel (0) target = $region5
  $region4: #{autoencoder_forward.1} parent=0 // pred_region
    _
  $region5: #{autoencoder_forward.1} parent=0 // pred_fallthru
    _
  // Predicated region
  $region6: #{autoencoder_forward.1} parent=0 // pred_check
    _
  $region7: #{autoencoder_forward.1} parent=0 // pred_check_branch
    %19 = sbr.rel (0) target = $region9
  $region8: #{autoencoder_forward.1} parent=0 // pred_region
    _
  $region9: #{autoencoder_forward.1} parent=0 // pred_fallthru
    _
  // Predicated region
  $region10: #{autoencoder_forward.1} parent=0 // pred_check
    _
  $region11: #{autoencoder_forward.1} parent=0 // pred_check_branch
    %21 = sbr.rel (0) target = $region13
  $region12: #{autoencoder_forward.1} parent=0 // pred_region
    _
  $region13: #{autoencoder_forward.1} parent=0 // pred_fallthru
    _
  // Predicated region
  $region14: #{autoencoder_forward.1} parent=0 // pred_check
    _
  $region15: #{autoencoder_forward.1} parent=0 // pred_check_branch
    %23 = sbr.rel (0) target = $region17
  $region16: #{autoencoder_forward.1} parent=0 // pred_region
    _
  $region17: #{autoencoder_forward.1} parent=0 // pred_fallthru
    _
  // Predicated region
  $region18: #{autoencoder_forward.1} parent=0 // pred_check
    _
  $region19: #{autoencoder_forward.1} parent=0 // pred_check_branch
    %25 = sbr.rel (0) target = $region21
  $region20: #{autoencoder_forward.1} parent=0 // pred_region
    _
  $region21: #{autoencoder_forward.1} parent=0 // pred_fallthru
    _
  // Predicated region
  $region22: #{autoencoder_forward.1} parent=0 // pred_check
    _
  $region23: #{autoencoder_forward.1} parent=0 // pred_check_branch
    %27 = sbr.rel (0) target = $region25
  $region24: #{autoencoder_forward.1} parent=0 // pred_region
    _
  $region25: #{autoencoder_forward.1} parent=0 // pred_fallthru
    _
  // Predicated region
  $region26: #{autoencoder_forward.1} parent=0 // pred_check
    _
  $region27: #{autoencoder_forward.1} parent=0 // pred_check_branch
    %29 = sbr.rel (0) target = $region29
  $region28: #{autoencoder_forward.1} parent=0 // pred_region
    _
  $region29: #{autoencoder_forward.1} parent=0 // pred_fallthru
    _
  // Predicated region
  $region30: #{autoencoder_forward.1} parent=0 // pred_check
    _
  $region31: #{autoencoder_forward.1} parent=0 // pred_check_branch
    %31 = sbr.rel (0) target = $region33
  $region32: #{autoencoder_forward.1} parent=0 // pred_region
    _
  $region33: #{autoencoder_forward.1} parent=0 // pred_fallthru
    _
  // Predicated region
  $region34: #{autoencoder_forward.1} parent=0 // pred_check
    _
  $region35: #{autoencoder_forward.1} parent=0 // pred_check_branch
    %33 = sbr.rel (0) target = $region37
  $region36: #{autoencoder_forward.1} parent=0 // pred_region
    _
  $region37: #{autoencoder_forward.1} parent=0 // pred_fallthru
    _
  // Predicated region
  $region38: #{autoencoder_forward.1} parent=0 // pred_check
    _
  $region39: #{autoencoder_forward.1} parent=0 // pred_check_branch
    %35 = sbr.rel (0) target = $region41
  $region40: #{autoencoder_forward.1} parent=0 // pred_region
    _
  $region41: #{autoencoder_forward.1} parent=0 // pred_fallthru
    _
  // Predicated region
  $region42: #{autoencoder_forward.1} parent=0 // pred_check
    _
  $region43: #{autoencoder_forward.1} parent=0 // pred_check_branch
    %37 = sbr.rel (0) target = $region45
  $region44: #{autoencoder_forward.1} parent=0 // pred_region
    _
  $region45: #{autoencoder_forward.1} parent=0 // pred_fallthru
    _
  %v38 = vld [vmem:[%s0] sm:$0xff]
  %v39 = vld [vmem:[%s0 + $0x8] sm:$0xff]
  %v40 = vld [vmem:[%s0 + $0x10] sm:$0xff]
  %v41 = vld [vmem:[%s0 + $0x18] sm:$0xff]
  %v42 = vld [vmem:[%s0 + $0x20] sm:$0xff]
  %v43 = vld [vmem:[%s0 + $0x28] sm:$0xff]
  %v44 = vld [vmem:[%s0 + $0x30] sm:$0xff]
  %v45 = vld [vmem:[%s1] sm:$0xff]
  %v46 = vld [vmem:[%s1 + $0x8] sm:$0xff]
  %v47 = vld [vmem:[%s1 + $0x10] sm:$0xff]
  %v48 = vld [vmem:[%s1 + $0x18] sm:$0xff]
  %v49 = vld [vmem:[%s1 + $0x20] sm:$0xff]
  %v50 = vld [vmem:[%s1 + $0x28] sm:$0xff]
  %v51 = vld [vmem:[%s1 + $0x30] sm:$0xff]
  %v52 = vld [vmem:[%s1 + $0x38] sm:$0xff]
  %v53 = vld [vmem:[%s1 + $0x40] sm:$0xff]
  %v54 = vld [vmem:[%s1 + $0x48] sm:$0xff]
  %v55 = vld [vmem:[%s1 + $0x50] sm:$0xff]
  %v56 = vld [vmem:[%s1 + $0x58] sm:$0xff]
  %v57 = vld [vmem:[%s1 + $0x60] sm:$0xff]
  %v58 = vld [vmem:[%s1 + $0x68] sm:$0xff]
  %v59 = vld [vmem:[%s1 + $0x70] sm:$0xff]
  %v60 = vld [vmem:[%s1 + $0x78] sm:$0xff]
  %v61 = vld [vmem:[%s1 + $0x80] sm:$0xff]
  %v62 = vld [vmem:[%s1 + $0x88] sm:$0xff]
  %v63 = vld [vmem:[%s1 + $0x90] sm:$0xff]
  %v64 = vld [vmem:[%s1 + $0x98] sm:$0xff]
  %v65 = vld [vmem:[%s1 + $0xa0] sm:$0xff]
  %v66 = vld [vmem:[%s1 + $0xa8] sm:$0xff]
  %v67 = vld [vmem:[%s1 + $0xb0] sm:$0xff]
  %v68 = vld [vmem:[%s1 + $0xb8] sm:$0xff]
  %v69 = vld [vmem:[%s1 + $0xc0] sm:$0xff]
  %v70 = vld [vmem:[%s1 + $0xc8] sm:$0xff]
  %v71 = vld [vmem:[%s1 + $0xd0] sm:$0xff]
  %v72 = vld [vmem:[%s1 + $0xd8] sm:$0xff]
  %v73 = vld [vmem:[%s1 + $0xe0] sm:$0xff]
  %v74 = vld [vmem:[%s1 + $0xe8] sm:$0xff]
  %v75 = vld [vmem:[%s1 + $0xf0] sm:$0xff]
  %v76 = vld [vmem:[%s1 + $0xf8] sm:$0xff]
  %v77 = vld [vmem:[%s1 + $0x100] sm:$0xff]
  %v78 = vld [vmem:[%s1 + $0x108] sm:$0xff]
  %v79 = vld [vmem:[%s1 + $0x110] sm:$0xff]
  %v80 = vld [vmem:[%s1 + $0x118] sm:$0xff]
  %v81 = vld [vmem:[%s1 + $0x120] sm:$0xff]
  %v82 = vld [vmem:[%s1 + $0x128] sm:$0xff]
  %v83 = vld [vmem:[%s1 + $0x130] sm:$0xff]
  %v84 = vld [vmem:[%s1 + $0x138] sm:$0xff]
  %v85 = vld [vmem:[%s1 + $0x140] sm:$0xff]
  %v86 = vld [vmem:[%s1 + $0x148] sm:$0xff]
  %v87 = vld [vmem:[%s1 + $0x150] sm:$0xff]
  %v88 = vld [vmem:[%s1 + $0x158] sm:$0xff]
  %v89 = vld [vmem:[%s1 + $0x160] sm:$0xff]
  %v90 = vld [vmem:[%s1 + $0x168] sm:$0xff]
  %v91 = vld [vmem:[%s1 + $0x170] sm:$0xff]
  %v92 = vld [vmem:[%s1 + $0x178] sm:$0xff]
  %v93 = vld [vmem:[%s1 + $0x180] sm:$0xff]
  %v94 = vld [vmem:[%s1 + $0x188] sm:$0xff]
  %v95 = vld [vmem:[%s1 + $0x190] sm:$0xff]
  %v96 = vld [vmem:[%s1 + $0x198] sm:$0xff]
  %v97 = vld [vmem:[%s1 + $0x1a0] sm:$0xff]
  %v98 = vld [vmem:[%s1 + $0x1a8] sm:$0xff]
  %v99 = vld [vmem:[%s1 + $0x1b0] sm:$0xff]
  %v100 = vld [vmem:[%s1 + $0x1b8] sm:$0xff]
  %v101 = vld [vmem:[%s1 + $0x1c0] sm:$0xff]
  %v102 = vld [vmem:[%s1 + $0x1c8] sm:$0xff]
  %v103 = vld [vmem:[%s1 + $0x1d0] sm:$0xff]
  %v104 = vld [vmem:[%s1 + $0x1d8] sm:$0xff]
  %v105 = vld [vmem:[%s1 + $0x1e0] sm:$0xff]
  %v106 = vld [vmem:[%s1 + $0x1e8] sm:$0xff]
  %v107 = vld [vmem:[%s1 + $0x1f0] sm:$0xff]
  %v108 = vld [vmem:[%s1 + $0x1f8] sm:$0xff]
  %v109 = vld [vmem:[%s1 + $0x200] sm:$0xff]
  %v110 = vld [vmem:[%s1 + $0x208] sm:$0xff]
  %v111 = vld [vmem:[%s1 + $0x210] sm:$0xff]
  %v112 = vld [vmem:[%s1 + $0x218] sm:$0xff]
  %v113 = vld [vmem:[%s1 + $0x220] sm:$0xff]
  %v114 = vld [vmem:[%s1 + $0x228] sm:$0xff]
  %v115 = vld [vmem:[%s1 + $0x230] sm:$0xff]
  %v116 = vld [vmem:[%s1 + $0x238] sm:$0xff]
  %v117 = vld [vmem:[%s1 + $0x240] sm:$0xff]
  %v118 = vld [vmem:[%s1 + $0x248] sm:$0xff]
  %v119 = vld [vmem:[%s1 + $0x250] sm:$0xff]
  %v120 = vld [vmem:[%s1 + $0x258] sm:$0xff]
  %v121 = vld [vmem:[%s1 + $0x260] sm:$0xff]
  %v122 = vld [vmem:[%s1 + $0x268] sm:$0xff]
  %v123 = vld [vmem:[%s1 + $0x270] sm:$0xff]
  %v124 = vld [vmem:[%s1 + $0x278] sm:$0xff]
  %v125 = vld [vmem:[%s1 + $0x280] sm:$0xff]
  %v126 = vld [vmem:[%s1 + $0x288] sm:$0xff]
  %v127 = vld [vmem:[%s1 + $0x290] sm:$0xff]
  %v128 = vld [vmem:[%s1 + $0x298] sm:$0xff]
  %v129 = vld [vmem:[%s1 + $0x2a0] sm:$0xff]
  %v130 = vld [vmem:[%s1 + $0x2a8] sm:$0xff]
  %v131 = vld [vmem:[%s1 + $0x2b0] sm:$0xff]
  %v132 = vld [vmem:[%s1 + $0x2b8] sm:$0xff]
  %v133 = vld [vmem:[%s1 + $0x2c0] sm:$0xff]
  %v134 = vld [vmem:[%s1 + $0x2c8] sm:$0xff]
  %v135 = vld [vmem:[%s1 + $0x2d0] sm:$0xff]
  %v136 = vld [vmem:[%s1 + $0x2d8] sm:$0xff]
  %v137 = vld [vmem:[%s1 + $0x2e0] sm:$0xff]
  %v138 = vld [vmem:[%s1 + $0x2e8] sm:$0xff]
  %v139 = vld [vmem:[%s1 + $0x2f0] sm:$0xff]
  %v140 = vld [vmem:[%s1 + $0x2f8] sm:$0xff]
  %v141 = vld [vmem:[%s1 + $0x300] sm:$0xff]
  %v142 = vld [vmem:[%s1 + $0x308] sm:$0xff]
  %v143 = vld [vmem:[%s1 + $0x310] sm:$0xff]
  %v144 = vld [vmem:[%s1 + $0x318] sm:$0xff]
  %v145 = vld [vmem:[%s1 + $0x320] sm:$0xff]
  %v146 = vld [vmem:[%s1 + $0x328] sm:$0xff]
  %v147 = vld [vmem:[%s1 + $0x330] sm:$0xff]
  %v148 = vld [vmem:[%s1 + $0x338] sm:$0xff]
  %v149 = vld [vmem:[%s1 + $0x340] sm:$0xff]
  %v150 = vld [vmem:[%s1 + $0x348] sm:$0xff]
  %v151 = vld [vmem:[%s1 + $0x350] sm:$0xff]
  %v152 = vld [vmem:[%s1 + $0x358] sm:$0xff]
  %v153 = vld [vmem:[%s1 + $0x360] sm:$0xff]
  %v154 = vld [vmem:[%s1 + $0x368] sm:$0xff]
  %v155 = vld [vmem:[%s1 + $0x370] sm:$0xff]
  %v156 = vld [vmem:[%s1 + $0x378] sm:$0xff]
  %v157 = vld [vmem:[%s1 + $0x380] sm:$0xff]
  %v158 = vld [vmem:[%s1 + $0x388] sm:$0xff]
  %v159 = vld [vmem:[%s1 + $0x390] sm:$0xff]
  %v160 = vld [vmem:[%s1 + $0x398] sm:$0xff]
  %v161 = vld [vmem:[%s1 + $0x3a0] sm:$0xff]
  %v162 = vld [vmem:[%s1 + $0x3a8] sm:$0xff]
  %v163 = vld [vmem:[%s1 + $0x3b0] sm:$0xff]
  %v164 = vld [vmem:[%s1 + $0x3b8] sm:$0xff]
  %v165 = vld [vmem:[%s1 + $0x3c0] sm:$0xff]
  %v166 = vld [vmem:[%s1 + $0x3c8] sm:$0xff]
  %v167 = vld [vmem:[%s1 + $0x3d0] sm:$0xff]
  %v168 = vld [vmem:[%s1 + $0x3d8] sm:$0xff]
  %v169 = vld [vmem:[%s1 + $0x3e0] sm:$0xff]
  %v170 = vld [vmem:[%s1 + $0x3e8] sm:$0xff]
  %v171 = vld [vmem:[%s1 + $0x3f0] sm:$0xff]
  %v172 = vld [vmem:[%s1 + $0x3f8] sm:$0xff]
  %v173 = vld [vmem:[%s1 + $0x400] sm:$0xff]
  %v174 = vld [vmem:[%s1 + $0x408] sm:$0xff]
  %v175 = vld [vmem:[%s1 + $0x410] sm:$0xff]
  %v176 = vld [vmem:[%s1 + $0x418] sm:$0xff]
  %v177 = vld [vmem:[%s1 + $0x420] sm:$0xff]
  %v178 = vld [vmem:[%s1 + $0x428] sm:$0xff]
  %v179 = vld [vmem:[%s1 + $0x430] sm:$0xff]
  %v180 = vld [vmem:[%s1 + $0x438] sm:$0xff]
  %v181 = vld [vmem:[%s1 + $0x440] sm:$0xff]
  %v182 = vld [vmem:[%s1 + $0x448] sm:$0xff]
  %v183 = vld [vmem:[%s1 + $0x450] sm:$0xff]
  %v184 = vld [vmem:[%s1 + $0x458] sm:$0xff]
  %v185 = vld [vmem:[%s1 + $0x460] sm:$0xff]
  %v186 = vld [vmem:[%s1 + $0x468] sm:$0xff]
  %v187 = vld [vmem:[%s1 + $0x470] sm:$0xff]
  %v188 = vld [vmem:[%s1 + $0x478] sm:$0xff]
  %v189 = vld [vmem:[%s1 + $0x480] sm:$0xff]
  %v190 = vld [vmem:[%s1 + $0x488] sm:$0xff]
  %v191 = vld [vmem:[%s1 + $0x490] sm:$0xff]
  %v192 = vld [vmem:[%s1 + $0x498] sm:$0xff]
  %v193 = vld [vmem:[%s1 + $0x4a0] sm:$0xff]
  %v194 = vld [vmem:[%s1 + $0x4a8] sm:$0xff]
  %v195 = vld [vmem:[%s1 + $0x4b0] sm:$0xff]
  %v196 = vld [vmem:[%s1 + $0x4b8] sm:$0xff]
  %v197 = vld [vmem:[%s1 + $0x4c0] sm:$0xff]
  %v198 = vld [vmem:[%s1 + $0x4c8] sm:$0xff]
  %v199 = vld [vmem:[%s1 + $0x4d0] sm:$0xff]
  %v200 = vld [vmem:[%s1 + $0x4d8] sm:$0xff]
  %v201 = vld [vmem:[%s1 + $0x4e0] sm:$0xff]
  %v202 = vld [vmem:[%s1 + $0x4e8] sm:$0xff]
  %v203 = vld [vmem:[%s1 + $0x4f0] sm:$0xff]
  %v204 = vld [vmem:[%s1 + $0x4f8] sm:$0xff]
  %v205 = vld [vmem:[%s1 + $0x500] sm:$0xff]
  %v206 = vld [vmem:[%s1 + $0x508] sm:$0xff]
  %v207 = vld [vmem:[%s1 + $0x510] sm:$0xff]
  %v208 = vld [vmem:[%s1 + $0x518] sm:$0xff]
  %v209 = vld [vmem:[%s1 + $0x520] sm:$0xff]
  %v210 = vld [vmem:[%s1 + $0x528] sm:$0xff]
  %v211 = vld [vmem:[%s1 + $0x530] sm:$0xff]
  %v212 = vld [vmem:[%s1 + $0x538] sm:$0xff]
  %v213 = vld [vmem:[%s1 + $0x540] sm:$0xff]
  %v214 = vld [vmem:[%s1 + $0x548] sm:$0xff]
  %v215 = vld [vmem:[%s1 + $0x550] sm:$0xff]
  %v216 = vld [vmem:[%s1 + $0x558] sm:$0xff]
  %v217 = vld [vmem:[%s1 + $0x560] sm:$0xff]
  %v218 = vld [vmem:[%s1 + $0x568] sm:$0xff]
  %v219 = vld [vmem:[%s1 + $0x570] sm:$0xff]
  %v220 = vld [vmem:[%s1 + $0x578] sm:$0xff]
  %v221 = vld [vmem:[%s1 + $0x580] sm:$0xff]
  %v222 = vld [vmem:[%s1 + $0x588] sm:$0xff]
  %v223 = vld [vmem:[%s1 + $0x590] sm:$0xff]
  %v224 = vld [vmem:[%s1 + $0x598] sm:$0xff]
  %v225 = vld [vmem:[%s1 + $0x5a0] sm:$0xff]
  %v226 = vld [vmem:[%s1 + $0x5a8] sm:$0xff]
  %v227 = vld [vmem:[%s1 + $0x5b0] sm:$0xff]
  %v228 = vld [vmem:[%s1 + $0x5b8] sm:$0xff]
  %v229 = vld [vmem:[%s1 + $0x5c0] sm:$0xff]
  %v230 = vld [vmem:[%s1 + $0x5c8] sm:$0xff]
  %v231 = vld [vmem:[%s1 + $0x5d0] sm:$0xff]
  %v232 = vld [vmem:[%s1 + $0x5d8] sm:$0xff]
  %v233 = vld [vmem:[%s1 + $0x5e0] sm:$0xff]
  %v234 = vld [vmem:[%s1 + $0x5e8] sm:$0xff]
  %v235 = vld [vmem:[%s1 + $0x5f0] sm:$0xff]
  %v236 = vld [vmem:[%s1 + $0x5f8] sm:$0xff]
  %v237 = vld [vmem:[%s1 + $0x600] sm:$0xff]
  %v238 = vld [vmem:[%s1 + $0x608] sm:$0xff]
  %v239 = vld [vmem:[%s1 + $0x610] sm:$0xff]
  %v240 = vld [vmem:[%s1 + $0x618] sm:$0xff]
  %v241 = vld [vmem:[%s1 + $0x620] sm:$0xff]
  %v242 = vld [vmem:[%s1 + $0x628] sm:$0xff]
  %v243 = vld [vmem:[%s1 + $0x630] sm:$0xff]
  %v244 = vld [vmem:[%s1 + $0x638] sm:$0xff]
  %v245 = vld [vmem:[%s1 + $0x640] sm:$0xff]
  %v246 = vld [vmem:[%s1 + $0x648] sm:$0xff]
  %v247 = vld [vmem:[%s1 + $0x650] sm:$0xff]
  %v248 = vld [vmem:[%s1 + $0x658] sm:$0xff]
  %v249 = vld [vmem:[%s1 + $0x660] sm:$0xff]
  %v250 = vld [vmem:[%s1 + $0x668] sm:$0xff]
  %v251 = vld [vmem:[%s1 + $0x670] sm:$0xff]
  %v252 = vld [vmem:[%s1 + $0x678] sm:$0xff]
  %v253 = vld [vmem:[%s1 + $0x680] sm:$0xff]
  %v254 = vld [vmem:[%s1 + $0x688] sm:$0xff]
  %v255 = vld [vmem:[%s1 + $0x690] sm:$0xff]
  %v256 = vld [vmem:[%s1 + $0x698] sm:$0xff]
  %v257 = vld [vmem:[%s1 + $0x6a0] sm:$0xff]
  %v258 = vld [vmem:[%s1 + $0x6a8] sm:$0xff]
  %v259 = vld [vmem:[%s1 + $0x6b0] sm:$0xff]
  %v260 = vld [vmem:[%s1 + $0x6b8] sm:$0xff]
  %v261 = vld [vmem:[%s1 + $0x6c0] sm:$0xff]
  %v262 = vld [vmem:[%s1 + $0x6c8] sm:$0xff]
  %v263 = vld [vmem:[%s1 + $0x6d0] sm:$0xff]
  %v264 = vld [vmem:[%s1 + $0x6d8] sm:$0xff]
  %v265 = vld [vmem:[%s1 + $0x6e0] sm:$0xff]
  %v266 = vld [vmem:[%s1 + $0x6e8] sm:$0xff]
  %v267 = vld [vmem:[%s1 + $0x6f0] sm:$0xff]
  %v268 = vld [vmem:[%s1 + $0x6f8] sm:$0xff]
  %v269 = vld [vmem:[%s1 + $0x700] sm:$0xff]
  %v270 = vld [vmem:[%s1 + $0x708] sm:$0xff]
  %v271 = vld [vmem:[%s1 + $0x710] sm:$0xff]
  %v272 = vld [vmem:[%s1 + $0x718] sm:$0xff]
  %v273 = vld [vmem:[%s1 + $0x720] sm:$0xff]
  %v274 = vld [vmem:[%s1 + $0x728] sm:$0xff]
  %v275 = vld [vmem:[%s1 + $0x730] sm:$0xff]
  %v276 = vld [vmem:[%s1 + $0x738] sm:$0xff]
  %v277 = vld [vmem:[%s1 + $0x740] sm:$0xff]
  %v278 = vld [vmem:[%s1 + $0x748] sm:$0xff]
  %v279 = vld [vmem:[%s1 + $0x750] sm:$0xff]
  %v280 = vld [vmem:[%s1 + $0x758] sm:$0xff]
  %v281 = vld [vmem:[%s1 + $0x760] sm:$0xff]
  %v282 = vld [vmem:[%s1 + $0x768] sm:$0xff]
  %v283 = vld [vmem:[%s1 + $0x770] sm:$0xff]
  %v284 = vld [vmem:[%s1 + $0x778] sm:$0xff]
  %v285 = vld [vmem:[%s1 + $0x780] sm:$0xff]
  %v286 = vld [vmem:[%s1 + $0x788] sm:$0xff]
  %v287 = vld [vmem:[%s1 + $0x790] sm:$0xff]
  %v288 = vld [vmem:[%s1 + $0x798] sm:$0xff]
  %v289 = vld [vmem:[%s1 + $0x7a0] sm:$0xff]
  %v290 = vld [vmem:[%s1 + $0x7a8] sm:$0xff]
  %v291 = vld [vmem:[%s1 + $0x7b0] sm:$0xff]
  %v292 = vld [vmem:[%s1 + $0x7b8] sm:$0xff]
  %v293 = vld [vmem:[%s1 + $0x7c0] sm:$0xff]
  %v294 = vld [vmem:[%s1 + $0x7c8] sm:$0xff]
  %v295 = vld [vmem:[%s1 + $0x7d0] sm:$0xff]
  %v296 = vld [vmem:[%s1 + $0x7d8] sm:$0xff]
  %v297 = vld [vmem:[%s1 + $0x7e0] sm:$0xff]
  %v298 = vld [vmem:[%s1 + $0x7e8] sm:$0xff]
  %v299 = vld [vmem:[%s1 + $0x7f0] sm:$0xff]
  %v300 = vld [vmem:[%s1 + $0x7f8] sm:$0xff]
  %v301 = vld [vmem:[%s1 + $0x800] sm:$0xff]
  %v302 = vld [vmem:[%s1 + $0x808] sm:$0xff]
  %v303 = vld [vmem:[%s1 + $0x810] sm:$0xff]
  %v304 = vld [vmem:[%s1 + $0x818] sm:$0xff]
  %v305 = vld [vmem:[%s1 + $0x820] sm:$0xff]
  %v306 = vld [vmem:[%s1 + $0x828] sm:$0xff]
  %v307 = vld [vmem:[%s1 + $0x830] sm:$0xff]
  %v308 = vld [vmem:[%s1 + $0x838] sm:$0xff]
  %v309 = vld [vmem:[%s1 + $0x840] sm:$0xff]
  %v310 = vld [vmem:[%s1 + $0x848] sm:$0xff]
  %v311 = vld [vmem:[%s1 + $0x850] sm:$0xff]
  %v312 = vld [vmem:[%s1 + $0x858] sm:$0xff]
  %v313 = vld [vmem:[%s1 + $0x860] sm:$0xff]
  %v314 = vld [vmem:[%s1 + $0x868] sm:$0xff]
  %v315 = vld [vmem:[%s1 + $0x870] sm:$0xff]
  %v316 = vld [vmem:[%s1 + $0x878] sm:$0xff]
  %v317 = vld [vmem:[%s1 + $0x880] sm:$0xff]
  %v318 = vld [vmem:[%s1 + $0x888] sm:$0xff]
  %v319 = vld [vmem:[%s1 + $0x890] sm:$0xff]
  %v320 = vld [vmem:[%s1 + $0x898] sm:$0xff]
  %v321 = vld [vmem:[%s1 + $0x8a0] sm:$0xff]
  %v322 = vld [vmem:[%s1 + $0x8a8] sm:$0xff]
  %v323 = vld [vmem:[%s1 + $0x8b0] sm:$0xff]
  %v324 = vld [vmem:[%s1 + $0x8b8] sm:$0xff]
  %v325 = vld [vmem:[%s1 + $0x8c0] sm:$0xff]
  %v326 = vld [vmem:[%s1 + $0x8c8] sm:$0xff]
  %v327 = vld [vmem:[%s1 + $0x8d0] sm:$0xff]
  %v328 = vld [vmem:[%s1 + $0x8d8] sm:$0xff]
  %v329 = vld [vmem:[%s1 + $0x8e0] sm:$0xff]
  %v330 = vld [vmem:[%s1 + $0x8e8] sm:$0xff]
  %v331 = vld [vmem:[%s1 + $0x8f0] sm:$0xff]
  %v332 = vld [vmem:[%s1 + $0x8f8] sm:$0xff]
  %v333 = vld [vmem:[%s1 + $0x900] sm:$0xff]
  %v334 = vld [vmem:[%s1 + $0x908] sm:$0xff]
  %v335 = vld [vmem:[%s1 + $0x910] sm:$0xff]
  %v336 = vld [vmem:[%s1 + $0x918] sm:$0xff]
  %v337 = vld [vmem:[%s1 + $0x920] sm:$0xff]
  %v338 = vld [vmem:[%s1 + $0x928] sm:$0xff]
  %v339 = vld [vmem:[%s1 + $0x930] sm:$0xff]
  %v340 = vld [vmem:[%s1 + $0x938] sm:$0xff]
  %v341 = vld [vmem:[%s1 + $0x940] sm:$0xff]
  %v342 = vld [vmem:[%s1 + $0x948] sm:$0xff]
  %v343 = vld [vmem:[%s1 + $0x950] sm:$0xff]
  %v344 = vld [vmem:[%s1 + $0x958] sm:$0xff]
  %v345 = vld [vmem:[%s1 + $0x960] sm:$0xff]
  %v346 = vld [vmem:[%s1 + $0x968] sm:$0xff]
  %v347 = vld [vmem:[%s1 + $0x970] sm:$0xff]
  %v348 = vld [vmem:[%s1 + $0x978] sm:$0xff]
  %v349 = vld [vmem:[%s1 + $0x980] sm:$0xff]
  %v350 = vld [vmem:[%s1 + $0x988] sm:$0xff]
  %v351 = vld [vmem:[%s1 + $0x990] sm:$0xff]
  %v352 = vld [vmem:[%s1 + $0x998] sm:$0xff]
  %v353 = vld [vmem:[%s1 + $0x9a0] sm:$0xff]
  %v354 = vld [vmem:[%s1 + $0x9a8] sm:$0xff]
  %v355 = vld [vmem:[%s1 + $0x9b0] sm:$0xff]
  %v356 = vld [vmem:[%s1 + $0x9b8] sm:$0xff]
  %v357 = vld [vmem:[%s1 + $0x9c0] sm:$0xff]
  %v358 = vld [vmem:[%s1 + $0x9c8] sm:$0xff]
  %v359 = vld [vmem:[%s1 + $0x9d0] sm:$0xff]
  %v360 = vld [vmem:[%s1 + $0x9d8] sm:$0xff]
  %v361 = vld [vmem:[%s1 + $0x9e0] sm:$0xff]
  %v362 = vld [vmem:[%s1 + $0x9e8] sm:$0xff]
  %v363 = vld [vmem:[%s1 + $0x9f0] sm:$0xff]
  %v364 = vld [vmem:[%s1 + $0x9f8] sm:$0xff]
  %v365 = vld [vmem:[%s1 + $0xa00] sm:$0xff]
  %v366 = vld [vmem:[%s1 + $0xa08] sm:$0xff]
  %v367 = vld [vmem:[%s1 + $0xa10] sm:$0xff]
  %v368 = vld [vmem:[%s1 + $0xa18] sm:$0xff]
  %v369 = vld [vmem:[%s1 + $0xa20] sm:$0xff]
  %v370 = vld [vmem:[%s1 + $0xa28] sm:$0xff]
  %v371 = vld [vmem:[%s1 + $0xa30] sm:$0xff]
  %v372 = vld [vmem:[%s1 + $0xa38] sm:$0xff]
  %v373 = vld [vmem:[%s1 + $0xa40] sm:$0xff]
  %v374 = vld [vmem:[%s1 + $0xa48] sm:$0xff]
  %v375 = vld [vmem:[%s1 + $0xa50] sm:$0xff]
  %v376 = vld [vmem:[%s1 + $0xa58] sm:$0xff]
  %v377 = vld [vmem:[%s1 + $0xa60] sm:$0xff]
  %v378 = vld [vmem:[%s1 + $0xa68] sm:$0xff]
  %v379 = vld [vmem:[%s1 + $0xa70] sm:$0xff]
  %v380 = vld [vmem:[%s1 + $0xa78] sm:$0xff]
  %v381 = vld [vmem:[%s1 + $0xa80] sm:$0xff]
  %v382 = vld [vmem:[%s1 + $0xa88] sm:$0xff]
  %v383 = vld [vmem:[%s1 + $0xa90] sm:$0xff]
  %v384 = vld [vmem:[%s1 + $0xa98] sm:$0xff]
  %v385 = vld [vmem:[%s1 + $0xaa0] sm:$0xff]
  %v386 = vld [vmem:[%s1 + $0xaa8] sm:$0xff]
  %v387 = vld [vmem:[%s1 + $0xab0] sm:$0xff]
  %v388 = vld [vmem:[%s1 + $0xab8] sm:$0xff]
  %v389 = vld [vmem:[%s1 + $0xac0] sm:$0xff]
  %v390 = vld [vmem:[%s1 + $0xac8] sm:$0xff]
  %v391 = vld [vmem:[%s1 + $0xad0] sm:$0xff]
  %v392 = vld [vmem:[%s1 + $0xad8] sm:$0xff]
  %v393 = vld [vmem:[%s1 + $0xae0] sm:$0xff]
  %v394 = vld [vmem:[%s1 + $0xae8] sm:$0xff]
  %v395 = vld [vmem:[%s1 + $0xaf0] sm:$0xff]
  %v396 = vld [vmem:[%s1 + $0xaf8] sm:$0xff]
  %v397 = vld [vmem:[%s1 + $0xb00] sm:$0xff]
  %v398 = vld [vmem:[%s1 + $0xb08] sm:$0xff]
  %v399 = vld [vmem:[%s1 + $0xb10] sm:$0xff]
  %v400 = vld [vmem:[%s1 + $0xb18] sm:$0xff]
  %v401 = vld [vmem:[%s1 + $0xb20] sm:$0xff]
  %v402 = vld [vmem:[%s1 + $0xb28] sm:$0xff]
  %v403 = vld [vmem:[%s1 + $0xb30] sm:$0xff]
  %v404 = vld [vmem:[%s1 + $0xb38] sm:$0xff]
  %v405 = vld [vmem:[%s1 + $0xb40] sm:$0xff]
  %v406 = vld [vmem:[%s1 + $0xb48] sm:$0xff]
  %v407 = vld [vmem:[%s1 + $0xb50] sm:$0xff]
  %v408 = vld [vmem:[%s1 + $0xb58] sm:$0xff]
  %v409 = vld [vmem:[%s1 + $0xb60] sm:$0xff]
  %v410 = vld [vmem:[%s1 + $0xb68] sm:$0xff]
  %v411 = vld [vmem:[%s1 + $0xb70] sm:$0xff]
  %v412 = vld [vmem:[%s1 + $0xb78] sm:$0xff]
  %v413 = vld [vmem:[%s1 + $0xb80] sm:$0xff]
  %v414 = vld [vmem:[%s1 + $0xb88] sm:$0xff]
  %v415 = vld [vmem:[%s1 + $0xb90] sm:$0xff]
  %v416 = vld [vmem:[%s1 + $0xb98] sm:$0xff]
  %v417 = vld [vmem:[%s1 + $0xba0] sm:$0xff]
  %v418 = vld [vmem:[%s1 + $0xba8] sm:$0xff]
  %v419 = vld [vmem:[%s1 + $0xbb0] sm:$0xff]
  %v420 = vld [vmem:[%s1 + $0xbb8] sm:$0xff]
  %v421 = vld [vmem:[%s1 + $0xbc0] sm:$0xff]
  %v422 = vld [vmem:[%s1 + $0xbc8] sm:$0xff]
  %v423 = vld [vmem:[%s1 + $0xbd0] sm:$0xff]
  %v424 = vld [vmem:[%s1 + $0xbd8] sm:$0xff]
  %v425 = vld [vmem:[%s1 + $0xbe0] sm:$0xff]
  %v426 = vld [vmem:[%s1 + $0xbe8] sm:$0xff]
  %v427 = vld [vmem:[%s1 + $0xbf0] sm:$0xff]
  %v428 = vld [vmem:[%s1 + $0xbf8] sm:$0xff]
  %v429 = vld [vmem:[%s1 + $0xc00] sm:$0xff]
  %v430 = vld [vmem:[%s1 + $0xc08] sm:$0xff]
  %v431 = vld [vmem:[%s1 + $0xc10] sm:$0xff]
  %v432 = vld [vmem:[%s1 + $0xc18] sm:$0xff]
  %v433 = vld [vmem:[%s1 + $0xc20] sm:$0xff]
  %v434 = vld [vmem:[%s1 + $0xc28] sm:$0xff]
  %v435 = vld [vmem:[%s1 + $0xc30] sm:$0xff]
  %v436 = vld [vmem:[%s1 + $0xc38] sm:$0xff]
  %vm437 = vcmask 130048
  %v439 = vsel %vm437, %v44, 0
  %441 = vmatprep.subr.mxu0 %v46
  %442 = vmatpush1.msra.mxu0 %v45
  %443 = vmatprep.subr.mxu0 %v50
  %444 = vmatpush1.msra.mxu0 %v49
  %445 = vmatprep.subr.mxu0 %v54
  %446 = vmatpush1.msra.mxu0 %v53
  %447 = vmatprep.subr.mxu0 %v58
  %448 = vmatpush1.msra.mxu0 %v57
  %449 = vmatprep.subr.mxu0 %v62
  %450 = vmatpush1.msra.mxu0 %v61
  %451 = vmatprep.subr.mxu0 %v66
  %452 = vmatpush1.msra.mxu0 %v65
  %453 = vmatprep.subr.mxu0 %v70
  %454 = vmatpush1.msra.mxu0 %v69
  %455 = vmatprep.subr.mxu0 %v74
  %456 = vmatpush1.msra.mxu0 %v73
  %457 = vmatprep.subr.mxu0 %v78
  %458 = vmatpush1.msra.mxu0 %v77
  %459 = vmatprep.subr.mxu0 %v82
  %460 = vmatpush1.msra.mxu0 %v81
  %461 = vmatprep.subr.mxu0 %v86
  %462 = vmatpush1.msra.mxu0 %v85
  %463 = vmatprep.subr.mxu0 %v90
  %464 = vmatpush1.msra.mxu0 %v89
  %465 = vmatprep.subr.mxu0 %v94
  %466 = vmatpush1.msra.mxu0 %v93
  %467 = vmatprep.subr.mxu0 %v98
  %468 = vmatpush1.msra.mxu0 %v97
  %469 = vmatprep.subr.mxu0 %v102
  %470 = vmatpush1.msra.mxu0 %v101
  %471 = vmatprep.subr.mxu0 %v106
  %472 = vmatpush1.msra.mxu0 %v105
  %473 = vmatprep.subr.mxu0 %v110
  %474 = vmatpush1.msra.mxu0 %v109
  %475 = vmatprep.subr.mxu0 %v114
  %476 = vmatpush1.msra.mxu0 %v113
  %477 = vmatprep.subr.mxu0 %v118
  %478 = vmatpush1.msra.mxu0 %v117
  %479 = vmatprep.subr.mxu0 %v122
  %480 = vmatpush1.msra.mxu0 %v121
  %481 = vmatprep.subr.mxu0 %v126
  %482 = vmatpush1.msra.mxu0 %v125
  %483 = vmatprep.subr.mxu0 %v130
  %484 = vmatpush1.msra.mxu0 %v129
  %485 = vmatprep.subr.mxu0 %v134
  %486 = vmatpush1.msra.mxu0 %v133
  %487 = vmatprep.subr.mxu0 %v138
  %488 = vmatpush1.msra.mxu0 %v137
  %489 = vmatprep.subr.mxu0 %v142
  %490 = vmatpush1.msra.mxu0 %v141
  %491 = vmatprep.subr.mxu0 %v146
  %492 = vmatpush1.msra.mxu0 %v145
  %493 = vmatprep.subr.mxu0 %v150
  %494 = vmatpush1.msra.mxu0 %v149
  %495 = vmatprep.subr.mxu0 %v154
  %496 = vmatpush1.msra.mxu0 %v153
  %497 = vmatprep.subr.mxu0 %v158
  %498 = vmatpush1.msra.mxu0 %v157
  %499 = vmatprep.subr.mxu0 %v162
  %500 = vmatpush1.msra.mxu0 %v161
  %501 = vmatprep.subr.mxu0 %v166
  %502 = vmatpush1.msra.mxu0 %v165
  %503 = vmatprep.subr.mxu0 %v170
  %504 = vmatpush1.msra.mxu0 %v169
  %505 = vmatprep.mubr.f32.mxu0 %v39
  %506 = vmatmul.mubr.f32.gmra.mrb[0].mxu0 %v38
  %v507 = vpop.f32.mrb[0].mxu0
  %v508 = vadd.f32 0.0, %v507
  %v509 = vpop.f32.mrb[0].mxu0
  %v510 = vadd.f32 0.0, %v509
  %511 = vdwg.mxu0
  %512 = vmatprep.subr.mxu0 %v174
  %513 = vmatpush1.msra.mxu0 %v173
  %514 = vmatprep.subr.mxu0 %v178
  %515 = vmatpush1.msra.mxu0 %v177
  %516 = vmatprep.subr.mxu0 %v182
  %517 = vmatpush1.msra.mxu0 %v181
  %518 = vmatprep.subr.mxu0 %v186
  %519 = vmatpush1.msra.mxu0 %v185
  %520 = vmatprep.subr.mxu0 %v190
  %521 = vmatpush1.msra.mxu0 %v189
  %522 = vmatprep.subr.mxu0 %v194
  %523 = vmatpush1.msra.mxu0 %v193
  %524 = vmatprep.subr.mxu0 %v198
  %525 = vmatpush1.msra.mxu0 %v197
  %526 = vmatprep.subr.mxu0 %v202
  %527 = vmatpush1.msra.mxu0 %v201
  %528 = vmatprep.subr.mxu0 %v206
  %529 = vmatpush1.msra.mxu0 %v205
  %530 = vmatprep.subr.mxu0 %v210
  %531 = vmatpush1.msra.mxu0 %v209
  %532 = vmatprep.subr.mxu0 %v214
  %533 = vmatpush1.msra.mxu0 %v213
  %534 = vmatprep.subr.mxu0 %v218
  %535 = vmatpush1.msra.mxu0 %v217
  %536 = vmatprep.subr.mxu0 %v222
  %537 = vmatpush1.msra.mxu0 %v221
  %538 = vmatprep.subr.mxu0 %v226
  %539 = vmatpush1.msra.mxu0 %v225
  %540 = vmatprep.subr.mxu0 %v230
  %541 = vmatpush1.msra.mxu0 %v229
  %542 = vmatprep.subr.mxu0 %v234
  %543 = vmatpush1.msra.mxu0 %v233
  %544 = vmatprep.subr.mxu0 %v238
  %545 = vmatpush1.msra.mxu0 %v237
  %546 = vmatprep.subr.mxu0 %v242
  %547 = vmatpush1.msra.mxu0 %v241
  %548 = vmatprep.subr.mxu0 %v246
  %549 = vmatpush1.msra.mxu0 %v245
  %550 = vmatprep.subr.mxu0 %v250
  %551 = vmatpush1.msra.mxu0 %v249
  %552 = vmatprep.subr.mxu0 %v254
  %553 = vmatpush1.msra.mxu0 %v253
  %554 = vmatprep.subr.mxu0 %v258
  %555 = vmatpush1.msra.mxu0 %v257
  %556 = vmatprep.subr.mxu0 %v262
  %557 = vmatpush1.msra.mxu0 %v261
  %558 = vmatprep.subr.mxu0 %v266
  %559 = vmatpush1.msra.mxu0 %v265
  %560 = vmatprep.subr.mxu0 %v270
  %561 = vmatpush1.msra.mxu0 %v269
  %562 = vmatprep.subr.mxu0 %v274
  %563 = vmatpush1.msra.mxu0 %v273
  %564 = vmatprep.subr.mxu0 %v278
  %565 = vmatpush1.msra.mxu0 %v277
  %566 = vmatprep.subr.mxu0 %v282
  %567 = vmatpush1.msra.mxu0 %v281
  %568 = vmatprep.subr.mxu0 %v286
  %569 = vmatpush1.msra.mxu0 %v285
  %570 = vmatprep.subr.mxu0 %v290
  %571 = vmatpush1.msra.mxu0 %v289
  %572 = vmatprep.subr.mxu0 %v294
  %573 = vmatpush1.msra.mxu0 %v293
  %574 = vmatprep.subr.mxu0 %v298
  %575 = vmatpush1.msra.mxu0 %v297
  %576 = vmatprep.mubr.f32.mxu0 %v41
  %577 = vmatmul.mubr.f32.gmra.mrb[0].mxu0 %v40
  %v578 = vpop.f32.mrb[0].mxu0
  %v579 = vadd.f32 %v508, %v578
  %v580 = vpop.f32.mrb[0].mxu0
  %v581 = vadd.f32 %v510, %v580
  %582 = vdwg.mxu0
  %583 = vmatprep.subr.mxu0 %v302
  %584 = vmatpush1.msra.mxu0 %v301
  %585 = vmatprep.subr.mxu0 %v306
  %586 = vmatpush1.msra.mxu0 %v305
  %587 = vmatprep.subr.mxu0 %v310
  %588 = vmatpush1.msra.mxu0 %v309
  %589 = vmatprep.subr.mxu0 %v314
  %590 = vmatpush1.msra.mxu0 %v313
  %591 = vmatprep.subr.mxu0 %v318
  %592 = vmatpush1.msra.mxu0 %v317
  %593 = vmatprep.subr.mxu0 %v322
  %594 = vmatpush1.msra.mxu0 %v321
  %595 = vmatprep.subr.mxu0 %v326
  %596 = vmatpush1.msra.mxu0 %v325
  %597 = vmatprep.subr.mxu0 %v330
  %598 = vmatpush1.msra.mxu0 %v329
  %599 = vmatprep.subr.mxu0 %v334
  %600 = vmatpush1.msra.mxu0 %v333
  %601 = vmatprep.subr.mxu0 %v338
  %602 = vmatpush1.msra.mxu0 %v337
  %603 = vmatprep.subr.mxu0 %v342
  %604 = vmatpush1.msra.mxu0 %v341
  %605 = vmatprep.subr.mxu0 %v346
  %606 = vmatpush1.msra.mxu0 %v345
  %607 = vmatprep.subr.mxu0 %v350
  %608 = vmatpush1.msra.mxu0 %v349
  %609 = vmatprep.subr.mxu0 %v354
  %610 = vmatpush1.msra.mxu0 %v353
  %611 = vmatprep.subr.mxu0 %v358
  %612 = vmatpush1.msra.mxu0 %v357
  %613 = vmatprep.subr.mxu0 %v362
  %614 = vmatpush1.msra.mxu0 %v361
  %615 = vmatprep.subr.mxu0 %v366
  %616 = vmatpush1.msra.mxu0 %v365
  %617 = vmatprep.subr.mxu0 %v370
  %618 = vmatpush1.msra.mxu0 %v369
  %619 = vmatprep.subr.mxu0 %v374
  %620 = vmatpush1.msra.mxu0 %v373
  %621 = vmatprep.subr.mxu0 %v378
  %622 = vmatpush1.msra.mxu0 %v377
  %623 = vmatprep.subr.mxu0 %v382
  %624 = vmatpush1.msra.mxu0 %v381
  %625 = vmatprep.subr.mxu0 %v386
  %626 = vmatpush1.msra.mxu0 %v385
  %627 = vmatprep.subr.mxu0 %v390
  %628 = vmatpush1.msra.mxu0 %v389
  %629 = vmatprep.subr.mxu0 %v394
  %630 = vmatpush1.msra.mxu0 %v393
  %631 = vmatprep.subr.mxu0 %v398
  %632 = vmatpush1.msra.mxu0 %v397
  %633 = vmatprep.subr.mxu0 %v402
  %634 = vmatpush1.msra.mxu0 %v401
  %635 = vmatprep.subr.mxu0 %v406
  %636 = vmatpush1.msra.mxu0 %v405
  %637 = vmatprep.subr.mxu0 %v410
  %638 = vmatpush1.msra.mxu0 %v409
  %639 = vmatprep.subr.mxu0 %v414
  %640 = vmatpush1.msra.mxu0 %v413
  %641 = vmatprep.subr.mxu0 %v418
  %642 = vmatpush1.msra.mxu0 %v417
  %643 = vmatprep.subr.mxu0 %v422
  %644 = vmatpush1.msra.mxu0 %v421
  %645 = vmatprep.subr.mxu0 %v426
  %646 = vmatpush1.msra.mxu0 %v425
  %647 = vmatprep.mubr.f32.mxu0 %v43
  %648 = vmatmul.mubr.f32.gmra.mrb[0].mxu0 %v42
  %v649 = vpop.f32.mrb[0].mxu0
  %v650 = vadd.f32 %v579, %v649
  %v651 = vpop.f32.mrb[0].mxu0
  %v652 = vadd.f32 %v581, %v651
  %653 = vdwg.mxu0
  %654 = vmatprep.subr.mxu0 %v430
  %655 = vmatpush1.msra.mxu0 %v429
  %656 = vmatprep.subr.mxu0 %v434
  %657 = vmatpush1.msra.mxu0 %v433
  %658 = vmatprep.subr.mxu0 0.0
  %659 = vmatpush1.msra.mxu0 0.0
  %660 = vmatprep.subr.mxu0 0.0
  %661 = vmatpush1.msra.mxu0 0.0
  %662 = vmatprep.subr.mxu0 0.0
  %663 = vmatpush1.msra.mxu0 0.0
  %664 = vmatprep.subr.mxu0 0.0
  %665 = vmatpush1.msra.mxu0 0.0
  %666 = vmatprep.subr.mxu0 0.0
  %667 = vmatpush1.msra.mxu0 0.0
  %668 = vmatprep.subr.mxu0 0.0
  %669 = vmatpush1.msra.mxu0 0.0
  %670 = vmatprep.subr.mxu0 0.0
  %671 = vmatpush1.msra.mxu0 0.0
  %672 = vmatprep.subr.mxu0 0.0
  %673 = vmatpush1.msra.mxu0 0.0
  %674 = vmatprep.subr.mxu0 0.0
  %675 = vmatpush1.msra.mxu0 0.0
  %676 = vmatprep.subr.mxu0 0.0
  %677 = vmatpush1.msra.mxu0 0.0
  %678 = vmatprep.subr.mxu0 0.0
  %679 = vmatpush1.msra.mxu0 0.0
  %680 = vmatprep.subr.mxu0 0.0
  %681 = vmatpush1.msra.mxu0 0.0
  %682 = vmatprep.subr.mxu0 0.0
  %683 = vmatpush1.msra.mxu0 0.0
  %684 = vmatprep.subr.mxu0 0.0
  %685 = vmatpush1.msra.mxu0 0.0
  %686 = vmatprep.subr.mxu0 0.0
  %687 = vmatpush1.msra.mxu0 0.0
  %688 = vmatprep.subr.mxu0 0.0
  %689 = vmatpush1.msra.mxu0 0.0
  %690 = vmatprep.subr.mxu0 0.0
  %691 = vmatpush1.msra.mxu0 0.0
  %692 = vmatprep.subr.mxu0 0.0
  %693 = vmatpush1.msra.mxu0 0.0
  %694 = vmatprep.subr.mxu0 0.0
  %695 = vmatpush1.msra.mxu0 0.0
  %696 = vmatprep.subr.mxu0 0.0
  %697 = vmatpush1.msra.mxu0 0.0
  %698 = vmatprep.subr.mxu0 0.0
  %699 = vmatpush1.msra.mxu0 0.0
  %700 = vmatprep.subr.mxu0 0.0
  %701 = vmatpush1.msra.mxu0 0.0
  %702 = vmatprep.subr.mxu0 0.0
  %703 = vmatpush1.msra.mxu0 0.0
  %704 = vmatprep.subr.mxu0 0.0
  %705 = vmatpush1.msra.mxu0 0.0
  %706 = vmatprep.subr.mxu0 0.0
  %707 = vmatpush1.msra.mxu0 0.0
  %708 = vmatprep.subr.mxu0 0.0
  %709 = vmatpush1.msra.mxu0 0.0
  %710 = vmatprep.subr.mxu0 0.0
  %711 = vmatpush1.msra.mxu0 0.0
  %712 = vmatprep.subr.mxu0 0.0
  %713 = vmatpush1.msra.mxu0 0.0
  %714 = vmatprep.subr.mxu0 0.0
  %715 = vmatpush1.msra.mxu0 0.0
  %716 = vmatprep.subr.mxu0 0.0
  %717 = vmatpush1.msra.mxu0 0.0
  %718 = vmatprep.mubr.f32.mxu0 0.0
  %719 = vmatmul.mubr.f32.gmra.mrb[0].mxu0 %v439
  %v720 = vpop.f32.mrb[0].mxu0
  %v721 = vadd.f32 %v650, %v720
  %v722 = vpop.f32.mrb[0].mxu0
  %v723 = vadd.f32 %v652, %v722
  %724 = vdwg.mxu0
  %725 = vmatprep.subr.mxu0 %v48
  %726 = vmatpush1.msra.mxu0 %v47
  %727 = vmatprep.subr.mxu0 %v52
  %728 = vmatpush1.msra.mxu0 %v51
  %729 = vmatprep.subr.mxu0 %v56
  %730 = vmatpush1.msra.mxu0 %v55
  %731 = vmatprep.subr.mxu0 %v60
  %732 = vmatpush1.msra.mxu0 %v59
  %733 = vmatprep.subr.mxu0 %v64
  %734 = vmatpush1.msra.mxu0 %v63
  %735 = vmatprep.subr.mxu0 %v68
  %736 = vmatpush1.msra.mxu0 %v67
  %737 = vmatprep.subr.mxu0 %v72
  %738 = vmatpush1.msra.mxu0 %v71
  %739 = vmatprep.subr.mxu0 %v76
  %740 = vmatpush1.msra.mxu0 %v75
  %741 = vmatprep.subr.mxu0 %v80
  %742 = vmatpush1.msra.mxu0 %v79
  %743 = vmatprep.subr.mxu0 %v84
  %744 = vmatpush1.msra.mxu0 %v83
  %745 = vmatprep.subr.mxu0 %v88
  %746 = vmatpush1.msra.mxu0 %v87
  %747 = vmatprep.subr.mxu0 %v92
  %748 = vmatpush1.msra.mxu0 %v91
  %749 = vmatprep.subr.mxu0 %v96
  %750 = vmatpush1.msra.mxu0 %v95
  %751 = vmatprep.subr.mxu0 %v100
  %752 = vmatpush1.msra.mxu0 %v99
  %753 = vmatprep.subr.mxu0 %v104
  %754 = vmatpush1.msra.mxu0 %v103
  %755 = vmatprep.subr.mxu0 %v108
  %756 = vmatpush1.msra.mxu0 %v107
  %757 = vmatprep.subr.mxu0 %v112
  %758 = vmatpush1.msra.mxu0 %v111
  %759 = vmatprep.subr.mxu0 %v116
  %760 = vmatpush1.msra.mxu0 %v115
  %761 = vmatprep.subr.mxu0 %v120
  %762 = vmatpush1.msra.mxu0 %v119
  %763 = vmatprep.subr.mxu0 %v124
  %764 = vmatpush1.msra.mxu0 %v123
  %765 = vmatprep.subr.mxu0 %v128
  %766 = vmatpush1.msra.mxu0 %v127
  %767 = vmatprep.subr.mxu0 %v132
  %768 = vmatpush1.msra.mxu0 %v131
  %769 = vmatprep.subr.mxu0 %v136
  %770 = vmatpush1.msra.mxu0 %v135
  %771 = vmatprep.subr.mxu0 %v140
  %772 = vmatpush1.msra.mxu0 %v139
  %773 = vmatprep.subr.mxu0 %v144
  %774 = vmatpush1.msra.mxu0 %v143
  %775 = vmatprep.subr.mxu0 %v148
  %776 = vmatpush1.msra.mxu0 %v147
  %777 = vmatprep.subr.mxu0 %v152
  %778 = vmatpush1.msra.mxu0 %v151
  %779 = vmatprep.subr.mxu0 %v156
  %780 = vmatpush1.msra.mxu0 %v155
  %781 = vmatprep.subr.mxu0 %v160
  %782 = vmatpush1.msra.mxu0 %v159
  %783 = vmatprep.subr.mxu0 %v164
  %784 = vmatpush1.msra.mxu0 %v163
  %785 = vmatprep.subr.mxu0 %v168
  %786 = vmatpush1.msra.mxu0 %v167
  %787 = vmatprep.subr.mxu0 %v172
  %788 = vmatpush1.msra.mxu0 %v171
  %789 = vmatprep.mubr.f32.mxu0 %v39
  %790 = vmatmul.mubr.f32.gmra.mrb[0].mxu0 %v38
  %v791 = vpop.f32.mrb[0].mxu0
  %v792 = vadd.f32 0.0, %v791
  %v793 = vpop.f32.mrb[0].mxu0
  %v794 = vadd.f32 0.0, %v793
  %795 = vdwg.mxu0
  %796 = vmatprep.subr.mxu0 %v176
  %797 = vmatpush1.msra.mxu0 %v175
  %798 = vmatprep.subr.mxu0 %v180
  %799 = vmatpush1.msra.mxu0 %v179
  %800 = vmatprep.subr.mxu0 %v184
  %801 = vmatpush1.msra.mxu0 %v183
  %802 = vmatprep.subr.mxu0 %v188
  %803 = vmatpush1.msra.mxu0 %v187
  %804 = vmatprep.subr.mxu0 %v192
  %805 = vmatpush1.msra.mxu0 %v191
  %806 = vmatprep.subr.mxu0 %v196
  %807 = vmatpush1.msra.mxu0 %v195
  %808 = vmatprep.subr.mxu0 %v200
  %809 = vmatpush1.msra.mxu0 %v199
  %810 = vmatprep.subr.mxu0 %v204
  %811 = vmatpush1.msra.mxu0 %v203
  %812 = vmatprep.subr.mxu0 %v208
  %813 = vmatpush1.msra.mxu0 %v207
  %814 = vmatprep.subr.mxu0 %v212
  %815 = vmatpush1.msra.mxu0 %v211
  %816 = vmatprep.subr.mxu0 %v216
  %817 = vmatpush1.msra.mxu0 %v215
  %818 = vmatprep.subr.mxu0 %v220
  %819 = vmatpush1.msra.mxu0 %v219
  %820 = vmatprep.subr.mxu0 %v224
  %821 = vmatpush1.msra.mxu0 %v223
  %822 = vmatprep.subr.mxu0 %v228
  %823 = vmatpush1.msra.mxu0 %v227
  %824 = vmatprep.subr.mxu0 %v232
  %825 = vmatpush1.msra.mxu0 %v231
  %826 = vmatprep.subr.mxu0 %v236
  %827 = vmatpush1.msra.mxu0 %v235
  %828 = vmatprep.subr.mxu0 %v240
  %829 = vmatpush1.msra.mxu0 %v239
  %830 = vmatprep.subr.mxu0 %v244
  %831 = vmatpush1.msra.mxu0 %v243
  %832 = vmatprep.subr.mxu0 %v248
  %833 = vmatpush1.msra.mxu0 %v247
  %834 = vmatprep.subr.mxu0 %v252
  %835 = vmatpush1.msra.mxu0 %v251
  %836 = vmatprep.subr.mxu0 %v256
  %837 = vmatpush1.msra.mxu0 %v255
  %838 = vmatprep.subr.mxu0 %v260
  %839 = vmatpush1.msra.mxu0 %v259
  %840 = vmatprep.subr.mxu0 %v264
  %841 = vmatpush1.msra.mxu0 %v263
  %842 = vmatprep.subr.mxu0 %v268
  %843 = vmatpush1.msra.mxu0 %v267
  %844 = vmatprep.subr.mxu0 %v272
  %845 = vmatpush1.msra.mxu0 %v271
  %846 = vmatprep.subr.mxu0 %v276
  %847 = vmatpush1.msra.mxu0 %v275
  %848 = vmatprep.subr.mxu0 %v280
  %849 = vmatpush1.msra.mxu0 %v279
  %850 = vmatprep.subr.mxu0 %v284
  %851 = vmatpush1.msra.mxu0 %v283
  %852 = vmatprep.subr.mxu0 %v288
  %853 = vmatpush1.msra.mxu0 %v287
  %854 = vmatprep.subr.mxu0 %v292
  %855 = vmatpush1.msra.mxu0 %v291
  %856 = vmatprep.subr.mxu0 %v296
  %857 = vmatpush1.msra.mxu0 %v295
  %858 = vmatprep.subr.mxu0 %v300
  %859 = vmatpush1.msra.mxu0 %v299
  %860 = vmatprep.mubr.f32.mxu0 %v41
  %861 = vmatmul.mubr.f32.gmra.mrb[0].mxu0 %v40
  %v862 = vpop.f32.mrb[0].mxu0
  %v863 = vadd.f32 %v792, %v862
  %v864 = vpop.f32.mrb[0].mxu0
  %v865 = vadd.f32 %v794, %v864
  %866 = vdwg.mxu0
  %867 = vmatprep.subr.mxu0 %v304
  %868 = vmatpush1.msra.mxu0 %v303
  %869 = vmatprep.subr.mxu0 %v308
  %870 = vmatpush1.msra.mxu0 %v307
  %871 = vmatprep.subr.mxu0 %v312
  %872 = vmatpush1.msra.mxu0 %v311
  %873 = vmatprep.subr.mxu0 %v316
  %874 = vmatpush1.msra.mxu0 %v315
  %875 = vmatprep.subr.mxu0 %v320
  %876 = vmatpush1.msra.mxu0 %v319
  %877 = vmatprep.subr.mxu0 %v324
  %878 = vmatpush1.msra.mxu0 %v323
  %879 = vmatprep.subr.mxu0 %v328
  %880 = vmatpush1.msra.mxu0 %v327
  %881 = vmatprep.subr.mxu0 %v332
  %882 = vmatpush1.msra.mxu0 %v331
  %883 = vmatprep.subr.mxu0 %v336
  %884 = vmatpush1.msra.mxu0 %v335
  %885 = vmatprep.subr.mxu0 %v340
  %886 = vmatpush1.msra.mxu0 %v339
  %887 = vmatprep.subr.mxu0 %v344
  %888 = vmatpush1.msra.mxu0 %v343
  %889 = vmatprep.subr.mxu0 %v348
  %890 = vmatpush1.msra.mxu0 %v347
  %891 = vmatprep.subr.mxu0 %v352
  %892 = vmatpush1.msra.mxu0 %v351
  %893 = vmatprep.subr.mxu0 %v356
  %894 = vmatpush1.msra.mxu0 %v355
  %895 = vmatprep.subr.mxu0 %v360
  %896 = vmatpush1.msra.mxu0 %v359
  %897 = vmatprep.subr.mxu0 %v364
  %898 = vmatpush1.msra.mxu0 %v363
  %899 = vmatprep.subr.mxu0 %v368
  %900 = vmatpush1.msra.mxu0 %v367
  %901 = vmatprep.subr.mxu0 %v372
  %902 = vmatpush1.msra.mxu0 %v371
  %903 = vmatprep.subr.mxu0 %v376
  %904 = vmatpush1.msra.mxu0 %v375
  %905 = vmatprep.subr.mxu0 %v380
  %906 = vmatpush1.msra.mxu0 %v379
  %907 = vmatprep.subr.mxu0 %v384
  %908 = vmatpush1.msra.mxu0 %v383
  %909 = vmatprep.subr.mxu0 %v388
  %910 = vmatpush1.msra.mxu0 %v387
  %911 = vmatprep.subr.mxu0 %v392
  %912 = vmatpush1.msra.mxu0 %v391
  %913 = vmatprep.subr.mxu0 %v396
  %914 = vmatpush1.msra.mxu0 %v395
  %915 = vmatprep.subr.mxu0 %v400
  %916 = vmatpush1.msra.mxu0 %v399
  %917 = vmatprep.subr.mxu0 %v404
  %918 = vmatpush1.msra.mxu0 %v403
  %919 = vmatprep.subr.mxu0 %v408
  %920 = vmatpush1.msra.mxu0 %v407
  %921 = vmatprep.subr.mxu0 %v412
  %922 = vmatpush1.msra.mxu0 %v411
  %923 = vmatprep.subr.mxu0 %v416
  %924 = vmatpush1.msra.mxu0 %v415
  %925 = vmatprep.subr.mxu0 %v420
  %926 = vmatpush1.msra.mxu0 %v419
  %927 = vmatprep.subr.mxu0 %v424
  %928 = vmatpush1.msra.mxu0 %v423
  %929 = vmatprep.subr.mxu0 %v428
  %930 = vmatpush1.msra.mxu0 %v427
  %931 = vmatprep.mubr.f32.mxu0 %v43
  %932 = vmatmul.mubr.f32.gmra.mrb[0].mxu0 %v42
  %v933 = vpop.f32.mrb[0].mxu0
  %v934 = vadd.f32 %v863, %v933
  %v935 = vpop.f32.mrb[0].mxu0
  %v936 = vadd.f32 %v865, %v935
  %937 = vdwg.mxu0
  %938 = vmatprep.subr.mxu0 %v432
  %939 = vmatpush1.msra.mxu0 %v431
  %940 = vmatprep.subr.mxu0 %v436
  %941 = vmatpush1.msra.mxu0 %v435
  %942 = vmatprep.subr.mxu0 0.0
  %943 = vmatpush1.msra.mxu0 0.0
  %944 = vmatprep.subr.mxu0 0.0
  %945 = vmatpush1.msra.mxu0 0.0
  %946 = vmatprep.subr.mxu0 0.0
  %947 = vmatpush1.msra.mxu0 0.0
  %948 = vmatprep.subr.mxu0 0.0
  %949 = vmatpush1.msra.mxu0 0.0
  %950 = vmatprep.subr.mxu0 0.0
  %951 = vmatpush1.msra.mxu0 0.0
  %952 = vmatprep.subr.mxu0 0.0
  %953 = vmatpush1.msra.mxu0 0.0
  %954 = vmatprep.subr.mxu0 0.0
  %955 = vmatpush1.msra.mxu0 0.0
  %956 = vmatprep.subr.mxu0 0.0
  %957 = vmatpush1.msra.mxu0 0.0
  %958 = vmatprep.subr.mxu0 0.0
  %959 = vmatpush1.msra.mxu0 0.0
  %960 = vmatprep.subr.mxu0 0.0
  %961 = vmatpush1.msra.mxu0 0.0
  %962 = vmatprep.subr.mxu0 0.0
  %963 = vmatpush1.msra.mxu0 0.0
  %964 = vmatprep.subr.mxu0 0.0
  %965 = vmatpush1.msra.mxu0 0.0
  %966 = vmatprep.subr.mxu0 0.0
  %967 = vmatpush1.msra.mxu0 0.0
  %968 = vmatprep.subr.mxu0 0.0
  %969 = vmatpush1.msra.mxu0 0.0
  %970 = vmatprep.subr.mxu0 0.0
  %971 = vmatpush1.msra.mxu0 0.0
  %972 = vmatprep.subr.mxu0 0.0
  %973 = vmatpush1.msra.mxu0 0.0
  %974 = vmatprep.subr.mxu0 0.0
  %975 = vmatpush1.msra.mxu0 0.0
  %976 = vmatprep.subr.mxu0 0.0
  %977 = vmatpush1.msra.mxu0 0.0
  %978 = vmatprep.subr.mxu0 0.0
  %979 = vmatpush1.msra.mxu0 0.0
  %980 = vmatprep.subr.mxu0 0.0
  %981 = vmatpush1.msra.mxu0 0.0
  %982 = vmatprep.subr.mxu0 0.0
  %983 = vmatpush1.msra.mxu0 0.0
  %984 = vmatprep.subr.mxu0 0.0
  %985 = vmatpush1.msra.mxu0 0.0
  %986 = vmatprep.subr.mxu0 0.0
  %987 = vmatpush1.msra.mxu0 0.0
  %988 = vmatprep.subr.mxu0 0.0
  %989 = vmatpush1.msra.mxu0 0.0
  %990 = vmatprep.subr.mxu0 0.0
  %991 = vmatpush1.msra.mxu0 0.0
  %992 = vmatprep.subr.mxu0 0.0
  %993 = vmatpush1.msra.mxu0 0.0
  %994 = vmatprep.subr.mxu0 0.0
  %995 = vmatpush1.msra.mxu0 0.0
  %996 = vmatprep.subr.mxu0 0.0
  %997 = vmatpush1.msra.mxu0 0.0
  %998 = vmatprep.subr.mxu0 0.0
  %999 = vmatpush1.msra.mxu0 0.0
  %1000 = vmatprep.subr.mxu0 0.0
  %1001 = vmatpush1.msra.mxu0 0.0
  %1002 = vmatprep.mubr.f32.mxu0 0.0
  %1003 = vmatmul.mubr.f32.gmra.mrb[0].mxu0 %v439
  %v1004 = vpop.f32.mrb[0].mxu0
  %v1005 = vadd.f32 %v934, %v1004
  %v1006 = vpop.f32.mrb[0].mxu0
  %v1007 = vadd.f32 %v936, %v1006
  %1008 = vdwg.mxu0
  %s1009 = scalar_lea.vmem %s1, 3136
  %v1010 = vld [vmem:[%s1009] sm:$0xff]
  %v1011 = vld [vmem:[%s1009 + $0x8] sm:$0xff]
  %v1012 = vld [vmem:[%s1009 + $0x10] sm:$0xff]
  %v1013 = vld [vmem:[%s1009 + $0x18] sm:$0xff]
  %v1014 = vld [vmem:[%s1009 + $0x20] sm:$0xff]
  %v1015 = vld [vmem:[%s1009 + $0x28] sm:$0xff]
  %v1016 = vld [vmem:[%s1009 + $0x30] sm:$0xff]
  %v1017 = vld [vmem:[%s1009 + $0x38] sm:$0xff]
  %v1018 = vld [vmem:[%s1009 + $0x40] sm:$0xff]
  %v1019 = vld [vmem:[%s1009 + $0x48] sm:$0xff]
  %v1020 = vld [vmem:[%s1009 + $0x50] sm:$0xff]
  %v1021 = vld [vmem:[%s1009 + $0x58] sm:$0xff]
  %v1022 = vld [vmem:[%s1009 + $0x60] sm:$0xff]
  %v1023 = vld [vmem:[%s1009 + $0x68] sm:$0xff]
  %v1024 = vld [vmem:[%s1009 + $0x70] sm:$0xff]
  %v1025 = vld [vmem:[%s1009 + $0x78] sm:$0xff]
  %v1026 = vld [vmem:[%s1009 + $0x80] sm:$0xff]
  %v1027 = vld [vmem:[%s1009 + $0x88] sm:$0xff]
  %v1028 = vld [vmem:[%s1009 + $0x90] sm:$0xff]
  %v1029 = vld [vmem:[%s1009 + $0x98] sm:$0xff]
  %v1030 = vld [vmem:[%s1009 + $0xa0] sm:$0xff]
  %v1031 = vld [vmem:[%s1009 + $0xa8] sm:$0xff]
  %v1032 = vld [vmem:[%s1009 + $0xb0] sm:$0xff]
  %v1033 = vld [vmem:[%s1009 + $0xb8] sm:$0xff]
  %v1034 = vld [vmem:[%s1009 + $0xc0] sm:$0xff]
  %v1035 = vld [vmem:[%s1009 + $0xc8] sm:$0xff]
  %v1036 = vld [vmem:[%s1009 + $0xd0] sm:$0xff]
  %v1037 = vld [vmem:[%s1009 + $0xd8] sm:$0xff]
  %v1038 = vld [vmem:[%s1009 + $0xe0] sm:$0xff]
  %v1039 = vld [vmem:[%s1009 + $0xe8] sm:$0xff]
  %v1040 = vld [vmem:[%s1009 + $0xf0] sm:$0xff]
  %v1041 = vld [vmem:[%s1009 + $0xf8] sm:$0xff]
  %v1042 = vld [vmem:[%s1009 + $0x100] sm:$0xff]
  %v1043 = vld [vmem:[%s1009 + $0x108] sm:$0xff]
  %v1044 = vld [vmem:[%s1009 + $0x110] sm:$0xff]
  %v1045 = vld [vmem:[%s1009 + $0x118] sm:$0xff]
  %v1046 = vld [vmem:[%s1009 + $0x120] sm:$0xff]
  %v1047 = vld [vmem:[%s1009 + $0x128] sm:$0xff]
  %v1048 = vld [vmem:[%s1009 + $0x130] sm:$0xff]
  %v1049 = vld [vmem:[%s1009 + $0x138] sm:$0xff]
  %v1050 = vld [vmem:[%s1009 + $0x140] sm:$0xff]
  %v1051 = vld [vmem:[%s1009 + $0x148] sm:$0xff]
  %v1052 = vld [vmem:[%s1009 + $0x150] sm:$0xff]
  %v1053 = vld [vmem:[%s1009 + $0x158] sm:$0xff]
  %v1054 = vld [vmem:[%s1009 + $0x160] sm:$0xff]
  %v1055 = vld [vmem:[%s1009 + $0x168] sm:$0xff]
  %v1056 = vld [vmem:[%s1009 + $0x170] sm:$0xff]
  %v1057 = vld [vmem:[%s1009 + $0x178] sm:$0xff]
  %v1058 = vld [vmem:[%s1009 + $0x180] sm:$0xff]
  %v1059 = vld [vmem:[%s1009 + $0x188] sm:$0xff]
  %v1060 = vld [vmem:[%s1009 + $0x190] sm:$0xff]
  %v1061 = vld [vmem:[%s1009 + $0x198] sm:$0xff]
  %v1062 = vld [vmem:[%s1009 + $0x1a0] sm:$0xff]
  %v1063 = vld [vmem:[%s1009 + $0x1a8] sm:$0xff]
  %v1064 = vld [vmem:[%s1009 + $0x1b0] sm:$0xff]
  %v1065 = vld [vmem:[%s1009 + $0x1b8] sm:$0xff]
  %v1066 = vld [vmem:[%s1009 + $0x1c0] sm:$0xff]
  %v1067 = vld [vmem:[%s1009 + $0x1c8] sm:$0xff]
  %v1068 = vld [vmem:[%s1009 + $0x1d0] sm:$0xff]
  %v1069 = vld [vmem:[%s1009 + $0x1d8] sm:$0xff]
  %v1070 = vld [vmem:[%s1009 + $0x1e0] sm:$0xff]
  %v1071 = vld [vmem:[%s1009 + $0x1e8] sm:$0xff]
  %v1072 = vld [vmem:[%s1009 + $0x1f0] sm:$0xff]
  %v1073 = vld [vmem:[%s1009 + $0x1f8] sm:$0xff]
  %v1074 = vld [vmem:[%s1009 + $0x200] sm:$0xff]
  %v1075 = vld [vmem:[%s1009 + $0x208] sm:$0xff]
  %v1076 = vld [vmem:[%s1009 + $0x210] sm:$0xff]
  %v1077 = vld [vmem:[%s1009 + $0x218] sm:$0xff]
  %v1078 = vld [vmem:[%s1009 + $0x220] sm:$0xff]
  %v1079 = vld [vmem:[%s1009 + $0x228] sm:$0xff]
  %v1080 = vld [vmem:[%s1009 + $0x230] sm:$0xff]
  %v1081 = vld [vmem:[%s1009 + $0x238] sm:$0xff]
  %v1082 = vld [vmem:[%s1009 + $0x240] sm:$0xff]
  %v1083 = vld [vmem:[%s1009 + $0x248] sm:$0xff]
  %v1084 = vld [vmem:[%s1009 + $0x250] sm:$0xff]
  %v1085 = vld [vmem:[%s1009 + $0x258] sm:$0xff]
  %v1086 = vld [vmem:[%s1009 + $0x260] sm:$0xff]
  %v1087 = vld [vmem:[%s1009 + $0x268] sm:$0xff]
  %v1088 = vld [vmem:[%s1009 + $0x270] sm:$0xff]
  %v1089 = vld [vmem:[%s1009 + $0x278] sm:$0xff]
  %v1090 = vld [vmem:[%s1009 + $0x280] sm:$0xff]
  %v1091 = vld [vmem:[%s1009 + $0x288] sm:$0xff]
  %v1092 = vld [vmem:[%s1009 + $0x290] sm:$0xff]
  %v1093 = vld [vmem:[%s1009 + $0x298] sm:$0xff]
  %v1094 = vld [vmem:[%s1009 + $0x2a0] sm:$0xff]
  %v1095 = vld [vmem:[%s1009 + $0x2a8] sm:$0xff]
  %v1096 = vld [vmem:[%s1009 + $0x2b0] sm:$0xff]
  %v1097 = vld [vmem:[%s1009 + $0x2b8] sm:$0xff]
  %v1098 = vld [vmem:[%s1009 + $0x2c0] sm:$0xff]
  %v1099 = vld [vmem:[%s1009 + $0x2c8] sm:$0xff]
  %v1100 = vld [vmem:[%s1009 + $0x2d0] sm:$0xff]
  %v1101 = vld [vmem:[%s1009 + $0x2d8] sm:$0xff]
  %v1102 = vld [vmem:[%s1009 + $0x2e0] sm:$0xff]
  %v1103 = vld [vmem:[%s1009 + $0x2e8] sm:$0xff]
  %v1104 = vld [vmem:[%s1009 + $0x2f0] sm:$0xff]
  %v1105 = vld [vmem:[%s1009 + $0x2f8] sm:$0xff]
  %v1106 = vld [vmem:[%s1009 + $0x300] sm:$0xff]
  %v1107 = vld [vmem:[%s1009 + $0x308] sm:$0xff]
  %v1108 = vld [vmem:[%s1009 + $0x310] sm:$0xff]
  %v1109 = vld [vmem:[%s1009 + $0x318] sm:$0xff]
  %v1110 = vld [vmem:[%s1009 + $0x320] sm:$0xff]
  %v1111 = vld [vmem:[%s1009 + $0x328] sm:$0xff]
  %v1112 = vld [vmem:[%s1009 + $0x330] sm:$0xff]
  %v1113 = vld [vmem:[%s1009 + $0x338] sm:$0xff]
  %v1114 = vld [vmem:[%s1009 + $0x340] sm:$0xff]
  %v1115 = vld [vmem:[%s1009 + $0x348] sm:$0xff]
  %v1116 = vld [vmem:[%s1009 + $0x350] sm:$0xff]
  %v1117 = vld [vmem:[%s1009 + $0x358] sm:$0xff]
  %v1118 = vld [vmem:[%s1009 + $0x360] sm:$0xff]
  %v1119 = vld [vmem:[%s1009 + $0x368] sm:$0xff]
  %v1120 = vld [vmem:[%s1009 + $0x370] sm:$0xff]
  %v1121 = vld [vmem:[%s1009 + $0x378] sm:$0xff]
  %v1122 = vld [vmem:[%s1009 + $0x380] sm:$0xff]
  %v1123 = vld [vmem:[%s1009 + $0x388] sm:$0xff]
  %v1124 = vld [vmem:[%s1009 + $0x390] sm:$0xff]
  %v1125 = vld [vmem:[%s1009 + $0x398] sm:$0xff]
  %v1126 = vld [vmem:[%s1009 + $0x3a0] sm:$0xff]
  %v1127 = vld [vmem:[%s1009 + $0x3a8] sm:$0xff]
  %v1128 = vld [vmem:[%s1009 + $0x3b0] sm:$0xff]
  %v1129 = vld [vmem:[%s1009 + $0x3b8] sm:$0xff]
  %v1130 = vld [vmem:[%s1009 + $0x3c0] sm:$0xff]
  %v1131 = vld [vmem:[%s1009 + $0x3c8] sm:$0xff]
  %v1132 = vld [vmem:[%s1009 + $0x3d0] sm:$0xff]
  %v1133 = vld [vmem:[%s1009 + $0x3d8] sm:$0xff]
  %v1134 = vld [vmem:[%s1009 + $0x3e0] sm:$0xff]
  %v1135 = vld [vmem:[%s1009 + $0x3e8] sm:$0xff]
  %v1136 = vld [vmem:[%s1009 + $0x3f0] sm:$0xff]
  %v1137 = vld [vmem:[%s1009 + $0x3f8] sm:$0xff]
  %v1138 = vld [vmem:[%s1009 + $0x400] sm:$0xff]
  %v1139 = vld [vmem:[%s1009 + $0x408] sm:$0xff]
  %v1140 = vld [vmem:[%s1009 + $0x410] sm:$0xff]
  %v1141 = vld [vmem:[%s1009 + $0x418] sm:$0xff]
  %v1142 = vld [vmem:[%s1009 + $0x420] sm:$0xff]
  %v1143 = vld [vmem:[%s1009 + $0x428] sm:$0xff]
  %v1144 = vld [vmem:[%s1009 + $0x430] sm:$0xff]
  %v1145 = vld [vmem:[%s1009 + $0x438] sm:$0xff]
  %v1146 = vld [vmem:[%s1009 + $0x440] sm:$0xff]
  %v1147 = vld [vmem:[%s1009 + $0x448] sm:$0xff]
  %v1148 = vld [vmem:[%s1009 + $0x450] sm:$0xff]
  %v1149 = vld [vmem:[%s1009 + $0x458] sm:$0xff]
  %v1150 = vld [vmem:[%s1009 + $0x460] sm:$0xff]
  %v1151 = vld [vmem:[%s1009 + $0x468] sm:$0xff]
  %v1152 = vld [vmem:[%s1009 + $0x470] sm:$0xff]
  %v1153 = vld [vmem:[%s1009 + $0x478] sm:$0xff]
  %v1154 = vld [vmem:[%s1009 + $0x480] sm:$0xff]
  %v1155 = vld [vmem:[%s1009 + $0x488] sm:$0xff]
  %v1156 = vld [vmem:[%s1009 + $0x490] sm:$0xff]
  %v1157 = vld [vmem:[%s1009 + $0x498] sm:$0xff]
  %v1158 = vld [vmem:[%s1009 + $0x4a0] sm:$0xff]
  %v1159 = vld [vmem:[%s1009 + $0x4a8] sm:$0xff]
  %v1160 = vld [vmem:[%s1009 + $0x4b0] sm:$0xff]
  %v1161 = vld [vmem:[%s1009 + $0x4b8] sm:$0xff]
  %v1162 = vld [vmem:[%s1009 + $0x4c0] sm:$0xff]
  %v1163 = vld [vmem:[%s1009 + $0x4c8] sm:$0xff]
  %v1164 = vld [vmem:[%s1009 + $0x4d0] sm:$0xff]
  %v1165 = vld [vmem:[%s1009 + $0x4d8] sm:$0xff]
  %v1166 = vld [vmem:[%s1009 + $0x4e0] sm:$0xff]
  %v1167 = vld [vmem:[%s1009 + $0x4e8] sm:$0xff]
  %v1168 = vld [vmem:[%s1009 + $0x4f0] sm:$0xff]
  %v1169 = vld [vmem:[%s1009 + $0x4f8] sm:$0xff]
  %v1170 = vld [vmem:[%s1009 + $0x500] sm:$0xff]
  %v1171 = vld [vmem:[%s1009 + $0x508] sm:$0xff]
  %v1172 = vld [vmem:[%s1009 + $0x510] sm:$0xff]
  %v1173 = vld [vmem:[%s1009 + $0x518] sm:$0xff]
  %v1174 = vld [vmem:[%s1009 + $0x520] sm:$0xff]
  %v1175 = vld [vmem:[%s1009 + $0x528] sm:$0xff]
  %v1176 = vld [vmem:[%s1009 + $0x530] sm:$0xff]
  %v1177 = vld [vmem:[%s1009 + $0x538] sm:$0xff]
  %v1178 = vld [vmem:[%s1009 + $0x540] sm:$0xff]
  %v1179 = vld [vmem:[%s1009 + $0x548] sm:$0xff]
  %v1180 = vld [vmem:[%s1009 + $0x550] sm:$0xff]
  %v1181 = vld [vmem:[%s1009 + $0x558] sm:$0xff]
  %v1182 = vld [vmem:[%s1009 + $0x560] sm:$0xff]
  %v1183 = vld [vmem:[%s1009 + $0x568] sm:$0xff]
  %v1184 = vld [vmem:[%s1009 + $0x570] sm:$0xff]
  %v1185 = vld [vmem:[%s1009 + $0x578] sm:$0xff]
  %v1186 = vld [vmem:[%s1009 + $0x580] sm:$0xff]
  %v1187 = vld [vmem:[%s1009 + $0x588] sm:$0xff]
  %v1188 = vld [vmem:[%s1009 + $0x590] sm:$0xff]
  %v1189 = vld [vmem:[%s1009 + $0x598] sm:$0xff]
  %v1190 = vld [vmem:[%s1009 + $0x5a0] sm:$0xff]
  %v1191 = vld [vmem:[%s1009 + $0x5a8] sm:$0xff]
  %v1192 = vld [vmem:[%s1009 + $0x5b0] sm:$0xff]
  %v1193 = vld [vmem:[%s1009 + $0x5b8] sm:$0xff]
  %v1194 = vld [vmem:[%s1009 + $0x5c0] sm:$0xff]
  %v1195 = vld [vmem:[%s1009 + $0x5c8] sm:$0xff]
  %v1196 = vld [vmem:[%s1009 + $0x5d0] sm:$0xff]
  %v1197 = vld [vmem:[%s1009 + $0x5d8] sm:$0xff]
  %v1198 = vld [vmem:[%s1009 + $0x5e0] sm:$0xff]
  %v1199 = vld [vmem:[%s1009 + $0x5e8] sm:$0xff]
  %v1200 = vld [vmem:[%s1009 + $0x5f0] sm:$0xff]
  %v1201 = vld [vmem:[%s1009 + $0x5f8] sm:$0xff]
  %v1202 = vld [vmem:[%s1009 + $0x600] sm:$0xff]
  %v1203 = vld [vmem:[%s1009 + $0x608] sm:$0xff]
  %v1204 = vld [vmem:[%s1009 + $0x610] sm:$0xff]
  %v1205 = vld [vmem:[%s1009 + $0x618] sm:$0xff]
  %v1206 = vld [vmem:[%s1009 + $0x620] sm:$0xff]
  %v1207 = vld [vmem:[%s1009 + $0x628] sm:$0xff]
  %v1208 = vld [vmem:[%s1009 + $0x630] sm:$0xff]
  %v1209 = vld [vmem:[%s1009 + $0x638] sm:$0xff]
  %v1210 = vld [vmem:[%s1009 + $0x640] sm:$0xff]
  %v1211 = vld [vmem:[%s1009 + $0x648] sm:$0xff]
  %v1212 = vld [vmem:[%s1009 + $0x650] sm:$0xff]
  %v1213 = vld [vmem:[%s1009 + $0x658] sm:$0xff]
  %v1214 = vld [vmem:[%s1009 + $0x660] sm:$0xff]
  %v1215 = vld [vmem:[%s1009 + $0x668] sm:$0xff]
  %v1216 = vld [vmem:[%s1009 + $0x670] sm:$0xff]
  %v1217 = vld [vmem:[%s1009 + $0x678] sm:$0xff]
  %v1218 = vld [vmem:[%s1009 + $0x680] sm:$0xff]
  %v1219 = vld [vmem:[%s1009 + $0x688] sm:$0xff]
  %v1220 = vld [vmem:[%s1009 + $0x690] sm:$0xff]
  %v1221 = vld [vmem:[%s1009 + $0x698] sm:$0xff]
  %v1222 = vld [vmem:[%s1009 + $0x6a0] sm:$0xff]
  %v1223 = vld [vmem:[%s1009 + $0x6a8] sm:$0xff]
  %v1224 = vld [vmem:[%s1009 + $0x6b0] sm:$0xff]
  %v1225 = vld [vmem:[%s1009 + $0x6b8] sm:$0xff]
  %v1226 = vld [vmem:[%s1009 + $0x6c0] sm:$0xff]
  %v1227 = vld [vmem:[%s1009 + $0x6c8] sm:$0xff]
  %v1228 = vld [vmem:[%s1009 + $0x6d0] sm:$0xff]
  %v1229 = vld [vmem:[%s1009 + $0x6d8] sm:$0xff]
  %v1230 = vld [vmem:[%s1009 + $0x6e0] sm:$0xff]
  %v1231 = vld [vmem:[%s1009 + $0x6e8] sm:$0xff]
  %v1232 = vld [vmem:[%s1009 + $0x6f0] sm:$0xff]
  %v1233 = vld [vmem:[%s1009 + $0x6f8] sm:$0xff]
  %v1234 = vld [vmem:[%s1009 + $0x700] sm:$0xff]
  %v1235 = vld [vmem:[%s1009 + $0x708] sm:$0xff]
  %v1236 = vld [vmem:[%s1009 + $0x710] sm:$0xff]
  %v1237 = vld [vmem:[%s1009 + $0x718] sm:$0xff]
  %v1238 = vld [vmem:[%s1009 + $0x720] sm:$0xff]
  %v1239 = vld [vmem:[%s1009 + $0x728] sm:$0xff]
  %v1240 = vld [vmem:[%s1009 + $0x730] sm:$0xff]
  %v1241 = vld [vmem:[%s1009 + $0x738] sm:$0xff]
  %v1242 = vld [vmem:[%s1009 + $0x740] sm:$0xff]
  %v1243 = vld [vmem:[%s1009 + $0x748] sm:$0xff]
  %v1244 = vld [vmem:[%s1009 + $0x750] sm:$0xff]
  %v1245 = vld [vmem:[%s1009 + $0x758] sm:$0xff]
  %v1246 = vld [vmem:[%s1009 + $0x760] sm:$0xff]
  %v1247 = vld [vmem:[%s1009 + $0x768] sm:$0xff]
  %v1248 = vld [vmem:[%s1009 + $0x770] sm:$0xff]
  %v1249 = vld [vmem:[%s1009 + $0x778] sm:$0xff]
  %v1250 = vld [vmem:[%s1009 + $0x780] sm:$0xff]
  %v1251 = vld [vmem:[%s1009 + $0x788] sm:$0xff]
  %v1252 = vld [vmem:[%s1009 + $0x790] sm:$0xff]
  %v1253 = vld [vmem:[%s1009 + $0x798] sm:$0xff]
  %v1254 = vld [vmem:[%s1009 + $0x7a0] sm:$0xff]
  %v1255 = vld [vmem:[%s1009 + $0x7a8] sm:$0xff]
  %v1256 = vld [vmem:[%s1009 + $0x7b0] sm:$0xff]
  %v1257 = vld [vmem:[%s1009 + $0x7b8] sm:$0xff]
  %v1258 = vld [vmem:[%s1009 + $0x7c0] sm:$0xff]
  %v1259 = vld [vmem:[%s1009 + $0x7c8] sm:$0xff]
  %v1260 = vld [vmem:[%s1009 + $0x7d0] sm:$0xff]
  %v1261 = vld [vmem:[%s1009 + $0x7d8] sm:$0xff]
  %v1262 = vld [vmem:[%s1009 + $0x7e0] sm:$0xff]
  %v1263 = vld [vmem:[%s1009 + $0x7e8] sm:$0xff]
  %v1264 = vld [vmem:[%s1009 + $0x7f0] sm:$0xff]
  %v1265 = vld [vmem:[%s1009 + $0x7f8] sm:$0xff]
  %v1266 = vld [vmem:[%s1009 + $0x800] sm:$0xff]
  %v1267 = vld [vmem:[%s1009 + $0x808] sm:$0xff]
  %v1268 = vld [vmem:[%s1009 + $0x810] sm:$0xff]
  %v1269 = vld [vmem:[%s1009 + $0x818] sm:$0xff]
  %v1270 = vld [vmem:[%s1009 + $0x820] sm:$0xff]
  %v1271 = vld [vmem:[%s1009 + $0x828] sm:$0xff]
  %v1272 = vld [vmem:[%s1009 + $0x830] sm:$0xff]
  %v1273 = vld [vmem:[%s1009 + $0x838] sm:$0xff]
  %v1274 = vld [vmem:[%s1009 + $0x840] sm:$0xff]
  %v1275 = vld [vmem:[%s1009 + $0x848] sm:$0xff]
  %v1276 = vld [vmem:[%s1009 + $0x850] sm:$0xff]
  %v1277 = vld [vmem:[%s1009 + $0x858] sm:$0xff]
  %v1278 = vld [vmem:[%s1009 + $0x860] sm:$0xff]
  %v1279 = vld [vmem:[%s1009 + $0x868] sm:$0xff]
  %v1280 = vld [vmem:[%s1009 + $0x870] sm:$0xff]
  %v1281 = vld [vmem:[%s1009 + $0x878] sm:$0xff]
  %v1282 = vld [vmem:[%s1009 + $0x880] sm:$0xff]
  %v1283 = vld [vmem:[%s1009 + $0x888] sm:$0xff]
  %v1284 = vld [vmem:[%s1009 + $0x890] sm:$0xff]
  %v1285 = vld [vmem:[%s1009 + $0x898] sm:$0xff]
  %v1286 = vld [vmem:[%s1009 + $0x8a0] sm:$0xff]
  %v1287 = vld [vmem:[%s1009 + $0x8a8] sm:$0xff]
  %v1288 = vld [vmem:[%s1009 + $0x8b0] sm:$0xff]
  %v1289 = vld [vmem:[%s1009 + $0x8b8] sm:$0xff]
  %v1290 = vld [vmem:[%s1009 + $0x8c0] sm:$0xff]
  %v1291 = vld [vmem:[%s1009 + $0x8c8] sm:$0xff]
  %v1292 = vld [vmem:[%s1009 + $0x8d0] sm:$0xff]
  %v1293 = vld [vmem:[%s1009 + $0x8d8] sm:$0xff]
  %v1294 = vld [vmem:[%s1009 + $0x8e0] sm:$0xff]
  %v1295 = vld [vmem:[%s1009 + $0x8e8] sm:$0xff]
  %v1296 = vld [vmem:[%s1009 + $0x8f0] sm:$0xff]
  %v1297 = vld [vmem:[%s1009 + $0x8f8] sm:$0xff]
  %v1298 = vld [vmem:[%s1009 + $0x900] sm:$0xff]
  %v1299 = vld [vmem:[%s1009 + $0x908] sm:$0xff]
  %v1300 = vld [vmem:[%s1009 + $0x910] sm:$0xff]
  %v1301 = vld [vmem:[%s1009 + $0x918] sm:$0xff]
  %v1302 = vld [vmem:[%s1009 + $0x920] sm:$0xff]
  %v1303 = vld [vmem:[%s1009 + $0x928] sm:$0xff]
  %v1304 = vld [vmem:[%s1009 + $0x930] sm:$0xff]
  %v1305 = vld [vmem:[%s1009 + $0x938] sm:$0xff]
  %v1306 = vld [vmem:[%s1009 + $0x940] sm:$0xff]
  %v1307 = vld [vmem:[%s1009 + $0x948] sm:$0xff]
  %v1308 = vld [vmem:[%s1009 + $0x950] sm:$0xff]
  %v1309 = vld [vmem:[%s1009 + $0x958] sm:$0xff]
  %v1310 = vld [vmem:[%s1009 + $0x960] sm:$0xff]
  %v1311 = vld [vmem:[%s1009 + $0x968] sm:$0xff]
  %v1312 = vld [vmem:[%s1009 + $0x970] sm:$0xff]
  %v1313 = vld [vmem:[%s1009 + $0x978] sm:$0xff]
  %v1314 = vld [vmem:[%s1009 + $0x980] sm:$0xff]
  %v1315 = vld [vmem:[%s1009 + $0x988] sm:$0xff]
  %v1316 = vld [vmem:[%s1009 + $0x990] sm:$0xff]
  %v1317 = vld [vmem:[%s1009 + $0x998] sm:$0xff]
  %v1318 = vld [vmem:[%s1009 + $0x9a0] sm:$0xff]
  %v1319 = vld [vmem:[%s1009 + $0x9a8] sm:$0xff]
  %v1320 = vld [vmem:[%s1009 + $0x9b0] sm:$0xff]
  %v1321 = vld [vmem:[%s1009 + $0x9b8] sm:$0xff]
  %v1322 = vld [vmem:[%s1009 + $0x9c0] sm:$0xff]
  %v1323 = vld [vmem:[%s1009 + $0x9c8] sm:$0xff]
  %v1324 = vld [vmem:[%s1009 + $0x9d0] sm:$0xff]
  %v1325 = vld [vmem:[%s1009 + $0x9d8] sm:$0xff]
  %v1326 = vld [vmem:[%s1009 + $0x9e0] sm:$0xff]
  %v1327 = vld [vmem:[%s1009 + $0x9e8] sm:$0xff]
  %v1328 = vld [vmem:[%s1009 + $0x9f0] sm:$0xff]
  %v1329 = vld [vmem:[%s1009 + $0x9f8] sm:$0xff]
  %v1330 = vld [vmem:[%s1009 + $0xa00] sm:$0xff]
  %v1331 = vld [vmem:[%s1009 + $0xa08] sm:$0xff]
  %v1332 = vld [vmem:[%s1009 + $0xa10] sm:$0xff]
  %v1333 = vld [vmem:[%s1009 + $0xa18] sm:$0xff]
  %v1334 = vld [vmem:[%s1009 + $0xa20] sm:$0xff]
  %v1335 = vld [vmem:[%s1009 + $0xa28] sm:$0xff]
  %v1336 = vld [vmem:[%s1009 + $0xa30] sm:$0xff]
  %v1337 = vld [vmem:[%s1009 + $0xa38] sm:$0xff]
  %v1338 = vld [vmem:[%s1009 + $0xa40] sm:$0xff]
  %v1339 = vld [vmem:[%s1009 + $0xa48] sm:$0xff]
  %v1340 = vld [vmem:[%s1009 + $0xa50] sm:$0xff]
  %v1341 = vld [vmem:[%s1009 + $0xa58] sm:$0xff]
  %v1342 = vld [vmem:[%s1009 + $0xa60] sm:$0xff]
  %v1343 = vld [vmem:[%s1009 + $0xa68] sm:$0xff]
  %v1344 = vld [vmem:[%s1009 + $0xa70] sm:$0xff]
  %v1345 = vld [vmem:[%s1009 + $0xa78] sm:$0xff]
  %v1346 = vld [vmem:[%s1009 + $0xa80] sm:$0xff]
  %v1347 = vld [vmem:[%s1009 + $0xa88] sm:$0xff]
  %v1348 = vld [vmem:[%s1009 + $0xa90] sm:$0xff]
  %v1349 = vld [vmem:[%s1009 + $0xa98] sm:$0xff]
  %v1350 = vld [vmem:[%s1009 + $0xaa0] sm:$0xff]
  %v1351 = vld [vmem:[%s1009 + $0xaa8] sm:$0xff]
  %v1352 = vld [vmem:[%s1009 + $0xab0] sm:$0xff]
  %v1353 = vld [vmem:[%s1009 + $0xab8] sm:$0xff]
  %v1354 = vld [vmem:[%s1009 + $0xac0] sm:$0xff]
  %v1355 = vld [vmem:[%s1009 + $0xac8] sm:$0xff]
  %v1356 = vld [vmem:[%s1009 + $0xad0] sm:$0xff]
  %v1357 = vld [vmem:[%s1009 + $0xad8] sm:$0xff]
  %v1358 = vld [vmem:[%s1009 + $0xae0] sm:$0xff]
  %v1359 = vld [vmem:[%s1009 + $0xae8] sm:$0xff]
  %v1360 = vld [vmem:[%s1009 + $0xaf0] sm:$0xff]
  %v1361 = vld [vmem:[%s1009 + $0xaf8] sm:$0xff]
  %v1362 = vld [vmem:[%s1009 + $0xb00] sm:$0xff]
  %v1363 = vld [vmem:[%s1009 + $0xb08] sm:$0xff]
  %v1364 = vld [vmem:[%s1009 + $0xb10] sm:$0xff]
  %v1365 = vld [vmem:[%s1009 + $0xb18] sm:$0xff]
  %v1366 = vld [vmem:[%s1009 + $0xb20] sm:$0xff]
  %v1367 = vld [vmem:[%s1009 + $0xb28] sm:$0xff]
  %v1368 = vld [vmem:[%s1009 + $0xb30] sm:$0xff]
  %v1369 = vld [vmem:[%s1009 + $0xb38] sm:$0xff]
  %v1370 = vld [vmem:[%s1009 + $0xb40] sm:$0xff]
  %v1371 = vld [vmem:[%s1009 + $0xb48] sm:$0xff]
  %v1372 = vld [vmem:[%s1009 + $0xb50] sm:$0xff]
  %v1373 = vld [vmem:[%s1009 + $0xb58] sm:$0xff]
  %v1374 = vld [vmem:[%s1009 + $0xb60] sm:$0xff]
  %v1375 = vld [vmem:[%s1009 + $0xb68] sm:$0xff]
  %v1376 = vld [vmem:[%s1009 + $0xb70] sm:$0xff]
  %v1377 = vld [vmem:[%s1009 + $0xb78] sm:$0xff]
  %v1378 = vld [vmem:[%s1009 + $0xb80] sm:$0xff]
  %v1379 = vld [vmem:[%s1009 + $0xb88] sm:$0xff]
  %v1380 = vld [vmem:[%s1009 + $0xb90] sm:$0xff]
  %v1381 = vld [vmem:[%s1009 + $0xb98] sm:$0xff]
  %v1382 = vld [vmem:[%s1009 + $0xba0] sm:$0xff]
  %v1383 = vld [vmem:[%s1009 + $0xba8] sm:$0xff]
  %v1384 = vld [vmem:[%s1009 + $0xbb0] sm:$0xff]
  %v1385 = vld [vmem:[%s1009 + $0xbb8] sm:$0xff]
  %v1386 = vld [vmem:[%s1009 + $0xbc0] sm:$0xff]
  %v1387 = vld [vmem:[%s1009 + $0xbc8] sm:$0xff]
  %v1388 = vld [vmem:[%s1009 + $0xbd0] sm:$0xff]
  %v1389 = vld [vmem:[%s1009 + $0xbd8] sm:$0xff]
  %v1390 = vld [vmem:[%s1009 + $0xbe0] sm:$0xff]
  %v1391 = vld [vmem:[%s1009 + $0xbe8] sm:$0xff]
  %v1392 = vld [vmem:[%s1009 + $0xbf0] sm:$0xff]
  %v1393 = vld [vmem:[%s1009 + $0xbf8] sm:$0xff]
  %v1394 = vld [vmem:[%s1009 + $0xc00] sm:$0xff]
  %v1395 = vld [vmem:[%s1009 + $0xc08] sm:$0xff]
  %v1396 = vld [vmem:[%s1009 + $0xc10] sm:$0xff]
  %v1397 = vld [vmem:[%s1009 + $0xc18] sm:$0xff]
  %v1398 = vld [vmem:[%s1009 + $0xc20] sm:$0xff]
  %v1399 = vld [vmem:[%s1009 + $0xc28] sm:$0xff]
  %v1400 = vld [vmem:[%s1009 + $0xc30] sm:$0xff]
  %v1401 = vld [vmem:[%s1009 + $0xc38] sm:$0xff]
  %1402 = vmatprep.subr.mxu0 %v1011
  %1403 = vmatpush1.msra.mxu0 %v1010
  %1404 = vmatprep.subr.mxu0 %v1015
  %1405 = vmatpush1.msra.mxu0 %v1014
  %1406 = vmatprep.subr.mxu0 %v1019
  %1407 = vmatpush1.msra.mxu0 %v1018
  %1408 = vmatprep.subr.mxu0 %v1023
  %1409 = vmatpush1.msra.mxu0 %v1022
  %1410 = vmatprep.subr.mxu0 %v1027
  %1411 = vmatpush1.msra.mxu0 %v1026
  %1412 = vmatprep.subr.mxu0 %v1031
  %1413 = vmatpush1.msra.mxu0 %v1030
  %1414 = vmatprep.subr.mxu0 %v1035
  %1415 = vmatpush1.msra.mxu0 %v1034
  %1416 = vmatprep.subr.mxu0 %v1039
  %1417 = vmatpush1.msra.mxu0 %v1038
  %1418 = vmatprep.subr.mxu0 %v1043
  %1419 = vmatpush1.msra.mxu0 %v1042
  %1420 = vmatprep.subr.mxu0 %v1047
  %1421 = vmatpush1.msra.mxu0 %v1046
  %1422 = vmatprep.subr.mxu0 %v1051
  %1423 = vmatpush1.msra.mxu0 %v1050
  %1424 = vmatprep.subr.mxu0 %v1055
  %1425 = vmatpush1.msra.mxu0 %v1054
  %1426 = vmatprep.subr.mxu0 %v1059
  %1427 = vmatpush1.msra.mxu0 %v1058
  %1428 = vmatprep.subr.mxu0 %v1063
  %1429 = vmatpush1.msra.mxu0 %v1062
  %1430 = vmatprep.subr.mxu0 %v1067
  %1431 = vmatpush1.msra.mxu0 %v1066
  %1432 = vmatprep.subr.mxu0 %v1071
  %1433 = vmatpush1.msra.mxu0 %v1070
  %1434 = vmatprep.subr.mxu0 %v1075
  %1435 = vmatpush1.msra.mxu0 %v1074
  %1436 = vmatprep.subr.mxu0 %v1079
  %1437 = vmatpush1.msra.mxu0 %v1078
  %1438 = vmatprep.subr.mxu0 %v1083
  %1439 = vmatpush1.msra.mxu0 %v1082
  %1440 = vmatprep.subr.mxu0 %v1087
  %1441 = vmatpush1.msra.mxu0 %v1086
  %1442 = vmatprep.subr.mxu0 %v1091
  %1443 = vmatpush1.msra.mxu0 %v1090
  %1444 = vmatprep.subr.mxu0 %v1095
  %1445 = vmatpush1.msra.mxu0 %v1094
  %1446 = vmatprep.subr.mxu0 %v1099
  %1447 = vmatpush1.msra.mxu0 %v1098
  %1448 = vmatprep.subr.mxu0 %v1103
  %1449 = vmatpush1.msra.mxu0 %v1102
  %1450 = vmatprep.subr.mxu0 %v1107
  %1451 = vmatpush1.msra.mxu0 %v1106
  %1452 = vmatprep.subr.mxu0 %v1111
  %1453 = vmatpush1.msra.mxu0 %v1110
  %1454 = vmatprep.subr.mxu0 %v1115
  %1455 = vmatpush1.msra.mxu0 %v1114
  %1456 = vmatprep.subr.mxu0 %v1119
  %1457 = vmatpush1.msra.mxu0 %v1118
  %1458 = vmatprep.subr.mxu0 %v1123
  %1459 = vmatpush1.msra.mxu0 %v1122
  %1460 = vmatprep.subr.mxu0 %v1127
  %1461 = vmatpush1.msra.mxu0 %v1126
  %1462 = vmatprep.subr.mxu0 %v1131
  %1463 = vmatpush1.msra.mxu0 %v1130
  %1464 = vmatprep.subr.mxu0 %v1135
  %1465 = vmatpush1.msra.mxu0 %v1134
  %1466 = vmatprep.mubr.f32.mxu0 %v39
  %1467 = vmatmul.mubr.f32.gmra.mrb[0].mxu0 %v38
  %v1468 = vpop.f32.mrb[0].mxu0
  %v1469 = vadd.f32 0.0, %v1468
  %v1470 = vpop.f32.mrb[0].mxu0
  %v1471 = vadd.f32 0.0, %v1470
  %1472 = vdwg.mxu0
  %1473 = vmatprep.subr.mxu0 %v1139
  %1474 = vmatpush1.msra.mxu0 %v1138
  %1475 = vmatprep.subr.mxu0 %v1143
  %1476 = vmatpush1.msra.mxu0 %v1142
  %1477 = vmatprep.subr.mxu0 %v1147
  %1478 = vmatpush1.msra.mxu0 %v1146
  %1479 = vmatprep.subr.mxu0 %v1151
  %1480 = vmatpush1.msra.mxu0 %v1150
  %1481 = vmatprep.subr.mxu0 %v1155
  %1482 = vmatpush1.msra.mxu0 %v1154
  %1483 = vmatprep.subr.mxu0 %v1159
  %1484 = vmatpush1.msra.mxu0 %v1158
  %1485 = vmatprep.subr.mxu0 %v1163
  %1486 = vmatpush1.msra.mxu0 %v1162
  %1487 = vmatprep.subr.mxu0 %v1167
  %1488 = vmatpush1.msra.mxu0 %v1166
  %1489 = vmatprep.subr.mxu0 %v1171
  %1490 = vmatpush1.msra.mxu0 %v1170
  %1491 = vmatprep.subr.mxu0 %v1175
  %1492 = vmatpush1.msra.mxu0 %v1174
  %1493 = vmatprep.subr.mxu0 %v1179
  %1494 = vmatpush1.msra.mxu0 %v1178
  %1495 = vmatprep.subr.mxu0 %v1183
  %1496 = vmatpush1.msra.mxu0 %v1182
  %1497 = vmatprep.subr.mxu0 %v1187
  %1498 = vmatpush1.msra.mxu0 %v1186
  %1499 = vmatprep.subr.mxu0 %v1191
  %1500 = vmatpush1.msra.mxu0 %v1190
  %1501 = vmatprep.subr.mxu0 %v1195
  %1502 = vmatpush1.msra.mxu0 %v1194
  %1503 = vmatprep.subr.mxu0 %v1199
  %1504 = vmatpush1.msra.mxu0 %v1198
  %1505 = vmatprep.subr.mxu0 %v1203
  %1506 = vmatpush1.msra.mxu0 %v1202
  %1507 = vmatprep.subr.mxu0 %v1207
  %1508 = vmatpush1.msra.mxu0 %v1206
  %1509 = vmatprep.subr.mxu0 %v1211
  %1510 = vmatpush1.msra.mxu0 %v1210
  %1511 = vmatprep.subr.mxu0 %v1215
  %1512 = vmatpush1.msra.mxu0 %v1214
  %1513 = vmatprep.subr.mxu0 %v1219
  %1514 = vmatpush1.msra.mxu0 %v1218
  %1515 = vmatprep.subr.mxu0 %v1223
  %1516 = vmatpush1.msra.mxu0 %v1222
  %1517 = vmatprep.subr.mxu0 %v1227
  %1518 = vmatpush1.msra.mxu0 %v1226
  %1519 = vmatprep.subr.mxu0 %v1231
  %1520 = vmatpush1.msra.mxu0 %v1230
  %1521 = vmatprep.subr.mxu0 %v1235
  %1522 = vmatpush1.msra.mxu0 %v1234
  %1523 = vmatprep.subr.mxu0 %v1239
  %1524 = vmatpush1.msra.mxu0 %v1238
  %1525 = vmatprep.subr.mxu0 %v1243
  %1526 = vmatpush1.msra.mxu0 %v1242
  %1527 = vmatprep.subr.mxu0 %v1247
  %1528 = vmatpush1.msra.mxu0 %v1246
  %1529 = vmatprep.subr.mxu0 %v1251
  %1530 = vmatpush1.msra.mxu0 %v1250
  %1531 = vmatprep.subr.mxu0 %v1255
  %1532 = vmatpush1.msra.mxu0 %v1254
  %1533 = vmatprep.subr.mxu0 %v1259
  %1534 = vmatpush1.msra.mxu0 %v1258
  %1535 = vmatprep.subr.mxu0 %v1263
  %1536 = vmatpush1.msra.mxu0 %v1262
  %1537 = vmatprep.mubr.f32.mxu0 %v41
  %1538 = vmatmul.mubr.f32.gmra.mrb[0].mxu0 %v40
  %v1539 = vpop.f32.mrb[0].mxu0
  %v1540 = vadd.f32 %v1469, %v1539
  %v1541 = vpop.f32.mrb[0].mxu0
  %v1542 = vadd.f32 %v1471, %v1541
  %1543 = vdwg.mxu0
  %1544 = vmatprep.subr.mxu0 %v1267
  %1545 = vmatpush1.msra.mxu0 %v1266
  %1546 = vmatprep.subr.mxu0 %v1271
  %1547 = vmatpush1.msra.mxu0 %v1270
  %1548 = vmatprep.subr.mxu0 %v1275
  %1549 = vmatpush1.msra.mxu0 %v1274
  %1550 = vmatprep.subr.mxu0 %v1279
  %1551 = vmatpush1.msra.mxu0 %v1278
  %1552 = vmatprep.subr.mxu0 %v1283
  %1553 = vmatpush1.msra.mxu0 %v1282
  %1554 = vmatprep.subr.mxu0 %v1287
  %1555 = vmatpush1.msra.mxu0 %v1286
  %1556 = vmatprep.subr.mxu0 %v1291
  %1557 = vmatpush1.msra.mxu0 %v1290
  %1558 = vmatprep.subr.mxu0 %v1295
  %1559 = vmatpush1.msra.mxu0 %v1294
  %1560 = vmatprep.subr.mxu0 %v1299
  %1561 = vmatpush1.msra.mxu0 %v1298
  %1562 = vmatprep.subr.mxu0 %v1303
  %1563 = vmatpush1.msra.mxu0 %v1302
  %1564 = vmatprep.subr.mxu0 %v1307
  %1565 = vmatpush1.msra.mxu0 %v1306
  %1566 = vmatprep.subr.mxu0 %v1311
  %1567 = vmatpush1.msra.mxu0 %v1310
  %1568 = vmatprep.subr.mxu0 %v1315
  %1569 = vmatpush1.msra.mxu0 %v1314
  %1570 = vmatprep.subr.mxu0 %v1319
  %1571 = vmatpush1.msra.mxu0 %v1318
  %1572 = vmatprep.subr.mxu0 %v1323
  %1573 = vmatpush1.msra.mxu0 %v1322
  %1574 = vmatprep.subr.mxu0 %v1327
  %1575 = vmatpush1.msra.mxu0 %v1326
  %1576 = vmatprep.subr.mxu0 %v1331
  %1577 = vmatpush1.msra.mxu0 %v1330
  %1578 = vmatprep.subr.mxu0 %v1335
  %1579 = vmatpush1.msra.mxu0 %v1334
  %1580 = vmatprep.subr.mxu0 %v1339
  %1581 = vmatpush1.msra.mxu0 %v1338
  %1582 = vmatprep.subr.mxu0 %v1343
  %1583 = vmatpush1.msra.mxu0 %v1342
  %1584 = vmatprep.subr.mxu0 %v1347
  %1585 = vmatpush1.msra.mxu0 %v1346
  %1586 = vmatprep.subr.mxu0 %v1351
  %1587 = vmatpush1.msra.mxu0 %v1350
  %1588 = vmatprep.subr.mxu0 %v1355
  %1589 = vmatpush1.msra.mxu0 %v1354
  %1590 = vmatprep.subr.mxu0 %v1359
  %1591 = vmatpush1.msra.mxu0 %v1358
  %1592 = vmatprep.subr.mxu0 %v1363
  %1593 = vmatpush1.msra.mxu0 %v1362
  %1594 = vmatprep.subr.mxu0 %v1367
  %1595 = vmatpush1.msra.mxu0 %v1366
  %1596 = vmatprep.subr.mxu0 %v1371
  %1597 = vmatpush1.msra.mxu0 %v1370
  %1598 = vmatprep.subr.mxu0 %v1375
  %1599 = vmatpush1.msra.mxu0 %v1374
  %1600 = vmatprep.subr.mxu0 %v1379
  %1601 = vmatpush1.msra.mxu0 %v1378
  %1602 = vmatprep.subr.mxu0 %v1383
  %1603 = vmatpush1.msra.mxu0 %v1382
  %1604 = vmatprep.subr.mxu0 %v1387
  %1605 = vmatpush1.msra.mxu0 %v1386
  %1606 = vmatprep.subr.mxu0 %v1391
  %1607 = vmatpush1.msra.mxu0 %v1390
  %1608 = vmatprep.mubr.f32.mxu0 %v43
  %1609 = vmatmul.mubr.f32.gmra.mrb[0].mxu0 %v42
  %v1610 = vpop.f32.mrb[0].mxu0
  %v1611 = vadd.f32 %v1540, %v1610
  %v1612 = vpop.f32.mrb[0].mxu0
  %v1613 = vadd.f32 %v1542, %v1612
  %1614 = vdwg.mxu0
  %1615 = vmatprep.subr.mxu0 %v1395
  %1616 = vmatpush1.msra.mxu0 %v1394
  %1617 = vmatprep.subr.mxu0 %v1399
  %1618 = vmatpush1.msra.mxu0 %v1398
  %1619 = vmatprep.subr.mxu0 0.0
  %1620 = vmatpush1.msra.mxu0 0.0
  %1621 = vmatprep.subr.mxu0 0.0
  %1622 = vmatpush1.msra.mxu0 0.0
  %1623 = vmatprep.subr.mxu0 0.0
  %1624 = vmatpush1.msra.mxu0 0.0
  %1625 = vmatprep.subr.mxu0 0.0
  %1626 = vmatpush1.msra.mxu0 0.0
  %1627 = vmatprep.subr.mxu0 0.0
  %1628 = vmatpush1.msra.mxu0 0.0
  %1629 = vmatprep.subr.mxu0 0.0
  %1630 = vmatpush1.msra.mxu0 0.0
  %1631 = vmatprep.subr.mxu0 0.0
  %1632 = vmatpush1.msra.mxu0 0.0
  %1633 = vmatprep.subr.mxu0 0.0
  %1634 = vmatpush1.msra.mxu0 0.0
  %1635 = vmatprep.subr.mxu0 0.0
  %1636 = vmatpush1.msra.mxu0 0.0
  %1637 = vmatprep.subr.mxu0 0.0
  %1638 = vmatpush1.msra.mxu0 0.0
  %1639 = vmatprep.subr.mxu0 0.0
  %1640 = vmatpush1.msra.mxu0 0.0
  %1641 = vmatprep.subr.mxu0 0.0
  %1642 = vmatpush1.msra.mxu0 0.0
  %1643 = vmatprep.subr.mxu0 0.0
  %1644 = vmatpush1.msra.mxu0 0.0
  %1645 = vmatprep.subr.mxu0 0.0
  %1646 = vmatpush1.msra.mxu0 0.0
  %1647 = vmatprep.subr.mxu0 0.0
  %1648 = vmatpush1.msra.mxu0 0.0
  %1649 = vmatprep.subr.mxu0 0.0
  %1650 = vmatpush1.msra.mxu0 0.0
  %1651 = vmatprep.subr.mxu0 0.0
  %1652 = vmatpush1.msra.mxu0 0.0
  %1653 = vmatprep.subr.mxu0 0.0
  %1654 = vmatpush1.msra.mxu0 0.0
  %1655 = vmatprep.subr.mxu0 0.0
  %1656 = vmatpush1.msra.mxu0 0.0
  %1657 = vmatprep.subr.mxu0 0.0
  %1658 = vmatpush1.msra.mxu0 0.0
  %1659 = vmatprep.subr.mxu0 0.0
  %1660 = vmatpush1.msra.mxu0 0.0
  %1661 = vmatprep.subr.mxu0 0.0
  %1662 = vmatpush1.msra.mxu0 0.0
  %1663 = vmatprep.subr.mxu0 0.0
  %1664 = vmatpush1.msra.mxu0 0.0
  %1665 = vmatprep.subr.mxu0 0.0
  %1666 = vmatpush1.msra.mxu0 0.0
  %1667 = vmatprep.subr.mxu0 0.0
  %1668 = vmatpush1.msra.mxu0 0.0
  %1669 = vmatprep.subr.mxu0 0.0
  %1670 = vmatpush1.msra.mxu0 0.0
  %1671 = vmatprep.subr.mxu0 0.0
  %1672 = vmatpush1.msra.mxu0 0.0
  %1673 = vmatprep.subr.mxu0 0.0
  %1674 = vmatpush1.msra.mxu0 0.0
  %1675 = vmatprep.subr.mxu0 0.0
  %1676 = vmatpush1.msra.mxu0 0.0
  %1677 = vmatprep.subr.mxu0 0.0
  %1678 = vmatpush1.msra.mxu0 0.0
  %1679 = vmatprep.mubr.f32.mxu0 0.0
  %1680 = vmatmul.mubr.f32.gmra.mrb[0].mxu0 %v439
  %v1681 = vpop.f32.mrb[0].mxu0
  %v1682 = vadd.f32 %v1611, %v1681
  %v1683 = vpop.f32.mrb[0].mxu0
  %v1684 = vadd.f32 %v1613, %v1683
  %1685 = vdwg.mxu0
  %1686 = vmatprep.subr.mxu0 %v1013
  %1687 = vmatpush1.msra.mxu0 %v1012
  %1688 = vmatprep.subr.mxu0 %v1017
  %1689 = vmatpush1.msra.mxu0 %v1016
  %1690 = vmatprep.subr.mxu0 %v1021
  %1691 = vmatpush1.msra.mxu0 %v1020
  %1692 = vmatprep.subr.mxu0 %v1025
  %1693 = vmatpush1.msra.mxu0 %v1024
  %1694 = vmatprep.subr.mxu0 %v1029
  %1695 = vmatpush1.msra.mxu0 %v1028
  %1696 = vmatprep.subr.mxu0 %v1033
  %1697 = vmatpush1.msra.mxu0 %v1032
  %1698 = vmatprep.subr.mxu0 %v1037
  %1699 = vmatpush1.msra.mxu0 %v1036
  %1700 = vmatprep.subr.mxu0 %v1041
  %1701 = vmatpush1.msra.mxu0 %v1040
  %1702 = vmatprep.subr.mxu0 %v1045
  %1703 = vmatpush1.msra.mxu0 %v1044
  %1704 = vmatprep.subr.mxu0 %v1049
  %1705 = vmatpush1.msra.mxu0 %v1048
  %1706 = vmatprep.subr.mxu0 %v1053
  %1707 = vmatpush1.msra.mxu0 %v1052
  %1708 = vmatprep.subr.mxu0 %v1057
  %1709 = vmatpush1.msra.mxu0 %v1056
  %1710 = vmatprep.subr.mxu0 %v1061
  %1711 = vmatpush1.msra.mxu0 %v1060
  %1712 = vmatprep.subr.mxu0 %v1065
  %1713 = vmatpush1.msra.mxu0 %v1064
  %1714 = vmatprep.subr.mxu0 %v1069
  %1715 = vmatpush1.msra.mxu0 %v1068
  %1716 = vmatprep.subr.mxu0 %v1073
  %1717 = vmatpush1.msra.mxu0 %v1072
  %1718 = vmatprep.subr.mxu0 %v1077
  %1719 = vmatpush1.msra.mxu0 %v1076
  %1720 = vmatprep.subr.mxu0 %v1081
  %1721 = vmatpush1.msra.mxu0 %v1080
  %1722 = vmatprep.subr.mxu0 %v1085
  %1723 = vmatpush1.msra.mxu0 %v1084
  %1724 = vmatprep.subr.mxu0 %v1089
  %1725 = vmatpush1.msra.mxu0 %v1088
  %1726 = vmatprep.subr.mxu0 %v1093
  %1727 = vmatpush1.msra.mxu0 %v1092
  %1728 = vmatprep.subr.mxu0 %v1097
  %1729 = vmatpush1.msra.mxu0 %v1096
  %1730 = vmatprep.subr.mxu0 %v1101
  %1731 = vmatpush1.msra.mxu0 %v1100
  %1732 = vmatprep.subr.mxu0 %v1105
  %1733 = vmatpush1.msra.mxu0 %v1104
  %1734 = vmatprep.subr.mxu0 %v1109
  %1735 = vmatpush1.msra.mxu0 %v1108
  %1736 = vmatprep.subr.mxu0 %v1113
  %1737 = vmatpush1.msra.mxu0 %v1112
  %1738 = vmatprep.subr.mxu0 %v1117
  %1739 = vmatpush1.msra.mxu0 %v1116
  %1740 = vmatprep.subr.mxu0 %v1121
  %1741 = vmatpush1.msra.mxu0 %v1120
  %1742 = vmatprep.subr.mxu0 %v1125
  %1743 = vmatpush1.msra.mxu0 %v1124
  %1744 = vmatprep.subr.mxu0 %v1129
  %1745 = vmatpush1.msra.mxu0 %v1128
  %1746 = vmatprep.subr.mxu0 %v1133
  %1747 = vmatpush1.msra.mxu0 %v1132
  %1748 = vmatprep.subr.mxu0 %v1137
  %1749 = vmatpush1.msra.mxu0 %v1136
  %1750 = vmatprep.mubr.f32.mxu0 %v39
  %1751 = vmatmul.mubr.f32.gmra.mrb[0].mxu0 %v38
  %v1752 = vpop.f32.mrb[0].mxu0
  %v1753 = vadd.f32 0.0, %v1752
  %v1754 = vpop.f32.mrb[0].mxu0
  %v1755 = vadd.f32 0.0, %v1754
  %1756 = vdwg.mxu0
  %1757 = vmatprep.subr.mxu0 %v1141
  %1758 = vmatpush1.msra.mxu0 %v1140
  %1759 = vmatprep.subr.mxu0 %v1145
  %1760 = vmatpush1.msra.mxu0 %v1144
  %1761 = vmatprep.subr.mxu0 %v1149
  %1762 = vmatpush1.msra.mxu0 %v1148
  %1763 = vmatprep.subr.mxu0 %v1153
  %1764 = vmatpush1.msra.mxu0 %v1152
  %1765 = vmatprep.subr.mxu0 %v1157
  %1766 = vmatpush1.msra.mxu0 %v1156
  %1767 = vmatprep.subr.mxu0 %v1161
  %1768 = vmatpush1.msra.mxu0 %v1160
  %1769 = vmatprep.subr.mxu0 %v1165
  %1770 = vmatpush1.msra.mxu0 %v1164
  %1771 = vmatprep.subr.mxu0 %v1169
  %1772 = vmatpush1.msra.mxu0 %v1168
  %1773 = vmatprep.subr.mxu0 %v1173
  %1774 = vmatpush1.msra.mxu0 %v1172
  %1775 = vmatprep.subr.mxu0 %v1177
  %1776 = vmatpush1.msra.mxu0 %v1176
  %1777 = vmatprep.subr.mxu0 %v1181
  %1778 = vmatpush1.msra.mxu0 %v1180
  %1779 = vmatprep.subr.mxu0 %v1185
  %1780 = vmatpush1.msra.mxu0 %v1184
  %1781 = vmatprep.subr.mxu0 %v1189
  %1782 = vmatpush1.msra.mxu0 %v1188
  %1783 = vmatprep.subr.mxu0 %v1193
  %1784 = vmatpush1.msra.mxu0 %v1192
  %1785 = vmatprep.subr.mxu0 %v1197
  %1786 = vmatpush1.msra.mxu0 %v1196
  %1787 = vmatprep.subr.mxu0 %v1201
  %1788 = vmatpush1.msra.mxu0 %v1200
  %1789 = vmatprep.subr.mxu0 %v1205
  %1790 = vmatpush1.msra.mxu0 %v1204
  %1791 = vmatprep.subr.mxu0 %v1209
  %1792 = vmatpush1.msra.mxu0 %v1208
  %1793 = vmatprep.subr.mxu0 %v1213
  %1794 = vmatpush1.msra.mxu0 %v1212
  %1795 = vmatprep.subr.mxu0 %v1217
  %1796 = vmatpush1.msra.mxu0 %v1216
  %1797 = vmatprep.subr.mxu0 %v1221
  %1798 = vmatpush1.msra.mxu0 %v1220
  %1799 = vmatprep.subr.mxu0 %v1225
  %1800 = vmatpush1.msra.mxu0 %v1224
  %1801 = vmatprep.subr.mxu0 %v1229
  %1802 = vmatpush1.msra.mxu0 %v1228
  %1803 = vmatprep.subr.mxu0 %v1233
  %1804 = vmatpush1.msra.mxu0 %v1232
  %1805 = vmatprep.subr.mxu0 %v1237
  %1806 = vmatpush1.msra.mxu0 %v1236
  %1807 = vmatprep.subr.mxu0 %v1241
  %1808 = vmatpush1.msra.mxu0 %v1240
  %1809 = vmatprep.subr.mxu0 %v1245
  %1810 = vmatpush1.msra.mxu0 %v1244
  %1811 = vmatprep.subr.mxu0 %v1249
  %1812 = vmatpush1.msra.mxu0 %v1248
  %1813 = vmatprep.subr.mxu0 %v1253
  %1814 = vmatpush1.msra.mxu0 %v1252
  %1815 = vmatprep.subr.mxu0 %v1257
  %1816 = vmatpush1.msra.mxu0 %v1256
  %1817 = vmatprep.subr.mxu0 %v1261
  %1818 = vmatpush1.msra.mxu0 %v1260
  %1819 = vmatprep.subr.mxu0 %v1265
  %1820 = vmatpush1.msra.mxu0 %v1264
  %1821 = vmatprep.mubr.f32.mxu0 %v41
  %1822 = vmatmul.mubr.f32.gmra.mrb[0].mxu0 %v40
  %v1823 = vpop.f32.mrb[0].mxu0
  %v1824 = vadd.f32 %v1753, %v1823
  %v1825 = vpop.f32.mrb[0].mxu0
  %v1826 = vadd.f32 %v1755, %v1825
  %1827 = vdwg.mxu0
  %1828 = vmatprep.subr.mxu0 %v1269
  %1829 = vmatpush1.msra.mxu0 %v1268
  %1830 = vmatprep.subr.mxu0 %v1273
  %1831 = vmatpush1.msra.mxu0 %v1272
  %1832 = vmatprep.subr.mxu0 %v1277
  %1833 = vmatpush1.msra.mxu0 %v1276
  %1834 = vmatprep.subr.mxu0 %v1281
  %1835 = vmatpush1.msra.mxu0 %v1280
  %1836 = vmatprep.subr.mxu0 %v1285
  %1837 = vmatpush1.msra.mxu0 %v1284
  %1838 = vmatprep.subr.mxu0 %v1289
  %1839 = vmatpush1.msra.mxu0 %v1288
  %1840 = vmatprep.subr.mxu0 %v1293
  %1841 = vmatpush1.msra.mxu0 %v1292
  %1842 = vmatprep.subr.mxu0 %v1297
  %1843 = vmatpush1.msra.mxu0 %v1296
  %1844 = vmatprep.subr.mxu0 %v1301
  %1845 = vmatpush1.msra.mxu0 %v1300
  %1846 = vmatprep.subr.mxu0 %v1305
  %1847 = vmatpush1.msra.mxu0 %v1304
  %1848 = vmatprep.subr.mxu0 %v1309
  %1849 = vmatpush1.msra.mxu0 %v1308
  %1850 = vmatprep.subr.mxu0 %v1313
  %1851 = vmatpush1.msra.mxu0 %v1312
  %1852 = vmatprep.subr.mxu0 %v1317
  %1853 = vmatpush1.msra.mxu0 %v1316
  %1854 = vmatprep.subr.mxu0 %v1321
  %1855 = vmatpush1.msra.mxu0 %v1320
  %1856 = vmatprep.subr.mxu0 %v1325
  %1857 = vmatpush1.msra.mxu0 %v1324
  %1858 = vmatprep.subr.mxu0 %v1329
  %1859 = vmatpush1.msra.mxu0 %v1328
  %1860 = vmatprep.subr.mxu0 %v1333
  %1861 = vmatpush1.msra.mxu0 %v1332
  %1862 = vmatprep.subr.mxu0 %v1337
  %1863 = vmatpush1.msra.mxu0 %v1336
  %1864 = vmatprep.subr.mxu0 %v1341
  %1865 = vmatpush1.msra.mxu0 %v1340
  %1866 = vmatprep.subr.mxu0 %v1345
  %1867 = vmatpush1.msra.mxu0 %v1344
  %1868 = vmatprep.subr.mxu0 %v1349
  %1869 = vmatpush1.msra.mxu0 %v1348
  %1870 = vmatprep.subr.mxu0 %v1353
  %1871 = vmatpush1.msra.mxu0 %v1352
  %1872 = vmatprep.subr.mxu0 %v1357
  %1873 = vmatpush1.msra.mxu0 %v1356
  %1874 = vmatprep.subr.mxu0 %v1361
  %1875 = vmatpush1.msra.mxu0 %v1360
  %1876 = vmatprep.subr.mxu0 %v1365
  %1877 = vmatpush1.msra.mxu0 %v1364
  %1878 = vmatprep.subr.mxu0 %v1369
  %1879 = vmatpush1.msra.mxu0 %v1368
  %1880 = vmatprep.subr.mxu0 %v1373
  %1881 = vmatpush1.msra.mxu0 %v1372
  %1882 = vmatprep.subr.mxu0 %v1377
  %1883 = vmatpush1.msra.mxu0 %v1376
  %1884 = vmatprep.subr.mxu0 %v1381
  %1885 = vmatpush1.msra.mxu0 %v1380
  %1886 = vmatprep.subr.mxu0 %v1385
  %1887 = vmatpush1.msra.mxu0 %v1384
  %1888 = vmatprep.subr.mxu0 %v1389
  %1889 = vmatpush1.msra.mxu0 %v1388
  %1890 = vmatprep.subr.mxu0 %v1393
  %1891 = vmatpush1.msra.mxu0 %v1392
  %1892 = vmatprep.mubr.f32.mxu0 %v43
  %1893 = vmatmul.mubr.f32.gmra.mrb[0].mxu0 %v42
  %v1894 = vpop.f32.mrb[0].mxu0
  %v1895 = vadd.f32 %v1824, %v1894
  %v1896 = vpop.f32.mrb[0].mxu0
  %v1897 = vadd.f32 %v1826, %v1896
  %1898 = vdwg.mxu0
  %1899 = vmatprep.subr.mxu0 %v1397
  %1900 = vmatpush1.msra.mxu0 %v1396
  %1901 = vmatprep.subr.mxu0 %v1401
  %1902 = vmatpush1.msra.mxu0 %v1400
  %1903 = vmatprep.subr.mxu0 0.0
  %1904 = vmatpush1.msra.mxu0 0.0
  %1905 = vmatprep.subr.mxu0 0.0
  %1906 = vmatpush1.msra.mxu0 0.0
  %1907 = vmatprep.subr.mxu0 0.0
  %1908 = vmatpush1.msra.mxu0 0.0
  %1909 = vmatprep.subr.mxu0 0.0
  %1910 = vmatpush1.msra.mxu0 0.0
  %1911 = vmatprep.subr.mxu0 0.0
  %1912 = vmatpush1.msra.mxu0 0.0
  %1913 = vmatprep.subr.mxu0 0.0
  %1914 = vmatpush1.msra.mxu0 0.0
  %1915 = vmatprep.subr.mxu0 0.0
  %1916 = vmatpush1.msra.mxu0 0.0
  %1917 = vmatprep.subr.mxu0 0.0
  %1918 = vmatpush1.msra.mxu0 0.0
  %1919 = vmatprep.subr.mxu0 0.0
  %1920 = vmatpush1.msra.mxu0 0.0
  %1921 = vmatprep.subr.mxu0 0.0
  %1922 = vmatpush1.msra.mxu0 0.0
  %1923 = vmatprep.subr.mxu0 0.0
  %1924 = vmatpush1.msra.mxu0 0.0
  %1925 = vmatprep.subr.mxu0 0.0
  %1926 = vmatpush1.msra.mxu0 0.0
  %1927 = vmatprep.subr.mxu0 0.0
  %1928 = vmatpush1.msra.mxu0 0.0
  %1929 = vmatprep.subr.mxu0 0.0
  %1930 = vmatpush1.msra.mxu0 0.0
  %1931 = vmatprep.subr.mxu0 0.0
  %1932 = vmatpush1.msra.mxu0 0.0
  %1933 = vmatprep.subr.mxu0 0.0
  %1934 = vmatpush1.msra.mxu0 0.0
  %1935 = vmatprep.subr.mxu0 0.0
  %1936 = vmatpush1.msra.mxu0 0.0
  %1937 = vmatprep.subr.mxu0 0.0
  %1938 = vmatpush1.msra.mxu0 0.0
  %1939 = vmatprep.subr.mxu0 0.0
  %1940 = vmatpush1.msra.mxu0 0.0
  %1941 = vmatprep.subr.mxu0 0.0
  %1942 = vmatpush1.msra.mxu0 0.0
  %1943 = vmatprep.subr.mxu0 0.0
  %1944 = vmatpush1.msra.mxu0 0.0
  %1945 = vmatprep.subr.mxu0 0.0
  %1946 = vmatpush1.msra.mxu0 0.0
  %1947 = vmatprep.subr.mxu0 0.0
  %1948 = vmatpush1.msra.mxu0 0.0
  %1949 = vmatprep.subr.mxu0 0.0
  %1950 = vmatpush1.msra.mxu0 0.0
  %1951 = vmatprep.subr.mxu0 0.0
  %1952 = vmatpush1.msra.mxu0 0.0
  %1953 = vmatprep.subr.mxu0 0.0
  %1954 = vmatpush1.msra.mxu0 0.0
  %1955 = vmatprep.subr.mxu0 0.0
  %1956 = vmatpush1.msra.mxu0 0.0
  %1957 = vmatprep.subr.mxu0 0.0
  %1958 = vmatpush1.msra.mxu0 0.0
  %1959 = vmatprep.subr.mxu0 0.0
  %1960 = vmatpush1.msra.mxu0 0.0
  %1961 = vmatprep.subr.mxu0 0.0
  %1962 = vmatpush1.msra.mxu0 0.0
  %1963 = vmatprep.mubr.f32.mxu0 0.0
  %1964 = vmatmul.mubr.f32.gmra.mrb[0].mxu0 %v439
  %v1965 = vpop.f32.mrb[0].mxu0
  %v1966 = vadd.f32 %v1895, %v1965
  %v1967 = vpop.f32.mrb[0].mxu0
  %v1968 = vadd.f32 %v1897, %v1967
  %1969 = vdwg.mxu0
  %v1970 = vmax.f32 %v721, %v1682
  %v1971 = vmax.f32 %v723, %v1684
  %v1972 = vmax.f32 %v1005, %v1966
  %v1973 = vmax.f32 %v1007, %v1968
  %s1974 = scalar_lea.vmem %s1, 6272
  %v1975 = vld [vmem:[%s1974] sm:$0xff]
  %v1976 = vld [vmem:[%s1974 + $0x8] sm:$0xff]
  %v1977 = vld [vmem:[%s1974 + $0x10] sm:$0xff]
  %v1978 = vld [vmem:[%s1974 + $0x18] sm:$0xff]
  %v1979 = vld [vmem:[%s1974 + $0x20] sm:$0xff]
  %v1980 = vld [vmem:[%s1974 + $0x28] sm:$0xff]
  %v1981 = vld [vmem:[%s1974 + $0x30] sm:$0xff]
  %v1982 = vld [vmem:[%s1974 + $0x38] sm:$0xff]
  %v1983 = vld [vmem:[%s1974 + $0x40] sm:$0xff]
  %v1984 = vld [vmem:[%s1974 + $0x48] sm:$0xff]
  %v1985 = vld [vmem:[%s1974 + $0x50] sm:$0xff]
  %v1986 = vld [vmem:[%s1974 + $0x58] sm:$0xff]
  %v1987 = vld [vmem:[%s1974 + $0x60] sm:$0xff]
  %v1988 = vld [vmem:[%s1974 + $0x68] sm:$0xff]
  %v1989 = vld [vmem:[%s1974 + $0x70] sm:$0xff]
  %v1990 = vld [vmem:[%s1974 + $0x78] sm:$0xff]
  %v1991 = vld [vmem:[%s1974 + $0x80] sm:$0xff]
  %v1992 = vld [vmem:[%s1974 + $0x88] sm:$0xff]
  %v1993 = vld [vmem:[%s1974 + $0x90] sm:$0xff]
  %v1994 = vld [vmem:[%s1974 + $0x98] sm:$0xff]
  %v1995 = vld [vmem:[%s1974 + $0xa0] sm:$0xff]
  %v1996 = vld [vmem:[%s1974 + $0xa8] sm:$0xff]
  %v1997 = vld [vmem:[%s1974 + $0xb0] sm:$0xff]
  %v1998 = vld [vmem:[%s1974 + $0xb8] sm:$0xff]
  %v1999 = vld [vmem:[%s1974 + $0xc0] sm:$0xff]
  %v2000 = vld [vmem:[%s1974 + $0xc8] sm:$0xff]
  %v2001 = vld [vmem:[%s1974 + $0xd0] sm:$0xff]
  %v2002 = vld [vmem:[%s1974 + $0xd8] sm:$0xff]
  %v2003 = vld [vmem:[%s1974 + $0xe0] sm:$0xff]
  %v2004 = vld [vmem:[%s1974 + $0xe8] sm:$0xff]
  %v2005 = vld [vmem:[%s1974 + $0xf0] sm:$0xff]
  %v2006 = vld [vmem:[%s1974 + $0xf8] sm:$0xff]
  %v2007 = vld [vmem:[%s1974 + $0x100] sm:$0xff]
  %v2008 = vld [vmem:[%s1974 + $0x108] sm:$0xff]
  %v2009 = vld [vmem:[%s1974 + $0x110] sm:$0xff]
  %v2010 = vld [vmem:[%s1974 + $0x118] sm:$0xff]
  %v2011 = vld [vmem:[%s1974 + $0x120] sm:$0xff]
  %v2012 = vld [vmem:[%s1974 + $0x128] sm:$0xff]
  %v2013 = vld [vmem:[%s1974 + $0x130] sm:$0xff]
  %v2014 = vld [vmem:[%s1974 + $0x138] sm:$0xff]
  %v2015 = vld [vmem:[%s1974 + $0x140] sm:$0xff]
  %v2016 = vld [vmem:[%s1974 + $0x148] sm:$0xff]
  %v2017 = vld [vmem:[%s1974 + $0x150] sm:$0xff]
  %v2018 = vld [vmem:[%s1974 + $0x158] sm:$0xff]
  %v2019 = vld [vmem:[%s1974 + $0x160] sm:$0xff]
  %v2020 = vld [vmem:[%s1974 + $0x168] sm:$0xff]
  %v2021 = vld [vmem:[%s1974 + $0x170] sm:$0xff]
  %v2022 = vld [vmem:[%s1974 + $0x178] sm:$0xff]
  %v2023 = vld [vmem:[%s1974 + $0x180] sm:$0xff]
  %v2024 = vld [vmem:[%s1974 + $0x188] sm:$0xff]
  %v2025 = vld [vmem:[%s1974 + $0x190] sm:$0xff]
  %v2026 = vld [vmem:[%s1974 + $0x198] sm:$0xff]
  %v2027 = vld [vmem:[%s1974 + $0x1a0] sm:$0xff]
  %v2028 = vld [vmem:[%s1974 + $0x1a8] sm:$0xff]
  %v2029 = vld [vmem:[%s1974 + $0x1b0] sm:$0xff]
  %v2030 = vld [vmem:[%s1974 + $0x1b8] sm:$0xff]
  %v2031 = vld [vmem:[%s1974 + $0x1c0] sm:$0xff]
  %v2032 = vld [vmem:[%s1974 + $0x1c8] sm:$0xff]
  %v2033 = vld [vmem:[%s1974 + $0x1d0] sm:$0xff]
  %v2034 = vld [vmem:[%s1974 + $0x1d8] sm:$0xff]
  %v2035 = vld [vmem:[%s1974 + $0x1e0] sm:$0xff]
  %v2036 = vld [vmem:[%s1974 + $0x1e8] sm:$0xff]
  %v2037 = vld [vmem:[%s1974 + $0x1f0] sm:$0xff]
  %v2038 = vld [vmem:[%s1974 + $0x1f8] sm:$0xff]
  %v2039 = vld [vmem:[%s1974 + $0x200] sm:$0xff]
  %v2040 = vld [vmem:[%s1974 + $0x208] sm:$0xff]
  %v2041 = vld [vmem:[%s1974 + $0x210] sm:$0xff]
  %v2042 = vld [vmem:[%s1974 + $0x218] sm:$0xff]
  %v2043 = vld [vmem:[%s1974 + $0x220] sm:$0xff]
  %v2044 = vld [vmem:[%s1974 + $0x228] sm:$0xff]
  %v2045 = vld [vmem:[%s1974 + $0x230] sm:$0xff]
  %v2046 = vld [vmem:[%s1974 + $0x238] sm:$0xff]
  %v2047 = vld [vmem:[%s1974 + $0x240] sm:$0xff]
  %v2048 = vld [vmem:[%s1974 + $0x248] sm:$0xff]
  %v2049 = vld [vmem:[%s1974 + $0x250] sm:$0xff]
  %v2050 = vld [vmem:[%s1974 + $0x258] sm:$0xff]
  %v2051 = vld [vmem:[%s1974 + $0x260] sm:$0xff]
  %v2052 = vld [vmem:[%s1974 + $0x268] sm:$0xff]
  %v2053 = vld [vmem:[%s1974 + $0x270] sm:$0xff]
  %v2054 = vld [vmem:[%s1974 + $0x278] sm:$0xff]
  %v2055 = vld [vmem:[%s1974 + $0x280] sm:$0xff]
  %v2056 = vld [vmem:[%s1974 + $0x288] sm:$0xff]
  %v2057 = vld [vmem:[%s1974 + $0x290] sm:$0xff]
  %v2058 = vld [vmem:[%s1974 + $0x298] sm:$0xff]
  %v2059 = vld [vmem:[%s1974 + $0x2a0] sm:$0xff]
  %v2060 = vld [vmem:[%s1974 + $0x2a8] sm:$0xff]
  %v2061 = vld [vmem:[%s1974 + $0x2b0] sm:$0xff]
  %v2062 = vld [vmem:[%s1974 + $0x2b8] sm:$0xff]
  %v2063 = vld [vmem:[%s1974 + $0x2c0] sm:$0xff]
  %v2064 = vld [vmem:[%s1974 + $0x2c8] sm:$0xff]
  %v2065 = vld [vmem:[%s1974 + $0x2d0] sm:$0xff]
  %v2066 = vld [vmem:[%s1974 + $0x2d8] sm:$0xff]
  %v2067 = vld [vmem:[%s1974 + $0x2e0] sm:$0xff]
  %v2068 = vld [vmem:[%s1974 + $0x2e8] sm:$0xff]
  %v2069 = vld [vmem:[%s1974 + $0x2f0] sm:$0xff]
  %v2070 = vld [vmem:[%s1974 + $0x2f8] sm:$0xff]
  %v2071 = vld [vmem:[%s1974 + $0x300] sm:$0xff]
  %v2072 = vld [vmem:[%s1974 + $0x308] sm:$0xff]
  %v2073 = vld [vmem:[%s1974 + $0x310] sm:$0xff]
  %v2074 = vld [vmem:[%s1974 + $0x318] sm:$0xff]
  %v2075 = vld [vmem:[%s1974 + $0x320] sm:$0xff]
  %v2076 = vld [vmem:[%s1974 + $0x328] sm:$0xff]
  %v2077 = vld [vmem:[%s1974 + $0x330] sm:$0xff]
  %v2078 = vld [vmem:[%s1974 + $0x338] sm:$0xff]
  %v2079 = vld [vmem:[%s1974 + $0x340] sm:$0xff]
  %v2080 = vld [vmem:[%s1974 + $0x348] sm:$0xff]
  %v2081 = vld [vmem:[%s1974 + $0x350] sm:$0xff]
  %v2082 = vld [vmem:[%s1974 + $0x358] sm:$0xff]
  %v2083 = vld [vmem:[%s1974 + $0x360] sm:$0xff]
  %v2084 = vld [vmem:[%s1974 + $0x368] sm:$0xff]
  %v2085 = vld [vmem:[%s1974 + $0x370] sm:$0xff]
  %v2086 = vld [vmem:[%s1974 + $0x378] sm:$0xff]
  %v2087 = vld [vmem:[%s1974 + $0x380] sm:$0xff]
  %v2088 = vld [vmem:[%s1974 + $0x388] sm:$0xff]
  %v2089 = vld [vmem:[%s1974 + $0x390] sm:$0xff]
  %v2090 = vld [vmem:[%s1974 + $0x398] sm:$0xff]
  %v2091 = vld [vmem:[%s1974 + $0x3a0] sm:$0xff]
  %v2092 = vld [vmem:[%s1974 + $0x3a8] sm:$0xff]
  %v2093 = vld [vmem:[%s1974 + $0x3b0] sm:$0xff]
  %v2094 = vld [vmem:[%s1974 + $0x3b8] sm:$0xff]
  %v2095 = vld [vmem:[%s1974 + $0x3c0] sm:$0xff]
  %v2096 = vld [vmem:[%s1974 + $0x3c8] sm:$0xff]
  %v2097 = vld [vmem:[%s1974 + $0x3d0] sm:$0xff]
  %v2098 = vld [vmem:[%s1974 + $0x3d8] sm:$0xff]
  %v2099 = vld [vmem:[%s1974 + $0x3e0] sm:$0xff]
  %v2100 = vld [vmem:[%s1974 + $0x3e8] sm:$0xff]
  %v2101 = vld [vmem:[%s1974 + $0x3f0] sm:$0xff]
  %v2102 = vld [vmem:[%s1974 + $0x3f8] sm:$0xff]
  %v2103 = vld [vmem:[%s1974 + $0x400] sm:$0xff]
  %v2104 = vld [vmem:[%s1974 + $0x408] sm:$0xff]
  %v2105 = vld [vmem:[%s1974 + $0x410] sm:$0xff]
  %v2106 = vld [vmem:[%s1974 + $0x418] sm:$0xff]
  %v2107 = vld [vmem:[%s1974 + $0x420] sm:$0xff]
  %v2108 = vld [vmem:[%s1974 + $0x428] sm:$0xff]
  %v2109 = vld [vmem:[%s1974 + $0x430] sm:$0xff]
  %v2110 = vld [vmem:[%s1974 + $0x438] sm:$0xff]
  %v2111 = vld [vmem:[%s1974 + $0x440] sm:$0xff]
  %v2112 = vld [vmem:[%s1974 + $0x448] sm:$0xff]
  %v2113 = vld [vmem:[%s1974 + $0x450] sm:$0xff]
  %v2114 = vld [vmem:[%s1974 + $0x458] sm:$0xff]
  %v2115 = vld [vmem:[%s1974 + $0x460] sm:$0xff]
  %v2116 = vld [vmem:[%s1974 + $0x468] sm:$0xff]
  %v2117 = vld [vmem:[%s1974 + $0x470] sm:$0xff]
  %v2118 = vld [vmem:[%s1974 + $0x478] sm:$0xff]
  %v2119 = vld [vmem:[%s1974 + $0x480] sm:$0xff]
  %v2120 = vld [vmem:[%s1974 + $0x488] sm:$0xff]
  %v2121 = vld [vmem:[%s1974 + $0x490] sm:$0xff]
  %v2122 = vld [vmem:[%s1974 + $0x498] sm:$0xff]
  %v2123 = vld [vmem:[%s1974 + $0x4a0] sm:$0xff]
  %v2124 = vld [vmem:[%s1974 + $0x4a8] sm:$0xff]
  %v2125 = vld [vmem:[%s1974 + $0x4b0] sm:$0xff]
  %v2126 = vld [vmem:[%s1974 + $0x4b8] sm:$0xff]
  %v2127 = vld [vmem:[%s1974 + $0x4c0] sm:$0xff]
  %v2128 = vld [vmem:[%s1974 + $0x4c8] sm:$0xff]
  %v2129 = vld [vmem:[%s1974 + $0x4d0] sm:$0xff]
  %v2130 = vld [vmem:[%s1974 + $0x4d8] sm:$0xff]
  %v2131 = vld [vmem:[%s1974 + $0x4e0] sm:$0xff]
  %v2132 = vld [vmem:[%s1974 + $0x4e8] sm:$0xff]
  %v2133 = vld [vmem:[%s1974 + $0x4f0] sm:$0xff]
  %v2134 = vld [vmem:[%s1974 + $0x4f8] sm:$0xff]
  %v2135 = vld [vmem:[%s1974 + $0x500] sm:$0xff]
  %v2136 = vld [vmem:[%s1974 + $0x508] sm:$0xff]
  %v2137 = vld [vmem:[%s1974 + $0x510] sm:$0xff]
  %v2138 = vld [vmem:[%s1974 + $0x518] sm:$0xff]
  %v2139 = vld [vmem:[%s1974 + $0x520] sm:$0xff]
  %v2140 = vld [vmem:[%s1974 + $0x528] sm:$0xff]
  %v2141 = vld [vmem:[%s1974 + $0x530] sm:$0xff]
  %v2142 = vld [vmem:[%s1974 + $0x538] sm:$0xff]
  %v2143 = vld [vmem:[%s1974 + $0x540] sm:$0xff]
  %v2144 = vld [vmem:[%s1974 + $0x548] sm:$0xff]
  %v2145 = vld [vmem:[%s1974 + $0x550] sm:$0xff]
  %v2146 = vld [vmem:[%s1974 + $0x558] sm:$0xff]
  %v2147 = vld [vmem:[%s1974 + $0x560] sm:$0xff]
  %v2148 = vld [vmem:[%s1974 + $0x568] sm:$0xff]
  %v2149 = vld [vmem:[%s1974 + $0x570] sm:$0xff]
  %v2150 = vld [vmem:[%s1974 + $0x578] sm:$0xff]
  %v2151 = vld [vmem:[%s1974 + $0x580] sm:$0xff]
  %v2152 = vld [vmem:[%s1974 + $0x588] sm:$0xff]
  %v2153 = vld [vmem:[%s1974 + $0x590] sm:$0xff]
  %v2154 = vld [vmem:[%s1974 + $0x598] sm:$0xff]
  %v2155 = vld [vmem:[%s1974 + $0x5a0] sm:$0xff]
  %v2156 = vld [vmem:[%s1974 + $0x5a8] sm:$0xff]
  %v2157 = vld [vmem:[%s1974 + $0x5b0] sm:$0xff]
  %v2158 = vld [vmem:[%s1974 + $0x5b8] sm:$0xff]
  %v2159 = vld [vmem:[%s1974 + $0x5c0] sm:$0xff]
  %v2160 = vld [vmem:[%s1974 + $0x5c8] sm:$0xff]
  %v2161 = vld [vmem:[%s1974 + $0x5d0] sm:$0xff]
  %v2162 = vld [vmem:[%s1974 + $0x5d8] sm:$0xff]
  %v2163 = vld [vmem:[%s1974 + $0x5e0] sm:$0xff]
  %v2164 = vld [vmem:[%s1974 + $0x5e8] sm:$0xff]
  %v2165 = vld [vmem:[%s1974 + $0x5f0] sm:$0xff]
  %v2166 = vld [vmem:[%s1974 + $0x5f8] sm:$0xff]
  %v2167 = vld [vmem:[%s1974 + $0x600] sm:$0xff]
  %v2168 = vld [vmem:[%s1974 + $0x608] sm:$0xff]
  %v2169 = vld [vmem:[%s1974 + $0x610] sm:$0xff]
  %v2170 = vld [vmem:[%s1974 + $0x618] sm:$0xff]
  %v2171 = vld [vmem:[%s1974 + $0x620] sm:$0xff]
  %v2172 = vld [vmem:[%s1974 + $0x628] sm:$0xff]
  %v2173 = vld [vmem:[%s1974 + $0x630] sm:$0xff]
  %v2174 = vld [vmem:[%s1974 + $0x638] sm:$0xff]
  %v2175 = vld [vmem:[%s1974 + $0x640] sm:$0xff]
  %v2176 = vld [vmem:[%s1974 + $0x648] sm:$0xff]
  %v2177 = vld [vmem:[%s1974 + $0x650] sm:$0xff]
  %v2178 = vld [vmem:[%s1974 + $0x658] sm:$0xff]
  %v2179 = vld [vmem:[%s1974 + $0x660] sm:$0xff]
  %v2180 = vld [vmem:[%s1974 + $0x668] sm:$0xff]
  %v2181 = vld [vmem:[%s1974 + $0x670] sm:$0xff]
  %v2182 = vld [vmem:[%s1974 + $0x678] sm:$0xff]
  %v2183 = vld [vmem:[%s1974 + $0x680] sm:$0xff]
  %v2184 = vld [vmem:[%s1974 + $0x688] sm:$0xff]
  %v2185 = vld [vmem:[%s1974 + $0x690] sm:$0xff]
  %v2186 = vld [vmem:[%s1974 + $0x698] sm:$0xff]
  %v2187 = vld [vmem:[%s1974 + $0x6a0] sm:$0xff]
  %v2188 = vld [vmem:[%s1974 + $0x6a8] sm:$0xff]
  %v2189 = vld [vmem:[%s1974 + $0x6b0] sm:$0xff]
  %v2190 = vld [vmem:[%s1974 + $0x6b8] sm:$0xff]
  %v2191 = vld [vmem:[%s1974 + $0x6c0] sm:$0xff]
  %v2192 = vld [vmem:[%s1974 + $0x6c8] sm:$0xff]
  %v2193 = vld [vmem:[%s1974 + $0x6d0] sm:$0xff]
  %v2194 = vld [vmem:[%s1974 + $0x6d8] sm:$0xff]
  %v2195 = vld [vmem:[%s1974 + $0x6e0] sm:$0xff]
  %v2196 = vld [vmem:[%s1974 + $0x6e8] sm:$0xff]
  %v2197 = vld [vmem:[%s1974 + $0x6f0] sm:$0xff]
  %v2198 = vld [vmem:[%s1974 + $0x6f8] sm:$0xff]
  %v2199 = vld [vmem:[%s1974 + $0x700] sm:$0xff]
  %v2200 = vld [vmem:[%s1974 + $0x708] sm:$0xff]
  %v2201 = vld [vmem:[%s1974 + $0x710] sm:$0xff]
  %v2202 = vld [vmem:[%s1974 + $0x718] sm:$0xff]
  %v2203 = vld [vmem:[%s1974 + $0x720] sm:$0xff]
  %v2204 = vld [vmem:[%s1974 + $0x728] sm:$0xff]
  %v2205 = vld [vmem:[%s1974 + $0x730] sm:$0xff]
  %v2206 = vld [vmem:[%s1974 + $0x738] sm:$0xff]
  %v2207 = vld [vmem:[%s1974 + $0x740] sm:$0xff]
  %v2208 = vld [vmem:[%s1974 + $0x748] sm:$0xff]
  %v2209 = vld [vmem:[%s1974 + $0x750] sm:$0xff]
  %v2210 = vld [vmem:[%s1974 + $0x758] sm:$0xff]
  %v2211 = vld [vmem:[%s1974 + $0x760] sm:$0xff]
  %v2212 = vld [vmem:[%s1974 + $0x768] sm:$0xff]
  %v2213 = vld [vmem:[%s1974 + $0x770] sm:$0xff]
  %v2214 = vld [vmem:[%s1974 + $0x778] sm:$0xff]
  %v2215 = vld [vmem:[%s1974 + $0x780] sm:$0xff]
  %v2216 = vld [vmem:[%s1974 + $0x788] sm:$0xff]
  %v2217 = vld [vmem:[%s1974 + $0x790] sm:$0xff]
  %v2218 = vld [vmem:[%s1974 + $0x798] sm:$0xff]
  %v2219 = vld [vmem:[%s1974 + $0x7a0] sm:$0xff]
  %v2220 = vld [vmem:[%s1974 + $0x7a8] sm:$0xff]
  %v2221 = vld [vmem:[%s1974 + $0x7b0] sm:$0xff]
  %v2222 = vld [vmem:[%s1974 + $0x7b8] sm:$0xff]
  %v2223 = vld [vmem:[%s1974 + $0x7c0] sm:$0xff]
  %v2224 = vld [vmem:[%s1974 + $0x7c8] sm:$0xff]
  %v2225 = vld [vmem:[%s1974 + $0x7d0] sm:$0xff]
  %v2226 = vld [vmem:[%s1974 + $0x7d8] sm:$0xff]
  %v2227 = vld [vmem:[%s1974 + $0x7e0] sm:$0xff]
  %v2228 = vld [vmem:[%s1974 + $0x7e8] sm:$0xff]
  %v2229 = vld [vmem:[%s1974 + $0x7f0] sm:$0xff]
  %v2230 = vld [vmem:[%s1974 + $0x7f8] sm:$0xff]
  %v2231 = vld [vmem:[%s1974 + $0x800] sm:$0xff]
  %v2232 = vld [vmem:[%s1974 + $0x808] sm:$0xff]
  %v2233 = vld [vmem:[%s1974 + $0x810] sm:$0xff]
  %v2234 = vld [vmem:[%s1974 + $0x818] sm:$0xff]
  %v2235 = vld [vmem:[%s1974 + $0x820] sm:$0xff]
  %v2236 = vld [vmem:[%s1974 + $0x828] sm:$0xff]
  %v2237 = vld [vmem:[%s1974 + $0x830] sm:$0xff]
  %v2238 = vld [vmem:[%s1974 + $0x838] sm:$0xff]
  %v2239 = vld [vmem:[%s1974 + $0x840] sm:$0xff]
  %v2240 = vld [vmem:[%s1974 + $0x848] sm:$0xff]
  %v2241 = vld [vmem:[%s1974 + $0x850] sm:$0xff]
  %v2242 = vld [vmem:[%s1974 + $0x858] sm:$0xff]
  %v2243 = vld [vmem:[%s1974 + $0x860] sm:$0xff]
  %v2244 = vld [vmem:[%s1974 + $0x868] sm:$0xff]
  %v2245 = vld [vmem:[%s1974 + $0x870] sm:$0xff]
  %v2246 = vld [vmem:[%s1974 + $0x878] sm:$0xff]
  %v2247 = vld [vmem:[%s1974 + $0x880] sm:$0xff]
  %v2248 = vld [vmem:[%s1974 + $0x888] sm:$0xff]
  %v2249 = vld [vmem:[%s1974 + $0x890] sm:$0xff]
  %v2250 = vld [vmem:[%s1974 + $0x898] sm:$0xff]
  %v2251 = vld [vmem:[%s1974 + $0x8a0] sm:$0xff]
  %v2252 = vld [vmem:[%s1974 + $0x8a8] sm:$0xff]
  %v2253 = vld [vmem:[%s1974 + $0x8b0] sm:$0xff]
  %v2254 = vld [vmem:[%s1974 + $0x8b8] sm:$0xff]
  %v2255 = vld [vmem:[%s1974 + $0x8c0] sm:$0xff]
  %v2256 = vld [vmem:[%s1974 + $0x8c8] sm:$0xff]
  %v2257 = vld [vmem:[%s1974 + $0x8d0] sm:$0xff]
  %v2258 = vld [vmem:[%s1974 + $0x8d8] sm:$0xff]
  %v2259 = vld [vmem:[%s1974 + $0x8e0] sm:$0xff]
  %v2260 = vld [vmem:[%s1974 + $0x8e8] sm:$0xff]
  %v2261 = vld [vmem:[%s1974 + $0x8f0] sm:$0xff]
  %v2262 = vld [vmem:[%s1974 + $0x8f8] sm:$0xff]
  %v2263 = vld [vmem:[%s1974 + $0x900] sm:$0xff]
  %v2264 = vld [vmem:[%s1974 + $0x908] sm:$0xff]
  %v2265 = vld [vmem:[%s1974 + $0x910] sm:$0xff]
  %v2266 = vld [vmem:[%s1974 + $0x918] sm:$0xff]
  %v2267 = vld [vmem:[%s1974 + $0x920] sm:$0xff]
  %v2268 = vld [vmem:[%s1974 + $0x928] sm:$0xff]
  %v2269 = vld [vmem:[%s1974 + $0x930] sm:$0xff]
  %v2270 = vld [vmem:[%s1974 + $0x938] sm:$0xff]
  %v2271 = vld [vmem:[%s1974 + $0x940] sm:$0xff]
  %v2272 = vld [vmem:[%s1974 + $0x948] sm:$0xff]
  %v2273 = vld [vmem:[%s1974 + $0x950] sm:$0xff]
  %v2274 = vld [vmem:[%s1974 + $0x958] sm:$0xff]
  %v2275 = vld [vmem:[%s1974 + $0x960] sm:$0xff]
  %v2276 = vld [vmem:[%s1974 + $0x968] sm:$0xff]
  %v2277 = vld [vmem:[%s1974 + $0x970] sm:$0xff]
  %v2278 = vld [vmem:[%s1974 + $0x978] sm:$0xff]
  %v2279 = vld [vmem:[%s1974 + $0x980] sm:$0xff]
  %v2280 = vld [vmem:[%s1974 + $0x988] sm:$0xff]
  %v2281 = vld [vmem:[%s1974 + $0x990] sm:$0xff]
  %v2282 = vld [vmem:[%s1974 + $0x998] sm:$0xff]
  %v2283 = vld [vmem:[%s1974 + $0x9a0] sm:$0xff]
  %v2284 = vld [vmem:[%s1974 + $0x9a8] sm:$0xff]
  %v2285 = vld [vmem:[%s1974 + $0x9b0] sm:$0xff]
  %v2286 = vld [vmem:[%s1974 + $0x9b8] sm:$0xff]
  %v2287 = vld [vmem:[%s1974 + $0x9c0] sm:$0xff]
  %v2288 = vld [vmem:[%s1974 + $0x9c8] sm:$0xff]
  %v2289 = vld [vmem:[%s1974 + $0x9d0] sm:$0xff]
  %v2290 = vld [vmem:[%s1974 + $0x9d8] sm:$0xff]
  %v2291 = vld [vmem:[%s1974 + $0x9e0] sm:$0xff]
  %v2292 = vld [vmem:[%s1974 + $0x9e8] sm:$0xff]
  %v2293 = vld [vmem:[%s1974 + $0x9f0] sm:$0xff]
  %v2294 = vld [vmem:[%s1974 + $0x9f8] sm:$0xff]
  %v2295 = vld [vmem:[%s1974 + $0xa00] sm:$0xff]
  %v2296 = vld [vmem:[%s1974 + $0xa08] sm:$0xff]
  %v2297 = vld [vmem:[%s1974 + $0xa10] sm:$0xff]
  %v2298 = vld [vmem:[%s1974 + $0xa18] sm:$0xff]
  %v2299 = vld [vmem:[%s1974 + $0xa20] sm:$0xff]
  %v2300 = vld [vmem:[%s1974 + $0xa28] sm:$0xff]
  %v2301 = vld [vmem:[%s1974 + $0xa30] sm:$0xff]
  %v2302 = vld [vmem:[%s1974 + $0xa38] sm:$0xff]
  %v2303 = vld [vmem:[%s1974 + $0xa40] sm:$0xff]
  %v2304 = vld [vmem:[%s1974 + $0xa48] sm:$0xff]
  %v2305 = vld [vmem:[%s1974 + $0xa50] sm:$0xff]
  %v2306 = vld [vmem:[%s1974 + $0xa58] sm:$0xff]
  %v2307 = vld [vmem:[%s1974 + $0xa60] sm:$0xff]
  %v2308 = vld [vmem:[%s1974 + $0xa68] sm:$0xff]
  %v2309 = vld [vmem:[%s1974 + $0xa70] sm:$0xff]
  %v2310 = vld [vmem:[%s1974 + $0xa78] sm:$0xff]
  %v2311 = vld [vmem:[%s1974 + $0xa80] sm:$0xff]
  %v2312 = vld [vmem:[%s1974 + $0xa88] sm:$0xff]
  %v2313 = vld [vmem:[%s1974 + $0xa90] sm:$0xff]
  %v2314 = vld [vmem:[%s1974 + $0xa98] sm:$0xff]
  %v2315 = vld [vmem:[%s1974 + $0xaa0] sm:$0xff]
  %v2316 = vld [vmem:[%s1974 + $0xaa8] sm:$0xff]
  %v2317 = vld [vmem:[%s1974 + $0xab0] sm:$0xff]
  %v2318 = vld [vmem:[%s1974 + $0xab8] sm:$0xff]
  %v2319 = vld [vmem:[%s1974 + $0xac0] sm:$0xff]
  %v2320 = vld [vmem:[%s1974 + $0xac8] sm:$0xff]
  %v2321 = vld [vmem:[%s1974 + $0xad0] sm:$0xff]
  %v2322 = vld [vmem:[%s1974 + $0xad8] sm:$0xff]
  %v2323 = vld [vmem:[%s1974 + $0xae0] sm:$0xff]
  %v2324 = vld [vmem:[%s1974 + $0xae8] sm:$0xff]
  %v2325 = vld [vmem:[%s1974 + $0xaf0] sm:$0xff]
  %v2326 = vld [vmem:[%s1974 + $0xaf8] sm:$0xff]
  %v2327 = vld [vmem:[%s1974 + $0xb00] sm:$0xff]
  %v2328 = vld [vmem:[%s1974 + $0xb08] sm:$0xff]
  %v2329 = vld [vmem:[%s1974 + $0xb10] sm:$0xff]
  %v2330 = vld [vmem:[%s1974 + $0xb18] sm:$0xff]
  %v2331 = vld [vmem:[%s1974 + $0xb20] sm:$0xff]
  %v2332 = vld [vmem:[%s1974 + $0xb28] sm:$0xff]
  %v2333 = vld [vmem:[%s1974 + $0xb30] sm:$0xff]
  %v2334 = vld [vmem:[%s1974 + $0xb38] sm:$0xff]
  %v2335 = vld [vmem:[%s1974 + $0xb40] sm:$0xff]
  %v2336 = vld [vmem:[%s1974 + $0xb48] sm:$0xff]
  %v2337 = vld [vmem:[%s1974 + $0xb50] sm:$0xff]
  %v2338 = vld [vmem:[%s1974 + $0xb58] sm:$0xff]
  %v2339 = vld [vmem:[%s1974 + $0xb60] sm:$0xff]
  %v2340 = vld [vmem:[%s1974 + $0xb68] sm:$0xff]
  %v2341 = vld [vmem:[%s1974 + $0xb70] sm:$0xff]
  %v2342 = vld [vmem:[%s1974 + $0xb78] sm:$0xff]
  %v2343 = vld [vmem:[%s1974 + $0xb80] sm:$0xff]
  %v2344 = vld [vmem:[%s1974 + $0xb88] sm:$0xff]
  %v2345 = vld [vmem:[%s1974 + $0xb90] sm:$0xff]
  %v2346 = vld [vmem:[%s1974 + $0xb98] sm:$0xff]
  %v2347 = vld [vmem:[%s1974 + $0xba0] sm:$0xff]
  %v2348 = vld [vmem:[%s1974 + $0xba8] sm:$0xff]
  %v2349 = vld [vmem:[%s1974 + $0xbb0] sm:$0xff]
  %v2350 = vld [vmem:[%s1974 + $0xbb8] sm:$0xff]
  %v2351 = vld [vmem:[%s1974 + $0xbc0] sm:$0xff]
  %v2352 = vld [vmem:[%s1974 + $0xbc8] sm:$0xff]
  %v2353 = vld [vmem:[%s1974 + $0xbd0] sm:$0xff]
  %v2354 = vld [vmem:[%s1974 + $0xbd8] sm:$0xff]
  %v2355 = vld [vmem:[%s1974 + $0xbe0] sm:$0xff]
  %v2356 = vld [vmem:[%s1974 + $0xbe8] sm:$0xff]
  %v2357 = vld [vmem:[%s1974 + $0xbf0] sm:$0xff]
  %v2358 = vld [vmem:[%s1974 + $0xbf8] sm:$0xff]
  %v2359 = vld [vmem:[%s1974 + $0xc00] sm:$0xff]
  %v2360 = vld [vmem:[%s1974 + $0xc08] sm:$0xff]
  %v2361 = vld [vmem:[%s1974 + $0xc10] sm:$0xff]
  %v2362 = vld [vmem:[%s1974 + $0xc18] sm:$0xff]
  %v2363 = vld [vmem:[%s1974 + $0xc20] sm:$0xff]
  %v2364 = vld [vmem:[%s1974 + $0xc28] sm:$0xff]
  %v2365 = vld [vmem:[%s1974 + $0xc30] sm:$0xff]
  %v2366 = vld [vmem:[%s1974 + $0xc38] sm:$0xff]
  %2367 = vmatprep.subr.mxu0 %v1976
  %2368 = vmatpush1.msra.mxu0 %v1975
  %2369 = vmatprep.subr.mxu0 %v1980
  %2370 = vmatpush1.msra.mxu0 %v1979
  %2371 = vmatprep.subr.mxu0 %v1984
  %2372 = vmatpush1.msra.mxu0 %v1983
  %2373 = vmatprep.subr.mxu0 %v1988
  %2374 = vmatpush1.msra.mxu0 %v1987
  %2375 = vmatprep.subr.mxu0 %v1992
  %2376 = vmatpush1.msra.mxu0 %v1991
  %2377 = vmatprep.subr.mxu0 %v1996
  %2378 = vmatpush1.msra.mxu0 %v1995
  %2379 = vmatprep.subr.mxu0 %v2000
  %2380 = vmatpush1.msra.mxu0 %v1999
  %2381 = vmatprep.subr.mxu0 %v2004
  %2382 = vmatpush1.msra.mxu0 %v2003
  %2383 = vmatprep.subr.mxu0 %v2008
  %2384 = vmatpush1.msra.mxu0 %v2007
  %2385 = vmatprep.subr.mxu0 %v2012
  %2386 = vmatpush1.msra.mxu0 %v2011
  %2387 = vmatprep.subr.mxu0 %v2016
  %2388 = vmatpush1.msra.mxu0 %v2015
  %2389 = vmatprep.subr.mxu0 %v2020
  %2390 = vmatpush1.msra.mxu0 %v2019
  %2391 = vmatprep.subr.mxu0 %v2024
  %2392 = vmatpush1.msra.mxu0 %v2023
  %2393 = vmatprep.subr.mxu0 %v2028
  %2394 = vmatpush1.msra.mxu0 %v2027
  %2395 = vmatprep.subr.mxu0 %v2032
  %2396 = vmatpush1.msra.mxu0 %v2031
  %2397 = vmatprep.subr.mxu0 %v2036
  %2398 = vmatpush1.msra.mxu0 %v2035
  %2399 = vmatprep.subr.mxu0 %v2040
  %2400 = vmatpush1.msra.mxu0 %v2039
  %2401 = vmatprep.subr.mxu0 %v2044
  %2402 = vmatpush1.msra.mxu0 %v2043
  %2403 = vmatprep.subr.mxu0 %v2048
  %2404 = vmatpush1.msra.mxu0 %v2047
  %2405 = vmatprep.subr.mxu0 %v2052
  %2406 = vmatpush1.msra.mxu0 %v2051
  %2407 = vmatprep.subr.mxu0 %v2056
  %2408 = vmatpush1.msra.mxu0 %v2055
  %2409 = vmatprep.subr.mxu0 %v2060
  %2410 = vmatpush1.msra.mxu0 %v2059
  %2411 = vmatprep.subr.mxu0 %v2064
  %2412 = vmatpush1.msra.mxu0 %v2063
  %2413 = vmatprep.subr.mxu0 %v2068
  %2414 = vmatpush1.msra.mxu0 %v2067
  %2415 = vmatprep.subr.mxu0 %v2072
  %2416 = vmatpush1.msra.mxu0 %v2071
  %2417 = vmatprep.subr.mxu0 %v2076
  %2418 = vmatpush1.msra.mxu0 %v2075
  %2419 = vmatprep.subr.mxu0 %v2080
  %2420 = vmatpush1.msra.mxu0 %v2079
  %2421 = vmatprep.subr.mxu0 %v2084
  %2422 = vmatpush1.msra.mxu0 %v2083
  %2423 = vmatprep.subr.mxu0 %v2088
  %2424 = vmatpush1.msra.mxu0 %v2087
  %2425 = vmatprep.subr.mxu0 %v2092
  %2426 = vmatpush1.msra.mxu0 %v2091
  %2427 = vmatprep.subr.mxu0 %v2096
  %2428 = vmatpush1.msra.mxu0 %v2095
  %2429 = vmatprep.subr.mxu0 %v2100
  %2430 = vmatpush1.msra.mxu0 %v2099
  %2431 = vmatprep.mubr.f32.mxu0 %v39
  %2432 = vmatmul.mubr.f32.gmra.mrb[0].mxu0 %v38
  %v2433 = vpop.f32.mrb[0].mxu0
  %v2434 = vadd.f32 0.0, %v2433
  %v2435 = vpop.f32.mrb[0].mxu0
  %v2436 = vadd.f32 0.0, %v2435
  %2437 = vdwg.mxu0
  %2438 = vmatprep.subr.mxu0 %v2104
  %2439 = vmatpush1.msra.mxu0 %v2103
  %2440 = vmatprep.subr.mxu0 %v2108
  %2441 = vmatpush1.msra.mxu0 %v2107
  %2442 = vmatprep.subr.mxu0 %v2112
  %2443 = vmatpush1.msra.mxu0 %v2111
  %2444 = vmatprep.subr.mxu0 %v2116
  %2445 = vmatpush1.msra.mxu0 %v2115
  %2446 = vmatprep.subr.mxu0 %v2120
  %2447 = vmatpush1.msra.mxu0 %v2119
  %2448 = vmatprep.subr.mxu0 %v2124
  %2449 = vmatpush1.msra.mxu0 %v2123
  %2450 = vmatprep.subr.mxu0 %v2128
  %2451 = vmatpush1.msra.mxu0 %v2127
  %2452 = vmatprep.subr.mxu0 %v2132
  %2453 = vmatpush1.msra.mxu0 %v2131
  %2454 = vmatprep.subr.mxu0 %v2136
  %2455 = vmatpush1.msra.mxu0 %v2135
  %2456 = vmatprep.subr.mxu0 %v2140
  %2457 = vmatpush1.msra.mxu0 %v2139
  %2458 = vmatprep.subr.mxu0 %v2144
  %2459 = vmatpush1.msra.mxu0 %v2143
  %2460 = vmatprep.subr.mxu0 %v2148
  %2461 = vmatpush1.msra.mxu0 %v2147
  %2462 = vmatprep.subr.mxu0 %v2152
  %2463 = vmatpush1.msra.mxu0 %v2151
  %2464 = vmatprep.subr.mxu0 %v2156
  %2465 = vmatpush1.msra.mxu0 %v2155
  %2466 = vmatprep.subr.mxu0 %v2160
  %2467 = vmatpush1.msra.mxu0 %v2159
  %2468 = vmatprep.subr.mxu0 %v2164
  %2469 = vmatpush1.msra.mxu0 %v2163
  %2470 = vmatprep.subr.mxu0 %v2168
  %2471 = vmatpush1.msra.mxu0 %v2167
  %2472 = vmatprep.subr.mxu0 %v2172
  %2473 = vmatpush1.msra.mxu0 %v2171
  %2474 = vmatprep.subr.mxu0 %v2176
  %2475 = vmatpush1.msra.mxu0 %v2175
  %2476 = vmatprep.subr.mxu0 %v2180
  %2477 = vmatpush1.msra.mxu0 %v2179
  %2478 = vmatprep.subr.mxu0 %v2184
  %2479 = vmatpush1.msra.mxu0 %v2183
  %2480 = vmatprep.subr.mxu0 %v2188
  %2481 = vmatpush1.msra.mxu0 %v2187
  %2482 = vmatprep.subr.mxu0 %v2192
  %2483 = vmatpush1.msra.mxu0 %v2191
  %2484 = vmatprep.subr.mxu0 %v2196
  %2485 = vmatpush1.msra.mxu0 %v2195
  %2486 = vmatprep.subr.mxu0 %v2200
  %2487 = vmatpush1.msra.mxu0 %v2199
  %2488 = vmatprep.subr.mxu0 %v2204
  %2489 = vmatpush1.msra.mxu0 %v2203
  %2490 = vmatprep.subr.mxu0 %v2208
  %2491 = vmatpush1.msra.mxu0 %v2207
  %2492 = vmatprep.subr.mxu0 %v2212
  %2493 = vmatpush1.msra.mxu0 %v2211
  %2494 = vmatprep.subr.mxu0 %v2216
  %2495 = vmatpush1.msra.mxu0 %v2215
  %2496 = vmatprep.subr.mxu0 %v2220
  %2497 = vmatpush1.msra.mxu0 %v2219
  %2498 = vmatprep.subr.mxu0 %v2224
  %2499 = vmatpush1.msra.mxu0 %v2223
  %2500 = vmatprep.subr.mxu0 %v2228
  %2501 = vmatpush1.msra.mxu0 %v2227
  %2502 = vmatprep.mubr.f32.mxu0 %v41
  %2503 = vmatmul.mubr.f32.gmra.mrb[0].mxu0 %v40
  %v2504 = vpop.f32.mrb[0].mxu0
  %v2505 = vadd.f32 %v2434, %v2504
  %v2506 = vpop.f32.mrb[0].mxu0
  %v2507 = vadd.f32 %v2436, %v2506
  %2508 = vdwg.mxu0
  %2509 = vmatprep.subr.mxu0 %v2232
  %2510 = vmatpush1.msra.mxu0 %v2231
  %2511 = vmatprep.subr.mxu0 %v2236
  %2512 = vmatpush1.msra.mxu0 %v2235
  %2513 = vmatprep.subr.mxu0 %v2240
  %2514 = vmatpush1.msra.mxu0 %v2239
  %2515 = vmatprep.subr.mxu0 %v2244
  %2516 = vmatpush1.msra.mxu0 %v2243
  %2517 = vmatprep.subr.mxu0 %v2248
  %2518 = vmatpush1.msra.mxu0 %v2247
  %2519 = vmatprep.subr.mxu0 %v2252
  %2520 = vmatpush1.msra.mxu0 %v2251
  %2521 = vmatprep.subr.mxu0 %v2256
  %2522 = vmatpush1.msra.mxu0 %v2255
  %2523 = vmatprep.subr.mxu0 %v2260
  %2524 = vmatpush1.msra.mxu0 %v2259
  %2525 = vmatprep.subr.mxu0 %v2264
  %2526 = vmatpush1.msra.mxu0 %v2263
  %2527 = vmatprep.subr.mxu0 %v2268
  %2528 = vmatpush1.msra.mxu0 %v2267
  %2529 = vmatprep.subr.mxu0 %v2272
  %2530 = vmatpush1.msra.mxu0 %v2271
  %2531 = vmatprep.subr.mxu0 %v2276
  %2532 = vmatpush1.msra.mxu0 %v2275
  %2533 = vmatprep.subr.mxu0 %v2280
  %2534 = vmatpush1.msra.mxu0 %v2279
  %2535 = vmatprep.subr.mxu0 %v2284
  %2536 = vmatpush1.msra.mxu0 %v2283
  %2537 = vmatprep.subr.mxu0 %v2288
  %2538 = vmatpush1.msra.mxu0 %v2287
  %2539 = vmatprep.subr.mxu0 %v2292
  %2540 = vmatpush1.msra.mxu0 %v2291
  %2541 = vmatprep.subr.mxu0 %v2296
  %2542 = vmatpush1.msra.mxu0 %v2295
  %2543 = vmatprep.subr.mxu0 %v2300
  %2544 = vmatpush1.msra.mxu0 %v2299
  %2545 = vmatprep.subr.mxu0 %v2304
  %2546 = vmatpush1.msra.mxu0 %v2303
  %2547 = vmatprep.subr.mxu0 %v2308
  %2548 = vmatpush1.msra.mxu0 %v2307
  %2549 = vmatprep.subr.mxu0 %v2312
  %2550 = vmatpush1.msra.mxu0 %v2311
  %2551 = vmatprep.subr.mxu0 %v2316
  %2552 = vmatpush1.msra.mxu0 %v2315
  %2553 = vmatprep.subr.mxu0 %v2320
  %2554 = vmatpush1.msra.mxu0 %v2319
  %2555 = vmatprep.subr.mxu0 %v2324
  %2556 = vmatpush1.msra.mxu0 %v2323
  %2557 = vmatprep.subr.mxu0 %v2328
  %2558 = vmatpush1.msra.mxu0 %v2327
  %2559 = vmatprep.subr.mxu0 %v2332
  %2560 = vmatpush1.msra.mxu0 %v2331
  %2561 = vmatprep.subr.mxu0 %v2336
  %2562 = vmatpush1.msra.mxu0 %v2335
  %2563 = vmatprep.subr.mxu0 %v2340
  %2564 = vmatpush1.msra.mxu0 %v2339
  %2565 = vmatprep.subr.mxu0 %v2344
  %2566 = vmatpush1.msra.mxu0 %v2343
  %2567 = vmatprep.subr.mxu0 %v2348
  %2568 = vmatpush1.msra.mxu0 %v2347
  %2569 = vmatprep.subr.mxu0 %v2352
  %2570 = vmatpush1.msra.mxu0 %v2351
  %2571 = vmatprep.subr.mxu0 %v2356
  %2572 = vmatpush1.msra.mxu0 %v2355
  %2573 = vmatprep.mubr.f32.mxu0 %v43
  %2574 = vmatmul.mubr.f32.gmra.mrb[0].mxu0 %v42
  %v2575 = vpop.f32.mrb[0].mxu0
  %v2576 = vadd.f32 %v2505, %v2575
  %v2577 = vpop.f32.mrb[0].mxu0
  %v2578 = vadd.f32 %v2507, %v2577
  %2579 = vdwg.mxu0
  %2580 = vmatprep.subr.mxu0 %v2360
  %2581 = vmatpush1.msra.mxu0 %v2359
  %2582 = vmatprep.subr.mxu0 %v2364
  %2583 = vmatpush1.msra.mxu0 %v2363
  %2584 = vmatprep.subr.mxu0 0.0
  %2585 = vmatpush1.msra.mxu0 0.0
  %2586 = vmatprep.subr.mxu0 0.0
  %2587 = vmatpush1.msra.mxu0 0.0
  %2588 = vmatprep.subr.mxu0 0.0
  %2589 = vmatpush1.msra.mxu0 0.0
  %2590 = vmatprep.subr.mxu0 0.0
  %2591 = vmatpush1.msra.mxu0 0.0
  %2592 = vmatprep.subr.mxu0 0.0
  %2593 = vmatpush1.msra.mxu0 0.0
  %2594 = vmatprep.subr.mxu0 0.0
  %2595 = vmatpush1.msra.mxu0 0.0
  %2596 = vmatprep.subr.mxu0 0.0
  %2597 = vmatpush1.msra.mxu0 0.0
  %2598 = vmatprep.subr.mxu0 0.0
  %2599 = vmatpush1.msra.mxu0 0.0
  %2600 = vmatprep.subr.mxu0 0.0
  %2601 = vmatpush1.msra.mxu0 0.0
  %2602 = vmatprep.subr.mxu0 0.0
  %2603 = vmatpush1.msra.mxu0 0.0
  %2604 = vmatprep.subr.mxu0 0.0
  %2605 = vmatpush1.msra.mxu0 0.0
  %2606 = vmatprep.subr.mxu0 0.0
  %2607 = vmatpush1.msra.mxu0 0.0
  %2608 = vmatprep.subr.mxu0 0.0
  %2609 = vmatpush1.msra.mxu0 0.0
  %2610 = vmatprep.subr.mxu0 0.0
  %2611 = vmatpush1.msra.mxu0 0.0
  %2612 = vmatprep.subr.mxu0 0.0
  %2613 = vmatpush1.msra.mxu0 0.0
  %2614 = vmatprep.subr.mxu0 0.0
  %2615 = vmatpush1.msra.mxu0 0.0
  %2616 = vmatprep.subr.mxu0 0.0
  %2617 = vmatpush1.msra.mxu0 0.0
  %2618 = vmatprep.subr.mxu0 0.0
  %2619 = vmatpush1.msra.mxu0 0.0
  %2620 = vmatprep.subr.mxu0 0.0
  %2621 = vmatpush1.msra.mxu0 0.0
  %2622 = vmatprep.subr.mxu0 0.0
  %2623 = vmatpush1.msra.mxu0 0.0
  %2624 = vmatprep.subr.mxu0 0.0
  %2625 = vmatpush1.msra.mxu0 0.0
  %2626 = vmatprep.subr.mxu0 0.0
  %2627 = vmatpush1.msra.mxu0 0.0
  %2628 = vmatprep.subr.mxu0 0.0
  %2629 = vmatpush1.msra.mxu0 0.0
  %2630 = vmatprep.subr.mxu0 0.0
  %2631 = vmatpush1.msra.mxu0 0.0
  %2632 = vmatprep.subr.mxu0 0.0
  %2633 = vmatpush1.msra.mxu0 0.0
  %2634 = vmatprep.subr.mxu0 0.0
  %2635 = vmatpush1.msra.mxu0 0.0
  %2636 = vmatprep.subr.mxu0 0.0
  %2637 = vmatpush1.msra.mxu0 0.0
  %2638 = vmatprep.subr.mxu0 0.0
  %2639 = vmatpush1.msra.mxu0 0.0
  %2640 = vmatprep.subr.mxu0 0.0
  %2641 = vmatpush1.msra.mxu0 0.0
  %2642 = vmatprep.subr.mxu0 0.0
  %2643 = vmatpush1.msra.mxu0 0.0
  %2644 = vmatprep.mubr.f32.mxu0 0.0
  %2645 = vmatmul.mubr.f32.gmra.mrb[0].mxu0 %v439
  %v2646 = vpop.f32.mrb[0].mxu0
  %v2647 = vadd.f32 %v2576, %v2646
  %v2648 = vpop.f32.mrb[0].mxu0
  %v2649 = vadd.f32 %v2578, %v2648
  %2650 = vdwg.mxu0
  %2651 = vmatprep.subr.mxu0 %v1978
  %2652 = vmatpush1.msra.mxu0 %v1977
  %2653 = vmatprep.subr.mxu0 %v1982
  %2654 = vmatpush1.msra.mxu0 %v1981
  %2655 = vmatprep.subr.mxu0 %v1986
  %2656 = vmatpush1.msra.mxu0 %v1985
  %2657 = vmatprep.subr.mxu0 %v1990
  %2658 = vmatpush1.msra.mxu0 %v1989
  %2659 = vmatprep.subr.mxu0 %v1994
  %2660 = vmatpush1.msra.mxu0 %v1993
  %2661 = vmatprep.subr.mxu0 %v1998
  %2662 = vmatpush1.msra.mxu0 %v1997
  %2663 = vmatprep.subr.mxu0 %v2002
  %2664 = vmatpush1.msra.mxu0 %v2001
  %2665 = vmatprep.subr.mxu0 %v2006
  %2666 = vmatpush1.msra.mxu0 %v2005
  %2667 = vmatprep.subr.mxu0 %v2010
  %2668 = vmatpush1.msra.mxu0 %v2009
  %2669 = vmatprep.subr.mxu0 %v2014
  %2670 = vmatpush1.msra.mxu0 %v2013
  %2671 = vmatprep.subr.mxu0 %v2018
  %2672 = vmatpush1.msra.mxu0 %v2017
  %2673 = vmatprep.subr.mxu0 %v2022
  %2674 = vmatpush1.msra.mxu0 %v2021
  %2675 = vmatprep.subr.mxu0 %v2026
  %2676 = vmatpush1.msra.mxu0 %v2025
  %2677 = vmatprep.subr.mxu0 %v2030
  %2678 = vmatpush1.msra.mxu0 %v2029
  %2679 = vmatprep.subr.mxu0 %v2034
  %2680 = vmatpush1.msra.mxu0 %v2033
  %2681 = vmatprep.subr.mxu0 %v2038
  %2682 = vmatpush1.msra.mxu0 %v2037
  %2683 = vmatprep.subr.mxu0 %v2042
  %2684 = vmatpush1.msra.mxu0 %v2041
  %2685 = vmatprep.subr.mxu0 %v2046
  %2686 = vmatpush1.msra.mxu0 %v2045
  %2687 = vmatprep.subr.mxu0 %v2050
  %2688 = vmatpush1.msra.mxu0 %v2049
  %2689 = vmatprep.subr.mxu0 %v2054
  %2690 = vmatpush1.msra.mxu0 %v2053
  %2691 = vmatprep.subr.mxu0 %v2058
  %2692 = vmatpush1.msra.mxu0 %v2057
  %2693 = vmatprep.subr.mxu0 %v2062
  %2694 = vmatpush1.msra.mxu0 %v2061
  %2695 = vmatprep.subr.mxu0 %v2066
  %2696 = vmatpush1.msra.mxu0 %v2065
  %2697 = vmatprep.subr.mxu0 %v2070
  %2698 = vmatpush1.msra.mxu0 %v2069
  %2699 = vmatprep.subr.mxu0 %v2074
  %2700 = vmatpush1.msra.mxu0 %v2073
  %2701 = vmatprep.subr.mxu0 %v2078
  %2702 = vmatpush1.msra.mxu0 %v2077
  %2703 = vmatprep.subr.mxu0 %v2082
  %2704 = vmatpush1.msra.mxu0 %v2081
  %2705 = vmatprep.subr.mxu0 %v2086
  %2706 = vmatpush1.msra.mxu0 %v2085
  %2707 = vmatprep.subr.mxu0 %v2090
  %2708 = vmatpush1.msra.mxu0 %v2089
  %2709 = vmatprep.subr.mxu0 %v2094
  %2710 = vmatpush1.msra.mxu0 %v2093
  %2711 = vmatprep.subr.mxu0 %v2098
  %2712 = vmatpush1.msra.mxu0 %v2097
  %2713 = vmatprep.subr.mxu0 %v2102
  %2714 = vmatpush1.msra.mxu0 %v2101
  %2715 = vmatprep.mubr.f32.mxu0 %v39
  %2716 = vmatmul.mubr.f32.gmra.mrb[0].mxu0 %v38
  %v2717 = vpop.f32.mrb[0].mxu0
  %v2718 = vadd.f32 0.0, %v2717
  %v2719 = vpop.f32.mrb[0].mxu0
  %v2720 = vadd.f32 0.0, %v2719
  %2721 = vdwg.mxu0
  %2722 = vmatprep.subr.mxu0 %v2106
  %2723 = vmatpush1.msra.mxu0 %v2105
  %2724 = vmatprep.subr.mxu0 %v2110
  %2725 = vmatpush1.msra.mxu0 %v2109
  %2726 = vmatprep.subr.mxu0 %v2114
  %2727 = vmatpush1.msra.mxu0 %v2113
  %2728 = vmatprep.subr.mxu0 %v2118
  %2729 = vmatpush1.msra.mxu0 %v2117
  %2730 = vmatprep.subr.mxu0 %v2122
  %2731 = vmatpush1.msra.mxu0 %v2121
  %2732 = vmatprep.subr.mxu0 %v2126
  %2733 = vmatpush1.msra.mxu0 %v2125
  %2734 = vmatprep.subr.mxu0 %v2130
  %2735 = vmatpush1.msra.mxu0 %v2129
  %2736 = vmatprep.subr.mxu0 %v2134
  %2737 = vmatpush1.msra.mxu0 %v2133
  %2738 = vmatprep.subr.mxu0 %v2138
  %2739 = vmatpush1.msra.mxu0 %v2137
  %2740 = vmatprep.subr.mxu0 %v2142
  %2741 = vmatpush1.msra.mxu0 %v2141
  %2742 = vmatprep.subr.mxu0 %v2146
  %2743 = vmatpush1.msra.mxu0 %v2145
  %2744 = vmatprep.subr.mxu0 %v2150
  %2745 = vmatpush1.msra.mxu0 %v2149
  %2746 = vmatprep.subr.mxu0 %v2154
  %2747 = vmatpush1.msra.mxu0 %v2153
  %2748 = vmatprep.subr.mxu0 %v2158
  %2749 = vmatpush1.msra.mxu0 %v2157
  %2750 = vmatprep.subr.mxu0 %v2162
  %2751 = vmatpush1.msra.mxu0 %v2161
  %2752 = vmatprep.subr.mxu0 %v2166
  %2753 = vmatpush1.msra.mxu0 %v2165
  %2754 = vmatprep.subr.mxu0 %v2170
  %2755 = vmatpush1.msra.mxu0 %v2169
  %2756 = vmatprep.subr.mxu0 %v2174
  %2757 = vmatpush1.msra.mxu0 %v2173
  %2758 = vmatprep.subr.mxu0 %v2178
  %2759 = vmatpush1.msra.mxu0 %v2177
  %2760 = vmatprep.subr.mxu0 %v2182
  %2761 = vmatpush1.msra.mxu0 %v2181
  %2762 = vmatprep.subr.mxu0 %v2186
  %2763 = vmatpush1.msra.mxu0 %v2185
  %2764 = vmatprep.subr.mxu0 %v2190
  %2765 = vmatpush1.msra.mxu0 %v2189
  %2766 = vmatprep.subr.mxu0 %v2194
  %2767 = vmatpush1.msra.mxu0 %v2193
  %2768 = vmatprep.subr.mxu0 %v2198
  %2769 = vmatpush1.msra.mxu0 %v2197
  %2770 = vmatprep.subr.mxu0 %v2202
  %2771 = vmatpush1.msra.mxu0 %v2201
  %2772 = vmatprep.subr.mxu0 %v2206
  %2773 = vmatpush1.msra.mxu0 %v2205
  %2774 = vmatprep.subr.mxu0 %v2210
  %2775 = vmatpush1.msra.mxu0 %v2209
  %2776 = vmatprep.subr.mxu0 %v2214
  %2777 = vmatpush1.msra.mxu0 %v2213
  %2778 = vmatprep.subr.mxu0 %v2218
  %2779 = vmatpush1.msra.mxu0 %v2217
  %2780 = vmatprep.subr.mxu0 %v2222
  %2781 = vmatpush1.msra.mxu0 %v2221
  %2782 = vmatprep.subr.mxu0 %v2226
  %2783 = vmatpush1.msra.mxu0 %v2225
  %2784 = vmatprep.subr.mxu0 %v2230
  %2785 = vmatpush1.msra.mxu0 %v2229
  %2786 = vmatprep.mubr.f32.mxu0 %v41
  %2787 = vmatmul.mubr.f32.gmra.mrb[0].mxu0 %v40
  %v2788 = vpop.f32.mrb[0].mxu0
  %v2789 = vadd.f32 %v2718, %v2788
  %v2790 = vpop.f32.mrb[0].mxu0
  %v2791 = vadd.f32 %v2720, %v2790
  %2792 = vdwg.mxu0
  %2793 = vmatprep.subr.mxu0 %v2234
  %2794 = vmatpush1.msra.mxu0 %v2233
  %2795 = vmatprep.subr.mxu0 %v2238
  %2796 = vmatpush1.msra.mxu0 %v2237
  %2797 = vmatprep.subr.mxu0 %v2242
  %2798 = vmatpush1.msra.mxu0 %v2241
  %2799 = vmatprep.subr.mxu0 %v2246
  %2800 = vmatpush1.msra.mxu0 %v2245
  %2801 = vmatprep.subr.mxu0 %v2250
  %2802 = vmatpush1.msra.mxu0 %v2249
  %2803 = vmatprep.subr.mxu0 %v2254
  %2804 = vmatpush1.msra.mxu0 %v2253
  %2805 = vmatprep.subr.mxu0 %v2258
  %2806 = vmatpush1.msra.mxu0 %v2257
  %2807 = vmatprep.subr.mxu0 %v2262
  %2808 = vmatpush1.msra.mxu0 %v2261
  %2809 = vmatprep.subr.mxu0 %v2266
  %2810 = vmatpush1.msra.mxu0 %v2265
  %2811 = vmatprep.subr.mxu0 %v2270
  %2812 = vmatpush1.msra.mxu0 %v2269
  %2813 = vmatprep.subr.mxu0 %v2274
  %2814 = vmatpush1.msra.mxu0 %v2273
  %2815 = vmatprep.subr.mxu0 %v2278
  %2816 = vmatpush1.msra.mxu0 %v2277
  %2817 = vmatprep.subr.mxu0 %v2282
  %2818 = vmatpush1.msra.mxu0 %v2281
  %2819 = vmatprep.subr.mxu0 %v2286
  %2820 = vmatpush1.msra.mxu0 %v2285
  %2821 = vmatprep.subr.mxu0 %v2290
  %2822 = vmatpush1.msra.mxu0 %v2289
  %2823 = vmatprep.subr.mxu0 %v2294
  %2824 = vmatpush1.msra.mxu0 %v2293
  %2825 = vmatprep.subr.mxu0 %v2298
  %2826 = vmatpush1.msra.mxu0 %v2297
  %2827 = vmatprep.subr.mxu0 %v2302
  %2828 = vmatpush1.msra.mxu0 %v2301
  %2829 = vmatprep.subr.mxu0 %v2306
  %2830 = vmatpush1.msra.mxu0 %v2305
  %2831 = vmatprep.subr.mxu0 %v2310
  %2832 = vmatpush1.msra.mxu0 %v2309
  %2833 = vmatprep.subr.mxu0 %v2314
  %2834 = vmatpush1.msra.mxu0 %v2313
  %2835 = vmatprep.subr.mxu0 %v2318
  %2836 = vmatpush1.msra.mxu0 %v2317
  %2837 = vmatprep.subr.mxu0 %v2322
  %2838 = vmatpush1.msra.mxu0 %v2321
  %2839 = vmatprep.subr.mxu0 %v2326
  %2840 = vmatpush1.msra.mxu0 %v2325
  %2841 = vmatprep.subr.mxu0 %v2330
  %2842 = vmatpush1.msra.mxu0 %v2329
  %2843 = vmatprep.subr.mxu0 %v2334
  %2844 = vmatpush1.msra.mxu0 %v2333
  %2845 = vmatprep.subr.mxu0 %v2338
  %2846 = vmatpush1.msra.mxu0 %v2337
  %2847 = vmatprep.subr.mxu0 %v2342
  %2848 = vmatpush1.msra.mxu0 %v2341
  %2849 = vmatprep.subr.mxu0 %v2346
  %2850 = vmatpush1.msra.mxu0 %v2345
  %2851 = vmatprep.subr.mxu0 %v2350
  %2852 = vmatpush1.msra.mxu0 %v2349
  %2853 = vmatprep.subr.mxu0 %v2354
  %2854 = vmatpush1.msra.mxu0 %v2353
  %2855 = vmatprep.subr.mxu0 %v2358
  %2856 = vmatpush1.msra.mxu0 %v2357
  %2857 = vmatprep.mubr.f32.mxu0 %v43
  %2858 = vmatmul.mubr.f32.gmra.mrb[0].mxu0 %v42
  %v2859 = vpop.f32.mrb[0].mxu0
  %v2860 = vadd.f32 %v2789, %v2859
  %v2861 = vpop.f32.mrb[0].mxu0
  %v2862 = vadd.f32 %v2791, %v2861
  %2863 = vdwg.mxu0
  %2864 = vmatprep.subr.mxu0 %v2362
  %2865 = vmatpush1.msra.mxu0 %v2361
  %2866 = vmatprep.subr.mxu0 %v2366
  %2867 = vmatpush1.msra.mxu0 %v2365
  %2868 = vmatprep.subr.mxu0 0.0
  %2869 = vmatpush1.msra.mxu0 0.0
  %2870 = vmatprep.subr.mxu0 0.0
  %2871 = vmatpush1.msra.mxu0 0.0
  %2872 = vmatprep.subr.mxu0 0.0
  %2873 = vmatpush1.msra.mxu0 0.0
  %2874 = vmatprep.subr.mxu0 0.0
  %2875 = vmatpush1.msra.mxu0 0.0
  %2876 = vmatprep.subr.mxu0 0.0
  %2877 = vmatpush1.msra.mxu0 0.0
  %2878 = vmatprep.subr.mxu0 0.0
  %2879 = vmatpush1.msra.mxu0 0.0
  %2880 = vmatprep.subr.mxu0 0.0
  %2881 = vmatpush1.msra.mxu0 0.0
  %2882 = vmatprep.subr.mxu0 0.0
  %2883 = vmatpush1.msra.mxu0 0.0
  %2884 = vmatprep.subr.mxu0 0.0
  %2885 = vmatpush1.msra.mxu0 0.0
  %2886 = vmatprep.subr.mxu0 0.0
  %2887 = vmatpush1.msra.mxu0 0.0
  %2888 = vmatprep.subr.mxu0 0.0
  %2889 = vmatpush1.msra.mxu0 0.0
  %2890 = vmatprep.subr.mxu0 0.0
  %2891 = vmatpush1.msra.mxu0 0.0
  %2892 = vmatprep.subr.mxu0 0.0
  %2893 = vmatpush1.msra.mxu0 0.0
  %2894 = vmatprep.subr.mxu0 0.0
  %2895 = vmatpush1.msra.mxu0 0.0
  %2896 = vmatprep.subr.mxu0 0.0
  %2897 = vmatpush1.msra.mxu0 0.0
  %2898 = vmatprep.subr.mxu0 0.0
  %2899 = vmatpush1.msra.mxu0 0.0
  %2900 = vmatprep.subr.mxu0 0.0
  %2901 = vmatpush1.msra.mxu0 0.0
  %2902 = vmatprep.subr.mxu0 0.0
  %2903 = vmatpush1.msra.mxu0 0.0
  %2904 = vmatprep.subr.mxu0 0.0
  %2905 = vmatpush1.msra.mxu0 0.0
  %2906 = vmatprep.subr.mxu0 0.0
  %2907 = vmatpush1.msra.mxu0 0.0
  %2908 = vmatprep.subr.mxu0 0.0
  %2909 = vmatpush1.msra.mxu0 0.0
  %2910 = vmatprep.subr.mxu0 0.0
  %2911 = vmatpush1.msra.mxu0 0.0
  %2912 = vmatprep.subr.mxu0 0.0
  %2913 = vmatpush1.msra.mxu0 0.0
  %2914 = vmatprep.subr.mxu0 0.0
  %2915 = vmatpush1.msra.mxu0 0.0
  %2916 = vmatprep.subr.mxu0 0.0
  %2917 = vmatpush1.msra.mxu0 0.0
  %2918 = vmatprep.subr.mxu0 0.0
  %2919 = vmatpush1.msra.mxu0 0.0
  %2920 = vmatprep.subr.mxu0 0.0
  %2921 = vmatpush1.msra.mxu0 0.0
  %2922 = vmatprep.subr.mxu0 0.0
  %2923 = vmatpush1.msra.mxu0 0.0
  %2924 = vmatprep.subr.mxu0 0.0
  %2925 = vmatpush1.msra.mxu0 0.0
  %2926 = vmatprep.subr.mxu0 0.0
  %2927 = vmatpush1.msra.mxu0 0.0
  %2928 = vmatprep.mubr.f32.mxu0 0.0
  %2929 = vmatmul.mubr.f32.gmra.mrb[0].mxu0 %v439
  %v2930 = vpop.f32.mrb[0].mxu0
  %v2931 = vadd.f32 %v2860, %v2930
  %v2932 = vpop.f32.mrb[0].mxu0
  %v2933 = vadd.f32 %v2862, %v2932
  %2934 = vdwg.mxu0
  %v2935 = vmax.f32 %v1970, %v2647
  %v2936 = vmax.f32 %v1971, %v2649
  %v2937 = vmax.f32 %v1972, %v2931
  %v2938 = vmax.f32 %v1973, %v2933
  %s2939 = scalar_lea.vmem %s1, 9408
  %v2940 = vld [vmem:[%s2939] sm:$0xff]
  %v2941 = vld [vmem:[%s2939 + $0x8] sm:$0xff]
  %v2942 = vld [vmem:[%s2939 + $0x10] sm:$0xff]
  %v2943 = vld [vmem:[%s2939 + $0x18] sm:$0xff]
  %v2944 = vld [vmem:[%s2939 + $0x20] sm:$0xff]
  %v2945 = vld [vmem:[%s2939 + $0x28] sm:$0xff]
  %v2946 = vld [vmem:[%s2939 + $0x30] sm:$0xff]
  %v2947 = vld [vmem:[%s2939 + $0x38] sm:$0xff]
  %v2948 = vld [vmem:[%s2939 + $0x40] sm:$0xff]
  %v2949 = vld [vmem:[%s2939 + $0x48] sm:$0xff]
  %v2950 = vld [vmem:[%s2939 + $0x50] sm:$0xff]
  %v2951 = vld [vmem:[%s2939 + $0x58] sm:$0xff]
  %v2952 = vld [vmem:[%s2939 + $0x60] sm:$0xff]
  %v2953 = vld [vmem:[%s2939 + $0x68] sm:$0xff]
  %v2954 = vld [vmem:[%s2939 + $0x70] sm:$0xff]
  %v2955 = vld [vmem:[%s2939 + $0x78] sm:$0xff]
  %v2956 = vld [vmem:[%s2939 + $0x80] sm:$0xff]
  %v2957 = vld [vmem:[%s2939 + $0x88] sm:$0xff]
  %v2958 = vld [vmem:[%s2939 + $0x90] sm:$0xff]
  %v2959 = vld [vmem:[%s2939 + $0x98] sm:$0xff]
  %v2960 = vld [vmem:[%s2939 + $0xa0] sm:$0xff]
  %v2961 = vld [vmem:[%s2939 + $0xa8] sm:$0xff]
  %v2962 = vld [vmem:[%s2939 + $0xb0] sm:$0xff]
  %v2963 = vld [vmem:[%s2939 + $0xb8] sm:$0xff]
  %v2964 = vld [vmem:[%s2939 + $0xc0] sm:$0xff]
  %v2965 = vld [vmem:[%s2939 + $0xc8] sm:$0xff]
  %v2966 = vld [vmem:[%s2939 + $0xd0] sm:$0xff]
  %v2967 = vld [vmem:[%s2939 + $0xd8] sm:$0xff]
  %v2968 = vld [vmem:[%s2939 + $0xe0] sm:$0xff]
  %v2969 = vld [vmem:[%s2939 + $0xe8] sm:$0xff]
  %v2970 = vld [vmem:[%s2939 + $0xf0] sm:$0xff]
  %v2971 = vld [vmem:[%s2939 + $0xf8] sm:$0xff]
  %v2972 = vld [vmem:[%s2939 + $0x100] sm:$0xff]
  %v2973 = vld [vmem:[%s2939 + $0x108] sm:$0xff]
  %v2974 = vld [vmem:[%s2939 + $0x110] sm:$0xff]
  %v2975 = vld [vmem:[%s2939 + $0x118] sm:$0xff]
  %v2976 = vld [vmem:[%s2939 + $0x120] sm:$0xff]
  %v2977 = vld [vmem:[%s2939 + $0x128] sm:$0xff]
  %v2978 = vld [vmem:[%s2939 + $0x130] sm:$0xff]
  %v2979 = vld [vmem:[%s2939 + $0x138] sm:$0xff]
  %v2980 = vld [vmem:[%s2939 + $0x140] sm:$0xff]
  %v2981 = vld [vmem:[%s2939 + $0x148] sm:$0xff]
  %v2982 = vld [vmem:[%s2939 + $0x150] sm:$0xff]
  %v2983 = vld [vmem:[%s2939 + $0x158] sm:$0xff]
  %v2984 = vld [vmem:[%s2939 + $0x160] sm:$0xff]
  %v2985 = vld [vmem:[%s2939 + $0x168] sm:$0xff]
  %v2986 = vld [vmem:[%s2939 + $0x170] sm:$0xff]
  %v2987 = vld [vmem:[%s2939 + $0x178] sm:$0xff]
  %v2988 = vld [vmem:[%s2939 + $0x180] sm:$0xff]
  %v2989 = vld [vmem:[%s2939 + $0x188] sm:$0xff]
  %v2990 = vld [vmem:[%s2939 + $0x190] sm:$0xff]
  %v2991 = vld [vmem:[%s2939 + $0x198] sm:$0xff]
  %v2992 = vld [vmem:[%s2939 + $0x1a0] sm:$0xff]
  %v2993 = vld [vmem:[%s2939 + $0x1a8] sm:$0xff]
  %v2994 = vld [vmem:[%s2939 + $0x1b0] sm:$0xff]
  %v2995 = vld [vmem:[%s2939 + $0x1b8] sm:$0xff]
  %v2996 = vld [vmem:[%s2939 + $0x1c0] sm:$0xff]
  %v2997 = vld [vmem:[%s2939 + $0x1c8] sm:$0xff]
  %v2998 = vld [vmem:[%s2939 + $0x1d0] sm:$0xff]
  %v2999 = vld [vmem:[%s2939 + $0x1d8] sm:$0xff]
  %v3000 = vld [vmem:[%s2939 + $0x1e0] sm:$0xff]
  %v3001 = vld [vmem:[%s2939 + $0x1e8] sm:$0xff]
  %v3002 = vld [vmem:[%s2939 + $0x1f0] sm:$0xff]
  %v3003 = vld [vmem:[%s2939 + $0x1f8] sm:$0xff]
  %v3004 = vld [vmem:[%s2939 + $0x200] sm:$0xff]
  %v3005 = vld [vmem:[%s2939 + $0x208] sm:$0xff]
  %v3006 = vld [vmem:[%s2939 + $0x210] sm:$0xff]
  %v3007 = vld [vmem:[%s2939 + $0x218] sm:$0xff]
  %v3008 = vld [vmem:[%s2939 + $0x220] sm:$0xff]
  %v3009 = vld [vmem:[%s2939 + $0x228] sm:$0xff]
  %v3010 = vld [vmem:[%s2939 + $0x230] sm:$0xff]
  %v3011 = vld [vmem:[%s2939 + $0x238] sm:$0xff]
  %v3012 = vld [vmem:[%s2939 + $0x240] sm:$0xff]
  %v3013 = vld [vmem:[%s2939 + $0x248] sm:$0xff]
  %v3014 = vld [vmem:[%s2939 + $0x250] sm:$0xff]
  %v3015 = vld [vmem:[%s2939 + $0x258] sm:$0xff]
  %v3016 = vld [vmem:[%s2939 + $0x260] sm:$0xff]
  %v3017 = vld [vmem:[%s2939 + $0x268] sm:$0xff]
  %v3018 = vld [vmem:[%s2939 + $0x270] sm:$0xff]
  %v3019 = vld [vmem:[%s2939 + $0x278] sm:$0xff]
  %v3020 = vld [vmem:[%s2939 + $0x280] sm:$0xff]
  %v3021 = vld [vmem:[%s2939 + $0x288] sm:$0xff]
  %v3022 = vld [vmem:[%s2939 + $0x290] sm:$0xff]
  %v3023 = vld [vmem:[%s2939 + $0x298] sm:$0xff]
  %v3024 = vld [vmem:[%s2939 + $0x2a0] sm:$0xff]
  %v3025 = vld [vmem:[%s2939 + $0x2a8] sm:$0xff]
  %v3026 = vld [vmem:[%s2939 + $0x2b0] sm:$0xff]
  %v3027 = vld [vmem:[%s2939 + $0x2b8] sm:$0xff]
  %v3028 = vld [vmem:[%s2939 + $0x2c0] sm:$0xff]
  %v3029 = vld [vmem:[%s2939 + $0x2c8] sm:$0xff]
  %v3030 = vld [vmem:[%s2939 + $0x2d0] sm:$0xff]
  %v3031 = vld [vmem:[%s2939 + $0x2d8] sm:$0xff]
  %v3032 = vld [vmem:[%s2939 + $0x2e0] sm:$0xff]
  %v3033 = vld [vmem:[%s2939 + $0x2e8] sm:$0xff]
  %v3034 = vld [vmem:[%s2939 + $0x2f0] sm:$0xff]
  %v3035 = vld [vmem:[%s2939 + $0x2f8] sm:$0xff]
  %v3036 = vld [vmem:[%s2939 + $0x300] sm:$0xff]
  %v3037 = vld [vmem:[%s2939 + $0x308] sm:$0xff]
  %v3038 = vld [vmem:[%s2939 + $0x310] sm:$0xff]
  %v3039 = vld [vmem:[%s2939 + $0x318] sm:$0xff]
  %v3040 = vld [vmem:[%s2939 + $0x320] sm:$0xff]
  %v3041 = vld [vmem:[%s2939 + $0x328] sm:$0xff]
  %v3042 = vld [vmem:[%s2939 + $0x330] sm:$0xff]
  %v3043 = vld [vmem:[%s2939 + $0x338] sm:$0xff]
  %v3044 = vld [vmem:[%s2939 + $0x340] sm:$0xff]
  %v3045 = vld [vmem:[%s2939 + $0x348] sm:$0xff]
  %v3046 = vld [vmem:[%s2939 + $0x350] sm:$0xff]
  %v3047 = vld [vmem:[%s2939 + $0x358] sm:$0xff]
  %v3048 = vld [vmem:[%s2939 + $0x360] sm:$0xff]
  %v3049 = vld [vmem:[%s2939 + $0x368] sm:$0xff]
  %v3050 = vld [vmem:[%s2939 + $0x370] sm:$0xff]
  %v3051 = vld [vmem:[%s2939 + $0x378] sm:$0xff]
  %v3052 = vld [vmem:[%s2939 + $0x380] sm:$0xff]
  %v3053 = vld [vmem:[%s2939 + $0x388] sm:$0xff]
  %v3054 = vld [vmem:[%s2939 + $0x390] sm:$0xff]
  %v3055 = vld [vmem:[%s2939 + $0x398] sm:$0xff]
  %v3056 = vld [vmem:[%s2939 + $0x3a0] sm:$0xff]
  %v3057 = vld [vmem:[%s2939 + $0x3a8] sm:$0xff]
  %v3058 = vld [vmem:[%s2939 + $0x3b0] sm:$0xff]
  %v3059 = vld [vmem:[%s2939 + $0x3b8] sm:$0xff]
  %v3060 = vld [vmem:[%s2939 + $0x3c0] sm:$0xff]
  %v3061 = vld [vmem:[%s2939 + $0x3c8] sm:$0xff]
  %v3062 = vld [vmem:[%s2939 + $0x3d0] sm:$0xff]
  %v3063 = vld [vmem:[%s2939 + $0x3d8] sm:$0xff]
  %v3064 = vld [vmem:[%s2939 + $0x3e0] sm:$0xff]
  %v3065 = vld [vmem:[%s2939 + $0x3e8] sm:$0xff]
  %v3066 = vld [vmem:[%s2939 + $0x3f0] sm:$0xff]
  %v3067 = vld [vmem:[%s2939 + $0x3f8] sm:$0xff]
  %v3068 = vld [vmem:[%s2939 + $0x400] sm:$0xff]
  %v3069 = vld [vmem:[%s2939 + $0x408] sm:$0xff]
  %v3070 = vld [vmem:[%s2939 + $0x410] sm:$0xff]
  %v3071 = vld [vmem:[%s2939 + $0x418] sm:$0xff]
  %v3072 = vld [vmem:[%s2939 + $0x420] sm:$0xff]
  %v3073 = vld [vmem:[%s2939 + $0x428] sm:$0xff]
  %v3074 = vld [vmem:[%s2939 + $0x430] sm:$0xff]
  %v3075 = vld [vmem:[%s2939 + $0x438] sm:$0xff]
  %v3076 = vld [vmem:[%s2939 + $0x440] sm:$0xff]
  %v3077 = vld [vmem:[%s2939 + $0x448] sm:$0xff]
  %v3078 = vld [vmem:[%s2939 + $0x450] sm:$0xff]
  %v3079 = vld [vmem:[%s2939 + $0x458] sm:$0xff]
  %v3080 = vld [vmem:[%s2939 + $0x460] sm:$0xff]
  %v3081 = vld [vmem:[%s2939 + $0x468] sm:$0xff]
  %v3082 = vld [vmem:[%s2939 + $0x470] sm:$0xff]
  %v3083 = vld [vmem:[%s2939 + $0x478] sm:$0xff]
  %v3084 = vld [vmem:[%s2939 + $0x480] sm:$0xff]
  %v3085 = vld [vmem:[%s2939 + $0x488] sm:$0xff]
  %v3086 = vld [vmem:[%s2939 + $0x490] sm:$0xff]
  %v3087 = vld [vmem:[%s2939 + $0x498] sm:$0xff]
  %v3088 = vld [vmem:[%s2939 + $0x4a0] sm:$0xff]
  %v3089 = vld [vmem:[%s2939 + $0x4a8] sm:$0xff]
  %v3090 = vld [vmem:[%s2939 + $0x4b0] sm:$0xff]
  %v3091 = vld [vmem:[%s2939 + $0x4b8] sm:$0xff]
  %v3092 = vld [vmem:[%s2939 + $0x4c0] sm:$0xff]
  %v3093 = vld [vmem:[%s2939 + $0x4c8] sm:$0xff]
  %v3094 = vld [vmem:[%s2939 + $0x4d0] sm:$0xff]
  %v3095 = vld [vmem:[%s2939 + $0x4d8] sm:$0xff]
  %v3096 = vld [vmem:[%s2939 + $0x4e0] sm:$0xff]
  %v3097 = vld [vmem:[%s2939 + $0x4e8] sm:$0xff]
  %v3098 = vld [vmem:[%s2939 + $0x4f0] sm:$0xff]
  %v3099 = vld [vmem:[%s2939 + $0x4f8] sm:$0xff]
  %v3100 = vld [vmem:[%s2939 + $0x500] sm:$0xff]
  %v3101 = vld [vmem:[%s2939 + $0x508] sm:$0xff]
  %v3102 = vld [vmem:[%s2939 + $0x510] sm:$0xff]
  %v3103 = vld [vmem:[%s2939 + $0x518] sm:$0xff]
  %v3104 = vld [vmem:[%s2939 + $0x520] sm:$0xff]
  %v3105 = vld [vmem:[%s2939 + $0x528] sm:$0xff]
  %v3106 = vld [vmem:[%s2939 + $0x530] sm:$0xff]
  %v3107 = vld [vmem:[%s2939 + $0x538] sm:$0xff]
  %v3108 = vld [vmem:[%s2939 + $0x540] sm:$0xff]
  %v3109 = vld [vmem:[%s2939 + $0x548] sm:$0xff]
  %v3110 = vld [vmem:[%s2939 + $0x550] sm:$0xff]
  %v3111 = vld [vmem:[%s2939 + $0x558] sm:$0xff]
  %v3112 = vld [vmem:[%s2939 + $0x560] sm:$0xff]
  %v3113 = vld [vmem:[%s2939 + $0x568] sm:$0xff]
  %v3114 = vld [vmem:[%s2939 + $0x570] sm:$0xff]
  %v3115 = vld [vmem:[%s2939 + $0x578] sm:$0xff]
  %v3116 = vld [vmem:[%s2939 + $0x580] sm:$0xff]
  %v3117 = vld [vmem:[%s2939 + $0x588] sm:$0xff]
  %v3118 = vld [vmem:[%s2939 + $0x590] sm:$0xff]
  %v3119 = vld [vmem:[%s2939 + $0x598] sm:$0xff]
  %v3120 = vld [vmem:[%s2939 + $0x5a0] sm:$0xff]
  %v3121 = vld [vmem:[%s2939 + $0x5a8] sm:$0xff]
  %v3122 = vld [vmem:[%s2939 + $0x5b0] sm:$0xff]
  %v3123 = vld [vmem:[%s2939 + $0x5b8] sm:$0xff]
  %v3124 = vld [vmem:[%s2939 + $0x5c0] sm:$0xff]
  %v3125 = vld [vmem:[%s2939 + $0x5c8] sm:$0xff]
  %v3126 = vld [vmem:[%s2939 + $0x5d0] sm:$0xff]
  %v3127 = vld [vmem:[%s2939 + $0x5d8] sm:$0xff]
  %v3128 = vld [vmem:[%s2939 + $0x5e0] sm:$0xff]
  %v3129 = vld [vmem:[%s2939 + $0x5e8] sm:$0xff]
  %v3130 = vld [vmem:[%s2939 + $0x5f0] sm:$0xff]
  %v3131 = vld [vmem:[%s2939 + $0x5f8] sm:$0xff]
  %v3132 = vld [vmem:[%s2939 + $0x600] sm:$0xff]
  %v3133 = vld [vmem:[%s2939 + $0x608] sm:$0xff]
  %v3134 = vld [vmem:[%s2939 + $0x610] sm:$0xff]
  %v3135 = vld [vmem:[%s2939 + $0x618] sm:$0xff]
  %v3136 = vld [vmem:[%s2939 + $0x620] sm:$0xff]
  %v3137 = vld [vmem:[%s2939 + $0x628] sm:$0xff]
  %v3138 = vld [vmem:[%s2939 + $0x630] sm:$0xff]
  %v3139 = vld [vmem:[%s2939 + $0x638] sm:$0xff]
  %v3140 = vld [vmem:[%s2939 + $0x640] sm:$0xff]
  %v3141 = vld [vmem:[%s2939 + $0x648] sm:$0xff]
  %v3142 = vld [vmem:[%s2939 + $0x650] sm:$0xff]
  %v3143 = vld [vmem:[%s2939 + $0x658] sm:$0xff]
  %v3144 = vld [vmem:[%s2939 + $0x660] sm:$0xff]
  %v3145 = vld [vmem:[%s2939 + $0x668] sm:$0xff]
  %v3146 = vld [vmem:[%s2939 + $0x670] sm:$0xff]
  %v3147 = vld [vmem:[%s2939 + $0x678] sm:$0xff]
  %v3148 = vld [vmem:[%s2939 + $0x680] sm:$0xff]
  %v3149 = vld [vmem:[%s2939 + $0x688] sm:$0xff]
  %v3150 = vld [vmem:[%s2939 + $0x690] sm:$0xff]
  %v3151 = vld [vmem:[%s2939 + $0x698] sm:$0xff]
  %v3152 = vld [vmem:[%s2939 + $0x6a0] sm:$0xff]
  %v3153 = vld [vmem:[%s2939 + $0x6a8] sm:$0xff]
  %v3154 = vld [vmem:[%s2939 + $0x6b0] sm:$0xff]
  %v3155 = vld [vmem:[%s2939 + $0x6b8] sm:$0xff]
  %v3156 = vld [vmem:[%s2939 + $0x6c0] sm:$0xff]
  %v3157 = vld [vmem:[%s2939 + $0x6c8] sm:$0xff]
  %v3158 = vld [vmem:[%s2939 + $0x6d0] sm:$0xff]
  %v3159 = vld [vmem:[%s2939 + $0x6d8] sm:$0xff]
  %v3160 = vld [vmem:[%s2939 + $0x6e0] sm:$0xff]
  %v3161 = vld [vmem:[%s2939 + $0x6e8] sm:$0xff]
  %v3162 = vld [vmem:[%s2939 + $0x6f0] sm:$0xff]
  %v3163 = vld [vmem:[%s2939 + $0x6f8] sm:$0xff]
  %v3164 = vld [vmem:[%s2939 + $0x700] sm:$0xff]
  %v3165 = vld [vmem:[%s2939 + $0x708] sm:$0xff]
  %v3166 = vld [vmem:[%s2939 + $0x710] sm:$0xff]
  %v3167 = vld [vmem:[%s2939 + $0x718] sm:$0xff]
  %v3168 = vld [vmem:[%s2939 + $0x720] sm:$0xff]
  %v3169 = vld [vmem:[%s2939 + $0x728] sm:$0xff]
  %v3170 = vld [vmem:[%s2939 + $0x730] sm:$0xff]
  %v3171 = vld [vmem:[%s2939 + $0x738] sm:$0xff]
  %v3172 = vld [vmem:[%s2939 + $0x740] sm:$0xff]
  %v3173 = vld [vmem:[%s2939 + $0x748] sm:$0xff]
  %v3174 = vld [vmem:[%s2939 + $0x750] sm:$0xff]
  %v3175 = vld [vmem:[%s2939 + $0x758] sm:$0xff]
  %v3176 = vld [vmem:[%s2939 + $0x760] sm:$0xff]
  %v3177 = vld [vmem:[%s2939 + $0x768] sm:$0xff]
  %v3178 = vld [vmem:[%s2939 + $0x770] sm:$0xff]
  %v3179 = vld [vmem:[%s2939 + $0x778] sm:$0xff]
  %v3180 = vld [vmem:[%s2939 + $0x780] sm:$0xff]
  %v3181 = vld [vmem:[%s2939 + $0x788] sm:$0xff]
  %v3182 = vld [vmem:[%s2939 + $0x790] sm:$0xff]
  %v3183 = vld [vmem:[%s2939 + $0x798] sm:$0xff]
  %v3184 = vld [vmem:[%s2939 + $0x7a0] sm:$0xff]
  %v3185 = vld [vmem:[%s2939 + $0x7a8] sm:$0xff]
  %v3186 = vld [vmem:[%s2939 + $0x7b0] sm:$0xff]
  %v3187 = vld [vmem:[%s2939 + $0x7b8] sm:$0xff]
  %v3188 = vld [vmem:[%s2939 + $0x7c0] sm:$0xff]
  %v3189 = vld [vmem:[%s2939 + $0x7c8] sm:$0xff]
  %v3190 = vld [vmem:[%s2939 + $0x7d0] sm:$0xff]
  %v3191 = vld [vmem:[%s2939 + $0x7d8] sm:$0xff]
  %v3192 = vld [vmem:[%s2939 + $0x7e0] sm:$0xff]
  %v3193 = vld [vmem:[%s2939 + $0x7e8] sm:$0xff]
  %v3194 = vld [vmem:[%s2939 + $0x7f0] sm:$0xff]
  %v3195 = vld [vmem:[%s2939 + $0x7f8] sm:$0xff]
  %v3196 = vld [vmem:[%s2939 + $0x800] sm:$0xff]
  %v3197 = vld [vmem:[%s2939 + $0x808] sm:$0xff]
  %v3198 = vld [vmem:[%s2939 + $0x810] sm:$0xff]
  %v3199 = vld [vmem:[%s2939 + $0x818] sm:$0xff]
  %v3200 = vld [vmem:[%s2939 + $0x820] sm:$0xff]
  %v3201 = vld [vmem:[%s2939 + $0x828] sm:$0xff]
  %v3202 = vld [vmem:[%s2939 + $0x830] sm:$0xff]
  %v3203 = vld [vmem:[%s2939 + $0x838] sm:$0xff]
  %v3204 = vld [vmem:[%s2939 + $0x840] sm:$0xff]
  %v3205 = vld [vmem:[%s2939 + $0x848] sm:$0xff]
  %v3206 = vld [vmem:[%s2939 + $0x850] sm:$0xff]
  %v3207 = vld [vmem:[%s2939 + $0x858] sm:$0xff]
  %v3208 = vld [vmem:[%s2939 + $0x860] sm:$0xff]
  %v3209 = vld [vmem:[%s2939 + $0x868] sm:$0xff]
  %v3210 = vld [vmem:[%s2939 + $0x870] sm:$0xff]
  %v3211 = vld [vmem:[%s2939 + $0x878] sm:$0xff]
  %v3212 = vld [vmem:[%s2939 + $0x880] sm:$0xff]
  %v3213 = vld [vmem:[%s2939 + $0x888] sm:$0xff]
  %v3214 = vld [vmem:[%s2939 + $0x890] sm:$0xff]
  %v3215 = vld [vmem:[%s2939 + $0x898] sm:$0xff]
  %v3216 = vld [vmem:[%s2939 + $0x8a0] sm:$0xff]
  %v3217 = vld [vmem:[%s2939 + $0x8a8] sm:$0xff]
  %v3218 = vld [vmem:[%s2939 + $0x8b0] sm:$0xff]
  %v3219 = vld [vmem:[%s2939 + $0x8b8] sm:$0xff]
  %v3220 = vld [vmem:[%s2939 + $0x8c0] sm:$0xff]
  %v3221 = vld [vmem:[%s2939 + $0x8c8] sm:$0xff]
  %v3222 = vld [vmem:[%s2939 + $0x8d0] sm:$0xff]
  %v3223 = vld [vmem:[%s2939 + $0x8d8] sm:$0xff]
  %v3224 = vld [vmem:[%s2939 + $0x8e0] sm:$0xff]
  %v3225 = vld [vmem:[%s2939 + $0x8e8] sm:$0xff]
  %v3226 = vld [vmem:[%s2939 + $0x8f0] sm:$0xff]
  %v3227 = vld [vmem:[%s2939 + $0x8f8] sm:$0xff]
  %v3228 = vld [vmem:[%s2939 + $0x900] sm:$0xff]
  %v3229 = vld [vmem:[%s2939 + $0x908] sm:$0xff]
  %v3230 = vld [vmem:[%s2939 + $0x910] sm:$0xff]
  %v3231 = vld [vmem:[%s2939 + $0x918] sm:$0xff]
  %v3232 = vld [vmem:[%s2939 + $0x920] sm:$0xff]
  %v3233 = vld [vmem:[%s2939 + $0x928] sm:$0xff]
  %v3234 = vld [vmem:[%s2939 + $0x930] sm:$0xff]
  %v3235 = vld [vmem:[%s2939 + $0x938] sm:$0xff]
  %v3236 = vld [vmem:[%s2939 + $0x940] sm:$0xff]
  %v3237 = vld [vmem:[%s2939 + $0x948] sm:$0xff]
  %v3238 = vld [vmem:[%s2939 + $0x950] sm:$0xff]
  %v3239 = vld [vmem:[%s2939 + $0x958] sm:$0xff]
  %v3240 = vld [vmem:[%s2939 + $0x960] sm:$0xff]
  %v3241 = vld [vmem:[%s2939 + $0x968] sm:$0xff]
  %v3242 = vld [vmem:[%s2939 + $0x970] sm:$0xff]
  %v3243 = vld [vmem:[%s2939 + $0x978] sm:$0xff]
  %v3244 = vld [vmem:[%s2939 + $0x980] sm:$0xff]
  %v3245 = vld [vmem:[%s2939 + $0x988] sm:$0xff]
  %v3246 = vld [vmem:[%s2939 + $0x990] sm:$0xff]
  %v3247 = vld [vmem:[%s2939 + $0x998] sm:$0xff]
  %v3248 = vld [vmem:[%s2939 + $0x9a0] sm:$0xff]
  %v3249 = vld [vmem:[%s2939 + $0x9a8] sm:$0xff]
  %v3250 = vld [vmem:[%s2939 + $0x9b0] sm:$0xff]
  %v3251 = vld [vmem:[%s2939 + $0x9b8] sm:$0xff]
  %v3252 = vld [vmem:[%s2939 + $0x9c0] sm:$0xff]
  %v3253 = vld [vmem:[%s2939 + $0x9c8] sm:$0xff]
  %v3254 = vld [vmem:[%s2939 + $0x9d0] sm:$0xff]
  %v3255 = vld [vmem:[%s2939 + $0x9d8] sm:$0xff]
  %v3256 = vld [vmem:[%s2939 + $0x9e0] sm:$0xff]
  %v3257 = vld [vmem:[%s2939 + $0x9e8] sm:$0xff]
  %v3258 = vld [vmem:[%s2939 + $0x9f0] sm:$0xff]
  %v3259 = vld [vmem:[%s2939 + $0x9f8] sm:$0xff]
  %v3260 = vld [vmem:[%s2939 + $0xa00] sm:$0xff]
  %v3261 = vld [vmem:[%s2939 + $0xa08] sm:$0xff]
  %v3262 = vld [vmem:[%s2939 + $0xa10] sm:$0xff]
  %v3263 = vld [vmem:[%s2939 + $0xa18] sm:$0xff]
  %v3264 = vld [vmem:[%s2939 + $0xa20] sm:$0xff]
  %v3265 = vld [vmem:[%s2939 + $0xa28] sm:$0xff]
  %v3266 = vld [vmem:[%s2939 + $0xa30] sm:$0xff]
  %v3267 = vld [vmem:[%s2939 + $0xa38] sm:$0xff]
  %v3268 = vld [vmem:[%s2939 + $0xa40] sm:$0xff]
  %v3269 = vld [vmem:[%s2939 + $0xa48] sm:$0xff]
  %v3270 = vld [vmem:[%s2939 + $0xa50] sm:$0xff]
  %v3271 = vld [vmem:[%s2939 + $0xa58] sm:$0xff]
  %v3272 = vld [vmem:[%s2939 + $0xa60] sm:$0xff]
  %v3273 = vld [vmem:[%s2939 + $0xa68] sm:$0xff]
  %v3274 = vld [vmem:[%s2939 + $0xa70] sm:$0xff]
  %v3275 = vld [vmem:[%s2939 + $0xa78] sm:$0xff]
  %v3276 = vld [vmem:[%s2939 + $0xa80] sm:$0xff]
  %v3277 = vld [vmem:[%s2939 + $0xa88] sm:$0xff]
  %v3278 = vld [vmem:[%s2939 + $0xa90] sm:$0xff]
  %v3279 = vld [vmem:[%s2939 + $0xa98] sm:$0xff]
  %v3280 = vld [vmem:[%s2939 + $0xaa0] sm:$0xff]
  %v3281 = vld [vmem:[%s2939 + $0xaa8] sm:$0xff]
  %v3282 = vld [vmem:[%s2939 + $0xab0] sm:$0xff]
  %v3283 = vld [vmem:[%s2939 + $0xab8] sm:$0xff]
  %v3284 = vld [vmem:[%s2939 + $0xac0] sm:$0xff]
  %v3285 = vld [vmem:[%s2939 + $0xac8] sm:$0xff]
  %v3286 = vld [vmem:[%s2939 + $0xad0] sm:$0xff]
  %v3287 = vld [vmem:[%s2939 + $0xad8] sm:$0xff]
  %v3288 = vld [vmem:[%s2939 + $0xae0] sm:$0xff]
  %v3289 = vld [vmem:[%s2939 + $0xae8] sm:$0xff]
  %v3290 = vld [vmem:[%s2939 + $0xaf0] sm:$0xff]
  %v3291 = vld [vmem:[%s2939 + $0xaf8] sm:$0xff]
  %v3292 = vld [vmem:[%s2939 + $0xb00] sm:$0xff]
  %v3293 = vld [vmem:[%s2939 + $0xb08] sm:$0xff]
  %v3294 = vld [vmem:[%s2939 + $0xb10] sm:$0xff]
  %v3295 = vld [vmem:[%s2939 + $0xb18] sm:$0xff]
  %v3296 = vld [vmem:[%s2939 + $0xb20] sm:$0xff]
  %v3297 = vld [vmem:[%s2939 + $0xb28] sm:$0xff]
  %v3298 = vld [vmem:[%s2939 + $0xb30] sm:$0xff]
  %v3299 = vld [vmem:[%s2939 + $0xb38] sm:$0xff]
  %v3300 = vld [vmem:[%s2939 + $0xb40] sm:$0xff]
  %v3301 = vld [vmem:[%s2939 + $0xb48] sm:$0xff]
  %v3302 = vld [vmem:[%s2939 + $0xb50] sm:$0xff]
  %v3303 = vld [vmem:[%s2939 + $0xb58] sm:$0xff]
  %v3304 = vld [vmem:[%s2939 + $0xb60] sm:$0xff]
  %v3305 = vld [vmem:[%s2939 + $0xb68] sm:$0xff]
  %v3306 = vld [vmem:[%s2939 + $0xb70] sm:$0xff]
  %v3307 = vld [vmem:[%s2939 + $0xb78] sm:$0xff]
  %v3308 = vld [vmem:[%s2939 + $0xb80] sm:$0xff]
  %v3309 = vld [vmem:[%s2939 + $0xb88] sm:$0xff]
  %v3310 = vld [vmem:[%s2939 + $0xb90] sm:$0xff]
  %v3311 = vld [vmem:[%s2939 + $0xb98] sm:$0xff]
  %v3312 = vld [vmem:[%s2939 + $0xba0] sm:$0xff]
  %v3313 = vld [vmem:[%s2939 + $0xba8] sm:$0xff]
  %v3314 = vld [vmem:[%s2939 + $0xbb0] sm:$0xff]
  %v3315 = vld [vmem:[%s2939 + $0xbb8] sm:$0xff]
  %v3316 = vld [vmem:[%s2939 + $0xbc0] sm:$0xff]
  %v3317 = vld [vmem:[%s2939 + $0xbc8] sm:$0xff]
  %v3318 = vld [vmem:[%s2939 + $0xbd0] sm:$0xff]
  %v3319 = vld [vmem:[%s2939 + $0xbd8] sm:$0xff]
  %v3320 = vld [vmem:[%s2939 + $0xbe0] sm:$0xff]
  %v3321 = vld [vmem:[%s2939 + $0xbe8] sm:$0xff]
  %v3322 = vld [vmem:[%s2939 + $0xbf0] sm:$0xff]
  %v3323 = vld [vmem:[%s2939 + $0xbf8] sm:$0xff]
  %v3324 = vld [vmem:[%s2939 + $0xc00] sm:$0xff]
  %v3325 = vld [vmem:[%s2939 + $0xc08] sm:$0xff]
  %v3326 = vld [vmem:[%s2939 + $0xc10] sm:$0xff]
  %v3327 = vld [vmem:[%s2939 + $0xc18] sm:$0xff]
  %v3328 = vld [vmem:[%s2939 + $0xc20] sm:$0xff]
  %v3329 = vld [vmem:[%s2939 + $0xc28] sm:$0xff]
  %v3330 = vld [vmem:[%s2939 + $0xc30] sm:$0xff]
  %v3331 = vld [vmem:[%s2939 + $0xc38] sm:$0xff]
  %3332 = vmatprep.subr.mxu0 %v2941
  %3333 = vmatpush1.msra.mxu0 %v2940
  %3334 = vmatprep.subr.mxu0 %v2945
  %3335 = vmatpush1.msra.mxu0 %v2944
  %3336 = vmatprep.subr.mxu0 %v2949
  %3337 = vmatpush1.msra.mxu0 %v2948
  %3338 = vmatprep.subr.mxu0 %v2953
  %3339 = vmatpush1.msra.mxu0 %v2952
  %3340 = vmatprep.subr.mxu0 %v2957
  %3341 = vmatpush1.msra.mxu0 %v2956
  %3342 = vmatprep.subr.mxu0 %v2961
  %3343 = vmatpush1.msra.mxu0 %v2960
  %3344 = vmatprep.subr.mxu0 %v2965
  %3345 = vmatpush1.msra.mxu0 %v2964
  %3346 = vmatprep.subr.mxu0 %v2969
  %3347 = vmatpush1.msra.mxu0 %v2968
  %3348 = vmatprep.subr.mxu0 %v2973
  %3349 = vmatpush1.msra.mxu0 %v2972
  %3350 = vmatprep.subr.mxu0 %v2977
  %3351 = vmatpush1.msra.mxu0 %v2976
  %3352 = vmatprep.subr.mxu0 %v2981
  %3353 = vmatpush1.msra.mxu0 %v2980
  %3354 = vmatprep.subr.mxu0 %v2985
  %3355 = vmatpush1.msra.mxu0 %v2984
  %3356 = vmatprep.subr.mxu0 %v2989
  %3357 = vmatpush1.msra.mxu0 %v2988
  %3358 = vmatprep.subr.mxu0 %v2993
  %3359 = vmatpush1.msra.mxu0 %v2992
  %3360 = vmatprep.subr.mxu0 %v2997
  %3361 = vmatpush1.msra.mxu0 %v2996
  %3362 = vmatprep.subr.mxu0 %v3001
  %3363 = vmatpush1.msra.mxu0 %v3000
  %3364 = vmatprep.subr.mxu0 %v3005
  %3365 = vmatpush1.msra.mxu0 %v3004
  %3366 = vmatprep.subr.mxu0 %v3009
  %3367 = vmatpush1.msra.mxu0 %v3008
  %3368 = vmatprep.subr.mxu0 %v3013
  %3369 = vmatpush1.msra.mxu0 %v3012
  %3370 = vmatprep.subr.mxu0 %v3017
  %3371 = vmatpush1.msra.mxu0 %v3016
  %3372 = vmatprep.subr.mxu0 %v3021
  %3373 = vmatpush1.msra.mxu0 %v3020
  %3374 = vmatprep.subr.mxu0 %v3025
  %3375 = vmatpush1.msra.mxu0 %v3024
  %3376 = vmatprep.subr.mxu0 %v3029
  %3377 = vmatpush1.msra.mxu0 %v3028
  %3378 = vmatprep.subr.mxu0 %v3033
  %3379 = vmatpush1.msra.mxu0 %v3032
  %3380 = vmatprep.subr.mxu0 %v3037
  %3381 = vmatpush1.msra.mxu0 %v3036
  %3382 = vmatprep.subr.mxu0 %v3041
  %3383 = vmatpush1.msra.mxu0 %v3040
  %3384 = vmatprep.subr.mxu0 %v3045
  %3385 = vmatpush1.msra.mxu0 %v3044
  %3386 = vmatprep.subr.mxu0 %v3049
  %3387 = vmatpush1.msra.mxu0 %v3048
  %3388 = vmatprep.subr.mxu0 %v3053
  %3389 = vmatpush1.msra.mxu0 %v3052
  %3390 = vmatprep.subr.mxu0 %v3057
  %3391 = vmatpush1.msra.mxu0 %v3056
  %3392 = vmatprep.subr.mxu0 %v3061
  %3393 = vmatpush1.msra.mxu0 %v3060
  %3394 = vmatprep.subr.mxu0 %v3065
  %3395 = vmatpush1.msra.mxu0 %v3064
  %3396 = vmatprep.mubr.f32.mxu0 %v39
  %3397 = vmatmul.mubr.f32.gmra.mrb[0].mxu0 %v38
  %v3398 = vpop.f32.mrb[0].mxu0
  %v3399 = vadd.f32 0.0, %v3398
  %v3400 = vpop.f32.mrb[0].mxu0
  %v3401 = vadd.f32 0.0, %v3400
  %3402 = vdwg.mxu0
  %3403 = vmatprep.subr.mxu0 %v3069
  %3404 = vmatpush1.msra.mxu0 %v3068
  %3405 = vmatprep.subr.mxu0 %v3073
  %3406 = vmatpush1.msra.mxu0 %v3072
  %3407 = vmatprep.subr.mxu0 %v3077
  %3408 = vmatpush1.msra.mxu0 %v3076
  %3409 = vmatprep.subr.mxu0 %v3081
  %3410 = vmatpush1.msra.mxu0 %v3080
  %3411 = vmatprep.subr.mxu0 %v3085
  %3412 = vmatpush1.msra.mxu0 %v3084
  %3413 = vmatprep.subr.mxu0 %v3089
  %3414 = vmatpush1.msra.mxu0 %v3088
  %3415 = vmatprep.subr.mxu0 %v3093
  %3416 = vmatpush1.msra.mxu0 %v3092
  %3417 = vmatprep.subr.mxu0 %v3097
  %3418 = vmatpush1.msra.mxu0 %v3096
  %3419 = vmatprep.subr.mxu0 %v3101
  %3420 = vmatpush1.msra.mxu0 %v3100
  %3421 = vmatprep.subr.mxu0 %v3105
  %3422 = vmatpush1.msra.mxu0 %v3104
  %3423 = vmatprep.subr.mxu0 %v3109
  %3424 = vmatpush1.msra.mxu0 %v3108
  %3425 = vmatprep.subr.mxu0 %v3113
  %3426 = vmatpush1.msra.mxu0 %v3112
  %3427 = vmatprep.subr.mxu0 %v3117
  %3428 = vmatpush1.msra.mxu0 %v3116
  %3429 = vmatprep.subr.mxu0 %v3121
  %3430 = vmatpush1.msra.mxu0 %v3120
  %3431 = vmatprep.subr.mxu0 %v3125
  %3432 = vmatpush1.msra.mxu0 %v3124
  %3433 = vmatprep.subr.mxu0 %v3129
  %3434 = vmatpush1.msra.mxu0 %v3128
  %3435 = vmatprep.subr.mxu0 %v3133
  %3436 = vmatpush1.msra.mxu0 %v3132
  %3437 = vmatprep.subr.mxu0 %v3137
  %3438 = vmatpush1.msra.mxu0 %v3136
  %3439 = vmatprep.subr.mxu0 %v3141
  %3440 = vmatpush1.msra.mxu0 %v3140
  %3441 = vmatprep.subr.mxu0 %v3145
  %3442 = vmatpush1.msra.mxu0 %v3144
  %3443 = vmatprep.subr.mxu0 %v3149
  %3444 = vmatpush1.msra.mxu0 %v3148
  %3445 = vmatprep.subr.mxu0 %v3153
  %3446 = vmatpush1.msra.mxu0 %v3152
  %3447 = vmatprep.subr.mxu0 %v3157
  %3448 = vmatpush1.msra.mxu0 %v3156
  %3449 = vmatprep.subr.mxu0 %v3161
  %3450 = vmatpush1.msra.mxu0 %v3160
  %3451 = vmatprep.subr.mxu0 %v3165
  %3452 = vmatpush1.msra.mxu0 %v3164
  %3453 = vmatprep.subr.mxu0 %v3169
  %3454 = vmatpush1.msra.mxu0 %v3168
  %3455 = vmatprep.subr.mxu0 %v3173
  %3456 = vmatpush1.msra.mxu0 %v3172
  %3457 = vmatprep.subr.mxu0 %v3177
  %3458 = vmatpush1.msra.mxu0 %v3176
  %3459 = vmatprep.subr.mxu0 %v3181
  %3460 = vmatpush1.msra.mxu0 %v3180
  %3461 = vmatprep.subr.mxu0 %v3185
  %3462 = vmatpush1.msra.mxu0 %v3184
  %3463 = vmatprep.subr.mxu0 %v3189
  %3464 = vmatpush1.msra.mxu0 %v3188
  %3465 = vmatprep.subr.mxu0 %v3193
  %3466 = vmatpush1.msra.mxu0 %v3192
  %3467 = vmatprep.mubr.f32.mxu0 %v41
  %3468 = vmatmul.mubr.f32.gmra.mrb[0].mxu0 %v40
  %v3469 = vpop.f32.mrb[0].mxu0
  %v3470 = vadd.f32 %v3399, %v3469
  %v3471 = vpop.f32.mrb[0].mxu0
  %v3472 = vadd.f32 %v3401, %v3471
  %3473 = vdwg.mxu0
  %3474 = vmatprep.subr.mxu0 %v3197
  %3475 = vmatpush1.msra.mxu0 %v3196
  %3476 = vmatprep.subr.mxu0 %v3201
  %3477 = vmatpush1.msra.mxu0 %v3200
  %3478 = vmatprep.subr.mxu0 %v3205
  %3479 = vmatpush1.msra.mxu0 %v3204
  %3480 = vmatprep.subr.mxu0 %v3209
  %3481 = vmatpush1.msra.mxu0 %v3208
  %3482 = vmatprep.subr.mxu0 %v3213
  %3483 = vmatpush1.msra.mxu0 %v3212
  %3484 = vmatprep.subr.mxu0 %v3217
  %3485 = vmatpush1.msra.mxu0 %v3216
  %3486 = vmatprep.subr.mxu0 %v3221
  %3487 = vmatpush1.msra.mxu0 %v3220
  %3488 = vmatprep.subr.mxu0 %v3225
  %3489 = vmatpush1.msra.mxu0 %v3224
  %3490 = vmatprep.subr.mxu0 %v3229
  %3491 = vmatpush1.msra.mxu0 %v3228
  %3492 = vmatprep.subr.mxu0 %v3233
  %3493 = vmatpush1.msra.mxu0 %v3232
  %3494 = vmatprep.subr.mxu0 %v3237
  %3495 = vmatpush1.msra.mxu0 %v3236
  %3496 = vmatprep.subr.mxu0 %v3241
  %3497 = vmatpush1.msra.mxu0 %v3240
  %3498 = vmatprep.subr.mxu0 %v3245
  %3499 = vmatpush1.msra.mxu0 %v3244
  %3500 = vmatprep.subr.mxu0 %v3249
  %3501 = vmatpush1.msra.mxu0 %v3248
  %3502 = vmatprep.subr.mxu0 %v3253
  %3503 = vmatpush1.msra.mxu0 %v3252
  %3504 = vmatprep.subr.mxu0 %v3257
  %3505 = vmatpush1.msra.mxu0 %v3256
  %3506 = vmatprep.subr.mxu0 %v3261
  %3507 = vmatpush1.msra.mxu0 %v3260
  %3508 = vmatprep.subr.mxu0 %v3265
  %3509 = vmatpush1.msra.mxu0 %v3264
  %3510 = vmatprep.subr.mxu0 %v3269
  %3511 = vmatpush1.msra.mxu0 %v3268
  %3512 = vmatprep.subr.mxu0 %v3273
  %3513 = vmatpush1.msra.mxu0 %v3272
  %3514 = vmatprep.subr.mxu0 %v3277
  %3515 = vmatpush1.msra.mxu0 %v3276
  %3516 = vmatprep.subr.mxu0 %v3281
  %3517 = vmatpush1.msra.mxu0 %v3280
  %3518 = vmatprep.subr.mxu0 %v3285
  %3519 = vmatpush1.msra.mxu0 %v3284
  %3520 = vmatprep.subr.mxu0 %v3289
  %3521 = vmatpush1.msra.mxu0 %v3288
  %3522 = vmatprep.subr.mxu0 %v3293
  %3523 = vmatpush1.msra.mxu0 %v3292
  %3524 = vmatprep.subr.mxu0 %v3297
  %3525 = vmatpush1.msra.mxu0 %v3296
  %3526 = vmatprep.subr.mxu0 %v3301
  %3527 = vmatpush1.msra.mxu0 %v3300
  %3528 = vmatprep.subr.mxu0 %v3305
  %3529 = vmatpush1.msra.mxu0 %v3304
  %3530 = vmatprep.subr.mxu0 %v3309
  %3531 = vmatpush1.msra.mxu0 %v3308
  %3532 = vmatprep.subr.mxu0 %v3313
  %3533 = vmatpush1.msra.mxu0 %v3312
  %3534 = vmatprep.subr.mxu0 %v3317
  %3535 = vmatpush1.msra.mxu0 %v3316
  %3536 = vmatprep.subr.mxu0 %v3321
  %3537 = vmatpush1.msra.mxu0 %v3320
  %3538 = vmatprep.mubr.f32.mxu0 %v43
  %3539 = vmatmul.mubr.f32.gmra.mrb[0].mxu0 %v42
  %v3540 = vpop.f32.mrb[0].mxu0
  %v3541 = vadd.f32 %v3470, %v3540
  %v3542 = vpop.f32.mrb[0].mxu0
  %v3543 = vadd.f32 %v3472, %v3542
  %3544 = vdwg.mxu0
  %3545 = vmatprep.subr.mxu0 %v3325
  %3546 = vmatpush1.msra.mxu0 %v3324
  %3547 = vmatprep.subr.mxu0 %v3329
  %3548 = vmatpush1.msra.mxu0 %v3328
  %3549 = vmatprep.subr.mxu0 0.0
  %3550 = vmatpush1.msra.mxu0 0.0
  %3551 = vmatprep.subr.mxu0 0.0
  %3552 = vmatpush1.msra.mxu0 0.0
  %3553 = vmatprep.subr.mxu0 0.0
  %3554 = vmatpush1.msra.mxu0 0.0
  %3555 = vmatprep.subr.mxu0 0.0
  %3556 = vmatpush1.msra.mxu0 0.0
  %3557 = vmatprep.subr.mxu0 0.0
  %3558 = vmatpush1.msra.mxu0 0.0
  %3559 = vmatprep.subr.mxu0 0.0
  %3560 = vmatpush1.msra.mxu0 0.0
  %3561 = vmatprep.subr.mxu0 0.0
  %3562 = vmatpush1.msra.mxu0 0.0
  %3563 = vmatprep.subr.mxu0 0.0
  %3564 = vmatpush1.msra.mxu0 0.0
  %3565 = vmatprep.subr.mxu0 0.0
  %3566 = vmatpush1.msra.mxu0 0.0
  %3567 = vmatprep.subr.mxu0 0.0
  %3568 = vmatpush1.msra.mxu0 0.0
  %3569 = vmatprep.subr.mxu0 0.0
  %3570 = vmatpush1.msra.mxu0 0.0
  %3571 = vmatprep.subr.mxu0 0.0
  %3572 = vmatpush1.msra.mxu0 0.0
  %3573 = vmatprep.subr.mxu0 0.0
  %3574 = vmatpush1.msra.mxu0 0.0
  %3575 = vmatprep.subr.mxu0 0.0
  %3576 = vmatpush1.msra.mxu0 0.0
  %3577 = vmatprep.subr.mxu0 0.0
  %3578 = vmatpush1.msra.mxu0 0.0
  %3579 = vmatprep.subr.mxu0 0.0
  %3580 = vmatpush1.msra.mxu0 0.0
  %3581 = vmatprep.subr.mxu0 0.0
  %3582 = vmatpush1.msra.mxu0 0.0
  %3583 = vmatprep.subr.mxu0 0.0
  %3584 = vmatpush1.msra.mxu0 0.0
  %3585 = vmatprep.subr.mxu0 0.0
  %3586 = vmatpush1.msra.mxu0 0.0
  %3587 = vmatprep.subr.mxu0 0.0
  %3588 = vmatpush1.msra.mxu0 0.0
  %3589 = vmatprep.subr.mxu0 0.0
  %3590 = vmatpush1.msra.mxu0 0.0
  %3591 = vmatprep.subr.mxu0 0.0
  %3592 = vmatpush1.msra.mxu0 0.0
  %3593 = vmatprep.subr.mxu0 0.0
  %3594 = vmatpush1.msra.mxu0 0.0
  %3595 = vmatprep.subr.mxu0 0.0
  %3596 = vmatpush1.msra.mxu0 0.0
  %3597 = vmatprep.subr.mxu0 0.0
  %3598 = vmatpush1.msra.mxu0 0.0
  %3599 = vmatprep.subr.mxu0 0.0
  %3600 = vmatpush1.msra.mxu0 0.0
  %3601 = vmatprep.subr.mxu0 0.0
  %3602 = vmatpush1.msra.mxu0 0.0
  %3603 = vmatprep.subr.mxu0 0.0
  %3604 = vmatpush1.msra.mxu0 0.0
  %3605 = vmatprep.subr.mxu0 0.0
  %3606 = vmatpush1.msra.mxu0 0.0
  %3607 = vmatprep.subr.mxu0 0.0
  %3608 = vmatpush1.msra.mxu0 0.0
  %3609 = vmatprep.mubr.f32.mxu0 0.0
  %3610 = vmatmul.mubr.f32.gmra.mrb[0].mxu0 %v439
  %v3611 = vpop.f32.mrb[0].mxu0
  %v3612 = vadd.f32 %v3541, %v3611
  %v3613 = vpop.f32.mrb[0].mxu0
  %v3614 = vadd.f32 %v3543, %v3613
  %3615 = vdwg.mxu0
  %3616 = vmatprep.subr.mxu0 %v2943
  %3617 = vmatpush1.msra.mxu0 %v2942
  %3618 = vmatprep.subr.mxu0 %v2947
  %3619 = vmatpush1.msra.mxu0 %v2946
  %3620 = vmatprep.subr.mxu0 %v2951
  %3621 = vmatpush1.msra.mxu0 %v2950
  %3622 = vmatprep.subr.mxu0 %v2955
  %3623 = vmatpush1.msra.mxu0 %v2954
  %3624 = vmatprep.subr.mxu0 %v2959
  %3625 = vmatpush1.msra.mxu0 %v2958
  %3626 = vmatprep.subr.mxu0 %v2963
  %3627 = vmatpush1.msra.mxu0 %v2962
  %3628 = vmatprep.subr.mxu0 %v2967
  %3629 = vmatpush1.msra.mxu0 %v2966
  %3630 = vmatprep.subr.mxu0 %v2971
  %3631 = vmatpush1.msra.mxu0 %v2970
  %3632 = vmatprep.subr.mxu0 %v2975
  %3633 = vmatpush1.msra.mxu0 %v2974
  %3634 = vmatprep.subr.mxu0 %v2979
  %3635 = vmatpush1.msra.mxu0 %v2978
  %3636 = vmatprep.subr.mxu0 %v2983
  %3637 = vmatpush1.msra.mxu0 %v2982
  %3638 = vmatprep.subr.mxu0 %v2987
  %3639 = vmatpush1.msra.mxu0 %v2986
  %3640 = vmatprep.subr.mxu0 %v2991
  %3641 = vmatpush1.msra.mxu0 %v2990
  %3642 = vmatprep.subr.mxu0 %v2995
  %3643 = vmatpush1.msra.mxu0 %v2994
  %3644 = vmatprep.subr.mxu0 %v2999
  %3645 = vmatpush1.msra.mxu0 %v2998
  %3646 = vmatprep.subr.mxu0 %v3003
  %3647 = vmatpush1.msra.mxu0 %v3002
  %3648 = vmatprep.subr.mxu0 %v3007
  %3649 = vmatpush1.msra.mxu0 %v3006
  %3650 = vmatprep.subr.mxu0 %v3011
  %3651 = vmatpush1.msra.mxu0 %v3010
  %3652 = vmatprep.subr.mxu0 %v3015
  %3653 = vmatpush1.msra.mxu0 %v3014
  %3654 = vmatprep.subr.mxu0 %v3019
  %3655 = vmatpush1.msra.mxu0 %v3018
  %3656 = vmatprep.subr.mxu0 %v3023
  %3657 = vmatpush1.msra.mxu0 %v3022
  %3658 = vmatprep.subr.mxu0 %v3027
  %3659 = vmatpush1.msra.mxu0 %v3026
  %3660 = vmatprep.subr.mxu0 %v3031
  %3661 = vmatpush1.msra.mxu0 %v3030
  %3662 = vmatprep.subr.mxu0 %v3035
  %3663 = vmatpush1.msra.mxu0 %v3034
  %3664 = vmatprep.subr.mxu0 %v3039
  %3665 = vmatpush1.msra.mxu0 %v3038
  %3666 = vmatprep.subr.mxu0 %v3043
  %3667 = vmatpush1.msra.mxu0 %v3042
  %3668 = vmatprep.subr.mxu0 %v3047
  %3669 = vmatpush1.msra.mxu0 %v3046
  %3670 = vmatprep.subr.mxu0 %v3051
  %3671 = vmatpush1.msra.mxu0 %v3050
  %3672 = vmatprep.subr.mxu0 %v3055
  %3673 = vmatpush1.msra.mxu0 %v3054
  %3674 = vmatprep.subr.mxu0 %v3059
  %3675 = vmatpush1.msra.mxu0 %v3058
  %3676 = vmatprep.subr.mxu0 %v3063
  %3677 = vmatpush1.msra.mxu0 %v3062
  %3678 = vmatprep.subr.mxu0 %v3067
  %3679 = vmatpush1.msra.mxu0 %v3066
  %3680 = vmatprep.mubr.f32.mxu0 %v39
  %3681 = vmatmul.mubr.f32.gmra.mrb[0].mxu0 %v38
  %v3682 = vpop.f32.mrb[0].mxu0
  %v3683 = vadd.f32 0.0, %v3682
  %v3684 = vpop.f32.mrb[0].mxu0
  %v3685 = vadd.f32 0.0, %v3684
  %3686 = vdwg.mxu0
  %3687 = vmatprep.subr.mxu0 %v3071
  %3688 = vmatpush1.msra.mxu0 %v3070
  %3689 = vmatprep.subr.mxu0 %v3075
  %3690 = vmatpush1.msra.mxu0 %v3074
  %3691 = vmatprep.subr.mxu0 %v3079
  %3692 = vmatpush1.msra.mxu0 %v3078
  %3693 = vmatprep.subr.mxu0 %v3083
  %3694 = vmatpush1.msra.mxu0 %v3082
  %3695 = vmatprep.subr.mxu0 %v3087
  %3696 = vmatpush1.msra.mxu0 %v3086
  %3697 = vmatprep.subr.mxu0 %v3091
  %3698 = vmatpush1.msra.mxu0 %v3090
  %3699 = vmatprep.subr.mxu0 %v3095
  %3700 = vmatpush1.msra.mxu0 %v3094
  %3701 = vmatprep.subr.mxu0 %v3099
  %3702 = vmatpush1.msra.mxu0 %v3098
  %3703 = vmatprep.subr.mxu0 %v3103
  %3704 = vmatpush1.msra.mxu0 %v3102
  %3705 = vmatprep.subr.mxu0 %v3107
  %3706 = vmatpush1.msra.mxu0 %v3106
  %3707 = vmatprep.subr.mxu0 %v3111
  %3708 = vmatpush1.msra.mxu0 %v3110
  %3709 = vmatprep.subr.mxu0 %v3115
  %3710 = vmatpush1.msra.mxu0 %v3114
  %3711 = vmatprep.subr.mxu0 %v3119
  %3712 = vmatpush1.msra.mxu0 %v3118
  %3713 = vmatprep.subr.mxu0 %v3123
  %3714 = vmatpush1.msra.mxu0 %v3122
  %3715 = vmatprep.subr.mxu0 %v3127
  %3716 = vmatpush1.msra.mxu0 %v3126
  %3717 = vmatprep.subr.mxu0 %v3131
  %3718 = vmatpush1.msra.mxu0 %v3130
  %3719 = vmatprep.subr.mxu0 %v3135
  %3720 = vmatpush1.msra.mxu0 %v3134
  %3721 = vmatprep.subr.mxu0 %v3139
  %3722 = vmatpush1.msra.mxu0 %v3138
  %3723 = vmatprep.subr.mxu0 %v3143
  %3724 = vmatpush1.msra.mxu0 %v3142
  %3725 = vmatprep.subr.mxu0 %v3147
  %3726 = vmatpush1.msra.mxu0 %v3146
  %3727 = vmatprep.subr.mxu0 %v3151
  %3728 = vmatpush1.msra.mxu0 %v3150
  %3729 = vmatprep.subr.mxu0 %v3155
  %3730 = vmatpush1.msra.mxu0 %v3154
  %3731 = vmatprep.subr.mxu0 %v3159
  %3732 = vmatpush1.msra.mxu0 %v3158
  %3733 = vmatprep.subr.mxu0 %v3163
  %3734 = vmatpush1.msra.mxu0 %v3162
  %3735 = vmatprep.subr.mxu0 %v3167
  %3736 = vmatpush1.msra.mxu0 %v3166
  %3737 = vmatprep.subr.mxu0 %v3171
  %3738 = vmatpush1.msra.mxu0 %v3170
  %3739 = vmatprep.subr.mxu0 %v3175
  %3740 = vmatpush1.msra.mxu0 %v3174
  %3741 = vmatprep.subr.mxu0 %v3179
  %3742 = vmatpush1.msra.mxu0 %v3178
  %3743 = vmatprep.subr.mxu0 %v3183
  %3744 = vmatpush1.msra.mxu0 %v3182
  %3745 = vmatprep.subr.mxu0 %v3187
  %3746 = vmatpush1.msra.mxu0 %v3186
  %3747 = vmatprep.subr.mxu0 %v3191
  %3748 = vmatpush1.msra.mxu0 %v3190
  %3749 = vmatprep.subr.mxu0 %v3195
  %3750 = vmatpush1.msra.mxu0 %v3194
  %3751 = vmatprep.mubr.f32.mxu0 %v41
  %3752 = vmatmul.mubr.f32.gmra.mrb[0].mxu0 %v40
  %v3753 = vpop.f32.mrb[0].mxu0
  %v3754 = vadd.f32 %v3683, %v3753
  %v3755 = vpop.f32.mrb[0].mxu0
  %v3756 = vadd.f32 %v3685, %v3755
  %3757 = vdwg.mxu0
  %3758 = vmatprep.subr.mxu0 %v3199
  %3759 = vmatpush1.msra.mxu0 %v3198
  %3760 = vmatprep.subr.mxu0 %v3203
  %3761 = vmatpush1.msra.mxu0 %v3202
  %3762 = vmatprep.subr.mxu0 %v3207
  %3763 = vmatpush1.msra.mxu0 %v3206
  %3764 = vmatprep.subr.mxu0 %v3211
  %3765 = vmatpush1.msra.mxu0 %v3210
  %3766 = vmatprep.subr.mxu0 %v3215
  %3767 = vmatpush1.msra.mxu0 %v3214
  %3768 = vmatprep.subr.mxu0 %v3219
  %3769 = vmatpush1.msra.mxu0 %v3218
  %3770 = vmatprep.subr.mxu0 %v3223
  %3771 = vmatpush1.msra.mxu0 %v3222
  %3772 = vmatprep.subr.mxu0 %v3227
  %3773 = vmatpush1.msra.mxu0 %v3226
  %3774 = vmatprep.subr.mxu0 %v3231
  %3775 = vmatpush1.msra.mxu0 %v3230
  %3776 = vmatprep.subr.mxu0 %v3235
  %3777 = vmatpush1.msra.mxu0 %v3234
  %3778 = vmatprep.subr.mxu0 %v3239
  %3779 = vmatpush1.msra.mxu0 %v3238
  %3780 = vmatprep.subr.mxu0 %v3243
  %3781 = vmatpush1.msra.mxu0 %v3242
  %3782 = vmatprep.subr.mxu0 %v3247
  %3783 = vmatpush1.msra.mxu0 %v3246
  %3784 = vmatprep.subr.mxu0 %v3251
  %3785 = vmatpush1.msra.mxu0 %v3250
  %3786 = vmatprep.subr.mxu0 %v3255
  %3787 = vmatpush1.msra.mxu0 %v3254
  %3788 = vmatprep.subr.mxu0 %v3259
  %3789 = vmatpush1.msra.mxu0 %v3258
  %3790 = vmatprep.subr.mxu0 %v3263
  %3791 = vmatpush1.msra.mxu0 %v3262
  %3792 = vmatprep.subr.mxu0 %v3267
  %3793 = vmatpush1.msra.mxu0 %v3266
  %3794 = vmatprep.subr.mxu0 %v3271
  %3795 = vmatpush1.msra.mxu0 %v3270
  %3796 = vmatprep.subr.mxu0 %v3275
  %3797 = vmatpush1.msra.mxu0 %v3274
  %3798 = vmatprep.subr.mxu0 %v3279
  %3799 = vmatpush1.msra.mxu0 %v3278
  %3800 = vmatprep.subr.mxu0 %v3283
  %3801 = vmatpush1.msra.mxu0 %v3282
  %3802 = vmatprep.subr.mxu0 %v3287
  %3803 = vmatpush1.msra.mxu0 %v3286
  %3804 = vmatprep.subr.mxu0 %v3291
  %3805 = vmatpush1.msra.mxu0 %v3290
  %3806 = vmatprep.subr.mxu0 %v3295
  %3807 = vmatpush1.msra.mxu0 %v3294
  %3808 = vmatprep.subr.mxu0 %v3299
  %3809 = vmatpush1.msra.mxu0 %v3298
  %3810 = vmatprep.subr.mxu0 %v3303
  %3811 = vmatpush1.msra.mxu0 %v3302
  %3812 = vmatprep.subr.mxu0 %v3307
  %3813 = vmatpush1.msra.mxu0 %v3306
  %3814 = vmatprep.subr.mxu0 %v3311
  %3815 = vmatpush1.msra.mxu0 %v3310
  %3816 = vmatprep.subr.mxu0 %v3315
  %3817 = vmatpush1.msra.mxu0 %v3314
  %3818 = vmatprep.subr.mxu0 %v3319
  %3819 = vmatpush1.msra.mxu0 %v3318
  %3820 = vmatprep.subr.mxu0 %v3323
  %3821 = vmatpush1.msra.mxu0 %v3322
  %3822 = vmatprep.mubr.f32.mxu0 %v43
  %3823 = vmatmul.mubr.f32.gmra.mrb[0].mxu0 %v42
  %v3824 = vpop.f32.mrb[0].mxu0
  %v3825 = vadd.f32 %v3754, %v3824
  %v3826 = vpop.f32.mrb[0].mxu0
  %v3827 = vadd.f32 %v3756, %v3826
  %3828 = vdwg.mxu0
  %3829 = vmatprep.subr.mxu0 %v3327
  %3830 = vmatpush1.msra.mxu0 %v3326
  %3831 = vmatprep.subr.mxu0 %v3331
  %3832 = vmatpush1.msra.mxu0 %v3330
  %3833 = vmatprep.subr.mxu0 0.0
  %3834 = vmatpush1.msra.mxu0 0.0
  %3835 = vmatprep.subr.mxu0 0.0
  %3836 = vmatpush1.msra.mxu0 0.0
  %3837 = vmatprep.subr.mxu0 0.0
  %3838 = vmatpush1.msra.mxu0 0.0
  %3839 = vmatprep.subr.mxu0 0.0
  %3840 = vmatpush1.msra.mxu0 0.0
  %3841 = vmatprep.subr.mxu0 0.0
  %3842 = vmatpush1.msra.mxu0 0.0
  %3843 = vmatprep.subr.mxu0 0.0
  %3844 = vmatpush1.msra.mxu0 0.0
  %3845 = vmatprep.subr.mxu0 0.0
  %3846 = vmatpush1.msra.mxu0 0.0
  %3847 = vmatprep.subr.mxu0 0.0
  %3848 = vmatpush1.msra.mxu0 0.0
  %3849 = vmatprep.subr.mxu0 0.0
  %3850 = vmatpush1.msra.mxu0 0.0
  %3851 = vmatprep.subr.mxu0 0.0
  %3852 = vmatpush1.msra.mxu0 0.0
  %3853 = vmatprep.subr.mxu0 0.0
  %3854 = vmatpush1.msra.mxu0 0.0
  %3855 = vmatprep.subr.mxu0 0.0
  %3856 = vmatpush1.msra.mxu0 0.0
  %3857 = vmatprep.subr.mxu0 0.0
  %3858 = vmatpush1.msra.mxu0 0.0
  %3859 = vmatprep.subr.mxu0 0.0
  %3860 = vmatpush1.msra.mxu0 0.0
  %3861 = vmatprep.subr.mxu0 0.0
  %3862 = vmatpush1.msra.mxu0 0.0
  %3863 = vmatprep.subr.mxu0 0.0
  %3864 = vmatpush1.msra.mxu0 0.0
  %3865 = vmatprep.subr.mxu0 0.0
  %3866 = vmatpush1.msra.mxu0 0.0
  %3867 = vmatprep.subr.mxu0 0.0
  %3868 = vmatpush1.msra.mxu0 0.0
  %3869 = vmatprep.subr.mxu0 0.0
  %3870 = vmatpush1.msra.mxu0 0.0
  %3871 = vmatprep.subr.mxu0 0.0
  %3872 = vmatpush1.msra.mxu0 0.0
  %3873 = vmatprep.subr.mxu0 0.0
  %3874 = vmatpush1.msra.mxu0 0.0
  %3875 = vmatprep.subr.mxu0 0.0
  %3876 = vmatpush1.msra.mxu0 0.0
  %3877 = vmatprep.subr.mxu0 0.0
  %3878 = vmatpush1.msra.mxu0 0.0
  %3879 = vmatprep.subr.mxu0 0.0
  %3880 = vmatpush1.msra.mxu0 0.0
  %3881 = vmatprep.subr.mxu0 0.0
  %3882 = vmatpush1.msra.mxu0 0.0
  %3883 = vmatprep.subr.mxu0 0.0
  %3884 = vmatpush1.msra.mxu0 0.0
  %3885 = vmatprep.subr.mxu0 0.0
  %3886 = vmatpush1.msra.mxu0 0.0
  %3887 = vmatprep.subr.mxu0 0.0
  %3888 = vmatpush1.msra.mxu0 0.0
  %3889 = vmatprep.subr.mxu0 0.0
  %3890 = vmatpush1.msra.mxu0 0.0
  %3891 = vmatprep.subr.mxu0 0.0
  %3892 = vmatpush1.msra.mxu0 0.0
  %3893 = vmatprep.mubr.f32.mxu0 0.0
  %3894 = vmatmul.mubr.f32.gmra.mrb[0].mxu0 %v439
  %v3895 = vpop.f32.mrb[0].mxu0
  %v3896 = vadd.f32 %v3825, %v3895
  %v3897 = vpop.f32.mrb[0].mxu0
  %v3898 = vadd.f32 %v3827, %v3897
  %3899 = vdwg.mxu0
  %v3900 = vmax.f32 %v2935, %v3612
  %v3901 = vmax.f32 %v2936, %v3614
  %v3902 = vmax.f32 %v2937, %v3896
  %v3903 = vmax.f32 %v2938, %v3898
  %v3904 = vld [vmem:[%s2] sm:$0xf]
  %v3906 = vlaneseq
  %v3907 = vshrl.u32 %v3906, 7
  %v3908 = vsub.s32 0, %v3907
  %v3909 = vrot.slane %v3904, %v3908
  %v3910 = vlaneseq
  %v3911 = vshrl.u32 %v3910, 7
  %v3912 = vsub.s32 1, %v3911
  %v3913 = vrot.slane %v3904, %v3912
  %v3914 = vlaneseq
  %v3915 = vshrl.u32 %v3914, 7
  %v3916 = vsub.s32 2, %v3915
  %v3917 = vrot.slane %v3904, %v3916
  %v3918 = vlaneseq
  %v3919 = vshrl.u32 %v3918, 7
  %v3920 = vsub.s32 3, %v3919
  %v3921 = vrot.slane %v3904, %v3920
  %v3926 = vadd.f32 %v3900, %v3909
  %v3927 = vadd.f32 %v3901, %v3913
  %v3928 = vadd.f32 %v3902, %v3917
  %v3929 = vadd.f32 %v3903, %v3921
  %v3930 = vmax.f32 %v3926, 0.0
  %v3931 = vmax.f32 %v3927, 0.0
  %v3932 = vmax.f32 %v3928, 0.0
  %v3933 = vmax.f32 %v3929, 0.0
  %v3934 = vld [vmem:[%s3] sm:$0xff]
  %v3935 = vld [vmem:[%s3 + $0x8] sm:$0xff]
  %v3936 = vld [vmem:[%s3 + $0x10] sm:$0xff]
  %v3937 = vld [vmem:[%s3 + $0x18] sm:$0xff]
  %v3938 = vld [vmem:[%s3 + $0x20] sm:$0xff]
  %v3939 = vld [vmem:[%s3 + $0x28] sm:$0xff]
  %v3940 = vld [vmem:[%s3 + $0x30] sm:$0xff]
  %v3941 = vld [vmem:[%s3 + $0x38] sm:$0xff]
  %v3942 = vld [vmem:[%s3 + $0x40] sm:$0xff]
  %v3943 = vld [vmem:[%s3 + $0x48] sm:$0xff]
  %v3944 = vld [vmem:[%s3 + $0x50] sm:$0xff]
  %v3945 = vld [vmem:[%s3 + $0x58] sm:$0xff]
  %v3946 = vld [vmem:[%s3 + $0x60] sm:$0xff]
  %v3947 = vld [vmem:[%s3 + $0x68] sm:$0xff]
  %v3948 = vld [vmem:[%s3 + $0x70] sm:$0xff]
  %v3949 = vld [vmem:[%s3 + $0x78] sm:$0xff]
  %v3950 = vld [vmem:[%s3 + $0x80] sm:$0xff]
  %v3951 = vld [vmem:[%s3 + $0x88] sm:$0xff]
  %v3952 = vld [vmem:[%s3 + $0x90] sm:$0xff]
  %v3953 = vld [vmem:[%s3 + $0x98] sm:$0xff]
  %v3954 = vld [vmem:[%s3 + $0xa0] sm:$0xff]
  %v3955 = vld [vmem:[%s3 + $0xa8] sm:$0xff]
  %v3956 = vld [vmem:[%s3 + $0xb0] sm:$0xff]
  %v3957 = vld [vmem:[%s3 + $0xb8] sm:$0xff]
  %v3958 = vld [vmem:[%s3 + $0xc0] sm:$0xff]
  %v3959 = vld [vmem:[%s3 + $0xc8] sm:$0xff]
  %v3960 = vld [vmem:[%s3 + $0xd0] sm:$0xff]
  %v3961 = vld [vmem:[%s3 + $0xd8] sm:$0xff]
  %v3962 = vld [vmem:[%s3 + $0xe0] sm:$0xff]
  %v3963 = vld [vmem:[%s3 + $0xe8] sm:$0xff]
  %v3964 = vld [vmem:[%s3 + $0xf0] sm:$0xff]
  %v3965 = vld [vmem:[%s3 + $0xf8] sm:$0xff]
  %v3966 = vld [vmem:[%s3 + $0x100] sm:$0xff]
  %v3967 = vld [vmem:[%s3 + $0x108] sm:$0xff]
  %v3968 = vld [vmem:[%s3 + $0x110] sm:$0xff]
  %v3969 = vld [vmem:[%s3 + $0x118] sm:$0xff]
  %v3970 = vld [vmem:[%s3 + $0x120] sm:$0xff]
  %v3971 = vld [vmem:[%s3 + $0x128] sm:$0xff]
  %v3972 = vld [vmem:[%s3 + $0x130] sm:$0xff]
  %v3973 = vld [vmem:[%s3 + $0x138] sm:$0xff]
  %v3974 = vld [vmem:[%s3 + $0x140] sm:$0xff]
  %v3975 = vld [vmem:[%s3 + $0x148] sm:$0xff]
  %v3976 = vld [vmem:[%s3 + $0x150] sm:$0xff]
  %v3977 = vld [vmem:[%s3 + $0x158] sm:$0xff]
  %v3978 = vld [vmem:[%s3 + $0x160] sm:$0xff]
  %v3979 = vld [vmem:[%s3 + $0x168] sm:$0xff]
  %v3980 = vld [vmem:[%s3 + $0x170] sm:$0xff]
  %v3981 = vld [vmem:[%s3 + $0x178] sm:$0xff]
  %v3982 = vld [vmem:[%s3 + $0x180] sm:$0xff]
  %v3983 = vld [vmem:[%s3 + $0x188] sm:$0xff]
  %v3985 = vsel %vm437, %v3933, 0
  %3987 = vmatprep.subr.mxu0 0.0
  %3988 = vmatpush1.msra.mxu0 %v3934
  %3989 = vmatprep.subr.mxu0 0.0
  %3990 = vmatpush1.msra.mxu0 %v3935
  %3991 = vmatprep.subr.mxu0 0.0
  %3992 = vmatpush1.msra.mxu0 %v3936
  %3993 = vmatprep.subr.mxu0 0.0
  %3994 = vmatpush1.msra.mxu0 %v3937
  %3995 = vmatprep.subr.mxu0 0.0
  %3996 = vmatpush1.msra.mxu0 %v3938
  %3997 = vmatprep.subr.mxu0 0.0
  %3998 = vmatpush1.msra.mxu0 %v3939
  %3999 = vmatprep.subr.mxu0 0.0
  %4000 = vmatpush1.msra.mxu0 %v3940
  %4001 = vmatprep.subr.mxu0 0.0
  %4002 = vmatpush1.msra.mxu0 %v3941
  %4003 = vmatprep.subr.mxu0 0.0
  %4004 = vmatpush1.msra.mxu0 %v3942
  %4005 = vmatprep.subr.mxu0 0.0
  %4006 = vmatpush1.msra.mxu0 %v3943
  %4007 = vmatprep.subr.mxu0 0.0
  %4008 = vmatpush1.msra.mxu0 %v3944
  %4009 = vmatprep.subr.mxu0 0.0
  %4010 = vmatpush1.msra.mxu0 %v3945
  %4011 = vmatprep.subr.mxu0 0.0
  %4012 = vmatpush1.msra.mxu0 %v3946
  %4013 = vmatprep.subr.mxu0 0.0
  %4014 = vmatpush1.msra.mxu0 %v3947
  %4015 = vmatprep.subr.mxu0 0.0
  %4016 = vmatpush1.msra.mxu0 %v3948
  %4017 = vmatprep.subr.mxu0 0.0
  %4018 = vmatpush1.msra.mxu0 %v3949
  %4019 = vmatprep.subr.mxu0 0.0
  %4020 = vmatpush1.msra.mxu0 %v3950
  %4021 = vmatprep.subr.mxu0 0.0
  %4022 = vmatpush1.msra.mxu0 %v3951
  %4023 = vmatprep.subr.mxu0 0.0
  %4024 = vmatpush1.msra.mxu0 %v3952
  %4025 = vmatprep.subr.mxu0 0.0
  %4026 = vmatpush1.msra.mxu0 %v3953
  %4027 = vmatprep.subr.mxu0 0.0
  %4028 = vmatpush1.msra.mxu0 %v3954
  %4029 = vmatprep.subr.mxu0 0.0
  %4030 = vmatpush1.msra.mxu0 %v3955
  %4031 = vmatprep.subr.mxu0 0.0
  %4032 = vmatpush1.msra.mxu0 %v3956
  %4033 = vmatprep.subr.mxu0 0.0
  %4034 = vmatpush1.msra.mxu0 %v3957
  %4035 = vmatprep.subr.mxu0 0.0
  %4036 = vmatpush1.msra.mxu0 %v3958
  %4037 = vmatprep.subr.mxu0 0.0
  %4038 = vmatpush1.msra.mxu0 %v3959
  %4039 = vmatprep.subr.mxu0 0.0
  %4040 = vmatpush1.msra.mxu0 %v3960
  %4041 = vmatprep.subr.mxu0 0.0
  %4042 = vmatpush1.msra.mxu0 %v3961
  %4043 = vmatprep.subr.mxu0 0.0
  %4044 = vmatpush1.msra.mxu0 %v3962
  %4045 = vmatprep.subr.mxu0 0.0
  %4046 = vmatpush1.msra.mxu0 %v3963
  %4047 = vmatprep.subr.mxu0 0.0
  %4048 = vmatpush1.msra.mxu0 %v3964
  %4049 = vmatprep.subr.mxu0 0.0
  %4050 = vmatpush1.msra.mxu0 %v3965
  %4051 = vmatprep.mubr.f32.mxu0 %v3931
  %4052 = vmatmul.mubr.f32.gmra.mrb[0].mxu0 %v3930
  %v4053 = vpop.f32.mrb[0].mxu0
  %v4054 = vadd.f32 0.0, %v4053
  %v4055 = vpop.f32.mrb[0].mxu0
  %4056 = vdwg.mxu0
  %4057 = vmatprep.subr.mxu0 0.0
  %4058 = vmatpush1.msra.mxu0 %v3966
  %4059 = vmatprep.subr.mxu0 0.0
  %4060 = vmatpush1.msra.mxu0 %v3967
  %4061 = vmatprep.subr.mxu0 0.0
  %4062 = vmatpush1.msra.mxu0 %v3968
  %4063 = vmatprep.subr.mxu0 0.0
  %4064 = vmatpush1.msra.mxu0 %v3969
  %4065 = vmatprep.subr.mxu0 0.0
  %4066 = vmatpush1.msra.mxu0 %v3970
  %4067 = vmatprep.subr.mxu0 0.0
  %4068 = vmatpush1.msra.mxu0 %v3971
  %4069 = vmatprep.subr.mxu0 0.0
  %4070 = vmatpush1.msra.mxu0 %v3972
  %4071 = vmatprep.subr.mxu0 0.0
  %4072 = vmatpush1.msra.mxu0 %v3973
  %4073 = vmatprep.subr.mxu0 0.0
  %4074 = vmatpush1.msra.mxu0 %v3974
  %4075 = vmatprep.subr.mxu0 0.0
  %4076 = vmatpush1.msra.mxu0 %v3975
  %4077 = vmatprep.subr.mxu0 0.0
  %4078 = vmatpush1.msra.mxu0 %v3976
  %4079 = vmatprep.subr.mxu0 0.0
  %4080 = vmatpush1.msra.mxu0 %v3977
  %4081 = vmatprep.subr.mxu0 0.0
  %4082 = vmatpush1.msra.mxu0 %v3978
  %4083 = vmatprep.subr.mxu0 0.0
  %4084 = vmatpush1.msra.mxu0 %v3979
  %4085 = vmatprep.subr.mxu0 0.0
  %4086 = vmatpush1.msra.mxu0 %v3980
  %4087 = vmatprep.subr.mxu0 0.0
  %4088 = vmatpush1.msra.mxu0 %v3981
  %4089 = vmatprep.subr.mxu0 0.0
  %4090 = vmatpush1.msra.mxu0 %v3982
  %4091 = vmatprep.subr.mxu0 0.0
  %4092 = vmatpush1.msra.mxu0 %v3983
  %4093 = vmatprep.subr.mxu0 0.0
  %4094 = vmatpush1.msra.mxu0 0.0
  %4095 = vmatprep.subr.mxu0 0.0
  %4096 = vmatpush1.msra.mxu0 0.0
  %4097 = vmatprep.subr.mxu0 0.0
  %4098 = vmatpush1.msra.mxu0 0.0
  %4099 = vmatprep.subr.mxu0 0.0
  %4100 = vmatpush1.msra.mxu0 0.0
  %4101 = vmatprep.subr.mxu0 0.0
  %4102 = vmatpush1.msra.mxu0 0.0
  %4103 = vmatprep.subr.mxu0 0.0
  %4104 = vmatpush1.msra.mxu0 0.0
  %4105 = vmatprep.subr.mxu0 0.0
  %4106 = vmatpush1.msra.mxu0 0.0
  %4107 = vmatprep.subr.mxu0 0.0
  %4108 = vmatpush1.msra.mxu0 0.0
  %4109 = vmatprep.subr.mxu0 0.0
  %4110 = vmatpush1.msra.mxu0 0.0
  %4111 = vmatprep.subr.mxu0 0.0
  %4112 = vmatpush1.msra.mxu0 0.0
  %4113 = vmatprep.subr.mxu0 0.0
  %4114 = vmatpush1.msra.mxu0 0.0
  %4115 = vmatprep.subr.mxu0 0.0
  %4116 = vmatpush1.msra.mxu0 0.0
  %4117 = vmatprep.subr.mxu0 0.0
  %4118 = vmatpush1.msra.mxu0 0.0
  %4119 = vmatprep.subr.mxu0 0.0
  %4120 = vmatpush1.msra.mxu0 0.0
  %4121 = vmatprep.mubr.f32.mxu0 %v3985
  %4122 = vmatmul.mubr.f32.gmra.mrb[0].mxu0 %v3932
  %v4123 = vpop.f32.mrb[0].mxu0
  %v4124 = vadd.f32 %v4054, %v4123
  %v4125 = vpop.f32.mrb[0].mxu0
  %4126 = vdwg.mxu0
  %s4127 = scalar_lea.vmem %s3, 400
  %v4128 = vld [vmem:[%s4127] sm:$0xff]
  %v4129 = vld [vmem:[%s4127 + $0x8] sm:$0xff]
  %v4130 = vld [vmem:[%s4127 + $0x10] sm:$0xff]
  %v4131 = vld [vmem:[%s4127 + $0x18] sm:$0xff]
  %v4132 = vld [vmem:[%s4127 + $0x20] sm:$0xff]
  %v4133 = vld [vmem:[%s4127 + $0x28] sm:$0xff]
  %v4134 = vld [vmem:[%s4127 + $0x30] sm:$0xff]
  %v4135 = vld [vmem:[%s4127 + $0x38] sm:$0xff]
  %v4136 = vld [vmem:[%s4127 + $0x40] sm:$0xff]
  %v4137 = vld [vmem:[%s4127 + $0x48] sm:$0xff]
  %v4138 = vld [vmem:[%s4127 + $0x50] sm:$0xff]
  %v4139 = vld [vmem:[%s4127 + $0x58] sm:$0xff]
  %v4140 = vld [vmem:[%s4127 + $0x60] sm:$0xff]
  %v4141 = vld [vmem:[%s4127 + $0x68] sm:$0xff]
  %v4142 = vld [vmem:[%s4127 + $0x70] sm:$0xff]
  %v4143 = vld [vmem:[%s4127 + $0x78] sm:$0xff]
  %v4144 = vld [vmem:[%s4127 + $0x80] sm:$0xff]
  %v4145 = vld [vmem:[%s4127 + $0x88] sm:$0xff]
  %v4146 = vld [vmem:[%s4127 + $0x90] sm:$0xff]
  %v4147 = vld [vmem:[%s4127 + $0x98] sm:$0xff]
  %v4148 = vld [vmem:[%s4127 + $0xa0] sm:$0xff]
  %v4149 = vld [vmem:[%s4127 + $0xa8] sm:$0xff]
  %v4150 = vld [vmem:[%s4127 + $0xb0] sm:$0xff]
  %v4151 = vld [vmem:[%s4127 + $0xb8] sm:$0xff]
  %v4152 = vld [vmem:[%s4127 + $0xc0] sm:$0xff]
  %v4153 = vld [vmem:[%s4127 + $0xc8] sm:$0xff]
  %v4154 = vld [vmem:[%s4127 + $0xd0] sm:$0xff]
  %v4155 = vld [vmem:[%s4127 + $0xd8] sm:$0xff]
  %v4156 = vld [vmem:[%s4127 + $0xe0] sm:$0xff]
  %v4157 = vld [vmem:[%s4127 + $0xe8] sm:$0xff]
  %v4158 = vld [vmem:[%s4127 + $0xf0] sm:$0xff]
  %v4159 = vld [vmem:[%s4127 + $0xf8] sm:$0xff]
  %v4160 = vld [vmem:[%s4127 + $0x100] sm:$0xff]
  %v4161 = vld [vmem:[%s4127 + $0x108] sm:$0xff]
  %v4162 = vld [vmem:[%s4127 + $0x110] sm:$0xff]
  %v4163 = vld [vmem:[%s4127 + $0x118] sm:$0xff]
  %v4164 = vld [vmem:[%s4127 + $0x120] sm:$0xff]
  %v4165 = vld [vmem:[%s4127 + $0x128] sm:$0xff]
  %v4166 = vld [vmem:[%s4127 + $0x130] sm:$0xff]
  %v4167 = vld [vmem:[%s4127 + $0x138] sm:$0xff]
  %v4168 = vld [vmem:[%s4127 + $0x140] sm:$0xff]
  %v4169 = vld [vmem:[%s4127 + $0x148] sm:$0xff]
  %v4170 = vld [vmem:[%s4127 + $0x150] sm:$0xff]
  %v4171 = vld [vmem:[%s4127 + $0x158] sm:$0xff]
  %v4172 = vld [vmem:[%s4127 + $0x160] sm:$0xff]
  %v4173 = vld [vmem:[%s4127 + $0x168] sm:$0xff]
  %v4174 = vld [vmem:[%s4127 + $0x170] sm:$0xff]
  %v4175 = vld [vmem:[%s4127 + $0x178] sm:$0xff]
  %v4176 = vld [vmem:[%s4127 + $0x180] sm:$0xff]
  %v4177 = vld [vmem:[%s4127 + $0x188] sm:$0xff]
  %4178 = vmatprep.subr.mxu0 0.0
  %4179 = vmatpush1.msra.mxu0 %v4128
  %4180 = vmatprep.subr.mxu0 0.0
  %4181 = vmatpush1.msra.mxu0 %v4129
  %4182 = vmatprep.subr.mxu0 0.0
  %4183 = vmatpush1.msra.mxu0 %v4130
  %4184 = vmatprep.subr.mxu0 0.0
  %4185 = vmatpush1.msra.mxu0 %v4131
  %4186 = vmatprep.subr.mxu0 0.0
  %4187 = vmatpush1.msra.mxu0 %v4132
  %4188 = vmatprep.subr.mxu0 0.0
  %4189 = vmatpush1.msra.mxu0 %v4133
  %4190 = vmatprep.subr.mxu0 0.0
  %4191 = vmatpush1.msra.mxu0 %v4134
  %4192 = vmatprep.subr.mxu0 0.0
  %4193 = vmatpush1.msra.mxu0 %v4135
  %4194 = vmatprep.subr.mxu0 0.0
  %4195 = vmatpush1.msra.mxu0 %v4136
  %4196 = vmatprep.subr.mxu0 0.0
  %4197 = vmatpush1.msra.mxu0 %v4137
  %4198 = vmatprep.subr.mxu0 0.0
  %4199 = vmatpush1.msra.mxu0 %v4138
  %4200 = vmatprep.subr.mxu0 0.0
  %4201 = vmatpush1.msra.mxu0 %v4139
  %4202 = vmatprep.subr.mxu0 0.0
  %4203 = vmatpush1.msra.mxu0 %v4140
  %4204 = vmatprep.subr.mxu0 0.0
  %4205 = vmatpush1.msra.mxu0 %v4141
  %4206 = vmatprep.subr.mxu0 0.0
  %4207 = vmatpush1.msra.mxu0 %v4142
  %4208 = vmatprep.subr.mxu0 0.0
  %4209 = vmatpush1.msra.mxu0 %v4143
  %4210 = vmatprep.subr.mxu0 0.0
  %4211 = vmatpush1.msra.mxu0 %v4144
  %4212 = vmatprep.subr.mxu0 0.0
  %4213 = vmatpush1.msra.mxu0 %v4145
  %4214 = vmatprep.subr.mxu0 0.0
  %4215 = vmatpush1.msra.mxu0 %v4146
  %4216 = vmatprep.subr.mxu0 0.0
  %4217 = vmatpush1.msra.mxu0 %v4147
  %4218 = vmatprep.subr.mxu0 0.0
  %4219 = vmatpush1.msra.mxu0 %v4148
  %4220 = vmatprep.subr.mxu0 0.0
  %4221 = vmatpush1.msra.mxu0 %v4149
  %4222 = vmatprep.subr.mxu0 0.0
  %4223 = vmatpush1.msra.mxu0 %v4150
  %4224 = vmatprep.subr.mxu0 0.0
  %4225 = vmatpush1.msra.mxu0 %v4151
  %4226 = vmatprep.subr.mxu0 0.0
  %4227 = vmatpush1.msra.mxu0 %v4152
  %4228 = vmatprep.subr.mxu0 0.0
  %4229 = vmatpush1.msra.mxu0 %v4153
  %4230 = vmatprep.subr.mxu0 0.0
  %4231 = vmatpush1.msra.mxu0 %v4154
  %4232 = vmatprep.subr.mxu0 0.0
  %4233 = vmatpush1.msra.mxu0 %v4155
  %4234 = vmatprep.subr.mxu0 0.0
  %4235 = vmatpush1.msra.mxu0 %v4156
  %4236 = vmatprep.subr.mxu0 0.0
  %4237 = vmatpush1.msra.mxu0 %v4157
  %4238 = vmatprep.subr.mxu0 0.0
  %4239 = vmatpush1.msra.mxu0 %v4158
  %4240 = vmatprep.subr.mxu0 0.0
  %4241 = vmatpush1.msra.mxu0 %v4159
  %4242 = vmatprep.mubr.f32.mxu0 %v3931
  %4243 = vmatmul.mubr.f32.gmra.mrb[0].mxu0 %v3930
  %v4244 = vpop.f32.mrb[0].mxu0
  %v4245 = vadd.f32 0.0, %v4244
  %v4246 = vpop.f32.mrb[0].mxu0
  %4247 = vdwg.mxu0
  %4248 = vmatprep.subr.mxu0 0.0
  %4249 = vmatpush1.msra.mxu0 %v4160
  %4250 = vmatprep.subr.mxu0 0.0
  %4251 = vmatpush1.msra.mxu0 %v4161
  %4252 = vmatprep.subr.mxu0 0.0
  %4253 = vmatpush1.msra.mxu0 %v4162
  %4254 = vmatprep.subr.mxu0 0.0
  %4255 = vmatpush1.msra.mxu0 %v4163
  %4256 = vmatprep.subr.mxu0 0.0
  %4257 = vmatpush1.msra.mxu0 %v4164
  %4258 = vmatprep.subr.mxu0 0.0
  %4259 = vmatpush1.msra.mxu0 %v4165
  %4260 = vmatprep.subr.mxu0 0.0
  %4261 = vmatpush1.msra.mxu0 %v4166
  %4262 = vmatprep.subr.mxu0 0.0
  %4263 = vmatpush1.msra.mxu0 %v4167
  %4264 = vmatprep.subr.mxu0 0.0
  %4265 = vmatpush1.msra.mxu0 %v4168
  %4266 = vmatprep.subr.mxu0 0.0
  %4267 = vmatpush1.msra.mxu0 %v4169
  %4268 = vmatprep.subr.mxu0 0.0
  %4269 = vmatpush1.msra.mxu0 %v4170
  %4270 = vmatprep.subr.mxu0 0.0
  %4271 = vmatpush1.msra.mxu0 %v4171
  %4272 = vmatprep.subr.mxu0 0.0
  %4273 = vmatpush1.msra.mxu0 %v4172
  %4274 = vmatprep.subr.mxu0 0.0
  %4275 = vmatpush1.msra.mxu0 %v4173
  %4276 = vmatprep.subr.mxu0 0.0
  %4277 = vmatpush1.msra.mxu0 %v4174
  %4278 = vmatprep.subr.mxu0 0.0
  %4279 = vmatpush1.msra.mxu0 %v4175
  %4280 = vmatprep.subr.mxu0 0.0
  %4281 = vmatpush1.msra.mxu0 %v4176
  %4282 = vmatprep.subr.mxu0 0.0
  %4283 = vmatpush1.msra.mxu0 %v4177
  %4284 = vmatprep.subr.mxu0 0.0
  %4285 = vmatpush1.msra.mxu0 0.0
  %4286 = vmatprep.subr.mxu0 0.0
  %4287 = vmatpush1.msra.mxu0 0.0
  %4288 = vmatprep.subr.mxu0 0.0
  %4289 = vmatpush1.msra.mxu0 0.0
  %4290 = vmatprep.subr.mxu0 0.0
  %4291 = vmatpush1.msra.mxu0 0.0
  %4292 = vmatprep.subr.mxu0 0.0
  %4293 = vmatpush1.msra.mxu0 0.0
  %4294 = vmatprep.subr.mxu0 0.0
  %4295 = vmatpush1.msra.mxu0 0.0
  %4296 = vmatprep.subr.mxu0 0.0
  %4297 = vmatpush1.msra.mxu0 0.0
  %4298 = vmatprep.subr.mxu0 0.0
  %4299 = vmatpush1.msra.mxu0 0.0
  %4300 = vmatprep.subr.mxu0 0.0
  %4301 = vmatpush1.msra.mxu0 0.0
  %4302 = vmatprep.subr.mxu0 0.0
  %4303 = vmatpush1.msra.mxu0 0.0
  %4304 = vmatprep.subr.mxu0 0.0
  %4305 = vmatpush1.msra.mxu0 0.0
  %4306 = vmatprep.subr.mxu0 0.0
  %4307 = vmatpush1.msra.mxu0 0.0
  %4308 = vmatprep.subr.mxu0 0.0
  %4309 = vmatpush1.msra.mxu0 0.0
  %4310 = vmatprep.subr.mxu0 0.0
  %4311 = vmatpush1.msra.mxu0 0.0
  %4312 = vmatprep.mubr.f32.mxu0 %v3985
  %4313 = vmatmul.mubr.f32.gmra.mrb[0].mxu0 %v3932
  %v4314 = vpop.f32.mrb[0].mxu0
  %v4315 = vadd.f32 %v4245, %v4314
  %v4316 = vpop.f32.mrb[0].mxu0
  %4317 = vdwg.mxu0
  %v4318 = vmax.f32 %v4124, %v4315
  %s4319 = scalar_lea.vmem %s3, 800
  %v4320 = vld [vmem:[%s4319] sm:$0xff]
  %v4321 = vld [vmem:[%s4319 + $0x8] sm:$0xff]
  %v4322 = vld [vmem:[%s4319 + $0x10] sm:$0xff]
  %v4323 = vld [vmem:[%s4319 + $0x18] sm:$0xff]
  %v4324 = vld [vmem:[%s4319 + $0x20] sm:$0xff]
  %v4325 = vld [vmem:[%s4319 + $0x28] sm:$0xff]
  %v4326 = vld [vmem:[%s4319 + $0x30] sm:$0xff]
  %v4327 = vld [vmem:[%s4319 + $0x38] sm:$0xff]
  %v4328 = vld [vmem:[%s4319 + $0x40] sm:$0xff]
  %v4329 = vld [vmem:[%s4319 + $0x48] sm:$0xff]
  %v4330 = vld [vmem:[%s4319 + $0x50] sm:$0xff]
  %v4331 = vld [vmem:[%s4319 + $0x58] sm:$0xff]
  %v4332 = vld [vmem:[%s4319 + $0x60] sm:$0xff]
  %v4333 = vld [vmem:[%s4319 + $0x68] sm:$0xff]
  %v4334 = vld [vmem:[%s4319 + $0x70] sm:$0xff]
  %v4335 = vld [vmem:[%s4319 + $0x78] sm:$0xff]
  %v4336 = vld [vmem:[%s4319 + $0x80] sm:$0xff]
  %v4337 = vld [vmem:[%s4319 + $0x88] sm:$0xff]
  %v4338 = vld [vmem:[%s4319 + $0x90] sm:$0xff]
  %v4339 = vld [vmem:[%s4319 + $0x98] sm:$0xff]
  %v4340 = vld [vmem:[%s4319 + $0xa0] sm:$0xff]
  %v4341 = vld [vmem:[%s4319 + $0xa8] sm:$0xff]
  %v4342 = vld [vmem:[%s4319 + $0xb0] sm:$0xff]
  %v4343 = vld [vmem:[%s4319 + $0xb8] sm:$0xff]
  %v4344 = vld [vmem:[%s4319 + $0xc0] sm:$0xff]
  %v4345 = vld [vmem:[%s4319 + $0xc8] sm:$0xff]
  %v4346 = vld [vmem:[%s4319 + $0xd0] sm:$0xff]
  %v4347 = vld [vmem:[%s4319 + $0xd8] sm:$0xff]
  %v4348 = vld [vmem:[%s4319 + $0xe0] sm:$0xff]
  %v4349 = vld [vmem:[%s4319 + $0xe8] sm:$0xff]
  %v4350 = vld [vmem:[%s4319 + $0xf0] sm:$0xff]
  %v4351 = vld [vmem:[%s4319 + $0xf8] sm:$0xff]
  %v4352 = vld [vmem:[%s4319 + $0x100] sm:$0xff]
  %v4353 = vld [vmem:[%s4319 + $0x108] sm:$0xff]
  %v4354 = vld [vmem:[%s4319 + $0x110] sm:$0xff]
  %v4355 = vld [vmem:[%s4319 + $0x118] sm:$0xff]
  %v4356 = vld [vmem:[%s4319 + $0x120] sm:$0xff]
  %v4357 = vld [vmem:[%s4319 + $0x128] sm:$0xff]
  %v4358 = vld [vmem:[%s4319 + $0x130] sm:$0xff]
  %v4359 = vld [vmem:[%s4319 + $0x138] sm:$0xff]
  %v4360 = vld [vmem:[%s4319 + $0x140] sm:$0xff]
  %v4361 = vld [vmem:[%s4319 + $0x148] sm:$0xff]
  %v4362 = vld [vmem:[%s4319 + $0x150] sm:$0xff]
  %v4363 = vld [vmem:[%s4319 + $0x158] sm:$0xff]
  %v4364 = vld [vmem:[%s4319 + $0x160] sm:$0xff]
  %v4365 = vld [vmem:[%s4319 + $0x168] sm:$0xff]
  %v4366 = vld [vmem:[%s4319 + $0x170] sm:$0xff]
  %v4367 = vld [vmem:[%s4319 + $0x178] sm:$0xff]
  %v4368 = vld [vmem:[%s4319 + $0x180] sm:$0xff]
  %v4369 = vld [vmem:[%s4319 + $0x188] sm:$0xff]
  %4370 = vmatprep.subr.mxu0 0.0
  %4371 = vmatpush1.msra.mxu0 %v4320
  %4372 = vmatprep.subr.mxu0 0.0
  %4373 = vmatpush1.msra.mxu0 %v4321
  %4374 = vmatprep.subr.mxu0 0.0
  %4375 = vmatpush1.msra.mxu0 %v4322
  %4376 = vmatprep.subr.mxu0 0.0
  %4377 = vmatpush1.msra.mxu0 %v4323
  %4378 = vmatprep.subr.mxu0 0.0
  %4379 = vmatpush1.msra.mxu0 %v4324
  %4380 = vmatprep.subr.mxu0 0.0
  %4381 = vmatpush1.msra.mxu0 %v4325
  %4382 = vmatprep.subr.mxu0 0.0
  %4383 = vmatpush1.msra.mxu0 %v4326
  %4384 = vmatprep.subr.mxu0 0.0
  %4385 = vmatpush1.msra.mxu0 %v4327
  %4386 = vmatprep.subr.mxu0 0.0
  %4387 = vmatpush1.msra.mxu0 %v4328
  %4388 = vmatprep.subr.mxu0 0.0
  %4389 = vmatpush1.msra.mxu0 %v4329
  %4390 = vmatprep.subr.mxu0 0.0
  %4391 = vmatpush1.msra.mxu0 %v4330
  %4392 = vmatprep.subr.mxu0 0.0
  %4393 = vmatpush1.msra.mxu0 %v4331
  %4394 = vmatprep.subr.mxu0 0.0
  %4395 = vmatpush1.msra.mxu0 %v4332
  %4396 = vmatprep.subr.mxu0 0.0
  %4397 = vmatpush1.msra.mxu0 %v4333
  %4398 = vmatprep.subr.mxu0 0.0
  %4399 = vmatpush1.msra.mxu0 %v4334
  %4400 = vmatprep.subr.mxu0 0.0
  %4401 = vmatpush1.msra.mxu0 %v4335
  %4402 = vmatprep.subr.mxu0 0.0
  %4403 = vmatpush1.msra.mxu0 %v4336
  %4404 = vmatprep.subr.mxu0 0.0
  %4405 = vmatpush1.msra.mxu0 %v4337
  %4406 = vmatprep.subr.mxu0 0.0
  %4407 = vmatpush1.msra.mxu0 %v4338
  %4408 = vmatprep.subr.mxu0 0.0
  %4409 = vmatpush1.msra.mxu0 %v4339
  %4410 = vmatprep.subr.mxu0 0.0
  %4411 = vmatpush1.msra.mxu0 %v4340
  %4412 = vmatprep.subr.mxu0 0.0
  %4413 = vmatpush1.msra.mxu0 %v4341
  %4414 = vmatprep.subr.mxu0 0.0
  %4415 = vmatpush1.msra.mxu0 %v4342
  %4416 = vmatprep.subr.mxu0 0.0
  %4417 = vmatpush1.msra.mxu0 %v4343
  %4418 = vmatprep.subr.mxu0 0.0
  %4419 = vmatpush1.msra.mxu0 %v4344
  %4420 = vmatprep.subr.mxu0 0.0
  %4421 = vmatpush1.msra.mxu0 %v4345
  %4422 = vmatprep.subr.mxu0 0.0
  %4423 = vmatpush1.msra.mxu0 %v4346
  %4424 = vmatprep.subr.mxu0 0.0
  %4425 = vmatpush1.msra.mxu0 %v4347
  %4426 = vmatprep.subr.mxu0 0.0
  %4427 = vmatpush1.msra.mxu0 %v4348
  %4428 = vmatprep.subr.mxu0 0.0
  %4429 = vmatpush1.msra.mxu0 %v4349
  %4430 = vmatprep.subr.mxu0 0.0
  %4431 = vmatpush1.msra.mxu0 %v4350
  %4432 = vmatprep.subr.mxu0 0.0
  %4433 = vmatpush1.msra.mxu0 %v4351
  %4434 = vmatprep.mubr.f32.mxu0 %v3931
  %4435 = vmatmul.mubr.f32.gmra.mrb[0].mxu0 %v3930
  %v4436 = vpop.f32.mrb[0].mxu0
  %v4437 = vadd.f32 0.0, %v4436
  %v4438 = vpop.f32.mrb[0].mxu0
  %4439 = vdwg.mxu0
  %4440 = vmatprep.subr.mxu0 0.0
  %4441 = vmatpush1.msra.mxu0 %v4352
  %4442 = vmatprep.subr.mxu0 0.0
  %4443 = vmatpush1.msra.mxu0 %v4353
  %4444 = vmatprep.subr.mxu0 0.0
  %4445 = vmatpush1.msra.mxu0 %v4354
  %4446 = vmatprep.subr.mxu0 0.0
  %4447 = vmatpush1.msra.mxu0 %v4355
  %4448 = vmatprep.subr.mxu0 0.0
  %4449 = vmatpush1.msra.mxu0 %v4356
  %4450 = vmatprep.subr.mxu0 0.0
  %4451 = vmatpush1.msra.mxu0 %v4357
  %4452 = vmatprep.subr.mxu0 0.0
  %4453 = vmatpush1.msra.mxu0 %v4358
  %4454 = vmatprep.subr.mxu0 0.0
  %4455 = vmatpush1.msra.mxu0 %v4359
  %4456 = vmatprep.subr.mxu0 0.0
  %4457 = vmatpush1.msra.mxu0 %v4360
  %4458 = vmatprep.subr.mxu0 0.0
  %4459 = vmatpush1.msra.mxu0 %v4361
  %4460 = vmatprep.subr.mxu0 0.0
  %4461 = vmatpush1.msra.mxu0 %v4362
  %4462 = vmatprep.subr.mxu0 0.0
  %4463 = vmatpush1.msra.mxu0 %v4363
  %4464 = vmatprep.subr.mxu0 0.0
  %4465 = vmatpush1.msra.mxu0 %v4364
  %4466 = vmatprep.subr.mxu0 0.0
  %4467 = vmatpush1.msra.mxu0 %v4365
  %4468 = vmatprep.subr.mxu0 0.0
  %4469 = vmatpush1.msra.mxu0 %v4366
  %4470 = vmatprep.subr.mxu0 0.0
  %4471 = vmatpush1.msra.mxu0 %v4367
  %4472 = vmatprep.subr.mxu0 0.0
  %4473 = vmatpush1.msra.mxu0 %v4368
  %4474 = vmatprep.subr.mxu0 0.0
  %4475 = vmatpush1.msra.mxu0 %v4369
  %4476 = vmatprep.subr.mxu0 0.0
  %4477 = vmatpush1.msra.mxu0 0.0
  %4478 = vmatprep.subr.mxu0 0.0
  %4479 = vmatpush1.msra.mxu0 0.0
  %4480 = vmatprep.subr.mxu0 0.0
  %4481 = vmatpush1.msra.mxu0 0.0
  %4482 = vmatprep.subr.mxu0 0.0
  %4483 = vmatpush1.msra.mxu0 0.0
  %4484 = vmatprep.subr.mxu0 0.0
  %4485 = vmatpush1.msra.mxu0 0.0
  %4486 = vmatprep.subr.mxu0 0.0
  %4487 = vmatpush1.msra.mxu0 0.0
  %4488 = vmatprep.subr.mxu0 0.0
  %4489 = vmatpush1.msra.mxu0 0.0
  %4490 = vmatprep.subr.mxu0 0.0
  %4491 = vmatpush1.msra.mxu0 0.0
  %4492 = vmatprep.subr.mxu0 0.0
  %4493 = vmatpush1.msra.mxu0 0.0
  %4494 = vmatprep.subr.mxu0 0.0
  %4495 = vmatpush1.msra.mxu0 0.0
  %4496 = vmatprep.subr.mxu0 0.0
  %4497 = vmatpush1.msra.mxu0 0.0
  %4498 = vmatprep.subr.mxu0 0.0
  %4499 = vmatpush1.msra.mxu0 0.0
  %4500 = vmatprep.subr.mxu0 0.0
  %4501 = vmatpush1.msra.mxu0 0.0
  %4502 = vmatprep.subr.mxu0 0.0
  %4503 = vmatpush1.msra.mxu0 0.0
  %4504 = vmatprep.mubr.f32.mxu0 %v3985
  %4505 = vmatmul.mubr.f32.gmra.mrb[0].mxu0 %v3932
  %v4506 = vpop.f32.mrb[0].mxu0
  %v4507 = vadd.f32 %v4437, %v4506
  %v4508 = vpop.f32.mrb[0].mxu0
  %4509 = vdwg.mxu0
  %v4510 = vmax.f32 %v4318, %v4507
  %s4511 = scalar_lea.vmem %s3, 1200
  %v4512 = vld [vmem:[%s4511] sm:$0xff]
  %v4513 = vld [vmem:[%s4511 + $0x8] sm:$0xff]
  %v4514 = vld [vmem:[%s4511 + $0x10] sm:$0xff]
  %v4515 = vld [vmem:[%s4511 + $0x18] sm:$0xff]
  %v4516 = vld [vmem:[%s4511 + $0x20] sm:$0xff]
  %v4517 = vld [vmem:[%s4511 + $0x28] sm:$0xff]
  %v4518 = vld [vmem:[%s4511 + $0x30] sm:$0xff]
  %v4519 = vld [vmem:[%s4511 + $0x38] sm:$0xff]
  %v4520 = vld [vmem:[%s4511 + $0x40] sm:$0xff]
  %v4521 = vld [vmem:[%s4511 + $0x48] sm:$0xff]
  %v4522 = vld [vmem:[%s4511 + $0x50] sm:$0xff]
  %v4523 = vld [vmem:[%s4511 + $0x58] sm:$0xff]
  %v4524 = vld [vmem:[%s4511 + $0x60] sm:$0xff]
  %v4525 = vld [vmem:[%s4511 + $0x68] sm:$0xff]
  %v4526 = vld [vmem:[%s4511 + $0x70] sm:$0xff]
  %v4527 = vld [vmem:[%s4511 + $0x78] sm:$0xff]
  %v4528 = vld [vmem:[%s4511 + $0x80] sm:$0xff]
  %v4529 = vld [vmem:[%s4511 + $0x88] sm:$0xff]
  %v4530 = vld [vmem:[%s4511 + $0x90] sm:$0xff]
  %v4531 = vld [vmem:[%s4511 + $0x98] sm:$0xff]
  %v4532 = vld [vmem:[%s4511 + $0xa0] sm:$0xff]
  %v4533 = vld [vmem:[%s4511 + $0xa8] sm:$0xff]
  %v4534 = vld [vmem:[%s4511 + $0xb0] sm:$0xff]
  %v4535 = vld [vmem:[%s4511 + $0xb8] sm:$0xff]
  %v4536 = vld [vmem:[%s4511 + $0xc0] sm:$0xff]
  %v4537 = vld [vmem:[%s4511 + $0xc8] sm:$0xff]
  %v4538 = vld [vmem:[%s4511 + $0xd0] sm:$0xff]
  %v4539 = vld [vmem:[%s4511 + $0xd8] sm:$0xff]
  %v4540 = vld [vmem:[%s4511 + $0xe0] sm:$0xff]
  %v4541 = vld [vmem:[%s4511 + $0xe8] sm:$0xff]
  %v4542 = vld [vmem:[%s4511 + $0xf0] sm:$0xff]
  %v4543 = vld [vmem:[%s4511 + $0xf8] sm:$0xff]
  %v4544 = vld [vmem:[%s4511 + $0x100] sm:$0xff]
  %v4545 = vld [vmem:[%s4511 + $0x108] sm:$0xff]
  %v4546 = vld [vmem:[%s4511 + $0x110] sm:$0xff]
  %v4547 = vld [vmem:[%s4511 + $0x118] sm:$0xff]
  %v4548 = vld [vmem:[%s4511 + $0x120] sm:$0xff]
  %v4549 = vld [vmem:[%s4511 + $0x128] sm:$0xff]
  %v4550 = vld [vmem:[%s4511 + $0x130] sm:$0xff]
  %v4551 = vld [vmem:[%s4511 + $0x138] sm:$0xff]
  %v4552 = vld [vmem:[%s4511 + $0x140] sm:$0xff]
  %v4553 = vld [vmem:[%s4511 + $0x148] sm:$0xff]
  %v4554 = vld [vmem:[%s4511 + $0x150] sm:$0xff]
  %v4555 = vld [vmem:[%s4511 + $0x158] sm:$0xff]
  %v4556 = vld [vmem:[%s4511 + $0x160] sm:$0xff]
  %v4557 = vld [vmem:[%s4511 + $0x168] sm:$0xff]
  %v4558 = vld [vmem:[%s4511 + $0x170] sm:$0xff]
  %v4559 = vld [vmem:[%s4511 + $0x178] sm:$0xff]
  %v4560 = vld [vmem:[%s4511 + $0x180] sm:$0xff]
  %v4561 = vld [vmem:[%s4511 + $0x188] sm:$0xff]
  %4562 = vmatprep.subr.mxu0 0.0
  %4563 = vmatpush1.msra.mxu0 %v4512
  %4564 = vmatprep.subr.mxu0 0.0
  %4565 = vmatpush1.msra.mxu0 %v4513
  %4566 = vmatprep.subr.mxu0 0.0
  %4567 = vmatpush1.msra.mxu0 %v4514
  %4568 = vmatprep.subr.mxu0 0.0
  %4569 = vmatpush1.msra.mxu0 %v4515
  %4570 = vmatprep.subr.mxu0 0.0
  %4571 = vmatpush1.msra.mxu0 %v4516
  %4572 = vmatprep.subr.mxu0 0.0
  %4573 = vmatpush1.msra.mxu0 %v4517
  %4574 = vmatprep.subr.mxu0 0.0
  %4575 = vmatpush1.msra.mxu0 %v4518
  %4576 = vmatprep.subr.mxu0 0.0
  %4577 = vmatpush1.msra.mxu0 %v4519
  %4578 = vmatprep.subr.mxu0 0.0
  %4579 = vmatpush1.msra.mxu0 %v4520
  %4580 = vmatprep.subr.mxu0 0.0
  %4581 = vmatpush1.msra.mxu0 %v4521
  %4582 = vmatprep.subr.mxu0 0.0
  %4583 = vmatpush1.msra.mxu0 %v4522
  %4584 = vmatprep.subr.mxu0 0.0
  %4585 = vmatpush1.msra.mxu0 %v4523
  %4586 = vmatprep.subr.mxu0 0.0
  %4587 = vmatpush1.msra.mxu0 %v4524
  %4588 = vmatprep.subr.mxu0 0.0
  %4589 = vmatpush1.msra.mxu0 %v4525
  %4590 = vmatprep.subr.mxu0 0.0
  %4591 = vmatpush1.msra.mxu0 %v4526
  %4592 = vmatprep.subr.mxu0 0.0
  %4593 = vmatpush1.msra.mxu0 %v4527
  %4594 = vmatprep.subr.mxu0 0.0
  %4595 = vmatpush1.msra.mxu0 %v4528
  %4596 = vmatprep.subr.mxu0 0.0
  %4597 = vmatpush1.msra.mxu0 %v4529
  %4598 = vmatprep.subr.mxu0 0.0
  %4599 = vmatpush1.msra.mxu0 %v4530
  %4600 = vmatprep.subr.mxu0 0.0
  %4601 = vmatpush1.msra.mxu0 %v4531
  %4602 = vmatprep.subr.mxu0 0.0
  %4603 = vmatpush1.msra.mxu0 %v4532
  %4604 = vmatprep.subr.mxu0 0.0
  %4605 = vmatpush1.msra.mxu0 %v4533
  %4606 = vmatprep.subr.mxu0 0.0
  %4607 = vmatpush1.msra.mxu0 %v4534
  %4608 = vmatprep.subr.mxu0 0.0
  %4609 = vmatpush1.msra.mxu0 %v4535
  %4610 = vmatprep.subr.mxu0 0.0
  %4611 = vmatpush1.msra.mxu0 %v4536
  %4612 = vmatprep.subr.mxu0 0.0
  %4613 = vmatpush1.msra.mxu0 %v4537
  %4614 = vmatprep.subr.mxu0 0.0
  %4615 = vmatpush1.msra.mxu0 %v4538
  %4616 = vmatprep.subr.mxu0 0.0
  %4617 = vmatpush1.msra.mxu0 %v4539
  %4618 = vmatprep.subr.mxu0 0.0
  %4619 = vmatpush1.msra.mxu0 %v4540
  %4620 = vmatprep.subr.mxu0 0.0
  %4621 = vmatpush1.msra.mxu0 %v4541
  %4622 = vmatprep.subr.mxu0 0.0
  %4623 = vmatpush1.msra.mxu0 %v4542
  %4624 = vmatprep.subr.mxu0 0.0
  %4625 = vmatpush1.msra.mxu0 %v4543
  %4626 = vmatprep.mubr.f32.mxu0 %v3931
  %4627 = vmatmul.mubr.f32.gmra.mrb[0].mxu0 %v3930
  %v4628 = vpop.f32.mrb[0].mxu0
  %v4629 = vadd.f32 0.0, %v4628
  %v4630 = vpop.f32.mrb[0].mxu0
  %4631 = vdwg.mxu0
  %4632 = vmatprep.subr.mxu0 0.0
  %4633 = vmatpush1.msra.mxu0 %v4544
  %4634 = vmatprep.subr.mxu0 0.0
  %4635 = vmatpush1.msra.mxu0 %v4545
  %4636 = vmatprep.subr.mxu0 0.0
  %4637 = vmatpush1.msra.mxu0 %v4546
  %4638 = vmatprep.subr.mxu0 0.0
  %4639 = vmatpush1.msra.mxu0 %v4547
  %4640 = vmatprep.subr.mxu0 0.0
  %4641 = vmatpush1.msra.mxu0 %v4548
  %4642 = vmatprep.subr.mxu0 0.0
  %4643 = vmatpush1.msra.mxu0 %v4549
  %4644 = vmatprep.subr.mxu0 0.0
  %4645 = vmatpush1.msra.mxu0 %v4550
  %4646 = vmatprep.subr.mxu0 0.0
  %4647 = vmatpush1.msra.mxu0 %v4551
  %4648 = vmatprep.subr.mxu0 0.0
  %4649 = vmatpush1.msra.mxu0 %v4552
  %4650 = vmatprep.subr.mxu0 0.0
  %4651 = vmatpush1.msra.mxu0 %v4553
  %4652 = vmatprep.subr.mxu0 0.0
  %4653 = vmatpush1.msra.mxu0 %v4554
  %4654 = vmatprep.subr.mxu0 0.0
  %4655 = vmatpush1.msra.mxu0 %v4555
  %4656 = vmatprep.subr.mxu0 0.0
  %4657 = vmatpush1.msra.mxu0 %v4556
  %4658 = vmatprep.subr.mxu0 0.0
  %4659 = vmatpush1.msra.mxu0 %v4557
  %4660 = vmatprep.subr.mxu0 0.0
  %4661 = vmatpush1.msra.mxu0 %v4558
  %4662 = vmatprep.subr.mxu0 0.0
  %4663 = vmatpush1.msra.mxu0 %v4559
  %4664 = vmatprep.subr.mxu0 0.0
  %4665 = vmatpush1.msra.mxu0 %v4560
  %4666 = vmatprep.subr.mxu0 0.0
  %4667 = vmatpush1.msra.mxu0 %v4561
  %4668 = vmatprep.subr.mxu0 0.0
  %4669 = vmatpush1.msra.mxu0 0.0
  %4670 = vmatprep.subr.mxu0 0.0
  %4671 = vmatpush1.msra.mxu0 0.0
  %4672 = vmatprep.subr.mxu0 0.0
  %4673 = vmatpush1.msra.mxu0 0.0
  %4674 = vmatprep.subr.mxu0 0.0
  %4675 = vmatpush1.msra.mxu0 0.0
  %4676 = vmatprep.subr.mxu0 0.0
  %4677 = vmatpush1.msra.mxu0 0.0
  %4678 = vmatprep.subr.mxu0 0.0
  %4679 = vmatpush1.msra.mxu0 0.0
  %4680 = vmatprep.subr.mxu0 0.0
  %4681 = vmatpush1.msra.mxu0 0.0
  %4682 = vmatprep.subr.mxu0 0.0
  %4683 = vmatpush1.msra.mxu0 0.0
  %4684 = vmatprep.subr.mxu0 0.0
  %4685 = vmatpush1.msra.mxu0 0.0
  %4686 = vmatprep.subr.mxu0 0.0
  %4687 = vmatpush1.msra.mxu0 0.0
  %4688 = vmatprep.subr.mxu0 0.0
  %4689 = vmatpush1.msra.mxu0 0.0
  %4690 = vmatprep.subr.mxu0 0.0
  %4691 = vmatpush1.msra.mxu0 0.0
  %4692 = vmatprep.subr.mxu0 0.0
  %4693 = vmatpush1.msra.mxu0 0.0
  %4694 = vmatprep.subr.mxu0 0.0
  %4695 = vmatpush1.msra.mxu0 0.0
  %4696 = vmatprep.mubr.f32.mxu0 %v3985
  %4697 = vmatmul.mubr.f32.gmra.mrb[0].mxu0 %v3932
  %v4698 = vpop.f32.mrb[0].mxu0
  %v4699 = vadd.f32 %v4629, %v4698
  %v4700 = vpop.f32.mrb[0].mxu0
  %4701 = vdwg.mxu0
  %v4702 = vmax.f32 %v4510, %v4699
  %v4703 = vld [vmem:[%s4] sm:$0x1]
  %v4705 = vlaneseq
  %v4706 = vshrl.u32 %v4705, 7
  %v4707 = vsub.s32 0, %v4706
  %v4708 = vrot.slane %v4703, %v4707
  %v4710 = vadd.f32 %v4702, %v4708
  %v4711 = vmax.f32 %v4710, 0.0
  %v4712 = vld [vmem:[%s5] sm:$0xff]
  %v4713 = vld [vmem:[%s5 + $0x8] sm:$0xff]
  %v4714 = vld [vmem:[%s5 + $0x10] sm:$0xff]
  %v4715 = vld [vmem:[%s5 + $0x18] sm:$0xff]
  %v4716 = vld [vmem:[%s5 + $0x20] sm:$0xff]
  %v4717 = vld [vmem:[%s5 + $0x28] sm:$0xff]
  %v4718 = vld [vmem:[%s5 + $0x30] sm:$0xff]
  %v4719 = vld [vmem:[%s5 + $0x38] sm:$0xff]
  %v4720 = vld [vmem:[%s5 + $0x40] sm:$0xff]
  %v4721 = vld [vmem:[%s5 + $0x48] sm:$0xff]
  %v4722 = vld [vmem:[%s5 + $0x50] sm:$0xff]
  %v4723 = vld [vmem:[%s5 + $0x58] sm:$0xff]
  %v4724 = vld [vmem:[%s5 + $0x60] sm:$0xff]
  %v4725 = vld [vmem:[%s5 + $0x68] sm:$0xff]
  %v4726 = vld [vmem:[%s5 + $0x70] sm:$0xff]
  %v4727 = vld [vmem:[%s5 + $0x78] sm:$0xff]
  %v4728 = vld [vmem:[%s6] sm:$0xf]
  %v4730 = vlaneseq
  %v4731 = vshrl.u32 %v4730, 7
  %v4732 = vsub.s32 0, %v4731
  %v4733 = vrot.slane %v4728, %v4732
  %v4734 = vlaneseq
  %v4735 = vshrl.u32 %v4734, 7
  %v4736 = vsub.s32 1, %v4735
  %v4737 = vrot.slane %v4728, %v4736
  %v4738 = vlaneseq
  %v4739 = vshrl.u32 %v4738, 7
  %v4740 = vsub.s32 2, %v4739
  %v4741 = vrot.slane %v4728, %v4740
  %v4742 = vlaneseq
  %v4743 = vshrl.u32 %v4742, 7
  %v4744 = vsub.s32 3, %v4743
  %v4745 = vrot.slane %v4728, %v4744
  %vm4750 = vcmask 261120
  %v4752 = vsel %vm4750, %v4711, 0
  %4754 = vmatprep.subr.mxu0 %v4713
  %4755 = vmatpush1.msra.mxu0 %v4712
  %4756 = vmatprep.subr.mxu0 %v4717
  %4757 = vmatpush1.msra.mxu0 %v4716
  %4758 = vmatprep.subr.mxu0 %v4721
  %4759 = vmatpush1.msra.mxu0 %v4720
  %4760 = vmatprep.subr.mxu0 %v4725
  %4761 = vmatpush1.msra.mxu0 %v4724
  %4762 = vmatprep.subr.mxu0 0.0
  %4763 = vmatpush1.msra.mxu0 0.0
  %4764 = vmatprep.subr.mxu0 0.0
  %4765 = vmatpush1.msra.mxu0 0.0
  %4766 = vmatprep.subr.mxu0 0.0
  %4767 = vmatpush1.msra.mxu0 0.0
  %4768 = vmatprep.subr.mxu0 0.0
  %4769 = vmatpush1.msra.mxu0 0.0
  %4770 = vmatprep.subr.mxu0 0.0
  %4771 = vmatpush1.msra.mxu0 0.0
  %4772 = vmatprep.subr.mxu0 0.0
  %4773 = vmatpush1.msra.mxu0 0.0
  %4774 = vmatprep.subr.mxu0 0.0
  %4775 = vmatpush1.msra.mxu0 0.0
  %4776 = vmatprep.subr.mxu0 0.0
  %4777 = vmatpush1.msra.mxu0 0.0
  %4778 = vmatprep.subr.mxu0 0.0
  %4779 = vmatpush1.msra.mxu0 0.0
  %4780 = vmatprep.subr.mxu0 0.0
  %4781 = vmatpush1.msra.mxu0 0.0
  %4782 = vmatprep.subr.mxu0 0.0
  %4783 = vmatpush1.msra.mxu0 0.0
  %4784 = vmatprep.subr.mxu0 0.0
  %4785 = vmatpush1.msra.mxu0 0.0
  %4786 = vmatprep.subr.mxu0 0.0
  %4787 = vmatpush1.msra.mxu0 0.0
  %4788 = vmatprep.subr.mxu0 0.0
  %4789 = vmatpush1.msra.mxu0 0.0
  %4790 = vmatprep.subr.mxu0 0.0
  %4791 = vmatpush1.msra.mxu0 0.0
  %4792 = vmatprep.subr.mxu0 0.0
  %4793 = vmatpush1.msra.mxu0 0.0
  %4794 = vmatprep.subr.mxu0 0.0
  %4795 = vmatpush1.msra.mxu0 0.0
  %4796 = vmatprep.subr.mxu0 0.0
  %4797 = vmatpush1.msra.mxu0 0.0
  %4798 = vmatprep.subr.mxu0 0.0
  %4799 = vmatpush1.msra.mxu0 0.0
  %4800 = vmatprep.subr.mxu0 0.0
  %4801 = vmatpush1.msra.mxu0 0.0
  %4802 = vmatprep.subr.mxu0 0.0
  %4803 = vmatpush1.msra.mxu0 0.0
  %4804 = vmatprep.subr.mxu0 0.0
  %4805 = vmatpush1.msra.mxu0 0.0
  %4806 = vmatprep.subr.mxu0 0.0
  %4807 = vmatpush1.msra.mxu0 0.0
  %4808 = vmatprep.subr.mxu0 0.0
  %4809 = vmatpush1.msra.mxu0 0.0
  %4810 = vmatprep.subr.mxu0 0.0
  %4811 = vmatpush1.msra.mxu0 0.0
  %4812 = vmatprep.subr.mxu0 0.0
  %4813 = vmatpush1.msra.mxu0 0.0
  %4814 = vmatprep.subr.mxu0 0.0
  %4815 = vmatpush1.msra.mxu0 0.0
  %4816 = vmatprep.subr.mxu0 0.0
  %4817 = vmatpush1.msra.mxu0 0.0
  %4818 = vmatprep.mubr.f32.mxu0 0.0
  %4819 = vmatmul.mubr.f32.gmra.mrb[0].mxu0 %v4752
  %v4820 = vpop.f32.mrb[0].mxu0
  %v4821 = vadd.f32 %v4733, %v4820
  %v4822 = vpop.f32.mrb[0].mxu0
  %v4823 = vadd.f32 %v4737, %v4822
  %4824 = vdwg.mxu0
  %4825 = vmatprep.subr.mxu0 %v4715
  %4826 = vmatpush1.msra.mxu0 %v4714
  %4827 = vmatprep.subr.mxu0 %v4719
  %4828 = vmatpush1.msra.mxu0 %v4718
  %4829 = vmatprep.subr.mxu0 %v4723
  %4830 = vmatpush1.msra.mxu0 %v4722
  %4831 = vmatprep.subr.mxu0 %v4727
  %4832 = vmatpush1.msra.mxu0 %v4726
  %4833 = vmatprep.subr.mxu0 0.0
  %4834 = vmatpush1.msra.mxu0 0.0
  %4835 = vmatprep.subr.mxu0 0.0
  %4836 = vmatpush1.msra.mxu0 0.0
  %4837 = vmatprep.subr.mxu0 0.0
  %4838 = vmatpush1.msra.mxu0 0.0
  %4839 = vmatprep.subr.mxu0 0.0
  %4840 = vmatpush1.msra.mxu0 0.0
  %4841 = vmatprep.subr.mxu0 0.0
  %4842 = vmatpush1.msra.mxu0 0.0
  %4843 = vmatprep.subr.mxu0 0.0
  %4844 = vmatpush1.msra.mxu0 0.0
  %4845 = vmatprep.subr.mxu0 0.0
  %4846 = vmatpush1.msra.mxu0 0.0
  %4847 = vmatprep.subr.mxu0 0.0
  %4848 = vmatpush1.msra.mxu0 0.0
  %4849 = vmatprep.subr.mxu0 0.0
  %4850 = vmatpush1.msra.mxu0 0.0
  %4851 = vmatprep.subr.mxu0 0.0
  %4852 = vmatpush1.msra.mxu0 0.0
  %4853 = vmatprep.subr.mxu0 0.0
  %4854 = vmatpush1.msra.mxu0 0.0
  %4855 = vmatprep.subr.mxu0 0.0
  %4856 = vmatpush1.msra.mxu0 0.0
  %4857 = vmatprep.subr.mxu0 0.0
  %4858 = vmatpush1.msra.mxu0 0.0
  %4859 = vmatprep.subr.mxu0 0.0
  %4860 = vmatpush1.msra.mxu0 0.0
  %4861 = vmatprep.subr.mxu0 0.0
  %4862 = vmatpush1.msra.mxu0 0.0
  %4863 = vmatprep.subr.mxu0 0.0
  %4864 = vmatpush1.msra.mxu0 0.0
  %4865 = vmatprep.subr.mxu0 0.0
  %4866 = vmatpush1.msra.mxu0 0.0
  %4867 = vmatprep.subr.mxu0 0.0
  %4868 = vmatpush1.msra.mxu0 0.0
  %4869 = vmatprep.subr.mxu0 0.0
  %4870 = vmatpush1.msra.mxu0 0.0
  %4871 = vmatprep.subr.mxu0 0.0
  %4872 = vmatpush1.msra.mxu0 0.0
  %4873 = vmatprep.subr.mxu0 0.0
  %4874 = vmatpush1.msra.mxu0 0.0
  %4875 = vmatprep.subr.mxu0 0.0
  %4876 = vmatpush1.msra.mxu0 0.0
  %4877 = vmatprep.subr.mxu0 0.0
  %4878 = vmatpush1.msra.mxu0 0.0
  %4879 = vmatprep.subr.mxu0 0.0
  %4880 = vmatpush1.msra.mxu0 0.0
  %4881 = vmatprep.subr.mxu0 0.0
  %4882 = vmatpush1.msra.mxu0 0.0
  %4883 = vmatprep.subr.mxu0 0.0
  %4884 = vmatpush1.msra.mxu0 0.0
  %4885 = vmatprep.subr.mxu0 0.0
  %4886 = vmatpush1.msra.mxu0 0.0
  %4887 = vmatprep.subr.mxu0 0.0
  %4888 = vmatpush1.msra.mxu0 0.0
  %4889 = vmatprep.mubr.f32.mxu0 0.0
  %4890 = vmatmul.mubr.f32.gmra.mrb[0].mxu0 %v4752
  %v4891 = vpop.f32.mrb[0].mxu0
  %v4892 = vadd.f32 %v4741, %v4891
  %v4893 = vpop.f32.mrb[0].mxu0
  %v4894 = vadd.f32 %v4745, %v4893
  %4895 = vdwg.mxu0
  %v4896 = vmax.f32 %v4821, 0.0
  %v4897 = vmax.f32 %v4823, 0.0
  %v4898 = vmax.f32 %v4892, 0.0
  %v4899 = vmax.f32 %v4894, 0.0
  %v4900 = vld [vmem:[%s7] sm:$0xff]
  %v4901 = vld [vmem:[%s7 + $0x8] sm:$0xff]
  %v4902 = vld [vmem:[%s7 + $0x10] sm:$0xff]
  %v4903 = vld [vmem:[%s7 + $0x18] sm:$0xff]
  %v4904 = vld [vmem:[%s7 + $0x20] sm:$0xff]
  %v4905 = vld [vmem:[%s7 + $0x28] sm:$0xff]
  %v4906 = vld [vmem:[%s7 + $0x30] sm:$0xff]
  %v4907 = vld [vmem:[%s7 + $0x38] sm:$0xff]
  %v4908 = vld [vmem:[%s7 + $0x40] sm:$0xff]
  %v4909 = vld [vmem:[%s7 + $0x48] sm:$0xff]
  %v4910 = vld [vmem:[%s7 + $0x50] sm:$0xff]
  %v4911 = vld [vmem:[%s7 + $0x58] sm:$0xff]
  %v4912 = vld [vmem:[%s7 + $0x60] sm:$0xff]
  %v4913 = vld [vmem:[%s7 + $0x68] sm:$0xff]
  %v4914 = vld [vmem:[%s7 + $0x70] sm:$0xff]
  %v4915 = vld [vmem:[%s7 + $0x78] sm:$0xff]
  %v4916 = vld [vmem:[%s7 + $0x80] sm:$0xff]
  %v4917 = vld [vmem:[%s7 + $0x88] sm:$0xff]
  %v4918 = vld [vmem:[%s7 + $0x90] sm:$0xff]
  %v4919 = vld [vmem:[%s7 + $0x98] sm:$0xff]
  %v4920 = vld [vmem:[%s7 + $0xa0] sm:$0xff]
  %v4921 = vld [vmem:[%s7 + $0xa8] sm:$0xff]
  %v4922 = vld [vmem:[%s7 + $0xb0] sm:$0xff]
  %v4923 = vld [vmem:[%s7 + $0xb8] sm:$0xff]
  %v4924 = vld [vmem:[%s7 + $0xc0] sm:$0xff]
  %v4925 = vld [vmem:[%s7 + $0xc8] sm:$0xff]
  %v4926 = vld [vmem:[%s7 + $0xd0] sm:$0xff]
  %v4927 = vld [vmem:[%s7 + $0xd8] sm:$0xff]
  %v4928 = vld [vmem:[%s7 + $0xe0] sm:$0xff]
  %v4929 = vld [vmem:[%s7 + $0xe8] sm:$0xff]
  %v4930 = vld [vmem:[%s7 + $0xf0] sm:$0xff]
  %v4931 = vld [vmem:[%s7 + $0xf8] sm:$0xff]
  %v4932 = vld [vmem:[%s7 + $0x100] sm:$0xff]
  %v4933 = vld [vmem:[%s7 + $0x108] sm:$0xff]
  %v4934 = vld [vmem:[%s7 + $0x110] sm:$0xff]
  %v4935 = vld [vmem:[%s7 + $0x118] sm:$0xff]
  %v4936 = vld [vmem:[%s7 + $0x120] sm:$0xff]
  %v4937 = vld [vmem:[%s7 + $0x128] sm:$0xff]
  %v4938 = vld [vmem:[%s7 + $0x130] sm:$0xff]
  %v4939 = vld [vmem:[%s7 + $0x138] sm:$0xff]
  %v4940 = vld [vmem:[%s7 + $0x140] sm:$0xff]
  %v4941 = vld [vmem:[%s7 + $0x148] sm:$0xff]
  %v4942 = vld [vmem:[%s7 + $0x150] sm:$0xff]
  %v4943 = vld [vmem:[%s7 + $0x158] sm:$0xff]
  %v4944 = vld [vmem:[%s7 + $0x160] sm:$0xff]
  %v4945 = vld [vmem:[%s7 + $0x168] sm:$0xff]
  %v4946 = vld [vmem:[%s7 + $0x170] sm:$0xff]
  %v4947 = vld [vmem:[%s7 + $0x178] sm:$0xff]
  %v4948 = vld [vmem:[%s7 + $0x180] sm:$0xff]
  %v4949 = vld [vmem:[%s7 + $0x188] sm:$0xff]
  %v4950 = vld [vmem:[%s7 + $0x190] sm:$0xff]
  %v4951 = vld [vmem:[%s7 + $0x198] sm:$0xff]
  %v4952 = vld [vmem:[%s7 + $0x1a0] sm:$0xff]
  %v4953 = vld [vmem:[%s7 + $0x1a8] sm:$0xff]
  %v4954 = vld [vmem:[%s7 + $0x1b0] sm:$0xff]
  %v4955 = vld [vmem:[%s7 + $0x1b8] sm:$0xff]
  %v4956 = vld [vmem:[%s7 + $0x1c0] sm:$0xff]
  %v4957 = vld [vmem:[%s7 + $0x1c8] sm:$0xff]
  %v4958 = vld [vmem:[%s7 + $0x1d0] sm:$0xff]
  %v4959 = vld [vmem:[%s7 + $0x1d8] sm:$0xff]
  %v4960 = vld [vmem:[%s7 + $0x1e0] sm:$0xff]
  %v4961 = vld [vmem:[%s7 + $0x1e8] sm:$0xff]
  %v4962 = vld [vmem:[%s7 + $0x1f0] sm:$0xff]
  %v4963 = vld [vmem:[%s7 + $0x1f8] sm:$0xff]
  %v4964 = vld [vmem:[%s7 + $0x200] sm:$0xff]
  %v4965 = vld [vmem:[%s7 + $0x208] sm:$0xff]
  %v4966 = vld [vmem:[%s7 + $0x210] sm:$0xff]
  %v4967 = vld [vmem:[%s7 + $0x218] sm:$0xff]
  %v4968 = vld [vmem:[%s7 + $0x220] sm:$0xff]
  %v4969 = vld [vmem:[%s7 + $0x228] sm:$0xff]
  %v4970 = vld [vmem:[%s7 + $0x230] sm:$0xff]
  %v4971 = vld [vmem:[%s7 + $0x238] sm:$0xff]
  %v4972 = vld [vmem:[%s7 + $0x240] sm:$0xff]
  %v4973 = vld [vmem:[%s7 + $0x248] sm:$0xff]
  %v4974 = vld [vmem:[%s7 + $0x250] sm:$0xff]
  %v4975 = vld [vmem:[%s7 + $0x258] sm:$0xff]
  %v4976 = vld [vmem:[%s7 + $0x260] sm:$0xff]
  %v4977 = vld [vmem:[%s7 + $0x268] sm:$0xff]
  %v4978 = vld [vmem:[%s7 + $0x270] sm:$0xff]
  %v4979 = vld [vmem:[%s7 + $0x278] sm:$0xff]
  %v4980 = vld [vmem:[%s7 + $0x280] sm:$0xff]
  %v4981 = vld [vmem:[%s7 + $0x288] sm:$0xff]
  %v4982 = vld [vmem:[%s7 + $0x290] sm:$0xff]
  %v4983 = vld [vmem:[%s7 + $0x298] sm:$0xff]
  %v4984 = vld [vmem:[%s7 + $0x2a0] sm:$0xff]
  %v4985 = vld [vmem:[%s7 + $0x2a8] sm:$0xff]
  %v4986 = vld [vmem:[%s7 + $0x2b0] sm:$0xff]
  %v4987 = vld [vmem:[%s7 + $0x2b8] sm:$0xff]
  %v4988 = vld [vmem:[%s7 + $0x2c0] sm:$0xff]
  %v4989 = vld [vmem:[%s7 + $0x2c8] sm:$0xff]
  %v4990 = vld [vmem:[%s7 + $0x2d0] sm:$0xff]
  %v4991 = vld [vmem:[%s7 + $0x2d8] sm:$0xff]
  %v4992 = vld [vmem:[%s7 + $0x2e0] sm:$0xff]
  %v4993 = vld [vmem:[%s7 + $0x2e8] sm:$0xff]
  %v4994 = vld [vmem:[%s7 + $0x2f0] sm:$0xff]
  %v4995 = vld [vmem:[%s7 + $0x2f8] sm:$0xff]
  %v4996 = vld [vmem:[%s7 + $0x300] sm:$0xff]
  %v4997 = vld [vmem:[%s7 + $0x308] sm:$0xff]
  %v4998 = vld [vmem:[%s7 + $0x310] sm:$0xff]
  %v4999 = vld [vmem:[%s7 + $0x318] sm:$0xff]
  %v5000 = vld [vmem:[%s7 + $0x320] sm:$0xff]
  %v5001 = vld [vmem:[%s7 + $0x328] sm:$0xff]
  %v5002 = vld [vmem:[%s7 + $0x330] sm:$0xff]
  %v5003 = vld [vmem:[%s7 + $0x338] sm:$0xff]
  %v5004 = vld [vmem:[%s7 + $0x340] sm:$0xff]
  %v5005 = vld [vmem:[%s7 + $0x348] sm:$0xff]
  %v5006 = vld [vmem:[%s7 + $0x350] sm:$0xff]
  %v5007 = vld [vmem:[%s7 + $0x358] sm:$0xff]
  %v5008 = vld [vmem:[%s7 + $0x360] sm:$0xff]
  %v5009 = vld [vmem:[%s7 + $0x368] sm:$0xff]
  %v5010 = vld [vmem:[%s7 + $0x370] sm:$0xff]
  %v5011 = vld [vmem:[%s7 + $0x378] sm:$0xff]
  %v5012 = vld [vmem:[%s7 + $0x380] sm:$0xff]
  %v5013 = vld [vmem:[%s7 + $0x388] sm:$0xff]
  %v5014 = vld [vmem:[%s7 + $0x390] sm:$0xff]
  %v5015 = vld [vmem:[%s7 + $0x398] sm:$0xff]
  %v5016 = vld [vmem:[%s7 + $0x3a0] sm:$0xff]
  %v5017 = vld [vmem:[%s7 + $0x3a8] sm:$0xff]
  %v5018 = vld [vmem:[%s7 + $0x3b0] sm:$0xff]
  %v5019 = vld [vmem:[%s7 + $0x3b8] sm:$0xff]
  %v5020 = vld [vmem:[%s7 + $0x3c0] sm:$0xff]
  %v5021 = vld [vmem:[%s7 + $0x3c8] sm:$0xff]
  %v5022 = vld [vmem:[%s7 + $0x3d0] sm:$0xff]
  %v5023 = vld [vmem:[%s7 + $0x3d8] sm:$0xff]
  %v5024 = vld [vmem:[%s7 + $0x3e0] sm:$0xff]
  %v5025 = vld [vmem:[%s7 + $0x3e8] sm:$0xff]
  %v5026 = vld [vmem:[%s7 + $0x3f0] sm:$0xff]
  %v5027 = vld [vmem:[%s7 + $0x3f8] sm:$0xff]
  %v5028 = vld [vmem:[%s7 + $0x400] sm:$0xff]
  %v5029 = vld [vmem:[%s7 + $0x408] sm:$0xff]
  %v5030 = vld [vmem:[%s7 + $0x410] sm:$0xff]
  %v5031 = vld [vmem:[%s7 + $0x418] sm:$0xff]
  %v5032 = vld [vmem:[%s7 + $0x420] sm:$0xff]
  %v5033 = vld [vmem:[%s7 + $0x428] sm:$0xff]
  %v5034 = vld [vmem:[%s7 + $0x430] sm:$0xff]
  %v5035 = vld [vmem:[%s7 + $0x438] sm:$0xff]
  %v5036 = vld [vmem:[%s7 + $0x440] sm:$0xff]
  %v5037 = vld [vmem:[%s7 + $0x448] sm:$0xff]
  %v5038 = vld [vmem:[%s7 + $0x450] sm:$0xff]
  %v5039 = vld [vmem:[%s7 + $0x458] sm:$0xff]
  %v5040 = vld [vmem:[%s7 + $0x460] sm:$0xff]
  %v5041 = vld [vmem:[%s7 + $0x468] sm:$0xff]
  %v5042 = vld [vmem:[%s7 + $0x470] sm:$0xff]
  %v5043 = vld [vmem:[%s7 + $0x478] sm:$0xff]
  %v5044 = vld [vmem:[%s7 + $0x480] sm:$0xff]
  %v5045 = vld [vmem:[%s7 + $0x488] sm:$0xff]
  %v5046 = vld [vmem:[%s7 + $0x490] sm:$0xff]
  %v5047 = vld [vmem:[%s7 + $0x498] sm:$0xff]
  %v5048 = vld [vmem:[%s7 + $0x4a0] sm:$0xff]
  %v5049 = vld [vmem:[%s7 + $0x4a8] sm:$0xff]
  %v5050 = vld [vmem:[%s7 + $0x4b0] sm:$0xff]
  %v5051 = vld [vmem:[%s7 + $0x4b8] sm:$0xff]
  %v5052 = vld [vmem:[%s7 + $0x4c0] sm:$0xff]
  %v5053 = vld [vmem:[%s7 + $0x4c8] sm:$0xff]
  %v5054 = vld [vmem:[%s7 + $0x4d0] sm:$0xff]
  %v5055 = vld [vmem:[%s7 + $0x4d8] sm:$0xff]
  %v5056 = vld [vmem:[%s7 + $0x4e0] sm:$0xff]
  %v5057 = vld [vmem:[%s7 + $0x4e8] sm:$0xff]
  %v5058 = vld [vmem:[%s7 + $0x4f0] sm:$0xff]
  %v5059 = vld [vmem:[%s7 + $0x4f8] sm:$0xff]
  %v5060 = vld [vmem:[%s7 + $0x500] sm:$0xff]
  %v5061 = vld [vmem:[%s7 + $0x508] sm:$0xff]
  %v5062 = vld [vmem:[%s7 + $0x510] sm:$0xff]
  %v5063 = vld [vmem:[%s7 + $0x518] sm:$0xff]
  %v5064 = vld [vmem:[%s7 + $0x520] sm:$0xff]
  %v5065 = vld [vmem:[%s7 + $0x528] sm:$0xff]
  %v5066 = vld [vmem:[%s7 + $0x530] sm:$0xff]
  %v5067 = vld [vmem:[%s7 + $0x538] sm:$0xff]
  %v5068 = vld [vmem:[%s7 + $0x540] sm:$0xff]
  %v5069 = vld [vmem:[%s7 + $0x548] sm:$0xff]
  %v5070 = vld [vmem:[%s7 + $0x550] sm:$0xff]
  %v5071 = vld [vmem:[%s7 + $0x558] sm:$0xff]
  %v5072 = vld [vmem:[%s7 + $0x560] sm:$0xff]
  %v5073 = vld [vmem:[%s7 + $0x568] sm:$0xff]
  %v5074 = vld [vmem:[%s7 + $0x570] sm:$0xff]
  %v5075 = vld [vmem:[%s7 + $0x578] sm:$0xff]
  %v5076 = vld [vmem:[%s7 + $0x580] sm:$0xff]
  %v5077 = vld [vmem:[%s7 + $0x588] sm:$0xff]
  %v5078 = vld [vmem:[%s7 + $0x590] sm:$0xff]
  %v5079 = vld [vmem:[%s7 + $0x598] sm:$0xff]
  %v5080 = vld [vmem:[%s7 + $0x5a0] sm:$0xff]
  %v5081 = vld [vmem:[%s7 + $0x5a8] sm:$0xff]
  %v5082 = vld [vmem:[%s7 + $0x5b0] sm:$0xff]
  %v5083 = vld [vmem:[%s7 + $0x5b8] sm:$0xff]
  %v5084 = vld [vmem:[%s7 + $0x5c0] sm:$0xff]
  %v5085 = vld [vmem:[%s7 + $0x5c8] sm:$0xff]
  %v5086 = vld [vmem:[%s7 + $0x5d0] sm:$0xff]
  %v5087 = vld [vmem:[%s7 + $0x5d8] sm:$0xff]
  %v5088 = vld [vmem:[%s7 + $0x5e0] sm:$0xff]
  %v5089 = vld [vmem:[%s7 + $0x5e8] sm:$0xff]
  %v5090 = vld [vmem:[%s7 + $0x5f0] sm:$0xff]
  %v5091 = vld [vmem:[%s7 + $0x5f8] sm:$0xff]
  %v5092 = vld [vmem:[%s7 + $0x600] sm:$0xff]
  %v5093 = vld [vmem:[%s7 + $0x608] sm:$0xff]
  %v5094 = vld [vmem:[%s7 + $0x610] sm:$0xff]
  %v5095 = vld [vmem:[%s7 + $0x618] sm:$0xff]
  %v5096 = vld [vmem:[%s7 + $0x620] sm:$0xff]
  %v5097 = vld [vmem:[%s7 + $0x628] sm:$0xff]
  %v5098 = vld [vmem:[%s7 + $0x630] sm:$0xff]
  %v5099 = vld [vmem:[%s7 + $0x638] sm:$0xff]
  %v5100 = vld [vmem:[%s7 + $0x640] sm:$0xff]
  %v5101 = vld [vmem:[%s7 + $0x648] sm:$0xff]
  %v5102 = vld [vmem:[%s7 + $0x650] sm:$0xff]
  %v5103 = vld [vmem:[%s7 + $0x658] sm:$0xff]
  %v5104 = vld [vmem:[%s7 + $0x660] sm:$0xff]
  %v5105 = vld [vmem:[%s7 + $0x668] sm:$0xff]
  %v5106 = vld [vmem:[%s7 + $0x670] sm:$0xff]
  %v5107 = vld [vmem:[%s7 + $0x678] sm:$0xff]
  %v5108 = vld [vmem:[%s7 + $0x680] sm:$0xff]
  %v5109 = vld [vmem:[%s7 + $0x688] sm:$0xff]
  %v5110 = vld [vmem:[%s7 + $0x690] sm:$0xff]
  %v5111 = vld [vmem:[%s7 + $0x698] sm:$0xff]
  %v5112 = vld [vmem:[%s7 + $0x6a0] sm:$0xff]
  %v5113 = vld [vmem:[%s7 + $0x6a8] sm:$0xff]
  %v5114 = vld [vmem:[%s7 + $0x6b0] sm:$0xff]
  %v5115 = vld [vmem:[%s7 + $0x6b8] sm:$0xff]
  %v5116 = vld [vmem:[%s7 + $0x6c0] sm:$0xff]
  %v5117 = vld [vmem:[%s7 + $0x6c8] sm:$0xff]
  %v5118 = vld [vmem:[%s7 + $0x6d0] sm:$0xff]
  %v5119 = vld [vmem:[%s7 + $0x6d8] sm:$0xff]
  %v5120 = vld [vmem:[%s7 + $0x6e0] sm:$0xff]
  %v5121 = vld [vmem:[%s7 + $0x6e8] sm:$0xff]
  %v5122 = vld [vmem:[%s7 + $0x6f0] sm:$0xff]
  %v5123 = vld [vmem:[%s7 + $0x6f8] sm:$0xff]
  %v5124 = vld [vmem:[%s7 + $0x700] sm:$0xff]
  %v5125 = vld [vmem:[%s7 + $0x708] sm:$0xff]
  %v5126 = vld [vmem:[%s7 + $0x710] sm:$0xff]
  %v5127 = vld [vmem:[%s7 + $0x718] sm:$0xff]
  %v5128 = vld [vmem:[%s7 + $0x720] sm:$0xff]
  %v5129 = vld [vmem:[%s7 + $0x728] sm:$0xff]
  %v5130 = vld [vmem:[%s7 + $0x730] sm:$0xff]
  %v5131 = vld [vmem:[%s7 + $0x738] sm:$0xff]
  %v5132 = vld [vmem:[%s7 + $0x740] sm:$0xff]
  %v5133 = vld [vmem:[%s7 + $0x748] sm:$0xff]
  %v5134 = vld [vmem:[%s7 + $0x750] sm:$0xff]
  %v5135 = vld [vmem:[%s7 + $0x758] sm:$0xff]
  %v5136 = vld [vmem:[%s7 + $0x760] sm:$0xff]
  %v5137 = vld [vmem:[%s7 + $0x768] sm:$0xff]
  %v5138 = vld [vmem:[%s7 + $0x770] sm:$0xff]
  %v5139 = vld [vmem:[%s7 + $0x778] sm:$0xff]
  %v5140 = vld [vmem:[%s7 + $0x780] sm:$0xff]
  %v5141 = vld [vmem:[%s7 + $0x788] sm:$0xff]
  %v5142 = vld [vmem:[%s7 + $0x790] sm:$0xff]
  %v5143 = vld [vmem:[%s7 + $0x798] sm:$0xff]
  %v5144 = vld [vmem:[%s7 + $0x7a0] sm:$0xff]
  %v5145 = vld [vmem:[%s7 + $0x7a8] sm:$0xff]
  %v5146 = vld [vmem:[%s7 + $0x7b0] sm:$0xff]
  %v5147 = vld [vmem:[%s7 + $0x7b8] sm:$0xff]
  %v5148 = vld [vmem:[%s7 + $0x7c0] sm:$0xff]
  %v5149 = vld [vmem:[%s7 + $0x7c8] sm:$0xff]
  %v5150 = vld [vmem:[%s7 + $0x7d0] sm:$0xff]
  %v5151 = vld [vmem:[%s7 + $0x7d8] sm:$0xff]
  %v5152 = vld [vmem:[%s7 + $0x7e0] sm:$0xff]
  %v5153 = vld [vmem:[%s7 + $0x7e8] sm:$0xff]
  %v5154 = vld [vmem:[%s7 + $0x7f0] sm:$0xff]
  %v5155 = vld [vmem:[%s7 + $0x7f8] sm:$0xff]
  %v5156 = vld [vmem:[%s7 + $0x800] sm:$0xff]
  %v5157 = vld [vmem:[%s7 + $0x808] sm:$0xff]
  %v5158 = vld [vmem:[%s7 + $0x810] sm:$0xff]
  %v5159 = vld [vmem:[%s7 + $0x818] sm:$0xff]
  %v5160 = vld [vmem:[%s7 + $0x820] sm:$0xff]
  %v5161 = vld [vmem:[%s7 + $0x828] sm:$0xff]
  %v5162 = vld [vmem:[%s7 + $0x830] sm:$0xff]
  %v5163 = vld [vmem:[%s7 + $0x838] sm:$0xff]
  %v5164 = vld [vmem:[%s7 + $0x840] sm:$0xff]
  %v5165 = vld [vmem:[%s7 + $0x848] sm:$0xff]
  %v5166 = vld [vmem:[%s7 + $0x850] sm:$0xff]
  %v5167 = vld [vmem:[%s7 + $0x858] sm:$0xff]
  %v5168 = vld [vmem:[%s7 + $0x860] sm:$0xff]
  %v5169 = vld [vmem:[%s7 + $0x868] sm:$0xff]
  %v5170 = vld [vmem:[%s7 + $0x870] sm:$0xff]
  %v5171 = vld [vmem:[%s7 + $0x878] sm:$0xff]
  %v5172 = vld [vmem:[%s7 + $0x880] sm:$0xff]
  %v5173 = vld [vmem:[%s7 + $0x888] sm:$0xff]
  %v5174 = vld [vmem:[%s7 + $0x890] sm:$0xff]
  %v5175 = vld [vmem:[%s7 + $0x898] sm:$0xff]
  %v5176 = vld [vmem:[%s7 + $0x8a0] sm:$0xff]
  %v5177 = vld [vmem:[%s7 + $0x8a8] sm:$0xff]
  %v5178 = vld [vmem:[%s7 + $0x8b0] sm:$0xff]
  %v5179 = vld [vmem:[%s7 + $0x8b8] sm:$0xff]
  %v5180 = vld [vmem:[%s7 + $0x8c0] sm:$0xff]
  %v5181 = vld [vmem:[%s7 + $0x8c8] sm:$0xff]
  %v5182 = vld [vmem:[%s7 + $0x8d0] sm:$0xff]
  %v5183 = vld [vmem:[%s7 + $0x8d8] sm:$0xff]
  %v5184 = vld [vmem:[%s7 + $0x8e0] sm:$0xff]
  %v5185 = vld [vmem:[%s7 + $0x8e8] sm:$0xff]
  %v5186 = vld [vmem:[%s7 + $0x8f0] sm:$0xff]
  %v5187 = vld [vmem:[%s7 + $0x8f8] sm:$0xff]
  %v5188 = vld [vmem:[%s7 + $0x900] sm:$0xff]
  %v5189 = vld [vmem:[%s7 + $0x908] sm:$0xff]
  %v5190 = vld [vmem:[%s7 + $0x910] sm:$0xff]
  %v5191 = vld [vmem:[%s7 + $0x918] sm:$0xff]
  %v5192 = vld [vmem:[%s7 + $0x920] sm:$0xff]
  %v5193 = vld [vmem:[%s7 + $0x928] sm:$0xff]
  %v5194 = vld [vmem:[%s7 + $0x930] sm:$0xff]
  %v5195 = vld [vmem:[%s7 + $0x938] sm:$0xff]
  %v5196 = vld [vmem:[%s7 + $0x940] sm:$0xff]
  %v5197 = vld [vmem:[%s7 + $0x948] sm:$0xff]
  %v5198 = vld [vmem:[%s7 + $0x950] sm:$0xff]
  %v5199 = vld [vmem:[%s7 + $0x958] sm:$0xff]
  %v5200 = vld [vmem:[%s7 + $0x960] sm:$0xff]
  %v5201 = vld [vmem:[%s7 + $0x968] sm:$0xff]
  %v5202 = vld [vmem:[%s7 + $0x970] sm:$0xff]
  %v5203 = vld [vmem:[%s7 + $0x978] sm:$0xff]
  %v5204 = vld [vmem:[%s7 + $0x980] sm:$0xff]
  %v5205 = vld [vmem:[%s7 + $0x988] sm:$0xff]
  %v5206 = vld [vmem:[%s7 + $0x990] sm:$0xff]
  %v5207 = vld [vmem:[%s7 + $0x998] sm:$0xff]
  %v5208 = vld [vmem:[%s7 + $0x9a0] sm:$0xff]
  %v5209 = vld [vmem:[%s7 + $0x9a8] sm:$0xff]
  %v5210 = vld [vmem:[%s7 + $0x9b0] sm:$0xff]
  %v5211 = vld [vmem:[%s7 + $0x9b8] sm:$0xff]
  %v5212 = vld [vmem:[%s7 + $0x9c0] sm:$0xff]
  %v5213 = vld [vmem:[%s7 + $0x9c8] sm:$0xff]
  %v5214 = vld [vmem:[%s7 + $0x9d0] sm:$0xff]
  %v5215 = vld [vmem:[%s7 + $0x9d8] sm:$0xff]
  %v5216 = vld [vmem:[%s7 + $0x9e0] sm:$0xff]
  %v5217 = vld [vmem:[%s7 + $0x9e8] sm:$0xff]
  %v5218 = vld [vmem:[%s7 + $0x9f0] sm:$0xff]
  %v5219 = vld [vmem:[%s7 + $0x9f8] sm:$0xff]
  %v5220 = vld [vmem:[%s7 + $0xa00] sm:$0xff]
  %v5221 = vld [vmem:[%s7 + $0xa08] sm:$0xff]
  %v5222 = vld [vmem:[%s7 + $0xa10] sm:$0xff]
  %v5223 = vld [vmem:[%s7 + $0xa18] sm:$0xff]
  %v5224 = vld [vmem:[%s7 + $0xa20] sm:$0xff]
  %v5225 = vld [vmem:[%s7 + $0xa28] sm:$0xff]
  %v5226 = vld [vmem:[%s7 + $0xa30] sm:$0xff]
  %v5227 = vld [vmem:[%s7 + $0xa38] sm:$0xff]
  %v5228 = vld [vmem:[%s7 + $0xa40] sm:$0xff]
  %v5229 = vld [vmem:[%s7 + $0xa48] sm:$0xff]
  %v5230 = vld [vmem:[%s7 + $0xa50] sm:$0xff]
  %v5231 = vld [vmem:[%s7 + $0xa58] sm:$0xff]
  %v5232 = vld [vmem:[%s7 + $0xa60] sm:$0xff]
  %v5233 = vld [vmem:[%s7 + $0xa68] sm:$0xff]
  %v5234 = vld [vmem:[%s7 + $0xa70] sm:$0xff]
  %v5235 = vld [vmem:[%s7 + $0xa78] sm:$0xff]
  %v5236 = vld [vmem:[%s7 + $0xa80] sm:$0xff]
  %v5237 = vld [vmem:[%s7 + $0xa88] sm:$0xff]
  %v5238 = vld [vmem:[%s7 + $0xa90] sm:$0xff]
  %v5239 = vld [vmem:[%s7 + $0xa98] sm:$0xff]
  %v5240 = vld [vmem:[%s7 + $0xaa0] sm:$0xff]
  %v5241 = vld [vmem:[%s7 + $0xaa8] sm:$0xff]
  %v5242 = vld [vmem:[%s7 + $0xab0] sm:$0xff]
  %v5243 = vld [vmem:[%s7 + $0xab8] sm:$0xff]
  %v5244 = vld [vmem:[%s7 + $0xac0] sm:$0xff]
  %v5245 = vld [vmem:[%s7 + $0xac8] sm:$0xff]
  %v5246 = vld [vmem:[%s7 + $0xad0] sm:$0xff]
  %v5247 = vld [vmem:[%s7 + $0xad8] sm:$0xff]
  %v5248 = vld [vmem:[%s7 + $0xae0] sm:$0xff]
  %v5249 = vld [vmem:[%s7 + $0xae8] sm:$0xff]
  %v5250 = vld [vmem:[%s7 + $0xaf0] sm:$0xff]
  %v5251 = vld [vmem:[%s7 + $0xaf8] sm:$0xff]
  %v5252 = vld [vmem:[%s7 + $0xb00] sm:$0xff]
  %v5253 = vld [vmem:[%s7 + $0xb08] sm:$0xff]
  %v5254 = vld [vmem:[%s7 + $0xb10] sm:$0xff]
  %v5255 = vld [vmem:[%s7 + $0xb18] sm:$0xff]
  %v5256 = vld [vmem:[%s7 + $0xb20] sm:$0xff]
  %v5257 = vld [vmem:[%s7 + $0xb28] sm:$0xff]
  %v5258 = vld [vmem:[%s7 + $0xb30] sm:$0xff]
  %v5259 = vld [vmem:[%s7 + $0xb38] sm:$0xff]
  %v5260 = vld [vmem:[%s7 + $0xb40] sm:$0xff]
  %v5261 = vld [vmem:[%s7 + $0xb48] sm:$0xff]
  %v5262 = vld [vmem:[%s7 + $0xb50] sm:$0xff]
  %v5263 = vld [vmem:[%s7 + $0xb58] sm:$0xff]
  %v5264 = vld [vmem:[%s7 + $0xb60] sm:$0xff]
  %v5265 = vld [vmem:[%s7 + $0xb68] sm:$0xff]
  %v5266 = vld [vmem:[%s7 + $0xb70] sm:$0xff]
  %v5267 = vld [vmem:[%s7 + $0xb78] sm:$0xff]
  %v5268 = vld [vmem:[%s7 + $0xb80] sm:$0xff]
  %v5269 = vld [vmem:[%s7 + $0xb88] sm:$0xff]
  %v5270 = vld [vmem:[%s7 + $0xb90] sm:$0xff]
  %v5271 = vld [vmem:[%s7 + $0xb98] sm:$0xff]
  %v5272 = vld [vmem:[%s7 + $0xba0] sm:$0xff]
  %v5273 = vld [vmem:[%s7 + $0xba8] sm:$0xff]
  %v5274 = vld [vmem:[%s7 + $0xbb0] sm:$0xff]
  %v5275 = vld [vmem:[%s7 + $0xbb8] sm:$0xff]
  %v5276 = vld [vmem:[%s7 + $0xbc0] sm:$0xff]
  %v5277 = vld [vmem:[%s7 + $0xbc8] sm:$0xff]
  %v5278 = vld [vmem:[%s7 + $0xbd0] sm:$0xff]
  %v5279 = vld [vmem:[%s7 + $0xbd8] sm:$0xff]
  %v5280 = vld [vmem:[%s7 + $0xbe0] sm:$0xff]
  %v5281 = vld [vmem:[%s7 + $0xbe8] sm:$0xff]
  %v5282 = vld [vmem:[%s7 + $0xbf0] sm:$0xff]
  %v5283 = vld [vmem:[%s7 + $0xbf8] sm:$0xff]
  %v5284 = vld [vmem:[%s7 + $0xc00] sm:$0xff]
  %v5285 = vld [vmem:[%s7 + $0xc08] sm:$0xff]
  %v5286 = vld [vmem:[%s7 + $0xc10] sm:$0xff]
  %v5287 = vld [vmem:[%s7 + $0xc18] sm:$0xff]
  %v5288 = vld [vmem:[%s7 + $0xc20] sm:$0xff]
  %v5289 = vld [vmem:[%s7 + $0xc28] sm:$0xff]
  %v5290 = vld [vmem:[%s7 + $0xc30] sm:$0xff]
  %v5291 = vld [vmem:[%s7 + $0xc38] sm:$0xff]
  %v5292 = vld [vmem:[%s7 + $0xc40] sm:$0xff]
  %v5293 = vld [vmem:[%s7 + $0xc48] sm:$0xff]
  %v5294 = vld [vmem:[%s7 + $0xc50] sm:$0xff]
  %v5295 = vld [vmem:[%s7 + $0xc58] sm:$0xff]
  %v5296 = vld [vmem:[%s7 + $0xc60] sm:$0xff]
  %v5297 = vld [vmem:[%s7 + $0xc68] sm:$0xff]
  %v5298 = vld [vmem:[%s7 + $0xc70] sm:$0xff]
  %v5299 = vld [vmem:[%s7 + $0xc78] sm:$0xff]
  %v5300 = vld [vmem:[%s7 + $0xc80] sm:$0xff]
  %v5301 = vld [vmem:[%s7 + $0xc88] sm:$0xff]
  %v5302 = vld [vmem:[%s7 + $0xc90] sm:$0xff]
  %v5303 = vld [vmem:[%s7 + $0xc98] sm:$0xff]
  %v5304 = vld [vmem:[%s7 + $0xca0] sm:$0xff]
  %v5305 = vld [vmem:[%s7 + $0xca8] sm:$0xff]
  %v5306 = vld [vmem:[%s7 + $0xcb0] sm:$0xff]
  %v5307 = vld [vmem:[%s7 + $0xcb8] sm:$0xff]
  %v5308 = vld [vmem:[%s7 + $0xcc0] sm:$0xff]
  %v5309 = vld [vmem:[%s7 + $0xcc8] sm:$0xff]
  %v5310 = vld [vmem:[%s7 + $0xcd0] sm:$0xff]
  %v5311 = vld [vmem:[%s7 + $0xcd8] sm:$0xff]
  %v5312 = vld [vmem:[%s7 + $0xce0] sm:$0xff]
  %v5313 = vld [vmem:[%s7 + $0xce8] sm:$0xff]
  %v5314 = vld [vmem:[%s7 + $0xcf0] sm:$0xff]
  %v5315 = vld [vmem:[%s7 + $0xcf8] sm:$0xff]
  %v5316 = vld [vmem:[%s7 + $0xd00] sm:$0xff]
  %v5317 = vld [vmem:[%s7 + $0xd08] sm:$0xff]
  %v5318 = vld [vmem:[%s7 + $0xd10] sm:$0xff]
  %v5319 = vld [vmem:[%s7 + $0xd18] sm:$0xff]
  %v5320 = vld [vmem:[%s7 + $0xd20] sm:$0xff]
  %v5321 = vld [vmem:[%s7 + $0xd28] sm:$0xff]
  %v5322 = vld [vmem:[%s7 + $0xd30] sm:$0xff]
  %v5323 = vld [vmem:[%s7 + $0xd38] sm:$0xff]
  %v5324 = vld [vmem:[%s7 + $0xd40] sm:$0xff]
  %v5325 = vld [vmem:[%s7 + $0xd48] sm:$0xff]
  %v5326 = vld [vmem:[%s7 + $0xd50] sm:$0xff]
  %v5327 = vld [vmem:[%s7 + $0xd58] sm:$0xff]
  %v5328 = vld [vmem:[%s7 + $0xd60] sm:$0xff]
  %v5329 = vld [vmem:[%s7 + $0xd68] sm:$0xff]
  %v5330 = vld [vmem:[%s7 + $0xd70] sm:$0xff]
  %v5331 = vld [vmem:[%s7 + $0xd78] sm:$0xff]
  %v5332 = vld [vmem:[%s7 + $0xd80] sm:$0xff]
  %v5333 = vld [vmem:[%s7 + $0xd88] sm:$0xff]
  %v5334 = vld [vmem:[%s7 + $0xd90] sm:$0xff]
  %v5335 = vld [vmem:[%s7 + $0xd98] sm:$0xff]
  %v5336 = vld [vmem:[%s7 + $0xda0] sm:$0xff]
  %v5337 = vld [vmem:[%s7 + $0xda8] sm:$0xff]
  %v5338 = vld [vmem:[%s7 + $0xdb0] sm:$0xff]
  %v5339 = vld [vmem:[%s7 + $0xdb8] sm:$0xff]
  %v5340 = vld [vmem:[%s7 + $0xdc0] sm:$0xff]
  %v5341 = vld [vmem:[%s7 + $0xdc8] sm:$0xff]
  %v5342 = vld [vmem:[%s7 + $0xdd0] sm:$0xff]
  %v5343 = vld [vmem:[%s7 + $0xdd8] sm:$0xff]
  %v5344 = vld [vmem:[%s7 + $0xde0] sm:$0xff]
  %v5345 = vld [vmem:[%s7 + $0xde8] sm:$0xff]
  %v5346 = vld [vmem:[%s7 + $0xdf0] sm:$0xff]
  %v5347 = vld [vmem:[%s7 + $0xdf8] sm:$0xff]
  %v5348 = vld [vmem:[%s7 + $0xe00] sm:$0xff]
  %v5349 = vld [vmem:[%s7 + $0xe08] sm:$0xff]
  %v5350 = vld [vmem:[%s7 + $0xe10] sm:$0xff]
  %v5351 = vld [vmem:[%s7 + $0xe18] sm:$0xff]
  %v5352 = vld [vmem:[%s7 + $0xe20] sm:$0xff]
  %v5353 = vld [vmem:[%s7 + $0xe28] sm:$0xff]
  %v5354 = vld [vmem:[%s7 + $0xe30] sm:$0xff]
  %v5355 = vld [vmem:[%s7 + $0xe38] sm:$0xff]
  %v5356 = vld [vmem:[%s7 + $0xe40] sm:$0xff]
  %v5357 = vld [vmem:[%s7 + $0xe48] sm:$0xff]
  %v5358 = vld [vmem:[%s7 + $0xe50] sm:$0xff]
  %v5359 = vld [vmem:[%s7 + $0xe58] sm:$0xff]
  %v5360 = vld [vmem:[%s7 + $0xe60] sm:$0xff]
  %v5361 = vld [vmem:[%s7 + $0xe68] sm:$0xff]
  %v5362 = vld [vmem:[%s7 + $0xe70] sm:$0xff]
  %v5363 = vld [vmem:[%s7 + $0xe78] sm:$0xff]
  %v5364 = vld [vmem:[%s7 + $0xe80] sm:$0xff]
  %v5365 = vld [vmem:[%s7 + $0xe88] sm:$0xff]
  %v5366 = vld [vmem:[%s7 + $0xe90] sm:$0xff]
  %v5367 = vld [vmem:[%s7 + $0xe98] sm:$0xff]
  %v5368 = vld [vmem:[%s7 + $0xea0] sm:$0xff]
  %v5369 = vld [vmem:[%s7 + $0xea8] sm:$0xff]
  %v5370 = vld [vmem:[%s7 + $0xeb0] sm:$0xff]
  %v5371 = vld [vmem:[%s7 + $0xeb8] sm:$0xff]
  %v5372 = vld [vmem:[%s7 + $0xec0] sm:$0xff]
  %v5373 = vld [vmem:[%s7 + $0xec8] sm:$0xff]
  %v5374 = vld [vmem:[%s7 + $0xed0] sm:$0xff]
  %v5375 = vld [vmem:[%s7 + $0xed8] sm:$0xff]
  %v5376 = vld [vmem:[%s7 + $0xee0] sm:$0xff]
  %v5377 = vld [vmem:[%s7 + $0xee8] sm:$0xff]
  %v5378 = vld [vmem:[%s7 + $0xef0] sm:$0xff]
  %v5379 = vld [vmem:[%s7 + $0xef8] sm:$0xff]
  %v5380 = vld [vmem:[%s7 + $0xf00] sm:$0xff]
  %v5381 = vld [vmem:[%s7 + $0xf08] sm:$0xff]
  %v5382 = vld [vmem:[%s7 + $0xf10] sm:$0xff]
  %v5383 = vld [vmem:[%s7 + $0xf18] sm:$0xff]
  %v5384 = vld [vmem:[%s7 + $0xf20] sm:$0xff]
  %v5385 = vld [vmem:[%s7 + $0xf28] sm:$0xff]
  %v5386 = vld [vmem:[%s7 + $0xf30] sm:$0xff]
  %v5387 = vld [vmem:[%s7 + $0xf38] sm:$0xff]
  %v5388 = vld [vmem:[%s7 + $0xf40] sm:$0xff]
  %v5389 = vld [vmem:[%s7 + $0xf48] sm:$0xff]
  %v5390 = vld [vmem:[%s7 + $0xf50] sm:$0xff]
  %v5391 = vld [vmem:[%s7 + $0xf58] sm:$0xff]
  %v5392 = vld [vmem:[%s7 + $0xf60] sm:$0xff]
  %v5393 = vld [vmem:[%s7 + $0xf68] sm:$0xff]
  %v5394 = vld [vmem:[%s7 + $0xf70] sm:$0xff]
  %v5395 = vld [vmem:[%s7 + $0xf78] sm:$0xff]
  %v5396 = vld [vmem:[%s7 + $0xf80] sm:$0xff]
  %v5397 = vld [vmem:[%s7 + $0xf88] sm:$0xff]
  %v5398 = vld [vmem:[%s7 + $0xf90] sm:$0xff]
  %v5399 = vld [vmem:[%s7 + $0xf98] sm:$0xff]
  %v5400 = vld [vmem:[%s7 + $0xfa0] sm:$0xff]
  %v5401 = vld [vmem:[%s7 + $0xfa8] sm:$0xff]
  %v5402 = vld [vmem:[%s7 + $0xfb0] sm:$0xff]
  %v5403 = vld [vmem:[%s7 + $0xfb8] sm:$0xff]
  %v5404 = vld [vmem:[%s7 + $0xfc0] sm:$0xff]
  %v5405 = vld [vmem:[%s7 + $0xfc8] sm:$0xff]
  %v5406 = vld [vmem:[%s7 + $0xfd0] sm:$0xff]
  %v5407 = vld [vmem:[%s7 + $0xfd8] sm:$0xff]
  %v5408 = vld [vmem:[%s7 + $0xfe0] sm:$0xff]
  %v5409 = vld [vmem:[%s7 + $0xfe8] sm:$0xff]
  %v5410 = vld [vmem:[%s7 + $0xff0] sm:$0xff]
  %v5411 = vld [vmem:[%s7 + $0xff8] sm:$0xff]
  %v5412 = vld [vmem:[%s7 + $0x1000] sm:$0xff]
  %v5413 = vld [vmem:[%s7 + $0x1008] sm:$0xff]
  %v5414 = vld [vmem:[%s7 + $0x1010] sm:$0xff]
  %v5415 = vld [vmem:[%s7 + $0x1018] sm:$0xff]
  %v5416 = vld [vmem:[%s7 + $0x1020] sm:$0xff]
  %v5417 = vld [vmem:[%s7 + $0x1028] sm:$0xff]
  %v5418 = vld [vmem:[%s7 + $0x1030] sm:$0xff]
  %v5419 = vld [vmem:[%s7 + $0x1038] sm:$0xff]
  %v5420 = vld [vmem:[%s7 + $0x1040] sm:$0xff]
  %v5421 = vld [vmem:[%s7 + $0x1048] sm:$0xff]
  %v5422 = vld [vmem:[%s7 + $0x1050] sm:$0xff]
  %v5423 = vld [vmem:[%s7 + $0x1058] sm:$0xff]
  %v5424 = vld [vmem:[%s7 + $0x1060] sm:$0xff]
  %v5425 = vld [vmem:[%s7 + $0x1068] sm:$0xff]
  %v5426 = vld [vmem:[%s7 + $0x1070] sm:$0xff]
  %v5427 = vld [vmem:[%s7 + $0x1078] sm:$0xff]
  %v5428 = vld [vmem:[%s7 + $0x1080] sm:$0xff]
  %v5429 = vld [vmem:[%s7 + $0x1088] sm:$0xff]
  %v5430 = vld [vmem:[%s7 + $0x1090] sm:$0xff]
  %v5431 = vld [vmem:[%s7 + $0x1098] sm:$0xff]
  %v5432 = vld [vmem:[%s7 + $0x10a0] sm:$0xff]
  %v5433 = vld [vmem:[%s7 + $0x10a8] sm:$0xff]
  %v5434 = vld [vmem:[%s7 + $0x10b0] sm:$0xff]
  %v5435 = vld [vmem:[%s7 + $0x10b8] sm:$0xff]
  %v5436 = vld [vmem:[%s7 + $0x10c0] sm:$0xff]
  %v5437 = vld [vmem:[%s7 + $0x10c8] sm:$0xff]
  %v5438 = vld [vmem:[%s7 + $0x10d0] sm:$0xff]
  %v5439 = vld [vmem:[%s7 + $0x10d8] sm:$0xff]
  %v5440 = vld [vmem:[%s7 + $0x10e0] sm:$0xff]
  %v5441 = vld [vmem:[%s7 + $0x10e8] sm:$0xff]
  %v5442 = vld [vmem:[%s7 + $0x10f0] sm:$0xff]
  %v5443 = vld [vmem:[%s7 + $0x10f8] sm:$0xff]
  %v5444 = vld [vmem:[%s7 + $0x1100] sm:$0xff]
  %v5445 = vld [vmem:[%s7 + $0x1108] sm:$0xff]
  %v5446 = vld [vmem:[%s7 + $0x1110] sm:$0xff]
  %v5447 = vld [vmem:[%s7 + $0x1118] sm:$0xff]
  %v5448 = vld [vmem:[%s7 + $0x1120] sm:$0xff]
  %v5449 = vld [vmem:[%s7 + $0x1128] sm:$0xff]
  %v5450 = vld [vmem:[%s7 + $0x1130] sm:$0xff]
  %v5451 = vld [vmem:[%s7 + $0x1138] sm:$0xff]
  %v5452 = vld [vmem:[%s7 + $0x1140] sm:$0xff]
  %v5453 = vld [vmem:[%s7 + $0x1148] sm:$0xff]
  %v5454 = vld [vmem:[%s7 + $0x1150] sm:$0xff]
  %v5455 = vld [vmem:[%s7 + $0x1158] sm:$0xff]
  %v5456 = vld [vmem:[%s7 + $0x1160] sm:$0xff]
  %v5457 = vld [vmem:[%s7 + $0x1168] sm:$0xff]
  %v5458 = vld [vmem:[%s7 + $0x1170] sm:$0xff]
  %v5459 = vld [vmem:[%s7 + $0x1178] sm:$0xff]
  %v5460 = vld [vmem:[%s7 + $0x1180] sm:$0xff]
  %v5461 = vld [vmem:[%s7 + $0x1188] sm:$0xff]
  %v5462 = vld [vmem:[%s7 + $0x1190] sm:$0xff]
  %v5463 = vld [vmem:[%s7 + $0x1198] sm:$0xff]
  %v5464 = vld [vmem:[%s7 + $0x11a0] sm:$0xff]
  %v5465 = vld [vmem:[%s7 + $0x11a8] sm:$0xff]
  %v5466 = vld [vmem:[%s7 + $0x11b0] sm:$0xff]
  %v5467 = vld [vmem:[%s7 + $0x11b8] sm:$0xff]
  %v5468 = vld [vmem:[%s7 + $0x11c0] sm:$0xff]
  %v5469 = vld [vmem:[%s7 + $0x11c8] sm:$0xff]
  %v5470 = vld [vmem:[%s7 + $0x11d0] sm:$0xff]
  %v5471 = vld [vmem:[%s7 + $0x11d8] sm:$0xff]
  %v5472 = vld [vmem:[%s7 + $0x11e0] sm:$0xff]
  %v5473 = vld [vmem:[%s7 + $0x11e8] sm:$0xff]
  %v5474 = vld [vmem:[%s7 + $0x11f0] sm:$0xff]
  %v5475 = vld [vmem:[%s7 + $0x11f8] sm:$0xff]
  %v5476 = vld [vmem:[%s7 + $0x1200] sm:$0xff]
  %v5477 = vld [vmem:[%s7 + $0x1208] sm:$0xff]
  %v5478 = vld [vmem:[%s7 + $0x1210] sm:$0xff]
  %v5479 = vld [vmem:[%s7 + $0x1218] sm:$0xff]
  %v5480 = vld [vmem:[%s7 + $0x1220] sm:$0xff]
  %v5481 = vld [vmem:[%s7 + $0x1228] sm:$0xff]
  %v5482 = vld [vmem:[%s7 + $0x1230] sm:$0xff]
  %v5483 = vld [vmem:[%s7 + $0x1238] sm:$0xff]
  %v5484 = vld [vmem:[%s7 + $0x1240] sm:$0xff]
  %v5485 = vld [vmem:[%s7 + $0x1248] sm:$0xff]
  %v5486 = vld [vmem:[%s7 + $0x1250] sm:$0xff]
  %v5487 = vld [vmem:[%s7 + $0x1258] sm:$0xff]
  %v5488 = vld [vmem:[%s7 + $0x1260] sm:$0xff]
  %v5489 = vld [vmem:[%s7 + $0x1268] sm:$0xff]
  %v5490 = vld [vmem:[%s7 + $0x1270] sm:$0xff]
  %v5491 = vld [vmem:[%s7 + $0x1278] sm:$0xff]
  %v5492 = vld [vmem:[%s7 + $0x1280] sm:$0xff]
  %v5493 = vld [vmem:[%s7 + $0x1288] sm:$0xff]
  %v5494 = vld [vmem:[%s7 + $0x1290] sm:$0xff]
  %v5495 = vld [vmem:[%s7 + $0x1298] sm:$0xff]
  %v5496 = vld [vmem:[%s7 + $0x12a0] sm:$0xff]
  %v5497 = vld [vmem:[%s7 + $0x12a8] sm:$0xff]
  %v5498 = vld [vmem:[%s7 + $0x12b0] sm:$0xff]
  %v5499 = vld [vmem:[%s7 + $0x12b8] sm:$0xff]
  %v5500 = vld [vmem:[%s7 + $0x12c0] sm:$0xff]
  %v5501 = vld [vmem:[%s7 + $0x12c8] sm:$0xff]
  %v5502 = vld [vmem:[%s7 + $0x12d0] sm:$0xff]
  %v5503 = vld [vmem:[%s7 + $0x12d8] sm:$0xff]
  %v5504 = vld [vmem:[%s7 + $0x12e0] sm:$0xff]
  %v5505 = vld [vmem:[%s7 + $0x12e8] sm:$0xff]
  %v5506 = vld [vmem:[%s7 + $0x12f0] sm:$0xff]
  %v5507 = vld [vmem:[%s7 + $0x12f8] sm:$0xff]
  %v5508 = vld [vmem:[%s7 + $0x1300] sm:$0xff]
  %v5509 = vld [vmem:[%s7 + $0x1308] sm:$0xff]
  %v5510 = vld [vmem:[%s7 + $0x1310] sm:$0xff]
  %v5511 = vld [vmem:[%s7 + $0x1318] sm:$0xff]
  %v5512 = vld [vmem:[%s7 + $0x1320] sm:$0xff]
  %v5513 = vld [vmem:[%s7 + $0x1328] sm:$0xff]
  %v5514 = vld [vmem:[%s7 + $0x1330] sm:$0xff]
  %v5515 = vld [vmem:[%s7 + $0x1338] sm:$0xff]
  %v5516 = vld [vmem:[%s7 + $0x1340] sm:$0xff]
  %v5517 = vld [vmem:[%s7 + $0x1348] sm:$0xff]
  %v5518 = vld [vmem:[%s7 + $0x1350] sm:$0xff]
  %v5519 = vld [vmem:[%s7 + $0x1358] sm:$0xff]
  %v5520 = vld [vmem:[%s7 + $0x1360] sm:$0xff]
  %v5521 = vld [vmem:[%s7 + $0x1368] sm:$0xff]
  %v5522 = vld [vmem:[%s7 + $0x1370] sm:$0xff]
  %v5523 = vld [vmem:[%s7 + $0x1378] sm:$0xff]
  %v5524 = vld [vmem:[%s7 + $0x1380] sm:$0xff]
  %v5525 = vld [vmem:[%s7 + $0x1388] sm:$0xff]
  %v5526 = vld [vmem:[%s7 + $0x1390] sm:$0xff]
  %v5527 = vld [vmem:[%s7 + $0x1398] sm:$0xff]
  %v5528 = vld [vmem:[%s7 + $0x13a0] sm:$0xff]
  %v5529 = vld [vmem:[%s7 + $0x13a8] sm:$0xff]
  %v5530 = vld [vmem:[%s7 + $0x13b0] sm:$0xff]
  %v5531 = vld [vmem:[%s7 + $0x13b8] sm:$0xff]
  %v5532 = vld [vmem:[%s7 + $0x13c0] sm:$0xff]
  %v5533 = vld [vmem:[%s7 + $0x13c8] sm:$0xff]
  %v5534 = vld [vmem:[%s7 + $0x13d0] sm:$0xff]
  %v5535 = vld [vmem:[%s7 + $0x13d8] sm:$0xff]
  %v5536 = vld [vmem:[%s7 + $0x13e0] sm:$0xff]
  %v5537 = vld [vmem:[%s7 + $0x13e8] sm:$0xff]
  %v5538 = vld [vmem:[%s7 + $0x13f0] sm:$0xff]
  %v5539 = vld [vmem:[%s7 + $0x13f8] sm:$0xff]
  %v5540 = vld [vmem:[%s7 + $0x1400] sm:$0xff]
  %v5541 = vld [vmem:[%s7 + $0x1408] sm:$0xff]
  %v5542 = vld [vmem:[%s7 + $0x1410] sm:$0xff]
  %v5543 = vld [vmem:[%s7 + $0x1418] sm:$0xff]
  %v5544 = vld [vmem:[%s7 + $0x1420] sm:$0xff]
  %v5545 = vld [vmem:[%s7 + $0x1428] sm:$0xff]
  %v5546 = vld [vmem:[%s7 + $0x1430] sm:$0xff]
  %v5547 = vld [vmem:[%s7 + $0x1438] sm:$0xff]
  %v5548 = vld [vmem:[%s7 + $0x1440] sm:$0xff]
  %v5549 = vld [vmem:[%s7 + $0x1448] sm:$0xff]
  %v5550 = vld [vmem:[%s7 + $0x1450] sm:$0xff]
  %v5551 = vld [vmem:[%s7 + $0x1458] sm:$0xff]
  %v5552 = vld [vmem:[%s7 + $0x1460] sm:$0xff]
  %v5553 = vld [vmem:[%s7 + $0x1468] sm:$0xff]
  %v5554 = vld [vmem:[%s7 + $0x1470] sm:$0xff]
  %v5555 = vld [vmem:[%s7 + $0x1478] sm:$0xff]
  %v5556 = vld [vmem:[%s7 + $0x1480] sm:$0xff]
  %v5557 = vld [vmem:[%s7 + $0x1488] sm:$0xff]
  %v5558 = vld [vmem:[%s7 + $0x1490] sm:$0xff]
  %v5559 = vld [vmem:[%s7 + $0x1498] sm:$0xff]
  %v5560 = vld [vmem:[%s7 + $0x14a0] sm:$0xff]
  %v5561 = vld [vmem:[%s7 + $0x14a8] sm:$0xff]
  %v5562 = vld [vmem:[%s7 + $0x14b0] sm:$0xff]
  %v5563 = vld [vmem:[%s7 + $0x14b8] sm:$0xff]
  %v5564 = vld [vmem:[%s7 + $0x14c0] sm:$0xff]
  %v5565 = vld [vmem:[%s7 + $0x14c8] sm:$0xff]
  %v5566 = vld [vmem:[%s7 + $0x14d0] sm:$0xff]
  %v5567 = vld [vmem:[%s7 + $0x14d8] sm:$0xff]
  %v5568 = vld [vmem:[%s7 + $0x14e0] sm:$0xff]
  %v5569 = vld [vmem:[%s7 + $0x14e8] sm:$0xff]
  %v5570 = vld [vmem:[%s7 + $0x14f0] sm:$0xff]
  %v5571 = vld [vmem:[%s7 + $0x14f8] sm:$0xff]
  %v5572 = vld [vmem:[%s7 + $0x1500] sm:$0xff]
  %v5573 = vld [vmem:[%s7 + $0x1508] sm:$0xff]
  %v5574 = vld [vmem:[%s7 + $0x1510] sm:$0xff]
  %v5575 = vld [vmem:[%s7 + $0x1518] sm:$0xff]
  %v5576 = vld [vmem:[%s7 + $0x1520] sm:$0xff]
  %v5577 = vld [vmem:[%s7 + $0x1528] sm:$0xff]
  %v5578 = vld [vmem:[%s7 + $0x1530] sm:$0xff]
  %v5579 = vld [vmem:[%s7 + $0x1538] sm:$0xff]
  %v5580 = vld [vmem:[%s7 + $0x1540] sm:$0xff]
  %v5581 = vld [vmem:[%s7 + $0x1548] sm:$0xff]
  %v5582 = vld [vmem:[%s7 + $0x1550] sm:$0xff]
  %v5583 = vld [vmem:[%s7 + $0x1558] sm:$0xff]
  %v5584 = vld [vmem:[%s7 + $0x1560] sm:$0xff]
  %v5585 = vld [vmem:[%s7 + $0x1568] sm:$0xff]
  %v5586 = vld [vmem:[%s7 + $0x1570] sm:$0xff]
  %v5587 = vld [vmem:[%s7 + $0x1578] sm:$0xff]
  %v5588 = vld [vmem:[%s7 + $0x1580] sm:$0xff]
  %v5589 = vld [vmem:[%s7 + $0x1588] sm:$0xff]
  %v5590 = vld [vmem:[%s7 + $0x1590] sm:$0xff]
  %v5591 = vld [vmem:[%s7 + $0x1598] sm:$0xff]
  %v5592 = vld [vmem:[%s7 + $0x15a0] sm:$0xff]
  %v5593 = vld [vmem:[%s7 + $0x15a8] sm:$0xff]
  %v5594 = vld [vmem:[%s7 + $0x15b0] sm:$0xff]
  %v5595 = vld [vmem:[%s7 + $0x15b8] sm:$0xff]
  %v5596 = vld [vmem:[%s7 + $0x15c0] sm:$0xff]
  %v5597 = vld [vmem:[%s7 + $0x15c8] sm:$0xff]
  %v5598 = vld [vmem:[%s7 + $0x15d0] sm:$0xff]
  %v5599 = vld [vmem:[%s7 + $0x15d8] sm:$0xff]
  %v5600 = vld [vmem:[%s7 + $0x15e0] sm:$0xff]
  %v5601 = vld [vmem:[%s7 + $0x15e8] sm:$0xff]
  %v5602 = vld [vmem:[%s7 + $0x15f0] sm:$0xff]
  %v5603 = vld [vmem:[%s7 + $0x15f8] sm:$0xff]
  %v5604 = vld [vmem:[%s7 + $0x1600] sm:$0xff]
  %v5605 = vld [vmem:[%s7 + $0x1608] sm:$0xff]
  %v5606 = vld [vmem:[%s7 + $0x1610] sm:$0xff]
  %v5607 = vld [vmem:[%s7 + $0x1618] sm:$0xff]
  %v5608 = vld [vmem:[%s7 + $0x1620] sm:$0xff]
  %v5609 = vld [vmem:[%s7 + $0x1628] sm:$0xff]
  %v5610 = vld [vmem:[%s7 + $0x1630] sm:$0xff]
  %v5611 = vld [vmem:[%s7 + $0x1638] sm:$0xff]
  %v5612 = vld [vmem:[%s7 + $0x1640] sm:$0xff]
  %v5613 = vld [vmem:[%s7 + $0x1648] sm:$0xff]
  %v5614 = vld [vmem:[%s7 + $0x1650] sm:$0xff]
  %v5615 = vld [vmem:[%s7 + $0x1658] sm:$0xff]
  %v5616 = vld [vmem:[%s7 + $0x1660] sm:$0xff]
  %v5617 = vld [vmem:[%s7 + $0x1668] sm:$0xff]
  %v5618 = vld [vmem:[%s7 + $0x1670] sm:$0xff]
  %v5619 = vld [vmem:[%s7 + $0x1678] sm:$0xff]
  %v5620 = vld [vmem:[%s7 + $0x1680] sm:$0xff]
  %v5621 = vld [vmem:[%s7 + $0x1688] sm:$0xff]
  %v5622 = vld [vmem:[%s7 + $0x1690] sm:$0xff]
  %v5623 = vld [vmem:[%s7 + $0x1698] sm:$0xff]
  %v5624 = vld [vmem:[%s7 + $0x16a0] sm:$0xff]
  %v5625 = vld [vmem:[%s7 + $0x16a8] sm:$0xff]
  %v5626 = vld [vmem:[%s7 + $0x16b0] sm:$0xff]
  %v5627 = vld [vmem:[%s7 + $0x16b8] sm:$0xff]
  %v5628 = vld [vmem:[%s7 + $0x16c0] sm:$0xff]
  %v5629 = vld [vmem:[%s7 + $0x16c8] sm:$0xff]
  %v5630 = vld [vmem:[%s7 + $0x16d0] sm:$0xff]
  %v5631 = vld [vmem:[%s7 + $0x16d8] sm:$0xff]
  %v5632 = vld [vmem:[%s7 + $0x16e0] sm:$0xff]
  %v5633 = vld [vmem:[%s7 + $0x16e8] sm:$0xff]
  %v5634 = vld [vmem:[%s7 + $0x16f0] sm:$0xff]
  %v5635 = vld [vmem:[%s7 + $0x16f8] sm:$0xff]
  %v5636 = vld [vmem:[%s7 + $0x1700] sm:$0xff]
  %v5637 = vld [vmem:[%s7 + $0x1708] sm:$0xff]
  %v5638 = vld [vmem:[%s7 + $0x1710] sm:$0xff]
  %v5639 = vld [vmem:[%s7 + $0x1718] sm:$0xff]
  %v5640 = vld [vmem:[%s7 + $0x1720] sm:$0xff]
  %v5641 = vld [vmem:[%s7 + $0x1728] sm:$0xff]
  %v5642 = vld [vmem:[%s7 + $0x1730] sm:$0xff]
  %v5643 = vld [vmem:[%s7 + $0x1738] sm:$0xff]
  %v5644 = vld [vmem:[%s7 + $0x1740] sm:$0xff]
  %v5645 = vld [vmem:[%s7 + $0x1748] sm:$0xff]
  %v5646 = vld [vmem:[%s7 + $0x1750] sm:$0xff]
  %v5647 = vld [vmem:[%s7 + $0x1758] sm:$0xff]
  %v5648 = vld [vmem:[%s7 + $0x1760] sm:$0xff]
  %v5649 = vld [vmem:[%s7 + $0x1768] sm:$0xff]
  %v5650 = vld [vmem:[%s8] sm:$0xff]
  %v5651 = vld [vmem:[%s8 + $0x8] sm:$0x7f]
  %v5654 = vlaneseq
  %v5655 = vshrl.u32 %v5654, 7
  %v5656 = vsub.s32 0, %v5655
  %v5657 = vrot.slane %v5650, %v5656
  %v5658 = vlaneseq
  %v5659 = vshrl.u32 %v5658, 7
  %v5660 = vsub.s32 1, %v5659
  %v5661 = vrot.slane %v5650, %v5660
  %v5662 = vlaneseq
  %v5663 = vshrl.u32 %v5662, 7
  %v5664 = vsub.s32 2, %v5663
  %v5665 = vrot.slane %v5650, %v5664
  %v5666 = vlaneseq
  %v5667 = vshrl.u32 %v5666, 7
  %v5668 = vsub.s32 3, %v5667
  %v5669 = vrot.slane %v5650, %v5668
  %v5670 = vlaneseq
  %v5671 = vshrl.u32 %v5670, 7
  %v5672 = vsub.s32 4, %v5671
  %v5673 = vrot.slane %v5650, %v5672
  %v5674 = vlaneseq
  %v5675 = vshrl.u32 %v5674, 7
  %v5676 = vsub.s32 5, %v5675
  %v5677 = vrot.slane %v5650, %v5676
  %v5678 = vlaneseq
  %v5679 = vshrl.u32 %v5678, 7
  %v5680 = vsub.s32 6, %v5679
  %v5681 = vrot.slane %v5650, %v5680
  %v5682 = vlaneseq
  %v5683 = vshrl.u32 %v5682, 7
  %v5684 = vsub.s32 7, %v5683
  %v5685 = vrot.slane %v5650, %v5684
  %v5686 = vlaneseq
  %v5687 = vshrl.u32 %v5686, 7
  %v5688 = vsub.s32 0, %v5687
  %v5689 = vrot.slane %v5651, %v5688
  %v5690 = vlaneseq
  %v5691 = vshrl.u32 %v5690, 7
  %v5692 = vsub.s32 1, %v5691
  %v5693 = vrot.slane %v5651, %v5692
  %v5694 = vlaneseq
  %v5695 = vshrl.u32 %v5694, 7
  %v5696 = vsub.s32 2, %v5695
  %v5697 = vrot.slane %v5651, %v5696
  %v5698 = vlaneseq
  %v5699 = vshrl.u32 %v5698, 7
  %v5700 = vsub.s32 3, %v5699
  %v5701 = vrot.slane %v5651, %v5700
  %v5702 = vlaneseq
  %v5703 = vshrl.u32 %v5702, 7
  %v5704 = vsub.s32 4, %v5703
  %v5705 = vrot.slane %v5651, %v5704
  %v5706 = vlaneseq
  %v5707 = vshrl.u32 %v5706, 7
  %v5708 = vsub.s32 5, %v5707
  %v5709 = vrot.slane %v5651, %v5708
  %v5710 = vlaneseq
  %v5711 = vshrl.u32 %v5710, 7
  %v5712 = vsub.s32 6, %v5711
  %v5713 = vrot.slane %v5651, %v5712
  %v5730 = vsel %vm437, %v4899, 0
  %5732 = vmatprep.subr.mxu0 %v4901
  %5733 = vmatpush1.msra.mxu0 %v4900
  %5734 = vmatprep.subr.mxu0 %v4916
  %5735 = vmatpush1.msra.mxu0 %v4915
  %5736 = vmatprep.subr.mxu0 %v4931
  %5737 = vmatpush1.msra.mxu0 %v4930
  %5738 = vmatprep.subr.mxu0 %v4946
  %5739 = vmatpush1.msra.mxu0 %v4945
  %5740 = vmatprep.subr.mxu0 %v4961
  %5741 = vmatpush1.msra.mxu0 %v4960
  %5742 = vmatprep.subr.mxu0 %v4976
  %5743 = vmatpush1.msra.mxu0 %v4975
  %5744 = vmatprep.subr.mxu0 %v4991
  %5745 = vmatpush1.msra.mxu0 %v4990
  %5746 = vmatprep.subr.mxu0 %v5006
  %5747 = vmatpush1.msra.mxu0 %v5005
  %5748 = vmatprep.subr.mxu0 %v5021
  %5749 = vmatpush1.msra.mxu0 %v5020
  %5750 = vmatprep.subr.mxu0 %v5036
  %5751 = vmatpush1.msra.mxu0 %v5035
  %5752 = vmatprep.subr.mxu0 %v5051
  %5753 = vmatpush1.msra.mxu0 %v5050
  %5754 = vmatprep.subr.mxu0 %v5066
  %5755 = vmatpush1.msra.mxu0 %v5065
  %5756 = vmatprep.subr.mxu0 %v5081
  %5757 = vmatpush1.msra.mxu0 %v5080
  %5758 = vmatprep.subr.mxu0 %v5096
  %5759 = vmatpush1.msra.mxu0 %v5095
  %5760 = vmatprep.subr.mxu0 %v5111
  %5761 = vmatpush1.msra.mxu0 %v5110
  %5762 = vmatprep.subr.mxu0 %v5126
  %5763 = vmatpush1.msra.mxu0 %v5125
  %5764 = vmatprep.subr.mxu0 %v5141
  %5765 = vmatpush1.msra.mxu0 %v5140
  %5766 = vmatprep.subr.mxu0 %v5156
  %5767 = vmatpush1.msra.mxu0 %v5155
  %5768 = vmatprep.subr.mxu0 %v5171
  %5769 = vmatpush1.msra.mxu0 %v5170
  %5770 = vmatprep.subr.mxu0 %v5186
  %5771 = vmatpush1.msra.mxu0 %v5185
  %5772 = vmatprep.subr.mxu0 %v5201
  %5773 = vmatpush1.msra.mxu0 %v5200
  %5774 = vmatprep.subr.mxu0 %v5216
  %5775 = vmatpush1.msra.mxu0 %v5215
  %5776 = vmatprep.subr.mxu0 %v5231
  %5777 = vmatpush1.msra.mxu0 %v5230
  %5778 = vmatprep.subr.mxu0 %v5246
  %5779 = vmatpush1.msra.mxu0 %v5245
  %5780 = vmatprep.subr.mxu0 %v5261
  %5781 = vmatpush1.msra.mxu0 %v5260
  %5782 = vmatprep.subr.mxu0 %v5276
  %5783 = vmatpush1.msra.mxu0 %v5275
  %5784 = vmatprep.subr.mxu0 %v5291
  %5785 = vmatpush1.msra.mxu0 %v5290
  %5786 = vmatprep.subr.mxu0 %v5306
  %5787 = vmatpush1.msra.mxu0 %v5305
  %5788 = vmatprep.subr.mxu0 %v5321
  %5789 = vmatpush1.msra.mxu0 %v5320
  %5790 = vmatprep.subr.mxu0 %v5336
  %5791 = vmatpush1.msra.mxu0 %v5335
  %5792 = vmatprep.subr.mxu0 %v5351
  %5793 = vmatpush1.msra.mxu0 %v5350
  %5794 = vmatprep.subr.mxu0 %v5366
  %5795 = vmatpush1.msra.mxu0 %v5365
  %5796 = vmatprep.mubr.f32.mxu0 %v4897
  %5797 = vmatmul.mubr.f32.gmra.mrb[0].mxu0 %v4896
  %v5798 = vpop.f32.mrb[0].mxu0
  %v5799 = vadd.f32 %v5657, %v5798
  %v5800 = vpop.f32.mrb[0].mxu0
  %v5801 = vadd.f32 %v5661, %v5800
  %5802 = vdwg.mxu0
  %5803 = vmatprep.subr.mxu0 %v5381
  %5804 = vmatpush1.msra.mxu0 %v5380
  %5805 = vmatprep.subr.mxu0 %v5396
  %5806 = vmatpush1.msra.mxu0 %v5395
  %5807 = vmatprep.subr.mxu0 %v5411
  %5808 = vmatpush1.msra.mxu0 %v5410
  %5809 = vmatprep.subr.mxu0 %v5426
  %5810 = vmatpush1.msra.mxu0 %v5425
  %5811 = vmatprep.subr.mxu0 %v5441
  %5812 = vmatpush1.msra.mxu0 %v5440
  %5813 = vmatprep.subr.mxu0 %v5456
  %5814 = vmatpush1.msra.mxu0 %v5455
  %5815 = vmatprep.subr.mxu0 %v5471
  %5816 = vmatpush1.msra.mxu0 %v5470
  %5817 = vmatprep.subr.mxu0 %v5486
  %5818 = vmatpush1.msra.mxu0 %v5485
  %5819 = vmatprep.subr.mxu0 %v5501
  %5820 = vmatpush1.msra.mxu0 %v5500
  %5821 = vmatprep.subr.mxu0 %v5516
  %5822 = vmatpush1.msra.mxu0 %v5515
  %5823 = vmatprep.subr.mxu0 %v5531
  %5824 = vmatpush1.msra.mxu0 %v5530
  %5825 = vmatprep.subr.mxu0 %v5546
  %5826 = vmatpush1.msra.mxu0 %v5545
  %5827 = vmatprep.subr.mxu0 %v5561
  %5828 = vmatpush1.msra.mxu0 %v5560
  %5829 = vmatprep.subr.mxu0 %v5576
  %5830 = vmatpush1.msra.mxu0 %v5575
  %5831 = vmatprep.subr.mxu0 %v5591
  %5832 = vmatpush1.msra.mxu0 %v5590
  %5833 = vmatprep.subr.mxu0 %v5606
  %5834 = vmatpush1.msra.mxu0 %v5605
  %5835 = vmatprep.subr.mxu0 %v5621
  %5836 = vmatpush1.msra.mxu0 %v5620
  %5837 = vmatprep.subr.mxu0 %v5636
  %5838 = vmatpush1.msra.mxu0 %v5635
  %5839 = vmatprep.subr.mxu0 0.0
  %5840 = vmatpush1.msra.mxu0 0.0
  %5841 = vmatprep.subr.mxu0 0.0
  %5842 = vmatpush1.msra.mxu0 0.0
  %5843 = vmatprep.subr.mxu0 0.0
  %5844 = vmatpush1.msra.mxu0 0.0
  %5845 = vmatprep.subr.mxu0 0.0
  %5846 = vmatpush1.msra.mxu0 0.0
  %5847 = vmatprep.subr.mxu0 0.0
  %5848 = vmatpush1.msra.mxu0 0.0
  %5849 = vmatprep.subr.mxu0 0.0
  %5850 = vmatpush1.msra.mxu0 0.0
  %5851 = vmatprep.subr.mxu0 0.0
  %5852 = vmatpush1.msra.mxu0 0.0
  %5853 = vmatprep.subr.mxu0 0.0
  %5854 = vmatpush1.msra.mxu0 0.0
  %5855 = vmatprep.subr.mxu0 0.0
  %5856 = vmatpush1.msra.mxu0 0.0
  %5857 = vmatprep.subr.mxu0 0.0
  %5858 = vmatpush1.msra.mxu0 0.0
  %5859 = vmatprep.subr.mxu0 0.0
  %5860 = vmatpush1.msra.mxu0 0.0
  %5861 = vmatprep.subr.mxu0 0.0
  %5862 = vmatpush1.msra.mxu0 0.0
  %5863 = vmatprep.subr.mxu0 0.0
  %5864 = vmatpush1.msra.mxu0 0.0
  %5865 = vmatprep.subr.mxu0 0.0
  %5866 = vmatpush1.msra.mxu0 0.0
  %5867 = vmatprep.mubr.f32.mxu0 %v5730
  %5868 = vmatmul.mubr.f32.gmra.mrb[0].mxu0 %v4898
  %v5869 = vpop.f32.mrb[0].mxu0
  %v5870 = vadd.f32 %v5799, %v5869
  %v5871 = vpop.f32.mrb[0].mxu0
  %v5872 = vadd.f32 %v5801, %v5871
  %5873 = vdwg.mxu0
  %5874 = vmatprep.subr.mxu0 %v4903
  %5875 = vmatpush1.msra.mxu0 %v4902
  %5876 = vmatprep.subr.mxu0 %v4918
  %5877 = vmatpush1.msra.mxu0 %v4917
  %5878 = vmatprep.subr.mxu0 %v4933
  %5879 = vmatpush1.msra.mxu0 %v4932
  %5880 = vmatprep.subr.mxu0 %v4948
  %5881 = vmatpush1.msra.mxu0 %v4947
  %5882 = vmatprep.subr.mxu0 %v4963
  %5883 = vmatpush1.msra.mxu0 %v4962
  %5884 = vmatprep.subr.mxu0 %v4978
  %5885 = vmatpush1.msra.mxu0 %v4977
  %5886 = vmatprep.subr.mxu0 %v4993
  %5887 = vmatpush1.msra.mxu0 %v4992
  %5888 = vmatprep.subr.mxu0 %v5008
  %5889 = vmatpush1.msra.mxu0 %v5007
  %5890 = vmatprep.subr.mxu0 %v5023
  %5891 = vmatpush1.msra.mxu0 %v5022
  %5892 = vmatprep.subr.mxu0 %v5038
  %5893 = vmatpush1.msra.mxu0 %v5037
  %5894 = vmatprep.subr.mxu0 %v5053
  %5895 = vmatpush1.msra.mxu0 %v5052
  %5896 = vmatprep.subr.mxu0 %v5068
  %5897 = vmatpush1.msra.mxu0 %v5067
  %5898 = vmatprep.subr.mxu0 %v5083
  %5899 = vmatpush1.msra.mxu0 %v5082
  %5900 = vmatprep.subr.mxu0 %v5098
  %5901 = vmatpush1.msra.mxu0 %v5097
  %5902 = vmatprep.subr.mxu0 %v5113
  %5903 = vmatpush1.msra.mxu0 %v5112
  %5904 = vmatprep.subr.mxu0 %v5128
  %5905 = vmatpush1.msra.mxu0 %v5127
  %5906 = vmatprep.subr.mxu0 %v5143
  %5907 = vmatpush1.msra.mxu0 %v5142
  %5908 = vmatprep.subr.mxu0 %v5158
  %5909 = vmatpush1.msra.mxu0 %v5157
  %5910 = vmatprep.subr.mxu0 %v5173
  %5911 = vmatpush1.msra.mxu0 %v5172
  %5912 = vmatprep.subr.mxu0 %v5188
  %5913 = vmatpush1.msra.mxu0 %v5187
  %5914 = vmatprep.subr.mxu0 %v5203
  %5915 = vmatpush1.msra.mxu0 %v5202
  %5916 = vmatprep.subr.mxu0 %v5218
  %5917 = vmatpush1.msra.mxu0 %v5217
  %5918 = vmatprep.subr.mxu0 %v5233
  %5919 = vmatpush1.msra.mxu0 %v5232
  %5920 = vmatprep.subr.mxu0 %v5248
  %5921 = vmatpush1.msra.mxu0 %v5247
  %5922 = vmatprep.subr.mxu0 %v5263
  %5923 = vmatpush1.msra.mxu0 %v5262
  %5924 = vmatprep.subr.mxu0 %v5278
  %5925 = vmatpush1.msra.mxu0 %v5277
  %5926 = vmatprep.subr.mxu0 %v5293
  %5927 = vmatpush1.msra.mxu0 %v5292
  %5928 = vmatprep.subr.mxu0 %v5308
  %5929 = vmatpush1.msra.mxu0 %v5307
  %5930 = vmatprep.subr.mxu0 %v5323
  %5931 = vmatpush1.msra.mxu0 %v5322
  %5932 = vmatprep.subr.mxu0 %v5338
  %5933 = vmatpush1.msra.mxu0 %v5337
  %5934 = vmatprep.subr.mxu0 %v5353
  %5935 = vmatpush1.msra.mxu0 %v5352
  %5936 = vmatprep.subr.mxu0 %v5368
  %5937 = vmatpush1.msra.mxu0 %v5367
  %5938 = vmatprep.mubr.f32.mxu0 %v4897
  %5939 = vmatmul.mubr.f32.gmra.mrb[0].mxu0 %v4896
  %v5940 = vpop.f32.mrb[0].mxu0
  %v5941 = vadd.f32 %v5665, %v5940
  %v5942 = vpop.f32.mrb[0].mxu0
  %v5943 = vadd.f32 %v5669, %v5942
  %5944 = vdwg.mxu0
  %5945 = vmatprep.subr.mxu0 %v5383
  %5946 = vmatpush1.msra.mxu0 %v5382
  %5947 = vmatprep.subr.mxu0 %v5398
  %5948 = vmatpush1.msra.mxu0 %v5397
  %5949 = vmatprep.subr.mxu0 %v5413
  %5950 = vmatpush1.msra.mxu0 %v5412
  %5951 = vmatprep.subr.mxu0 %v5428
  %5952 = vmatpush1.msra.mxu0 %v5427
  %5953 = vmatprep.subr.mxu0 %v5443
  %5954 = vmatpush1.msra.mxu0 %v5442
  %5955 = vmatprep.subr.mxu0 %v5458
  %5956 = vmatpush1.msra.mxu0 %v5457
  %5957 = vmatprep.subr.mxu0 %v5473
  %5958 = vmatpush1.msra.mxu0 %v5472
  %5959 = vmatprep.subr.mxu0 %v5488
  %5960 = vmatpush1.msra.mxu0 %v5487
  %5961 = vmatprep.subr.mxu0 %v5503
  %5962 = vmatpush1.msra.mxu0 %v5502
  %5963 = vmatprep.subr.mxu0 %v5518
  %5964 = vmatpush1.msra.mxu0 %v5517
  %5965 = vmatprep.subr.mxu0 %v5533
  %5966 = vmatpush1.msra.mxu0 %v5532
  %5967 = vmatprep.subr.mxu0 %v5548
  %5968 = vmatpush1.msra.mxu0 %v5547
  %5969 = vmatprep.subr.mxu0 %v5563
  %5970 = vmatpush1.msra.mxu0 %v5562
  %5971 = vmatprep.subr.mxu0 %v5578
  %5972 = vmatpush1.msra.mxu0 %v5577
  %5973 = vmatprep.subr.mxu0 %v5593
  %5974 = vmatpush1.msra.mxu0 %v5592
  %5975 = vmatprep.subr.mxu0 %v5608
  %5976 = vmatpush1.msra.mxu0 %v5607
  %5977 = vmatprep.subr.mxu0 %v5623
  %5978 = vmatpush1.msra.mxu0 %v5622
  %5979 = vmatprep.subr.mxu0 %v5638
  %5980 = vmatpush1.msra.mxu0 %v5637
  %5981 = vmatprep.subr.mxu0 0.0
  %5982 = vmatpush1.msra.mxu0 0.0
  %5983 = vmatprep.subr.mxu0 0.0
  %5984 = vmatpush1.msra.mxu0 0.0
  %5985 = vmatprep.subr.mxu0 0.0
  %5986 = vmatpush1.msra.mxu0 0.0
  %5987 = vmatprep.subr.mxu0 0.0
  %5988 = vmatpush1.msra.mxu0 0.0
  %5989 = vmatprep.subr.mxu0 0.0
  %5990 = vmatpush1.msra.mxu0 0.0
  %5991 = vmatprep.subr.mxu0 0.0
  %5992 = vmatpush1.msra.mxu0 0.0
  %5993 = vmatprep.subr.mxu0 0.0
  %5994 = vmatpush1.msra.mxu0 0.0
  %5995 = vmatprep.subr.mxu0 0.0
  %5996 = vmatpush1.msra.mxu0 0.0
  %5997 = vmatprep.subr.mxu0 0.0
  %5998 = vmatpush1.msra.mxu0 0.0
  %5999 = vmatprep.subr.mxu0 0.0
  %6000 = vmatpush1.msra.mxu0 0.0
  %6001 = vmatprep.subr.mxu0 0.0
  %6002 = vmatpush1.msra.mxu0 0.0
  %6003 = vmatprep.subr.mxu0 0.0
  %6004 = vmatpush1.msra.mxu0 0.0
  %6005 = vmatprep.subr.mxu0 0.0
  %6006 = vmatpush1.msra.mxu0 0.0
  %6007 = vmatprep.subr.mxu0 0.0
  %6008 = vmatpush1.msra.mxu0 0.0
  %6009 = vmatprep.mubr.f32.mxu0 %v5730
  %6010 = vmatmul.mubr.f32.gmra.mrb[0].mxu0 %v4898
  %v6011 = vpop.f32.mrb[0].mxu0
  %v6012 = vadd.f32 %v5941, %v6011
  %v6013 = vpop.f32.mrb[0].mxu0
  %v6014 = vadd.f32 %v5943, %v6013
  %6015 = vdwg.mxu0
  %6016 = vmatprep.subr.mxu0 %v4905
  %6017 = vmatpush1.msra.mxu0 %v4904
  %6018 = vmatprep.subr.mxu0 %v4920
  %6019 = vmatpush1.msra.mxu0 %v4919
  %6020 = vmatprep.subr.mxu0 %v4935
  %6021 = vmatpush1.msra.mxu0 %v4934
  %6022 = vmatprep.subr.mxu0 %v4950
  %6023 = vmatpush1.msra.mxu0 %v4949
  %6024 = vmatprep.subr.mxu0 %v4965
  %6025 = vmatpush1.msra.mxu0 %v4964
  %6026 = vmatprep.subr.mxu0 %v4980
  %6027 = vmatpush1.msra.mxu0 %v4979
  %6028 = vmatprep.subr.mxu0 %v4995
  %6029 = vmatpush1.msra.mxu0 %v4994
  %6030 = vmatprep.subr.mxu0 %v5010
  %6031 = vmatpush1.msra.mxu0 %v5009
  %6032 = vmatprep.subr.mxu0 %v5025
  %6033 = vmatpush1.msra.mxu0 %v5024
  %6034 = vmatprep.subr.mxu0 %v5040
  %6035 = vmatpush1.msra.mxu0 %v5039
  %6036 = vmatprep.subr.mxu0 %v5055
  %6037 = vmatpush1.msra.mxu0 %v5054
  %6038 = vmatprep.subr.mxu0 %v5070
  %6039 = vmatpush1.msra.mxu0 %v5069
  %6040 = vmatprep.subr.mxu0 %v5085
  %6041 = vmatpush1.msra.mxu0 %v5084
  %6042 = vmatprep.subr.mxu0 %v5100
  %6043 = vmatpush1.msra.mxu0 %v5099
  %6044 = vmatprep.subr.mxu0 %v5115
  %6045 = vmatpush1.msra.mxu0 %v5114
  %6046 = vmatprep.subr.mxu0 %v5130
  %6047 = vmatpush1.msra.mxu0 %v5129
  %6048 = vmatprep.subr.mxu0 %v5145
  %6049 = vmatpush1.msra.mxu0 %v5144
  %6050 = vmatprep.subr.mxu0 %v5160
  %6051 = vmatpush1.msra.mxu0 %v5159
  %6052 = vmatprep.subr.mxu0 %v5175
  %6053 = vmatpush1.msra.mxu0 %v5174
  %6054 = vmatprep.subr.mxu0 %v5190
  %6055 = vmatpush1.msra.mxu0 %v5189
  %6056 = vmatprep.subr.mxu0 %v5205
  %6057 = vmatpush1.msra.mxu0 %v5204
  %6058 = vmatprep.subr.mxu0 %v5220
  %6059 = vmatpush1.msra.mxu0 %v5219
  %6060 = vmatprep.subr.mxu0 %v5235
  %6061 = vmatpush1.msra.mxu0 %v5234
  %6062 = vmatprep.subr.mxu0 %v5250
  %6063 = vmatpush1.msra.mxu0 %v5249
  %6064 = vmatprep.subr.mxu0 %v5265
  %6065 = vmatpush1.msra.mxu0 %v5264
  %6066 = vmatprep.subr.mxu0 %v5280
  %6067 = vmatpush1.msra.mxu0 %v5279
  %6068 = vmatprep.subr.mxu0 %v5295
  %6069 = vmatpush1.msra.mxu0 %v5294
  %6070 = vmatprep.subr.mxu0 %v5310
  %6071 = vmatpush1.msra.mxu0 %v5309
  %6072 = vmatprep.subr.mxu0 %v5325
  %6073 = vmatpush1.msra.mxu0 %v5324
  %6074 = vmatprep.subr.mxu0 %v5340
  %6075 = vmatpush1.msra.mxu0 %v5339
  %6076 = vmatprep.subr.mxu0 %v5355
  %6077 = vmatpush1.msra.mxu0 %v5354
  %6078 = vmatprep.subr.mxu0 %v5370
  %6079 = vmatpush1.msra.mxu0 %v5369
  %6080 = vmatprep.mubr.f32.mxu0 %v4897
  %6081 = vmatmul.mubr.f32.gmra.mrb[0].mxu0 %v4896
  %v6082 = vpop.f32.mrb[0].mxu0
  %v6083 = vadd.f32 %v5673, %v6082
  %v6084 = vpop.f32.mrb[0].mxu0
  %v6085 = vadd.f32 %v5677, %v6084
  %6086 = vdwg.mxu0
  %6087 = vmatprep.subr.mxu0 %v5385
  %6088 = vmatpush1.msra.mxu0 %v5384
  %6089 = vmatprep.subr.mxu0 %v5400
  %6090 = vmatpush1.msra.mxu0 %v5399
  %6091 = vmatprep.subr.mxu0 %v5415
  %6092 = vmatpush1.msra.mxu0 %v5414
  %6093 = vmatprep.subr.mxu0 %v5430
  %6094 = vmatpush1.msra.mxu0 %v5429
  %6095 = vmatprep.subr.mxu0 %v5445
  %6096 = vmatpush1.msra.mxu0 %v5444
  %6097 = vmatprep.subr.mxu0 %v5460
  %6098 = vmatpush1.msra.mxu0 %v5459
  %6099 = vmatprep.subr.mxu0 %v5475
  %6100 = vmatpush1.msra.mxu0 %v5474
  %6101 = vmatprep.subr.mxu0 %v5490
  %6102 = vmatpush1.msra.mxu0 %v5489
  %6103 = vmatprep.subr.mxu0 %v5505
  %6104 = vmatpush1.msra.mxu0 %v5504
  %6105 = vmatprep.subr.mxu0 %v5520
  %6106 = vmatpush1.msra.mxu0 %v5519
  %6107 = vmatprep.subr.mxu0 %v5535
  %6108 = vmatpush1.msra.mxu0 %v5534
  %6109 = vmatprep.subr.mxu0 %v5550
  %6110 = vmatpush1.msra.mxu0 %v5549
  %6111 = vmatprep.subr.mxu0 %v5565
  %6112 = vmatpush1.msra.mxu0 %v5564
  %6113 = vmatprep.subr.mxu0 %v5580
  %6114 = vmatpush1.msra.mxu0 %v5579
  %6115 = vmatprep.subr.mxu0 %v5595
  %6116 = vmatpush1.msra.mxu0 %v5594
  %6117 = vmatprep.subr.mxu0 %v5610
  %6118 = vmatpush1.msra.mxu0 %v5609
  %6119 = vmatprep.subr.mxu0 %v5625
  %6120 = vmatpush1.msra.mxu0 %v5624
  %6121 = vmatprep.subr.mxu0 %v5640
  %6122 = vmatpush1.msra.mxu0 %v5639
  %6123 = vmatprep.subr.mxu0 0.0
  %6124 = vmatpush1.msra.mxu0 0.0
  %6125 = vmatprep.subr.mxu0 0.0
  %6126 = vmatpush1.msra.mxu0 0.0
  %6127 = vmatprep.subr.mxu0 0.0
  %6128 = vmatpush1.msra.mxu0 0.0
  %6129 = vmatprep.subr.mxu0 0.0
  %6130 = vmatpush1.msra.mxu0 0.0
  %6131 = vmatprep.subr.mxu0 0.0
  %6132 = vmatpush1.msra.mxu0 0.0
  %6133 = vmatprep.subr.mxu0 0.0
  %6134 = vmatpush1.msra.mxu0 0.0
  %6135 = vmatprep.subr.mxu0 0.0
  %6136 = vmatpush1.msra.mxu0 0.0
  %6137 = vmatprep.subr.mxu0 0.0
  %6138 = vmatpush1.msra.mxu0 0.0
  %6139 = vmatprep.subr.mxu0 0.0
  %6140 = vmatpush1.msra.mxu0 0.0
  %6141 = vmatprep.subr.mxu0 0.0
  %6142 = vmatpush1.msra.mxu0 0.0
  %6143 = vmatprep.subr.mxu0 0.0
  %6144 = vmatpush1.msra.mxu0 0.0
  %6145 = vmatprep.subr.mxu0 0.0
  %6146 = vmatpush1.msra.mxu0 0.0
  %6147 = vmatprep.subr.mxu0 0.0
  %6148 = vmatpush1.msra.mxu0 0.0
  %6149 = vmatprep.subr.mxu0 0.0
  %6150 = vmatpush1.msra.mxu0 0.0
  %6151 = vmatprep.mubr.f32.mxu0 %v5730
  %6152 = vmatmul.mubr.f32.gmra.mrb[0].mxu0 %v4898
  %v6153 = vpop.f32.mrb[0].mxu0
  %v6154 = vadd.f32 %v6083, %v6153
  %v6155 = vpop.f32.mrb[0].mxu0
  %v6156 = vadd.f32 %v6085, %v6155
  %6157 = vdwg.mxu0
  %6158 = vmatprep.subr.mxu0 %v4907
  %6159 = vmatpush1.msra.mxu0 %v4906
  %6160 = vmatprep.subr.mxu0 %v4922
  %6161 = vmatpush1.msra.mxu0 %v4921
  %6162 = vmatprep.subr.mxu0 %v4937
  %6163 = vmatpush1.msra.mxu0 %v4936
  %6164 = vmatprep.subr.mxu0 %v4952
  %6165 = vmatpush1.msra.mxu0 %v4951
  %6166 = vmatprep.subr.mxu0 %v4967
  %6167 = vmatpush1.msra.mxu0 %v4966
  %6168 = vmatprep.subr.mxu0 %v4982
  %6169 = vmatpush1.msra.mxu0 %v4981
  %6170 = vmatprep.subr.mxu0 %v4997
  %6171 = vmatpush1.msra.mxu0 %v4996
  %6172 = vmatprep.subr.mxu0 %v5012
  %6173 = vmatpush1.msra.mxu0 %v5011
  %6174 = vmatprep.subr.mxu0 %v5027
  %6175 = vmatpush1.msra.mxu0 %v5026
  %6176 = vmatprep.subr.mxu0 %v5042
  %6177 = vmatpush1.msra.mxu0 %v5041
  %6178 = vmatprep.subr.mxu0 %v5057
  %6179 = vmatpush1.msra.mxu0 %v5056
  %6180 = vmatprep.subr.mxu0 %v5072
  %6181 = vmatpush1.msra.mxu0 %v5071
  %6182 = vmatprep.subr.mxu0 %v5087
  %6183 = vmatpush1.msra.mxu0 %v5086
  %6184 = vmatprep.subr.mxu0 %v5102
  %6185 = vmatpush1.msra.mxu0 %v5101
  %6186 = vmatprep.subr.mxu0 %v5117
  %6187 = vmatpush1.msra.mxu0 %v5116
  %6188 = vmatprep.subr.mxu0 %v5132
  %6189 = vmatpush1.msra.mxu0 %v5131
  %6190 = vmatprep.subr.mxu0 %v5147
  %6191 = vmatpush1.msra.mxu0 %v5146
  %6192 = vmatprep.subr.mxu0 %v5162
  %6193 = vmatpush1.msra.mxu0 %v5161
  %6194 = vmatprep.subr.mxu0 %v5177
  %6195 = vmatpush1.msra.mxu0 %v5176
  %6196 = vmatprep.subr.mxu0 %v5192
  %6197 = vmatpush1.msra.mxu0 %v5191
  %6198 = vmatprep.subr.mxu0 %v5207
  %6199 = vmatpush1.msra.mxu0 %v5206
  %6200 = vmatprep.subr.mxu0 %v5222
  %6201 = vmatpush1.msra.mxu0 %v5221
  %6202 = vmatprep.subr.mxu0 %v5237
  %6203 = vmatpush1.msra.mxu0 %v5236
  %6204 = vmatprep.subr.mxu0 %v5252
  %6205 = vmatpush1.msra.mxu0 %v5251
  %6206 = vmatprep.subr.mxu0 %v5267
  %6207 = vmatpush1.msra.mxu0 %v5266
  %6208 = vmatprep.subr.mxu0 %v5282
  %6209 = vmatpush1.msra.mxu0 %v5281
  %6210 = vmatprep.subr.mxu0 %v5297
  %6211 = vmatpush1.msra.mxu0 %v5296
  %6212 = vmatprep.subr.mxu0 %v5312
  %6213 = vmatpush1.msra.mxu0 %v5311
  %6214 = vmatprep.subr.mxu0 %v5327
  %6215 = vmatpush1.msra.mxu0 %v5326
  %6216 = vmatprep.subr.mxu0 %v5342
  %6217 = vmatpush1.msra.mxu0 %v5341
  %6218 = vmatprep.subr.mxu0 %v5357
  %6219 = vmatpush1.msra.mxu0 %v5356
  %6220 = vmatprep.subr.mxu0 %v5372
  %6221 = vmatpush1.msra.mxu0 %v5371
  %6222 = vmatprep.mubr.f32.mxu0 %v4897
  %6223 = vmatmul.mubr.f32.gmra.mrb[0].mxu0 %v4896
  %v6224 = vpop.f32.mrb[0].mxu0
  %v6225 = vadd.f32 %v5681, %v6224
  %v6226 = vpop.f32.mrb[0].mxu0
  %v6227 = vadd.f32 %v5685, %v6226
  %6228 = vdwg.mxu0
  %6229 = vmatprep.subr.mxu0 %v5387
  %6230 = vmatpush1.msra.mxu0 %v5386
  %6231 = vmatprep.subr.mxu0 %v5402
  %6232 = vmatpush1.msra.mxu0 %v5401
  %6233 = vmatprep.subr.mxu0 %v5417
  %6234 = vmatpush1.msra.mxu0 %v5416
  %6235 = vmatprep.subr.mxu0 %v5432
  %6236 = vmatpush1.msra.mxu0 %v5431
  %6237 = vmatprep.subr.mxu0 %v5447
  %6238 = vmatpush1.msra.mxu0 %v5446
  %6239 = vmatprep.subr.mxu0 %v5462
  %6240 = vmatpush1.msra.mxu0 %v5461
  %6241 = vmatprep.subr.mxu0 %v5477
  %6242 = vmatpush1.msra.mxu0 %v5476
  %6243 = vmatprep.subr.mxu0 %v5492
  %6244 = vmatpush1.msra.mxu0 %v5491
  %6245 = vmatprep.subr.mxu0 %v5507
  %6246 = vmatpush1.msra.mxu0 %v5506
  %6247 = vmatprep.subr.mxu0 %v5522
  %6248 = vmatpush1.msra.mxu0 %v5521
  %6249 = vmatprep.subr.mxu0 %v5537
  %6250 = vmatpush1.msra.mxu0 %v5536
  %6251 = vmatprep.subr.mxu0 %v5552
  %6252 = vmatpush1.msra.mxu0 %v5551
  %6253 = vmatprep.subr.mxu0 %v5567
  %6254 = vmatpush1.msra.mxu0 %v5566
  %6255 = vmatprep.subr.mxu0 %v5582
  %6256 = vmatpush1.msra.mxu0 %v5581
  %6257 = vmatprep.subr.mxu0 %v5597
  %6258 = vmatpush1.msra.mxu0 %v5596
  %6259 = vmatprep.subr.mxu0 %v5612
  %6260 = vmatpush1.msra.mxu0 %v5611
  %6261 = vmatprep.subr.mxu0 %v5627
  %6262 = vmatpush1.msra.mxu0 %v5626
  %6263 = vmatprep.subr.mxu0 %v5642
  %6264 = vmatpush1.msra.mxu0 %v5641
  %6265 = vmatprep.subr.mxu0 0.0
  %6266 = vmatpush1.msra.mxu0 0.0
  %6267 = vmatprep.subr.mxu0 0.0
  %6268 = vmatpush1.msra.mxu0 0.0
  %6269 = vmatprep.subr.mxu0 0.0
  %6270 = vmatpush1.msra.mxu0 0.0
  %6271 = vmatprep.subr.mxu0 0.0
  %6272 = vmatpush1.msra.mxu0 0.0
  %6273 = vmatprep.subr.mxu0 0.0
  %6274 = vmatpush1.msra.mxu0 0.0
  %6275 = vmatprep.subr.mxu0 0.0
  %6276 = vmatpush1.msra.mxu0 0.0
  %6277 = vmatprep.subr.mxu0 0.0
  %6278 = vmatpush1.msra.mxu0 0.0
  %6279 = vmatprep.subr.mxu0 0.0
  %6280 = vmatpush1.msra.mxu0 0.0
  %6281 = vmatprep.subr.mxu0 0.0
  %6282 = vmatpush1.msra.mxu0 0.0
  %6283 = vmatprep.subr.mxu0 0.0
  %6284 = vmatpush1.msra.mxu0 0.0
  %6285 = vmatprep.subr.mxu0 0.0
  %6286 = vmatpush1.msra.mxu0 0.0
  %6287 = vmatprep.subr.mxu0 0.0
  %6288 = vmatpush1.msra.mxu0 0.0
  %6289 = vmatprep.subr.mxu0 0.0
  %6290 = vmatpush1.msra.mxu0 0.0
  %6291 = vmatprep.subr.mxu0 0.0
  %6292 = vmatpush1.msra.mxu0 0.0
  %6293 = vmatprep.mubr.f32.mxu0 %v5730
  %6294 = vmatmul.mubr.f32.gmra.mrb[0].mxu0 %v4898
  %v6295 = vpop.f32.mrb[0].mxu0
  %v6296 = vadd.f32 %v6225, %v6295
  %v6297 = vpop.f32.mrb[0].mxu0
  %v6298 = vadd.f32 %v6227, %v6297
  %6299 = vdwg.mxu0
  %6300 = vmatprep.subr.mxu0 %v4909
  %6301 = vmatpush1.msra.mxu0 %v4908
  %6302 = vmatprep.subr.mxu0 %v4924
  %6303 = vmatpush1.msra.mxu0 %v4923
  %6304 = vmatprep.subr.mxu0 %v4939
  %6305 = vmatpush1.msra.mxu0 %v4938
  %6306 = vmatprep.subr.mxu0 %v4954
  %6307 = vmatpush1.msra.mxu0 %v4953
  %6308 = vmatprep.subr.mxu0 %v4969
  %6309 = vmatpush1.msra.mxu0 %v4968
  %6310 = vmatprep.subr.mxu0 %v4984
  %6311 = vmatpush1.msra.mxu0 %v4983
  %6312 = vmatprep.subr.mxu0 %v4999
  %6313 = vmatpush1.msra.mxu0 %v4998
  %6314 = vmatprep.subr.mxu0 %v5014
  %6315 = vmatpush1.msra.mxu0 %v5013
  %6316 = vmatprep.subr.mxu0 %v5029
  %6317 = vmatpush1.msra.mxu0 %v5028
  %6318 = vmatprep.subr.mxu0 %v5044
  %6319 = vmatpush1.msra.mxu0 %v5043
  %6320 = vmatprep.subr.mxu0 %v5059
  %6321 = vmatpush1.msra.mxu0 %v5058
  %6322 = vmatprep.subr.mxu0 %v5074
  %6323 = vmatpush1.msra.mxu0 %v5073
  %6324 = vmatprep.subr.mxu0 %v5089
  %6325 = vmatpush1.msra.mxu0 %v5088
  %6326 = vmatprep.subr.mxu0 %v5104
  %6327 = vmatpush1.msra.mxu0 %v5103
  %6328 = vmatprep.subr.mxu0 %v5119
  %6329 = vmatpush1.msra.mxu0 %v5118
  %6330 = vmatprep.subr.mxu0 %v5134
  %6331 = vmatpush1.msra.mxu0 %v5133
  %6332 = vmatprep.subr.mxu0 %v5149
  %6333 = vmatpush1.msra.mxu0 %v5148
  %6334 = vmatprep.subr.mxu0 %v5164
  %6335 = vmatpush1.msra.mxu0 %v5163
  %6336 = vmatprep.subr.mxu0 %v5179
  %6337 = vmatpush1.msra.mxu0 %v5178
  %6338 = vmatprep.subr.mxu0 %v5194
  %6339 = vmatpush1.msra.mxu0 %v5193
  %6340 = vmatprep.subr.mxu0 %v5209
  %6341 = vmatpush1.msra.mxu0 %v5208
  %6342 = vmatprep.subr.mxu0 %v5224
  %6343 = vmatpush1.msra.mxu0 %v5223
  %6344 = vmatprep.subr.mxu0 %v5239
  %6345 = vmatpush1.msra.mxu0 %v5238
  %6346 = vmatprep.subr.mxu0 %v5254
  %6347 = vmatpush1.msra.mxu0 %v5253
  %6348 = vmatprep.subr.mxu0 %v5269
  %6349 = vmatpush1.msra.mxu0 %v5268
  %6350 = vmatprep.subr.mxu0 %v5284
  %6351 = vmatpush1.msra.mxu0 %v5283
  %6352 = vmatprep.subr.mxu0 %v5299
  %6353 = vmatpush1.msra.mxu0 %v5298
  %6354 = vmatprep.subr.mxu0 %v5314
  %6355 = vmatpush1.msra.mxu0 %v5313
  %6356 = vmatprep.subr.mxu0 %v5329
  %6357 = vmatpush1.msra.mxu0 %v5328
  %6358 = vmatprep.subr.mxu0 %v5344
  %6359 = vmatpush1.msra.mxu0 %v5343
  %6360 = vmatprep.subr.mxu0 %v5359
  %6361 = vmatpush1.msra.mxu0 %v5358
  %6362 = vmatprep.subr.mxu0 %v5374
  %6363 = vmatpush1.msra.mxu0 %v5373
  %6364 = vmatprep.mubr.f32.mxu0 %v4897
  %6365 = vmatmul.mubr.f32.gmra.mrb[0].mxu0 %v4896
  %v6366 = vpop.f32.mrb[0].mxu0
  %v6367 = vadd.f32 %v5689, %v6366
  %v6368 = vpop.f32.mrb[0].mxu0
  %v6369 = vadd.f32 %v5693, %v6368
  %6370 = vdwg.mxu0
  %6371 = vmatprep.subr.mxu0 %v5389
  %6372 = vmatpush1.msra.mxu0 %v5388
  %6373 = vmatprep.subr.mxu0 %v5404
  %6374 = vmatpush1.msra.mxu0 %v5403
  %6375 = vmatprep.subr.mxu0 %v5419
  %6376 = vmatpush1.msra.mxu0 %v5418
  %6377 = vmatprep.subr.mxu0 %v5434
  %6378 = vmatpush1.msra.mxu0 %v5433
  %6379 = vmatprep.subr.mxu0 %v5449
  %6380 = vmatpush1.msra.mxu0 %v5448
  %6381 = vmatprep.subr.mxu0 %v5464
  %6382 = vmatpush1.msra.mxu0 %v5463
  %6383 = vmatprep.subr.mxu0 %v5479
  %6384 = vmatpush1.msra.mxu0 %v5478
  %6385 = vmatprep.subr.mxu0 %v5494
  %6386 = vmatpush1.msra.mxu0 %v5493
  %6387 = vmatprep.subr.mxu0 %v5509
  %6388 = vmatpush1.msra.mxu0 %v5508
  %6389 = vmatprep.subr.mxu0 %v5524
  %6390 = vmatpush1.msra.mxu0 %v5523
  %6391 = vmatprep.subr.mxu0 %v5539
  %6392 = vmatpush1.msra.mxu0 %v5538
  %6393 = vmatprep.subr.mxu0 %v5554
  %6394 = vmatpush1.msra.mxu0 %v5553
  %6395 = vmatprep.subr.mxu0 %v5569
  %6396 = vmatpush1.msra.mxu0 %v5568
  %6397 = vmatprep.subr.mxu0 %v5584
  %6398 = vmatpush1.msra.mxu0 %v5583
  %6399 = vmatprep.subr.mxu0 %v5599
  %6400 = vmatpush1.msra.mxu0 %v5598
  %6401 = vmatprep.subr.mxu0 %v5614
  %6402 = vmatpush1.msra.mxu0 %v5613
  %6403 = vmatprep.subr.mxu0 %v5629
  %6404 = vmatpush1.msra.mxu0 %v5628
  %6405 = vmatprep.subr.mxu0 %v5644
  %6406 = vmatpush1.msra.mxu0 %v5643
  %6407 = vmatprep.subr.mxu0 0.0
  %6408 = vmatpush1.msra.mxu0 0.0
  %6409 = vmatprep.subr.mxu0 0.0
  %6410 = vmatpush1.msra.mxu0 0.0
  %6411 = vmatprep.subr.mxu0 0.0
  %6412 = vmatpush1.msra.mxu0 0.0
  %6413 = vmatprep.subr.mxu0 0.0
  %6414 = vmatpush1.msra.mxu0 0.0
  %6415 = vmatprep.subr.mxu0 0.0
  %6416 = vmatpush1.msra.mxu0 0.0
  %6417 = vmatprep.subr.mxu0 0.0
  %6418 = vmatpush1.msra.mxu0 0.0
  %6419 = vmatprep.subr.mxu0 0.0
  %6420 = vmatpush1.msra.mxu0 0.0
  %6421 = vmatprep.subr.mxu0 0.0
  %6422 = vmatpush1.msra.mxu0 0.0
  %6423 = vmatprep.subr.mxu0 0.0
  %6424 = vmatpush1.msra.mxu0 0.0
  %6425 = vmatprep.subr.mxu0 0.0
  %6426 = vmatpush1.msra.mxu0 0.0
  %6427 = vmatprep.subr.mxu0 0.0
  %6428 = vmatpush1.msra.mxu0 0.0
  %6429 = vmatprep.subr.mxu0 0.0
  %6430 = vmatpush1.msra.mxu0 0.0
  %6431 = vmatprep.subr.mxu0 0.0
  %6432 = vmatpush1.msra.mxu0 0.0
  %6433 = vmatprep.subr.mxu0 0.0
  %6434 = vmatpush1.msra.mxu0 0.0
  %6435 = vmatprep.mubr.f32.mxu0 %v5730
  %6436 = vmatmul.mubr.f32.gmra.mrb[0].mxu0 %v4898
  %v6437 = vpop.f32.mrb[0].mxu0
  %v6438 = vadd.f32 %v6367, %v6437
  %v6439 = vpop.f32.mrb[0].mxu0
  %v6440 = vadd.f32 %v6369, %v6439
  %6441 = vdwg.mxu0
  %6442 = vmatprep.subr.mxu0 %v4911
  %6443 = vmatpush1.msra.mxu0 %v4910
  %6444 = vmatprep.subr.mxu0 %v4926
  %6445 = vmatpush1.msra.mxu0 %v4925
  %6446 = vmatprep.subr.mxu0 %v4941
  %6447 = vmatpush1.msra.mxu0 %v4940
  %6448 = vmatprep.subr.mxu0 %v4956
  %6449 = vmatpush1.msra.mxu0 %v4955
  %6450 = vmatprep.subr.mxu0 %v4971
  %6451 = vmatpush1.msra.mxu0 %v4970
  %6452 = vmatprep.subr.mxu0 %v4986
  %6453 = vmatpush1.msra.mxu0 %v4985
  %6454 = vmatprep.subr.mxu0 %v5001
  %6455 = vmatpush1.msra.mxu0 %v5000
  %6456 = vmatprep.subr.mxu0 %v5016
  %6457 = vmatpush1.msra.mxu0 %v5015
  %6458 = vmatprep.subr.mxu0 %v5031
  %6459 = vmatpush1.msra.mxu0 %v5030
  %6460 = vmatprep.subr.mxu0 %v5046
  %6461 = vmatpush1.msra.mxu0 %v5045
  %6462 = vmatprep.subr.mxu0 %v5061
  %6463 = vmatpush1.msra.mxu0 %v5060
  %6464 = vmatprep.subr.mxu0 %v5076
  %6465 = vmatpush1.msra.mxu0 %v5075
  %6466 = vmatprep.subr.mxu0 %v5091
  %6467 = vmatpush1.msra.mxu0 %v5090
  %6468 = vmatprep.subr.mxu0 %v5106
  %6469 = vmatpush1.msra.mxu0 %v5105
  %6470 = vmatprep.subr.mxu0 %v5121
  %6471 = vmatpush1.msra.mxu0 %v5120
  %6472 = vmatprep.subr.mxu0 %v5136
  %6473 = vmatpush1.msra.mxu0 %v5135
  %6474 = vmatprep.subr.mxu0 %v5151
  %6475 = vmatpush1.msra.mxu0 %v5150
  %6476 = vmatprep.subr.mxu0 %v5166
  %6477 = vmatpush1.msra.mxu0 %v5165
  %6478 = vmatprep.subr.mxu0 %v5181
  %6479 = vmatpush1.msra.mxu0 %v5180
  %6480 = vmatprep.subr.mxu0 %v5196
  %6481 = vmatpush1.msra.mxu0 %v5195
  %6482 = vmatprep.subr.mxu0 %v5211
  %6483 = vmatpush1.msra.mxu0 %v5210
  %6484 = vmatprep.subr.mxu0 %v5226
  %6485 = vmatpush1.msra.mxu0 %v5225
  %6486 = vmatprep.subr.mxu0 %v5241
  %6487 = vmatpush1.msra.mxu0 %v5240
  %6488 = vmatprep.subr.mxu0 %v5256
  %6489 = vmatpush1.msra.mxu0 %v5255
  %6490 = vmatprep.subr.mxu0 %v5271
  %6491 = vmatpush1.msra.mxu0 %v5270
  %6492 = vmatprep.subr.mxu0 %v5286
  %6493 = vmatpush1.msra.mxu0 %v5285
  %6494 = vmatprep.subr.mxu0 %v5301
  %6495 = vmatpush1.msra.mxu0 %v5300
  %6496 = vmatprep.subr.mxu0 %v5316
  %6497 = vmatpush1.msra.mxu0 %v5315
  %6498 = vmatprep.subr.mxu0 %v5331
  %6499 = vmatpush1.msra.mxu0 %v5330
  %6500 = vmatprep.subr.mxu0 %v5346
  %6501 = vmatpush1.msra.mxu0 %v5345
  %6502 = vmatprep.subr.mxu0 %v5361
  %6503 = vmatpush1.msra.mxu0 %v5360
  %6504 = vmatprep.subr.mxu0 %v5376
  %6505 = vmatpush1.msra.mxu0 %v5375
  %6506 = vmatprep.mubr.f32.mxu0 %v4897
  %6507 = vmatmul.mubr.f32.gmra.mrb[0].mxu0 %v4896
  %v6508 = vpop.f32.mrb[0].mxu0
  %v6509 = vadd.f32 %v5697, %v6508
  %v6510 = vpop.f32.mrb[0].mxu0
  %v6511 = vadd.f32 %v5701, %v6510
  %6512 = vdwg.mxu0
  %6513 = vmatprep.subr.mxu0 %v5391
  %6514 = vmatpush1.msra.mxu0 %v5390
  %6515 = vmatprep.subr.mxu0 %v5406
  %6516 = vmatpush1.msra.mxu0 %v5405
  %6517 = vmatprep.subr.mxu0 %v5421
  %6518 = vmatpush1.msra.mxu0 %v5420
  %6519 = vmatprep.subr.mxu0 %v5436
  %6520 = vmatpush1.msra.mxu0 %v5435
  %6521 = vmatprep.subr.mxu0 %v5451
  %6522 = vmatpush1.msra.mxu0 %v5450
  %6523 = vmatprep.subr.mxu0 %v5466
  %6524 = vmatpush1.msra.mxu0 %v5465
  %6525 = vmatprep.subr.mxu0 %v5481
  %6526 = vmatpush1.msra.mxu0 %v5480
  %6527 = vmatprep.subr.mxu0 %v5496
  %6528 = vmatpush1.msra.mxu0 %v5495
  %6529 = vmatprep.subr.mxu0 %v5511
  %6530 = vmatpush1.msra.mxu0 %v5510
  %6531 = vmatprep.subr.mxu0 %v5526
  %6532 = vmatpush1.msra.mxu0 %v5525
  %6533 = vmatprep.subr.mxu0 %v5541
  %6534 = vmatpush1.msra.mxu0 %v5540
  %6535 = vmatprep.subr.mxu0 %v5556
  %6536 = vmatpush1.msra.mxu0 %v5555
  %6537 = vmatprep.subr.mxu0 %v5571
  %6538 = vmatpush1.msra.mxu0 %v5570
  %6539 = vmatprep.subr.mxu0 %v5586
  %6540 = vmatpush1.msra.mxu0 %v5585
  %6541 = vmatprep.subr.mxu0 %v5601
  %6542 = vmatpush1.msra.mxu0 %v5600
  %6543 = vmatprep.subr.mxu0 %v5616
  %6544 = vmatpush1.msra.mxu0 %v5615
  %6545 = vmatprep.subr.mxu0 %v5631
  %6546 = vmatpush1.msra.mxu0 %v5630
  %6547 = vmatprep.subr.mxu0 %v5646
  %6548 = vmatpush1.msra.mxu0 %v5645
  %6549 = vmatprep.subr.mxu0 0.0
  %6550 = vmatpush1.msra.mxu0 0.0
  %6551 = vmatprep.subr.mxu0 0.0
  %6552 = vmatpush1.msra.mxu0 0.0
  %6553 = vmatprep.subr.mxu0 0.0
  %6554 = vmatpush1.msra.mxu0 0.0
  %6555 = vmatprep.subr.mxu0 0.0
  %6556 = vmatpush1.msra.mxu0 0.0
  %6557 = vmatprep.subr.mxu0 0.0
  %6558 = vmatpush1.msra.mxu0 0.0
  %6559 = vmatprep.subr.mxu0 0.0
  %6560 = vmatpush1.msra.mxu0 0.0
  %6561 = vmatprep.subr.mxu0 0.0
  %6562 = vmatpush1.msra.mxu0 0.0
  %6563 = vmatprep.subr.mxu0 0.0
  %6564 = vmatpush1.msra.mxu0 0.0
  %6565 = vmatprep.subr.mxu0 0.0
  %6566 = vmatpush1.msra.mxu0 0.0
  %6567 = vmatprep.subr.mxu0 0.0
  %6568 = vmatpush1.msra.mxu0 0.0
  %6569 = vmatprep.subr.mxu0 0.0
  %6570 = vmatpush1.msra.mxu0 0.0
  %6571 = vmatprep.subr.mxu0 0.0
  %6572 = vmatpush1.msra.mxu0 0.0
  %6573 = vmatprep.subr.mxu0 0.0
  %6574 = vmatpush1.msra.mxu0 0.0
  %6575 = vmatprep.subr.mxu0 0.0
  %6576 = vmatpush1.msra.mxu0 0.0
  %6577 = vmatprep.mubr.f32.mxu0 %v5730
  %6578 = vmatmul.mubr.f32.gmra.mrb[0].mxu0 %v4898
  %v6579 = vpop.f32.mrb[0].mxu0
  %v6580 = vadd.f32 %v6509, %v6579
  %v6581 = vpop.f32.mrb[0].mxu0
  %v6582 = vadd.f32 %v6511, %v6581
  %6583 = vdwg.mxu0
  %6584 = vmatprep.subr.mxu0 %v4913
  %6585 = vmatpush1.msra.mxu0 %v4912
  %6586 = vmatprep.subr.mxu0 %v4928
  %6587 = vmatpush1.msra.mxu0 %v4927
  %6588 = vmatprep.subr.mxu0 %v4943
  %6589 = vmatpush1.msra.mxu0 %v4942
  %6590 = vmatprep.subr.mxu0 %v4958
  %6591 = vmatpush1.msra.mxu0 %v4957
  %6592 = vmatprep.subr.mxu0 %v4973
  %6593 = vmatpush1.msra.mxu0 %v4972
  %6594 = vmatprep.subr.mxu0 %v4988
  %6595 = vmatpush1.msra.mxu0 %v4987
  %6596 = vmatprep.subr.mxu0 %v5003
  %6597 = vmatpush1.msra.mxu0 %v5002
  %6598 = vmatprep.subr.mxu0 %v5018
  %6599 = vmatpush1.msra.mxu0 %v5017
  %6600 = vmatprep.subr.mxu0 %v5033
  %6601 = vmatpush1.msra.mxu0 %v5032
  %6602 = vmatprep.subr.mxu0 %v5048
  %6603 = vmatpush1.msra.mxu0 %v5047
  %6604 = vmatprep.subr.mxu0 %v5063
  %6605 = vmatpush1.msra.mxu0 %v5062
  %6606 = vmatprep.subr.mxu0 %v5078
  %6607 = vmatpush1.msra.mxu0 %v5077
  %6608 = vmatprep.subr.mxu0 %v5093
  %6609 = vmatpush1.msra.mxu0 %v5092
  %6610 = vmatprep.subr.mxu0 %v5108
  %6611 = vmatpush1.msra.mxu0 %v5107
  %6612 = vmatprep.subr.mxu0 %v5123
  %6613 = vmatpush1.msra.mxu0 %v5122
  %6614 = vmatprep.subr.mxu0 %v5138
  %6615 = vmatpush1.msra.mxu0 %v5137
  %6616 = vmatprep.subr.mxu0 %v5153
  %6617 = vmatpush1.msra.mxu0 %v5152
  %6618 = vmatprep.subr.mxu0 %v5168
  %6619 = vmatpush1.msra.mxu0 %v5167
  %6620 = vmatprep.subr.mxu0 %v5183
  %6621 = vmatpush1.msra.mxu0 %v5182
  %6622 = vmatprep.subr.mxu0 %v5198
  %6623 = vmatpush1.msra.mxu0 %v5197
  %6624 = vmatprep.subr.mxu0 %v5213
  %6625 = vmatpush1.msra.mxu0 %v5212
  %6626 = vmatprep.subr.mxu0 %v5228
  %6627 = vmatpush1.msra.mxu0 %v5227
  %6628 = vmatprep.subr.mxu0 %v5243
  %6629 = vmatpush1.msra.mxu0 %v5242
  %6630 = vmatprep.subr.mxu0 %v5258
  %6631 = vmatpush1.msra.mxu0 %v5257
  %6632 = vmatprep.subr.mxu0 %v5273
  %6633 = vmatpush1.msra.mxu0 %v5272
  %6634 = vmatprep.subr.mxu0 %v5288
  %6635 = vmatpush1.msra.mxu0 %v5287
  %6636 = vmatprep.subr.mxu0 %v5303
  %6637 = vmatpush1.msra.mxu0 %v5302
  %6638 = vmatprep.subr.mxu0 %v5318
  %6639 = vmatpush1.msra.mxu0 %v5317
  %6640 = vmatprep.subr.mxu0 %v5333
  %6641 = vmatpush1.msra.mxu0 %v5332
  %6642 = vmatprep.subr.mxu0 %v5348
  %6643 = vmatpush1.msra.mxu0 %v5347
  %6644 = vmatprep.subr.mxu0 %v5363
  %6645 = vmatpush1.msra.mxu0 %v5362
  %6646 = vmatprep.subr.mxu0 %v5378
  %6647 = vmatpush1.msra.mxu0 %v5377
  %6648 = vmatprep.mubr.f32.mxu0 %v4897
  %6649 = vmatmul.mubr.f32.gmra.mrb[0].mxu0 %v4896
  %v6650 = vpop.f32.mrb[0].mxu0
  %v6651 = vadd.f32 %v5705, %v6650
  %v6652 = vpop.f32.mrb[0].mxu0
  %v6653 = vadd.f32 %v5709, %v6652
  %6654 = vdwg.mxu0
  %6655 = vmatprep.subr.mxu0 %v5393
  %6656 = vmatpush1.msra.mxu0 %v5392
  %6657 = vmatprep.subr.mxu0 %v5408
  %6658 = vmatpush1.msra.mxu0 %v5407
  %6659 = vmatprep.subr.mxu0 %v5423
  %6660 = vmatpush1.msra.mxu0 %v5422
  %6661 = vmatprep.subr.mxu0 %v5438
  %6662 = vmatpush1.msra.mxu0 %v5437
  %6663 = vmatprep.subr.mxu0 %v5453
  %6664 = vmatpush1.msra.mxu0 %v5452
  %6665 = vmatprep.subr.mxu0 %v5468
  %6666 = vmatpush1.msra.mxu0 %v5467
  %6667 = vmatprep.subr.mxu0 %v5483
  %6668 = vmatpush1.msra.mxu0 %v5482
  %6669 = vmatprep.subr.mxu0 %v5498
  %6670 = vmatpush1.msra.mxu0 %v5497
  %6671 = vmatprep.subr.mxu0 %v5513
  %6672 = vmatpush1.msra.mxu0 %v5512
  %6673 = vmatprep.subr.mxu0 %v5528
  %6674 = vmatpush1.msra.mxu0 %v5527
  %6675 = vmatprep.subr.mxu0 %v5543
  %6676 = vmatpush1.msra.mxu0 %v5542
  %6677 = vmatprep.subr.mxu0 %v5558
  %6678 = vmatpush1.msra.mxu0 %v5557
  %6679 = vmatprep.subr.mxu0 %v5573
  %6680 = vmatpush1.msra.mxu0 %v5572
  %6681 = vmatprep.subr.mxu0 %v5588
  %6682 = vmatpush1.msra.mxu0 %v5587
  %6683 = vmatprep.subr.mxu0 %v5603
  %6684 = vmatpush1.msra.mxu0 %v5602
  %6685 = vmatprep.subr.mxu0 %v5618
  %6686 = vmatpush1.msra.mxu0 %v5617
  %6687 = vmatprep.subr.mxu0 %v5633
  %6688 = vmatpush1.msra.mxu0 %v5632
  %6689 = vmatprep.subr.mxu0 %v5648
  %6690 = vmatpush1.msra.mxu0 %v5647
  %6691 = vmatprep.subr.mxu0 0.0
  %6692 = vmatpush1.msra.mxu0 0.0
  %6693 = vmatprep.subr.mxu0 0.0
  %6694 = vmatpush1.msra.mxu0 0.0
  %6695 = vmatprep.subr.mxu0 0.0
  %6696 = vmatpush1.msra.mxu0 0.0
  %6697 = vmatprep.subr.mxu0 0.0
  %6698 = vmatpush1.msra.mxu0 0.0
  %6699 = vmatprep.subr.mxu0 0.0
  %6700 = vmatpush1.msra.mxu0 0.0
  %6701 = vmatprep.subr.mxu0 0.0
  %6702 = vmatpush1.msra.mxu0 0.0
  %6703 = vmatprep.subr.mxu0 0.0
  %6704 = vmatpush1.msra.mxu0 0.0
  %6705 = vmatprep.subr.mxu0 0.0
  %6706 = vmatpush1.msra.mxu0 0.0
  %6707 = vmatprep.subr.mxu0 0.0
  %6708 = vmatpush1.msra.mxu0 0.0
  %6709 = vmatprep.subr.mxu0 0.0
  %6710 = vmatpush1.msra.mxu0 0.0
  %6711 = vmatprep.subr.mxu0 0.0
  %6712 = vmatpush1.msra.mxu0 0.0
  %6713 = vmatprep.subr.mxu0 0.0
  %6714 = vmatpush1.msra.mxu0 0.0
  %6715 = vmatprep.subr.mxu0 0.0
  %6716 = vmatpush1.msra.mxu0 0.0
  %6717 = vmatprep.subr.mxu0 0.0
  %6718 = vmatpush1.msra.mxu0 0.0
  %6719 = vmatprep.mubr.f32.mxu0 %v5730
  %6720 = vmatmul.mubr.f32.gmra.mrb[0].mxu0 %v4898
  %v6721 = vpop.f32.mrb[0].mxu0
  %v6722 = vadd.f32 %v6651, %v6721
  %v6723 = vpop.f32.mrb[0].mxu0
  %v6724 = vadd.f32 %v6653, %v6723
  %6725 = vdwg.mxu0
  %6726 = vmatprep.subr.mxu0 0.0
  %6727 = vmatpush1.msra.mxu0 %v4914
  %6728 = vmatprep.subr.mxu0 0.0
  %6729 = vmatpush1.msra.mxu0 %v4929
  %6730 = vmatprep.subr.mxu0 0.0
  %6731 = vmatpush1.msra.mxu0 %v4944
  %6732 = vmatprep.subr.mxu0 0.0
  %6733 = vmatpush1.msra.mxu0 %v4959
  %6734 = vmatprep.subr.mxu0 0.0
  %6735 = vmatpush1.msra.mxu0 %v4974
  %6736 = vmatprep.subr.mxu0 0.0
  %6737 = vmatpush1.msra.mxu0 %v4989
  %6738 = vmatprep.subr.mxu0 0.0
  %6739 = vmatpush1.msra.mxu0 %v5004
  %6740 = vmatprep.subr.mxu0 0.0
  %6741 = vmatpush1.msra.mxu0 %v5019
  %6742 = vmatprep.subr.mxu0 0.0
  %6743 = vmatpush1.msra.mxu0 %v5034
  %6744 = vmatprep.subr.mxu0 0.0
  %6745 = vmatpush1.msra.mxu0 %v5049
  %6746 = vmatprep.subr.mxu0 0.0
  %6747 = vmatpush1.msra.mxu0 %v5064
  %6748 = vmatprep.subr.mxu0 0.0
  %6749 = vmatpush1.msra.mxu0 %v5079
  %6750 = vmatprep.subr.mxu0 0.0
  %6751 = vmatpush1.msra.mxu0 %v5094
  %6752 = vmatprep.subr.mxu0 0.0
  %6753 = vmatpush1.msra.mxu0 %v5109
  %6754 = vmatprep.subr.mxu0 0.0
  %6755 = vmatpush1.msra.mxu0 %v5124
  %6756 = vmatprep.subr.mxu0 0.0
  %6757 = vmatpush1.msra.mxu0 %v5139
  %6758 = vmatprep.subr.mxu0 0.0
  %6759 = vmatpush1.msra.mxu0 %v5154
  %6760 = vmatprep.subr.mxu0 0.0
  %6761 = vmatpush1.msra.mxu0 %v5169
  %6762 = vmatprep.subr.mxu0 0.0
  %6763 = vmatpush1.msra.mxu0 %v5184
  %6764 = vmatprep.subr.mxu0 0.0
  %6765 = vmatpush1.msra.mxu0 %v5199
  %6766 = vmatprep.subr.mxu0 0.0
  %6767 = vmatpush1.msra.mxu0 %v5214
  %6768 = vmatprep.subr.mxu0 0.0
  %6769 = vmatpush1.msra.mxu0 %v5229
  %6770 = vmatprep.subr.mxu0 0.0
  %6771 = vmatpush1.msra.mxu0 %v5244
  %6772 = vmatprep.subr.mxu0 0.0
  %6773 = vmatpush1.msra.mxu0 %v5259
  %6774 = vmatprep.subr.mxu0 0.0
  %6775 = vmatpush1.msra.mxu0 %v5274
  %6776 = vmatprep.subr.mxu0 0.0
  %6777 = vmatpush1.msra.mxu0 %v5289
  %6778 = vmatprep.subr.mxu0 0.0
  %6779 = vmatpush1.msra.mxu0 %v5304
  %6780 = vmatprep.subr.mxu0 0.0
  %6781 = vmatpush1.msra.mxu0 %v5319
  %6782 = vmatprep.subr.mxu0 0.0
  %6783 = vmatpush1.msra.mxu0 %v5334
  %6784 = vmatprep.subr.mxu0 0.0
  %6785 = vmatpush1.msra.mxu0 %v5349
  %6786 = vmatprep.subr.mxu0 0.0
  %6787 = vmatpush1.msra.mxu0 %v5364
  %6788 = vmatprep.subr.mxu0 0.0
  %6789 = vmatpush1.msra.mxu0 %v5379
  %6790 = vmatprep.mubr.f32.mxu0 %v4897
  %6791 = vmatmul.mubr.f32.gmra.mrb[0].mxu0 %v4896
  %v6792 = vpop.f32.mrb[0].mxu0
  %v6793 = vadd.f32 %v5713, %v6792
  %v6794 = vpop.f32.mrb[0].mxu0
  %6795 = vdwg.mxu0
  %6796 = vmatprep.subr.mxu0 0.0
  %6797 = vmatpush1.msra.mxu0 %v5394
  %6798 = vmatprep.subr.mxu0 0.0
  %6799 = vmatpush1.msra.mxu0 %v5409
  %6800 = vmatprep.subr.mxu0 0.0
  %6801 = vmatpush1.msra.mxu0 %v5424
  %6802 = vmatprep.subr.mxu0 0.0
  %6803 = vmatpush1.msra.mxu0 %v5439
  %6804 = vmatprep.subr.mxu0 0.0
  %6805 = vmatpush1.msra.mxu0 %v5454
  %6806 = vmatprep.subr.mxu0 0.0
  %6807 = vmatpush1.msra.mxu0 %v5469
  %6808 = vmatprep.subr.mxu0 0.0
  %6809 = vmatpush1.msra.mxu0 %v5484
  %6810 = vmatprep.subr.mxu0 0.0
  %6811 = vmatpush1.msra.mxu0 %v5499
  %6812 = vmatprep.subr.mxu0 0.0
  %6813 = vmatpush1.msra.mxu0 %v5514
  %6814 = vmatprep.subr.mxu0 0.0
  %6815 = vmatpush1.msra.mxu0 %v5529
  %6816 = vmatprep.subr.mxu0 0.0
  %6817 = vmatpush1.msra.mxu0 %v5544
  %6818 = vmatprep.subr.mxu0 0.0
  %6819 = vmatpush1.msra.mxu0 %v5559
  %6820 = vmatprep.subr.mxu0 0.0
  %6821 = vmatpush1.msra.mxu0 %v5574
  %6822 = vmatprep.subr.mxu0 0.0
  %6823 = vmatpush1.msra.mxu0 %v5589
  %6824 = vmatprep.subr.mxu0 0.0
  %6825 = vmatpush1.msra.mxu0 %v5604
  %6826 = vmatprep.subr.mxu0 0.0
  %6827 = vmatpush1.msra.mxu0 %v5619
  %6828 = vmatprep.subr.mxu0 0.0
  %6829 = vmatpush1.msra.mxu0 %v5634
  %6830 = vmatprep.subr.mxu0 0.0
  %6831 = vmatpush1.msra.mxu0 %v5649
  %6832 = vmatprep.subr.mxu0 0.0
  %6833 = vmatpush1.msra.mxu0 0.0
  %6834 = vmatprep.subr.mxu0 0.0
  %6835 = vmatpush1.msra.mxu0 0.0
  %6836 = vmatprep.subr.mxu0 0.0
  %6837 = vmatpush1.msra.mxu0 0.0
  %6838 = vmatprep.subr.mxu0 0.0
  %6839 = vmatpush1.msra.mxu0 0.0
  %6840 = vmatprep.subr.mxu0 0.0
  %6841 = vmatpush1.msra.mxu0 0.0
  %6842 = vmatprep.subr.mxu0 0.0
  %6843 = vmatpush1.msra.mxu0 0.0
  %6844 = vmatprep.subr.mxu0 0.0
  %6845 = vmatpush1.msra.mxu0 0.0
  %6846 = vmatprep.subr.mxu0 0.0
  %6847 = vmatpush1.msra.mxu0 0.0
  %6848 = vmatprep.subr.mxu0 0.0
  %6849 = vmatpush1.msra.mxu0 0.0
  %6850 = vmatprep.subr.mxu0 0.0
  %6851 = vmatpush1.msra.mxu0 0.0
  %6852 = vmatprep.subr.mxu0 0.0
  %6853 = vmatpush1.msra.mxu0 0.0
  %6854 = vmatprep.subr.mxu0 0.0
  %6855 = vmatpush1.msra.mxu0 0.0
  %6856 = vmatprep.subr.mxu0 0.0
  %6857 = vmatpush1.msra.mxu0 0.0
  %6858 = vmatprep.subr.mxu0 0.0
  %6859 = vmatpush1.msra.mxu0 0.0
  %6860 = vmatprep.mubr.f32.mxu0 %v5730
  %6861 = vmatmul.mubr.f32.gmra.mrb[0].mxu0 %v4898
  %v6862 = vpop.f32.mrb[0].mxu0
  %v6863 = vadd.f32 %v6793, %v6862
  %v6864 = vpop.f32.mrb[0].mxu0
  %6865 = vdwg.mxu0
  %v6866 = vmax.f32 %v5870, 0.0
  %v6867 = vmax.f32 %v5872, 0.0
  %v6868 = vmax.f32 %v6012, 0.0
  %v6869 = vmax.f32 %v6014, 0.0
  %v6870 = vmax.f32 %v6154, 0.0
  %v6871 = vmax.f32 %v6156, 0.0
  %v6872 = vmax.f32 %v6296, 0.0
  %v6873 = vmax.f32 %v6298, 0.0
  %v6874 = vmax.f32 %v6438, 0.0
  %v6875 = vmax.f32 %v6440, 0.0
  %v6876 = vmax.f32 %v6580, 0.0
  %v6877 = vmax.f32 %v6582, 0.0
  %v6878 = vmax.f32 %v6722, 0.0
  %v6879 = vmax.f32 %v6724, 0.0
  %v6880 = vmax.f32 %v6863, 0.0
  %v6881 = vld [vmem:[%s9] sm:$0xff]
  %v6882 = vld [vmem:[%s9 + $0x8] sm:$0xff]
  %v6883 = vld [vmem:[%s9 + $0x10] sm:$0xff]
  %v6884 = vld [vmem:[%s9 + $0x18] sm:$0xff]
  %v6885 = vld [vmem:[%s9 + $0x20] sm:$0xff]
  %v6886 = vld [vmem:[%s9 + $0x28] sm:$0xff]
  %v6887 = vld [vmem:[%s9 + $0x30] sm:$0xff]
  %v6888 = vld [vmem:[%s9 + $0x38] sm:$0xff]
  %v6889 = vld [vmem:[%s9 + $0x40] sm:$0xff]
  %v6890 = vld [vmem:[%s9 + $0x48] sm:$0xff]
  %v6891 = vld [vmem:[%s9 + $0x50] sm:$0xff]
  %v6892 = vld [vmem:[%s9 + $0x58] sm:$0xff]
  %v6893 = vld [vmem:[%s9 + $0x60] sm:$0xff]
  %v6894 = vld [vmem:[%s9 + $0x68] sm:$0xff]
  %v6895 = vld [vmem:[%s9 + $0x70] sm:$0xff]
  %v6896 = vld [vmem:[%s9 + $0x78] sm:$0xff]
  %v6897 = vld [vmem:[%s9 + $0x80] sm:$0xff]
  %v6898 = vld [vmem:[%s9 + $0x88] sm:$0xff]
  %v6899 = vld [vmem:[%s9 + $0x90] sm:$0xff]
  %v6900 = vld [vmem:[%s9 + $0x98] sm:$0xff]
  %v6901 = vld [vmem:[%s9 + $0xa0] sm:$0xff]
  %v6902 = vld [vmem:[%s9 + $0xa8] sm:$0xff]
  %v6903 = vld [vmem:[%s9 + $0xb0] sm:$0xff]
  %v6904 = vld [vmem:[%s9 + $0xb8] sm:$0xff]
  %v6905 = vld [vmem:[%s9 + $0xc0] sm:$0xff]
  %v6906 = vld [vmem:[%s9 + $0xc8] sm:$0xff]
  %v6907 = vld [vmem:[%s9 + $0xd0] sm:$0xff]
  %v6908 = vld [vmem:[%s9 + $0xd8] sm:$0xff]
  %v6909 = vld [vmem:[%s9 + $0xe0] sm:$0xff]
  %v6910 = vld [vmem:[%s9 + $0xe8] sm:$0xff]
  %v6911 = vld [vmem:[%s9 + $0xf0] sm:$0xff]
  %v6912 = vld [vmem:[%s9 + $0xf8] sm:$0xff]
  %v6913 = vld [vmem:[%s9 + $0x100] sm:$0xff]
  %v6914 = vld [vmem:[%s9 + $0x108] sm:$0xff]
  %v6915 = vld [vmem:[%s9 + $0x110] sm:$0xff]
  %v6916 = vld [vmem:[%s9 + $0x118] sm:$0xff]
  %v6917 = vld [vmem:[%s9 + $0x120] sm:$0xff]
  %v6918 = vld [vmem:[%s9 + $0x128] sm:$0xff]
  %v6919 = vld [vmem:[%s9 + $0x130] sm:$0xff]
  %v6920 = vld [vmem:[%s9 + $0x138] sm:$0xff]
  %v6921 = vld [vmem:[%s9 + $0x140] sm:$0xff]
  %v6922 = vld [vmem:[%s9 + $0x148] sm:$0xff]
  %v6923 = vld [vmem:[%s9 + $0x150] sm:$0xff]
  %v6924 = vld [vmem:[%s9 + $0x158] sm:$0xff]
  %v6925 = vld [vmem:[%s9 + $0x160] sm:$0xff]
  %v6926 = vld [vmem:[%s9 + $0x168] sm:$0xff]
  %v6927 = vld [vmem:[%s9 + $0x170] sm:$0xff]
  %v6928 = vld [vmem:[%s9 + $0x178] sm:$0xff]
  %v6929 = vld [vmem:[%s9 + $0x180] sm:$0xff]
  %v6930 = vld [vmem:[%s9 + $0x188] sm:$0xff]
  %v6931 = vld [vmem:[%s9 + $0x190] sm:$0xff]
  %v6932 = vld [vmem:[%s9 + $0x198] sm:$0xff]
  %v6933 = vld [vmem:[%s9 + $0x1a0] sm:$0xff]
  %v6934 = vld [vmem:[%s9 + $0x1a8] sm:$0xff]
  %v6935 = vld [vmem:[%s9 + $0x1b0] sm:$0xff]
  %v6936 = vld [vmem:[%s9 + $0x1b8] sm:$0xff]
  %v6937 = vld [vmem:[%s9 + $0x1c0] sm:$0xff]
  %v6938 = vld [vmem:[%s9 + $0x1c8] sm:$0xff]
  %v6939 = vld [vmem:[%s9 + $0x1d0] sm:$0xff]
  %v6940 = vld [vmem:[%s9 + $0x1d8] sm:$0xff]
  %v6941 = vld [vmem:[%s9 + $0x1e0] sm:$0xff]
  %v6942 = vld [vmem:[%s9 + $0x1e8] sm:$0xff]
  %v6943 = vld [vmem:[%s9 + $0x1f0] sm:$0xff]
  %v6944 = vld [vmem:[%s9 + $0x1f8] sm:$0xff]
  %v6945 = vld [vmem:[%s9 + $0x200] sm:$0xff]
  %v6946 = vld [vmem:[%s9 + $0x208] sm:$0xff]
  %v6947 = vld [vmem:[%s9 + $0x210] sm:$0xff]
  %v6948 = vld [vmem:[%s9 + $0x218] sm:$0xff]
  %v6949 = vld [vmem:[%s9 + $0x220] sm:$0xff]
  %v6950 = vld [vmem:[%s9 + $0x228] sm:$0xff]
  %v6951 = vld [vmem:[%s9 + $0x230] sm:$0xff]
  %v6952 = vld [vmem:[%s9 + $0x238] sm:$0xff]
  %v6953 = vld [vmem:[%s9 + $0x240] sm:$0xff]
  %v6954 = vld [vmem:[%s9 + $0x248] sm:$0xff]
  %v6955 = vld [vmem:[%s9 + $0x250] sm:$0xff]
  %v6956 = vld [vmem:[%s9 + $0x258] sm:$0xff]
  %v6957 = vld [vmem:[%s9 + $0x260] sm:$0xff]
  %v6958 = vld [vmem:[%s9 + $0x268] sm:$0xff]
  %v6959 = vld [vmem:[%s9 + $0x270] sm:$0xff]
  %v6960 = vld [vmem:[%s9 + $0x278] sm:$0xff]
  %v6961 = vld [vmem:[%s9 + $0x280] sm:$0xff]
  %v6962 = vld [vmem:[%s9 + $0x288] sm:$0xff]
  %v6963 = vld [vmem:[%s9 + $0x290] sm:$0xff]
  %v6964 = vld [vmem:[%s9 + $0x298] sm:$0xff]
  %v6965 = vld [vmem:[%s9 + $0x2a0] sm:$0xff]
  %v6966 = vld [vmem:[%s9 + $0x2a8] sm:$0xff]
  %v6967 = vld [vmem:[%s9 + $0x2b0] sm:$0xff]
  %v6968 = vld [vmem:[%s9 + $0x2b8] sm:$0xff]
  %v6969 = vld [vmem:[%s9 + $0x2c0] sm:$0xff]
  %v6970 = vld [vmem:[%s9 + $0x2c8] sm:$0xff]
  %v6971 = vld [vmem:[%s9 + $0x2d0] sm:$0xff]
  %v6972 = vld [vmem:[%s9 + $0x2d8] sm:$0xff]
  %v6973 = vld [vmem:[%s9 + $0x2e0] sm:$0xff]
  %v6974 = vld [vmem:[%s9 + $0x2e8] sm:$0xff]
  %v6975 = vld [vmem:[%s9 + $0x2f0] sm:$0xff]
  %v6976 = vld [vmem:[%s9 + $0x2f8] sm:$0xff]
  %v6977 = vld [vmem:[%s9 + $0x300] sm:$0xff]
  %v6978 = vld [vmem:[%s9 + $0x308] sm:$0xff]
  %v6979 = vld [vmem:[%s9 + $0x310] sm:$0xff]
  %v6980 = vld [vmem:[%s9 + $0x318] sm:$0xff]
  %v6981 = vld [vmem:[%s9 + $0x320] sm:$0xff]
  %v6982 = vld [vmem:[%s9 + $0x328] sm:$0xff]
  %v6983 = vld [vmem:[%s9 + $0x330] sm:$0xff]
  %v6984 = vld [vmem:[%s9 + $0x338] sm:$0xff]
  %v6985 = vld [vmem:[%s9 + $0x340] sm:$0xff]
  %v6986 = vld [vmem:[%s9 + $0x348] sm:$0xff]
  %v6987 = vld [vmem:[%s9 + $0x350] sm:$0xff]
  %v6988 = vld [vmem:[%s9 + $0x358] sm:$0xff]
  %v6989 = vld [vmem:[%s9 + $0x360] sm:$0xff]
  %v6990 = vld [vmem:[%s9 + $0x368] sm:$0xff]
  %v6991 = vld [vmem:[%s9 + $0x370] sm:$0xff]
  %v6992 = vld [vmem:[%s9 + $0x378] sm:$0xff]
  %v6993 = vld [vmem:[%s9 + $0x380] sm:$0xff]
  %v6994 = vld [vmem:[%s9 + $0x388] sm:$0xff]
  %v6995 = vld [vmem:[%s9 + $0x390] sm:$0xff]
  %v6996 = vld [vmem:[%s9 + $0x398] sm:$0xff]
  %v6997 = vld [vmem:[%s9 + $0x3a0] sm:$0xff]
  %v6998 = vld [vmem:[%s9 + $0x3a8] sm:$0xff]
  %v6999 = vld [vmem:[%s9 + $0x3b0] sm:$0xff]
  %v7000 = vld [vmem:[%s9 + $0x3b8] sm:$0xff]
  %v7001 = vld [vmem:[%s9 + $0x3c0] sm:$0xff]
  %v7002 = vld [vmem:[%s9 + $0x3c8] sm:$0xff]
  %v7003 = vld [vmem:[%s9 + $0x3d0] sm:$0xff]
  %v7004 = vld [vmem:[%s9 + $0x3d8] sm:$0xff]
  %v7005 = vld [vmem:[%s9 + $0x3e0] sm:$0xff]
  %v7006 = vld [vmem:[%s9 + $0x3e8] sm:$0xff]
  %v7007 = vld [vmem:[%s9 + $0x3f0] sm:$0xff]
  %v7008 = vld [vmem:[%s9 + $0x3f8] sm:$0xff]
  %v7009 = vld [vmem:[%s9 + $0x400] sm:$0xff]
  %v7010 = vld [vmem:[%s9 + $0x408] sm:$0xff]
  %v7011 = vld [vmem:[%s9 + $0x410] sm:$0xff]
  %v7012 = vld [vmem:[%s9 + $0x418] sm:$0xff]
  %v7013 = vld [vmem:[%s9 + $0x420] sm:$0xff]
  %v7014 = vld [vmem:[%s9 + $0x428] sm:$0xff]
  %v7015 = vld [vmem:[%s9 + $0x430] sm:$0xff]
  %v7016 = vld [vmem:[%s9 + $0x438] sm:$0xff]
  %v7017 = vld [vmem:[%s9 + $0x440] sm:$0xff]
  %v7018 = vld [vmem:[%s9 + $0x448] sm:$0xff]
  %v7019 = vld [vmem:[%s9 + $0x450] sm:$0xff]
  %v7020 = vld [vmem:[%s9 + $0x458] sm:$0xff]
  %v7021 = vld [vmem:[%s9 + $0x460] sm:$0xff]
  %v7022 = vld [vmem:[%s9 + $0x468] sm:$0xff]
  %v7023 = vld [vmem:[%s9 + $0x470] sm:$0xff]
  %v7024 = vld [vmem:[%s9 + $0x478] sm:$0xff]
  %v7025 = vld [vmem:[%s9 + $0x480] sm:$0xff]
  %v7026 = vld [vmem:[%s9 + $0x488] sm:$0xff]
  %v7027 = vld [vmem:[%s9 + $0x490] sm:$0xff]
  %v7028 = vld [vmem:[%s9 + $0x498] sm:$0xff]
  %v7029 = vld [vmem:[%s9 + $0x4a0] sm:$0xff]
  %v7030 = vld [vmem:[%s9 + $0x4a8] sm:$0xff]
  %v7031 = vld [vmem:[%s9 + $0x4b0] sm:$0xff]
  %v7032 = vld [vmem:[%s9 + $0x4b8] sm:$0xff]
  %v7033 = vld [vmem:[%s9 + $0x4c0] sm:$0xff]
  %v7034 = vld [vmem:[%s9 + $0x4c8] sm:$0xff]
  %v7035 = vld [vmem:[%s9 + $0x4d0] sm:$0xff]
  %v7036 = vld [vmem:[%s9 + $0x4d8] sm:$0xff]
  %v7037 = vld [vmem:[%s9 + $0x4e0] sm:$0xff]
  %v7038 = vld [vmem:[%s9 + $0x4e8] sm:$0xff]
  %v7039 = vld [vmem:[%s9 + $0x4f0] sm:$0xff]
  %v7040 = vld [vmem:[%s9 + $0x4f8] sm:$0xff]
  %v7041 = vld [vmem:[%s9 + $0x500] sm:$0xff]
  %v7042 = vld [vmem:[%s9 + $0x508] sm:$0xff]
  %v7043 = vld [vmem:[%s9 + $0x510] sm:$0xff]
  %v7044 = vld [vmem:[%s9 + $0x518] sm:$0xff]
  %v7045 = vld [vmem:[%s9 + $0x520] sm:$0xff]
  %v7046 = vld [vmem:[%s9 + $0x528] sm:$0xff]
  %v7047 = vld [vmem:[%s9 + $0x530] sm:$0xff]
  %v7048 = vld [vmem:[%s9 + $0x538] sm:$0xff]
  %v7049 = vld [vmem:[%s9 + $0x540] sm:$0xff]
  %v7050 = vld [vmem:[%s9 + $0x548] sm:$0xff]
  %v7051 = vld [vmem:[%s9 + $0x550] sm:$0xff]
  %v7052 = vld [vmem:[%s9 + $0x558] sm:$0xff]
  %v7053 = vld [vmem:[%s9 + $0x560] sm:$0xff]
  %v7054 = vld [vmem:[%s9 + $0x568] sm:$0xff]
  %v7055 = vld [vmem:[%s9 + $0x570] sm:$0xff]
  %v7056 = vld [vmem:[%s9 + $0x578] sm:$0xff]
  %v7057 = vld [vmem:[%s9 + $0x580] sm:$0xff]
  %v7058 = vld [vmem:[%s9 + $0x588] sm:$0xff]
  %v7059 = vld [vmem:[%s9 + $0x590] sm:$0xff]
  %v7060 = vld [vmem:[%s9 + $0x598] sm:$0xff]
  %v7061 = vld [vmem:[%s9 + $0x5a0] sm:$0xff]
  %v7062 = vld [vmem:[%s9 + $0x5a8] sm:$0xff]
  %v7063 = vld [vmem:[%s9 + $0x5b0] sm:$0xff]
  %v7064 = vld [vmem:[%s9 + $0x5b8] sm:$0xff]
  %v7065 = vld [vmem:[%s9 + $0x5c0] sm:$0xff]
  %v7066 = vld [vmem:[%s9 + $0x5c8] sm:$0xff]
  %v7067 = vld [vmem:[%s9 + $0x5d0] sm:$0xff]
  %v7068 = vld [vmem:[%s9 + $0x5d8] sm:$0xff]
  %v7069 = vld [vmem:[%s9 + $0x5e0] sm:$0xff]
  %v7070 = vld [vmem:[%s9 + $0x5e8] sm:$0xff]
  %v7071 = vld [vmem:[%s9 + $0x5f0] sm:$0xff]
  %v7072 = vld [vmem:[%s9 + $0x5f8] sm:$0xff]
  %v7073 = vld [vmem:[%s9 + $0x600] sm:$0xff]
  %v7074 = vld [vmem:[%s9 + $0x608] sm:$0xff]
  %v7075 = vld [vmem:[%s9 + $0x610] sm:$0xff]
  %v7076 = vld [vmem:[%s9 + $0x618] sm:$0xff]
  %v7077 = vld [vmem:[%s9 + $0x620] sm:$0xff]
  %v7078 = vld [vmem:[%s9 + $0x628] sm:$0xff]
  %v7079 = vld [vmem:[%s9 + $0x630] sm:$0xff]
  %v7080 = vld [vmem:[%s9 + $0x638] sm:$0xff]
  %v7081 = vld [vmem:[%s9 + $0x640] sm:$0xff]
  %v7082 = vld [vmem:[%s9 + $0x648] sm:$0xff]
  %v7083 = vld [vmem:[%s9 + $0x650] sm:$0xff]
  %v7084 = vld [vmem:[%s9 + $0x658] sm:$0xff]
  %v7085 = vld [vmem:[%s9 + $0x660] sm:$0xff]
  %v7086 = vld [vmem:[%s9 + $0x668] sm:$0xff]
  %v7087 = vld [vmem:[%s9 + $0x670] sm:$0xff]
  %v7088 = vld [vmem:[%s9 + $0x678] sm:$0xff]
  %v7089 = vld [vmem:[%s9 + $0x680] sm:$0xff]
  %v7090 = vld [vmem:[%s9 + $0x688] sm:$0xff]
  %v7091 = vld [vmem:[%s9 + $0x690] sm:$0xff]
  %v7092 = vld [vmem:[%s9 + $0x698] sm:$0xff]
  %v7093 = vld [vmem:[%s9 + $0x6a0] sm:$0xff]
  %v7094 = vld [vmem:[%s9 + $0x6a8] sm:$0xff]
  %v7095 = vld [vmem:[%s9 + $0x6b0] sm:$0xff]
  %v7096 = vld [vmem:[%s9 + $0x6b8] sm:$0xff]
  %v7097 = vld [vmem:[%s9 + $0x6c0] sm:$0xff]
  %v7098 = vld [vmem:[%s9 + $0x6c8] sm:$0xff]
  %v7099 = vld [vmem:[%s9 + $0x6d0] sm:$0xff]
  %v7100 = vld [vmem:[%s9 + $0x6d8] sm:$0xff]
  %v7101 = vld [vmem:[%s9 + $0x6e0] sm:$0xff]
  %v7102 = vld [vmem:[%s9 + $0x6e8] sm:$0xff]
  %v7103 = vld [vmem:[%s9 + $0x6f0] sm:$0xff]
  %v7104 = vld [vmem:[%s9 + $0x6f8] sm:$0xff]
  %v7105 = vld [vmem:[%s9 + $0x700] sm:$0xff]
  %v7106 = vld [vmem:[%s9 + $0x708] sm:$0xff]
  %v7107 = vld [vmem:[%s9 + $0x710] sm:$0xff]
  %v7108 = vld [vmem:[%s9 + $0x718] sm:$0xff]
  %v7109 = vld [vmem:[%s9 + $0x720] sm:$0xff]
  %v7110 = vld [vmem:[%s9 + $0x728] sm:$0xff]
  %v7111 = vld [vmem:[%s9 + $0x730] sm:$0xff]
  %v7112 = vld [vmem:[%s9 + $0x738] sm:$0xff]
  %v7113 = vld [vmem:[%s9 + $0x740] sm:$0xff]
  %v7114 = vld [vmem:[%s9 + $0x748] sm:$0xff]
  %v7115 = vld [vmem:[%s9 + $0x750] sm:$0xff]
  %v7116 = vld [vmem:[%s9 + $0x758] sm:$0xff]
  %v7117 = vld [vmem:[%s9 + $0x760] sm:$0xff]
  %v7118 = vld [vmem:[%s9 + $0x768] sm:$0xff]
  %v7119 = vld [vmem:[%s9 + $0x770] sm:$0xff]
  %v7120 = vld [vmem:[%s9 + $0x778] sm:$0xff]
  %v7121 = vld [vmem:[%s9 + $0x780] sm:$0xff]
  %v7122 = vld [vmem:[%s9 + $0x788] sm:$0xff]
  %v7123 = vld [vmem:[%s9 + $0x790] sm:$0xff]
  %v7124 = vld [vmem:[%s9 + $0x798] sm:$0xff]
  %v7125 = vld [vmem:[%s9 + $0x7a0] sm:$0xff]
  %v7126 = vld [vmem:[%s9 + $0x7a8] sm:$0xff]
  %v7127 = vld [vmem:[%s9 + $0x7b0] sm:$0xff]
  %v7128 = vld [vmem:[%s9 + $0x7b8] sm:$0xff]
  %v7129 = vld [vmem:[%s9 + $0x7c0] sm:$0xff]
  %v7130 = vld [vmem:[%s9 + $0x7c8] sm:$0xff]
  %v7131 = vld [vmem:[%s9 + $0x7d0] sm:$0xff]
  %v7132 = vld [vmem:[%s9 + $0x7d8] sm:$0xff]
  %v7133 = vld [vmem:[%s9 + $0x7e0] sm:$0xff]
  %v7134 = vld [vmem:[%s9 + $0x7e8] sm:$0xff]
  %v7135 = vld [vmem:[%s9 + $0x7f0] sm:$0xff]
  %v7136 = vld [vmem:[%s9 + $0x7f8] sm:$0xff]
  %v7137 = vld [vmem:[%s9 + $0x800] sm:$0xff]
  %v7138 = vld [vmem:[%s9 + $0x808] sm:$0xff]
  %v7139 = vld [vmem:[%s9 + $0x810] sm:$0xff]
  %v7140 = vld [vmem:[%s9 + $0x818] sm:$0xff]
  %v7141 = vld [vmem:[%s9 + $0x820] sm:$0xff]
  %v7142 = vld [vmem:[%s9 + $0x828] sm:$0xff]
  %v7143 = vld [vmem:[%s9 + $0x830] sm:$0xff]
  %v7144 = vld [vmem:[%s9 + $0x838] sm:$0xff]
  %v7145 = vld [vmem:[%s9 + $0x840] sm:$0xff]
  %v7146 = vld [vmem:[%s9 + $0x848] sm:$0xff]
  %v7147 = vld [vmem:[%s9 + $0x850] sm:$0xff]
  %v7148 = vld [vmem:[%s9 + $0x858] sm:$0xff]
  %v7149 = vld [vmem:[%s9 + $0x860] sm:$0xff]
  %v7150 = vld [vmem:[%s9 + $0x868] sm:$0xff]
  %v7151 = vld [vmem:[%s9 + $0x870] sm:$0xff]
  %v7152 = vld [vmem:[%s9 + $0x878] sm:$0xff]
  %v7153 = vld [vmem:[%s9 + $0x880] sm:$0xff]
  %v7154 = vld [vmem:[%s9 + $0x888] sm:$0xff]
  %v7155 = vld [vmem:[%s9 + $0x890] sm:$0xff]
  %v7156 = vld [vmem:[%s9 + $0x898] sm:$0xff]
  %v7157 = vld [vmem:[%s9 + $0x8a0] sm:$0xff]
  %v7158 = vld [vmem:[%s9 + $0x8a8] sm:$0xff]
  %v7159 = vld [vmem:[%s9 + $0x8b0] sm:$0xff]
  %v7160 = vld [vmem:[%s9 + $0x8b8] sm:$0xff]
  %v7161 = vld [vmem:[%s9 + $0x8c0] sm:$0xff]
  %v7162 = vld [vmem:[%s9 + $0x8c8] sm:$0xff]
  %v7163 = vld [vmem:[%s9 + $0x8d0] sm:$0xff]
  %v7164 = vld [vmem:[%s9 + $0x8d8] sm:$0xff]
  %v7165 = vld [vmem:[%s9 + $0x8e0] sm:$0xff]
  %v7166 = vld [vmem:[%s9 + $0x8e8] sm:$0xff]
  %v7167 = vld [vmem:[%s9 + $0x8f0] sm:$0xff]
  %v7168 = vld [vmem:[%s9 + $0x8f8] sm:$0xff]
  %v7169 = vld [vmem:[%s9 + $0x900] sm:$0xff]
  %v7170 = vld [vmem:[%s9 + $0x908] sm:$0xff]
  %v7171 = vld [vmem:[%s9 + $0x910] sm:$0xff]
  %v7172 = vld [vmem:[%s9 + $0x918] sm:$0xff]
  %v7173 = vld [vmem:[%s9 + $0x920] sm:$0xff]
  %v7174 = vld [vmem:[%s9 + $0x928] sm:$0xff]
  %v7175 = vld [vmem:[%s9 + $0x930] sm:$0xff]
  %v7176 = vld [vmem:[%s9 + $0x938] sm:$0xff]
  %v7177 = vld [vmem:[%s9 + $0x940] sm:$0xff]
  %v7178 = vld [vmem:[%s9 + $0x948] sm:$0xff]
  %v7179 = vld [vmem:[%s9 + $0x950] sm:$0xff]
  %v7180 = vld [vmem:[%s9 + $0x958] sm:$0xff]
  %v7181 = vld [vmem:[%s9 + $0x960] sm:$0xff]
  %v7182 = vld [vmem:[%s9 + $0x968] sm:$0xff]
  %v7183 = vld [vmem:[%s9 + $0x970] sm:$0xff]
  %v7184 = vld [vmem:[%s9 + $0x978] sm:$0xff]
  %v7185 = vld [vmem:[%s9 + $0x980] sm:$0xff]
  %v7186 = vld [vmem:[%s9 + $0x988] sm:$0xff]
  %v7187 = vld [vmem:[%s9 + $0x990] sm:$0xff]
  %v7188 = vld [vmem:[%s9 + $0x998] sm:$0xff]
  %v7189 = vld [vmem:[%s9 + $0x9a0] sm:$0xff]
  %v7190 = vld [vmem:[%s9 + $0x9a8] sm:$0xff]
  %v7191 = vld [vmem:[%s9 + $0x9b0] sm:$0xff]
  %v7192 = vld [vmem:[%s9 + $0x9b8] sm:$0xff]
  %v7193 = vld [vmem:[%s9 + $0x9c0] sm:$0xff]
  %v7194 = vld [vmem:[%s9 + $0x9c8] sm:$0xff]
  %v7195 = vld [vmem:[%s9 + $0x9d0] sm:$0xff]
  %v7196 = vld [vmem:[%s9 + $0x9d8] sm:$0xff]
  %v7197 = vld [vmem:[%s9 + $0x9e0] sm:$0xff]
  %v7198 = vld [vmem:[%s9 + $0x9e8] sm:$0xff]
  %v7199 = vld [vmem:[%s9 + $0x9f0] sm:$0xff]
  %v7200 = vld [vmem:[%s9 + $0x9f8] sm:$0xff]
  %v7201 = vld [vmem:[%s9 + $0xa00] sm:$0xff]
  %v7202 = vld [vmem:[%s9 + $0xa08] sm:$0xff]
  %v7203 = vld [vmem:[%s9 + $0xa10] sm:$0xff]
  %v7204 = vld [vmem:[%s9 + $0xa18] sm:$0xff]
  %v7205 = vld [vmem:[%s9 + $0xa20] sm:$0xff]
  %v7206 = vld [vmem:[%s9 + $0xa28] sm:$0xff]
  %v7207 = vld [vmem:[%s9 + $0xa30] sm:$0xff]
  %v7208 = vld [vmem:[%s9 + $0xa38] sm:$0xff]
  %v7209 = vld [vmem:[%s9 + $0xa40] sm:$0xff]
  %v7210 = vld [vmem:[%s9 + $0xa48] sm:$0xff]
  %v7211 = vld [vmem:[%s9 + $0xa50] sm:$0xff]
  %v7212 = vld [vmem:[%s9 + $0xa58] sm:$0xff]
  %v7213 = vld [vmem:[%s9 + $0xa60] sm:$0xff]
  %v7214 = vld [vmem:[%s9 + $0xa68] sm:$0xff]
  %v7215 = vld [vmem:[%s9 + $0xa70] sm:$0xff]
  %v7216 = vld [vmem:[%s9 + $0xa78] sm:$0xff]
  %v7217 = vld [vmem:[%s9 + $0xa80] sm:$0xff]
  %v7218 = vld [vmem:[%s9 + $0xa88] sm:$0xff]
  %v7219 = vld [vmem:[%s9 + $0xa90] sm:$0xff]
  %v7220 = vld [vmem:[%s9 + $0xa98] sm:$0xff]
  %v7221 = vld [vmem:[%s9 + $0xaa0] sm:$0xff]
  %v7222 = vld [vmem:[%s9 + $0xaa8] sm:$0xff]
  %v7223 = vld [vmem:[%s9 + $0xab0] sm:$0xff]
  %v7224 = vld [vmem:[%s9 + $0xab8] sm:$0xff]
  %v7225 = vld [vmem:[%s9 + $0xac0] sm:$0xff]
  %v7226 = vld [vmem:[%s9 + $0xac8] sm:$0xff]
  %v7227 = vld [vmem:[%s9 + $0xad0] sm:$0xff]
  %v7228 = vld [vmem:[%s9 + $0xad8] sm:$0xff]
  %v7229 = vld [vmem:[%s9 + $0xae0] sm:$0xff]
  %v7230 = vld [vmem:[%s9 + $0xae8] sm:$0xff]
  %v7231 = vld [vmem:[%s9 + $0xaf0] sm:$0xff]
  %v7232 = vld [vmem:[%s9 + $0xaf8] sm:$0xff]
  %v7233 = vld [vmem:[%s9 + $0xb00] sm:$0xff]
  %v7234 = vld [vmem:[%s9 + $0xb08] sm:$0xff]
  %v7235 = vld [vmem:[%s9 + $0xb10] sm:$0xff]
  %v7236 = vld [vmem:[%s9 + $0xb18] sm:$0xff]
  %v7237 = vld [vmem:[%s9 + $0xb20] sm:$0xff]
  %v7238 = vld [vmem:[%s9 + $0xb28] sm:$0xff]
  %v7239 = vld [vmem:[%s9 + $0xb30] sm:$0xff]
  %v7240 = vld [vmem:[%s9 + $0xb38] sm:$0xff]
  %v7241 = vld [vmem:[%s9 + $0xb40] sm:$0xff]
  %v7242 = vld [vmem:[%s9 + $0xb48] sm:$0xff]
  %v7243 = vld [vmem:[%s9 + $0xb50] sm:$0xff]
  %v7244 = vld [vmem:[%s9 + $0xb58] sm:$0xff]
  %v7245 = vld [vmem:[%s9 + $0xb60] sm:$0xff]
  %v7246 = vld [vmem:[%s9 + $0xb68] sm:$0xff]
  %v7247 = vld [vmem:[%s9 + $0xb70] sm:$0xff]
  %v7248 = vld [vmem:[%s9 + $0xb78] sm:$0xff]
  %v7249 = vld [vmem:[%s9 + $0xb80] sm:$0xff]
  %v7250 = vld [vmem:[%s9 + $0xb88] sm:$0xff]
  %v7251 = vld [vmem:[%s9 + $0xb90] sm:$0xff]
  %v7252 = vld [vmem:[%s9 + $0xb98] sm:$0xff]
  %v7253 = vld [vmem:[%s9 + $0xba0] sm:$0xff]
  %v7254 = vld [vmem:[%s9 + $0xba8] sm:$0xff]
  %v7255 = vld [vmem:[%s9 + $0xbb0] sm:$0xff]
  %v7256 = vld [vmem:[%s9 + $0xbb8] sm:$0xff]
  %v7257 = vld [vmem:[%s9 + $0xbc0] sm:$0xff]
  %v7258 = vld [vmem:[%s9 + $0xbc8] sm:$0xff]
  %v7259 = vld [vmem:[%s9 + $0xbd0] sm:$0xff]
  %v7260 = vld [vmem:[%s9 + $0xbd8] sm:$0xff]
  %v7261 = vld [vmem:[%s9 + $0xbe0] sm:$0xff]
  %v7262 = vld [vmem:[%s9 + $0xbe8] sm:$0xff]
  %v7263 = vld [vmem:[%s9 + $0xbf0] sm:$0xff]
  %v7264 = vld [vmem:[%s9 + $0xbf8] sm:$0xff]
  %v7265 = vld [vmem:[%s9 + $0xc00] sm:$0xff]
  %v7266 = vld [vmem:[%s9 + $0xc08] sm:$0xff]
  %v7267 = vld [vmem:[%s9 + $0xc10] sm:$0xff]
  %v7268 = vld [vmem:[%s9 + $0xc18] sm:$0xff]
  %v7269 = vld [vmem:[%s9 + $0xc20] sm:$0xff]
  %v7270 = vld [vmem:[%s9 + $0xc28] sm:$0xff]
  %v7271 = vld [vmem:[%s9 + $0xc30] sm:$0xff]
  %v7272 = vld [vmem:[%s9 + $0xc38] sm:$0xff]
  %v7273 = vld [vmem:[%s9 + $0xc40] sm:$0xff]
  %v7274 = vld [vmem:[%s9 + $0xc48] sm:$0xff]
  %v7275 = vld [vmem:[%s9 + $0xc50] sm:$0xff]
  %v7276 = vld [vmem:[%s9 + $0xc58] sm:$0xff]
  %v7277 = vld [vmem:[%s9 + $0xc60] sm:$0xff]
  %v7278 = vld [vmem:[%s9 + $0xc68] sm:$0xff]
  %v7279 = vld [vmem:[%s9 + $0xc70] sm:$0xff]
  %v7280 = vld [vmem:[%s9 + $0xc78] sm:$0xff]
  %v7281 = vld [vmem:[%s9 + $0xc80] sm:$0xff]
  %v7282 = vld [vmem:[%s9 + $0xc88] sm:$0xff]
  %v7283 = vld [vmem:[%s9 + $0xc90] sm:$0xff]
  %v7284 = vld [vmem:[%s9 + $0xc98] sm:$0xff]
  %v7285 = vld [vmem:[%s9 + $0xca0] sm:$0xff]
  %v7286 = vld [vmem:[%s9 + $0xca8] sm:$0xff]
  %v7287 = vld [vmem:[%s9 + $0xcb0] sm:$0xff]
  %v7288 = vld [vmem:[%s9 + $0xcb8] sm:$0xff]
  %v7289 = vld [vmem:[%s9 + $0xcc0] sm:$0xff]
  %v7290 = vld [vmem:[%s9 + $0xcc8] sm:$0xff]
  %v7291 = vld [vmem:[%s9 + $0xcd0] sm:$0xff]
  %v7292 = vld [vmem:[%s9 + $0xcd8] sm:$0xff]
  %v7293 = vld [vmem:[%s9 + $0xce0] sm:$0xff]
  %v7294 = vld [vmem:[%s9 + $0xce8] sm:$0xff]
  %v7295 = vld [vmem:[%s9 + $0xcf0] sm:$0xff]
  %v7296 = vld [vmem:[%s9 + $0xcf8] sm:$0xff]
  %v7297 = vld [vmem:[%s9 + $0xd00] sm:$0xff]
  %v7298 = vld [vmem:[%s9 + $0xd08] sm:$0xff]
  %v7299 = vld [vmem:[%s9 + $0xd10] sm:$0xff]
  %v7300 = vld [vmem:[%s9 + $0xd18] sm:$0xff]
  %v7301 = vld [vmem:[%s9 + $0xd20] sm:$0xff]
  %v7302 = vld [vmem:[%s9 + $0xd28] sm:$0xff]
  %v7303 = vld [vmem:[%s9 + $0xd30] sm:$0xff]
  %v7304 = vld [vmem:[%s9 + $0xd38] sm:$0xff]
  %v7305 = vld [vmem:[%s9 + $0xd40] sm:$0xff]
  %v7306 = vld [vmem:[%s9 + $0xd48] sm:$0xff]
  %v7307 = vld [vmem:[%s9 + $0xd50] sm:$0xff]
  %v7308 = vld [vmem:[%s9 + $0xd58] sm:$0xff]
  %v7309 = vld [vmem:[%s9 + $0xd60] sm:$0xff]
  %v7310 = vld [vmem:[%s9 + $0xd68] sm:$0xff]
  %v7311 = vld [vmem:[%s9 + $0xd70] sm:$0xff]
  %v7312 = vld [vmem:[%s9 + $0xd78] sm:$0xff]
  %v7313 = vld [vmem:[%s9 + $0xd80] sm:$0xff]
  %v7314 = vld [vmem:[%s9 + $0xd88] sm:$0xff]
  %v7315 = vld [vmem:[%s9 + $0xd90] sm:$0xff]
  %v7316 = vld [vmem:[%s9 + $0xd98] sm:$0xff]
  %v7317 = vld [vmem:[%s9 + $0xda0] sm:$0xff]
  %v7318 = vld [vmem:[%s9 + $0xda8] sm:$0xff]
  %v7319 = vld [vmem:[%s9 + $0xdb0] sm:$0xff]
  %v7320 = vld [vmem:[%s9 + $0xdb8] sm:$0xff]
  %v7321 = vld [vmem:[%s9 + $0xdc0] sm:$0xff]
  %v7322 = vld [vmem:[%s9 + $0xdc8] sm:$0xff]
  %v7323 = vld [vmem:[%s9 + $0xdd0] sm:$0xff]
  %v7324 = vld [vmem:[%s9 + $0xdd8] sm:$0xff]
  %v7325 = vld [vmem:[%s9 + $0xde0] sm:$0xff]
  %v7326 = vld [vmem:[%s9 + $0xde8] sm:$0xff]
  %v7327 = vld [vmem:[%s9 + $0xdf0] sm:$0xff]
  %v7328 = vld [vmem:[%s9 + $0xdf8] sm:$0xff]
  %v7329 = vld [vmem:[%s9 + $0xe00] sm:$0xff]
  %v7330 = vld [vmem:[%s9 + $0xe08] sm:$0xff]
  %v7331 = vld [vmem:[%s9 + $0xe10] sm:$0xff]
  %v7332 = vld [vmem:[%s9 + $0xe18] sm:$0xff]
  %v7333 = vld [vmem:[%s9 + $0xe20] sm:$0xff]
  %v7334 = vld [vmem:[%s9 + $0xe28] sm:$0xff]
  %v7335 = vld [vmem:[%s9 + $0xe30] sm:$0xff]
  %v7336 = vld [vmem:[%s9 + $0xe38] sm:$0xff]
  %v7337 = vld [vmem:[%s9 + $0xe40] sm:$0xff]
  %v7338 = vld [vmem:[%s9 + $0xe48] sm:$0xff]
  %v7339 = vld [vmem:[%s9 + $0xe50] sm:$0xff]
  %v7340 = vld [vmem:[%s9 + $0xe58] sm:$0xff]
  %v7341 = vld [vmem:[%s9 + $0xe60] sm:$0xff]
  %v7342 = vld [vmem:[%s9 + $0xe68] sm:$0xff]
  %v7343 = vld [vmem:[%s9 + $0xe70] sm:$0xff]
  %v7344 = vld [vmem:[%s9 + $0xe78] sm:$0xff]
  %v7345 = vld [vmem:[%s9 + $0xe80] sm:$0xff]
  %v7346 = vld [vmem:[%s9 + $0xe88] sm:$0xff]
  %v7347 = vld [vmem:[%s9 + $0xe90] sm:$0xff]
  %v7348 = vld [vmem:[%s9 + $0xe98] sm:$0xff]
  %v7349 = vld [vmem:[%s9 + $0xea0] sm:$0xff]
  %v7350 = vld [vmem:[%s9 + $0xea8] sm:$0xff]
  %v7351 = vld [vmem:[%s9 + $0xeb0] sm:$0xff]
  %v7352 = vld [vmem:[%s9 + $0xeb8] sm:$0xff]
  %v7353 = vld [vmem:[%s9 + $0xec0] sm:$0xff]
  %v7354 = vld [vmem:[%s9 + $0xec8] sm:$0xff]
  %v7355 = vld [vmem:[%s9 + $0xed0] sm:$0xff]
  %v7356 = vld [vmem:[%s9 + $0xed8] sm:$0xff]
  %v7357 = vld [vmem:[%s9 + $0xee0] sm:$0xff]
  %v7358 = vld [vmem:[%s9 + $0xee8] sm:$0xff]
  %v7359 = vld [vmem:[%s9 + $0xef0] sm:$0xff]
  %v7360 = vld [vmem:[%s9 + $0xef8] sm:$0xff]
  %v7361 = vld [vmem:[%s9 + $0xf00] sm:$0xff]
  %v7362 = vld [vmem:[%s9 + $0xf08] sm:$0xff]
  %v7363 = vld [vmem:[%s9 + $0xf10] sm:$0xff]
  %v7364 = vld [vmem:[%s9 + $0xf18] sm:$0xff]
  %v7365 = vld [vmem:[%s9 + $0xf20] sm:$0xff]
  %v7366 = vld [vmem:[%s9 + $0xf28] sm:$0xff]
  %v7367 = vld [vmem:[%s9 + $0xf30] sm:$0xff]
  %v7368 = vld [vmem:[%s9 + $0xf38] sm:$0xff]
  %v7369 = vld [vmem:[%s9 + $0xf40] sm:$0xff]
  %v7370 = vld [vmem:[%s9 + $0xf48] sm:$0xff]
  %v7371 = vld [vmem:[%s9 + $0xf50] sm:$0xff]
  %v7372 = vld [vmem:[%s9 + $0xf58] sm:$0xff]
  %v7373 = vld [vmem:[%s9 + $0xf60] sm:$0xff]
  %v7374 = vld [vmem:[%s9 + $0xf68] sm:$0xff]
  %v7375 = vld [vmem:[%s9 + $0xf70] sm:$0xff]
  %v7376 = vld [vmem:[%s9 + $0xf78] sm:$0xff]
  %v7377 = vld [vmem:[%s9 + $0xf80] sm:$0xff]
  %v7378 = vld [vmem:[%s9 + $0xf88] sm:$0xff]
  %v7379 = vld [vmem:[%s9 + $0xf90] sm:$0xff]
  %v7380 = vld [vmem:[%s9 + $0xf98] sm:$0xff]
  %v7381 = vld [vmem:[%s9 + $0xfa0] sm:$0xff]
  %v7382 = vld [vmem:[%s9 + $0xfa8] sm:$0xff]
  %v7383 = vld [vmem:[%s9 + $0xfb0] sm:$0xff]
  %v7384 = vld [vmem:[%s9 + $0xfb8] sm:$0xff]
  %v7385 = vld [vmem:[%s9 + $0xfc0] sm:$0xff]
  %v7386 = vld [vmem:[%s9 + $0xfc8] sm:$0xff]
  %v7387 = vld [vmem:[%s9 + $0xfd0] sm:$0xff]
  %v7388 = vld [vmem:[%s9 + $0xfd8] sm:$0xff]
  %v7389 = vld [vmem:[%s9 + $0xfe0] sm:$0xff]
  %v7390 = vld [vmem:[%s9 + $0xfe8] sm:$0xff]
  %v7391 = vld [vmem:[%s9 + $0xff0] sm:$0xff]
  %v7392 = vld [vmem:[%s9 + $0xff8] sm:$0xff]
  %v7393 = vld [vmem:[%s9 + $0x1000] sm:$0xff]
  %v7394 = vld [vmem:[%s9 + $0x1008] sm:$0xff]
  %v7395 = vld [vmem:[%s9 + $0x1010] sm:$0xff]
  %v7396 = vld [vmem:[%s9 + $0x1018] sm:$0xff]
  %v7397 = vld [vmem:[%s9 + $0x1020] sm:$0xff]
  %v7398 = vld [vmem:[%s9 + $0x1028] sm:$0xff]
  %v7399 = vld [vmem:[%s9 + $0x1030] sm:$0xff]
  %v7400 = vld [vmem:[%s9 + $0x1038] sm:$0xff]
  %v7401 = vld [vmem:[%s9 + $0x1040] sm:$0xff]
  %v7402 = vld [vmem:[%s9 + $0x1048] sm:$0xff]
  %v7403 = vld [vmem:[%s9 + $0x1050] sm:$0xff]
  %v7404 = vld [vmem:[%s9 + $0x1058] sm:$0xff]
  %v7405 = vld [vmem:[%s9 + $0x1060] sm:$0xff]
  %v7406 = vld [vmem:[%s9 + $0x1068] sm:$0xff]
  %v7407 = vld [vmem:[%s9 + $0x1070] sm:$0xff]
  %v7408 = vld [vmem:[%s9 + $0x1078] sm:$0xff]
  %v7409 = vld [vmem:[%s9 + $0x1080] sm:$0xff]
  %v7410 = vld [vmem:[%s9 + $0x1088] sm:$0xff]
  %v7411 = vld [vmem:[%s9 + $0x1090] sm:$0xff]
  %v7412 = vld [vmem:[%s9 + $0x1098] sm:$0xff]
  %v7413 = vld [vmem:[%s9 + $0x10a0] sm:$0xff]
  %v7414 = vld [vmem:[%s9 + $0x10a8] sm:$0xff]
  %v7415 = vld [vmem:[%s9 + $0x10b0] sm:$0xff]
  %v7416 = vld [vmem:[%s9 + $0x10b8] sm:$0xff]
  %v7417 = vld [vmem:[%s9 + $0x10c0] sm:$0xff]
  %v7418 = vld [vmem:[%s9 + $0x10c8] sm:$0xff]
  %v7419 = vld [vmem:[%s9 + $0x10d0] sm:$0xff]
  %v7420 = vld [vmem:[%s9 + $0x10d8] sm:$0xff]
  %v7421 = vld [vmem:[%s9 + $0x10e0] sm:$0xff]
  %v7422 = vld [vmem:[%s9 + $0x10e8] sm:$0xff]
  %v7423 = vld [vmem:[%s9 + $0x10f0] sm:$0xff]
  %v7424 = vld [vmem:[%s9 + $0x10f8] sm:$0xff]
  %v7425 = vld [vmem:[%s9 + $0x1100] sm:$0xff]
  %v7426 = vld [vmem:[%s9 + $0x1108] sm:$0xff]
  %v7427 = vld [vmem:[%s9 + $0x1110] sm:$0xff]
  %v7428 = vld [vmem:[%s9 + $0x1118] sm:$0xff]
  %v7429 = vld [vmem:[%s9 + $0x1120] sm:$0xff]
  %v7430 = vld [vmem:[%s9 + $0x1128] sm:$0xff]
  %v7431 = vld [vmem:[%s9 + $0x1130] sm:$0xff]
  %v7432 = vld [vmem:[%s9 + $0x1138] sm:$0xff]
  %v7433 = vld [vmem:[%s9 + $0x1140] sm:$0xff]
  %v7434 = vld [vmem:[%s9 + $0x1148] sm:$0xff]
  %v7435 = vld [vmem:[%s9 + $0x1150] sm:$0xff]
  %v7436 = vld [vmem:[%s9 + $0x1158] sm:$0xff]
  %v7437 = vld [vmem:[%s9 + $0x1160] sm:$0xff]
  %v7438 = vld [vmem:[%s9 + $0x1168] sm:$0xff]
  %v7439 = vld [vmem:[%s9 + $0x1170] sm:$0xff]
  %v7440 = vld [vmem:[%s9 + $0x1178] sm:$0xff]
  %v7441 = vld [vmem:[%s9 + $0x1180] sm:$0xff]
  %v7442 = vld [vmem:[%s9 + $0x1188] sm:$0xff]
  %v7443 = vld [vmem:[%s9 + $0x1190] sm:$0xff]
  %v7444 = vld [vmem:[%s9 + $0x1198] sm:$0xff]
  %v7445 = vld [vmem:[%s9 + $0x11a0] sm:$0xff]
  %v7446 = vld [vmem:[%s9 + $0x11a8] sm:$0xff]
  %v7447 = vld [vmem:[%s9 + $0x11b0] sm:$0xff]
  %v7448 = vld [vmem:[%s9 + $0x11b8] sm:$0xff]
  %v7449 = vld [vmem:[%s9 + $0x11c0] sm:$0xff]
  %v7450 = vld [vmem:[%s9 + $0x11c8] sm:$0xff]
  %v7451 = vld [vmem:[%s9 + $0x11d0] sm:$0xff]
  %v7452 = vld [vmem:[%s9 + $0x11d8] sm:$0xff]
  %v7453 = vld [vmem:[%s9 + $0x11e0] sm:$0xff]
  %v7454 = vld [vmem:[%s9 + $0x11e8] sm:$0xff]
  %v7455 = vld [vmem:[%s9 + $0x11f0] sm:$0xff]
  %v7456 = vld [vmem:[%s9 + $0x11f8] sm:$0xff]
  %v7457 = vld [vmem:[%s9 + $0x1200] sm:$0xff]
  %v7458 = vld [vmem:[%s9 + $0x1208] sm:$0xff]
  %v7459 = vld [vmem:[%s9 + $0x1210] sm:$0xff]
  %v7460 = vld [vmem:[%s9 + $0x1218] sm:$0xff]
  %v7461 = vld [vmem:[%s9 + $0x1220] sm:$0xff]
  %v7462 = vld [vmem:[%s9 + $0x1228] sm:$0xff]
  %v7463 = vld [vmem:[%s9 + $0x1230] sm:$0xff]
  %v7464 = vld [vmem:[%s9 + $0x1238] sm:$0xff]
  %v7465 = vld [vmem:[%s9 + $0x1240] sm:$0xff]
  %v7466 = vld [vmem:[%s9 + $0x1248] sm:$0xff]
  %v7467 = vld [vmem:[%s9 + $0x1250] sm:$0xff]
  %v7468 = vld [vmem:[%s9 + $0x1258] sm:$0xff]
  %v7469 = vld [vmem:[%s9 + $0x1260] sm:$0xff]
  %v7470 = vld [vmem:[%s9 + $0x1268] sm:$0xff]
  %v7471 = vld [vmem:[%s9 + $0x1270] sm:$0xff]
  %v7472 = vld [vmem:[%s9 + $0x1278] sm:$0xff]
  %v7473 = vld [vmem:[%s9 + $0x1280] sm:$0xff]
  %v7474 = vld [vmem:[%s9 + $0x1288] sm:$0xff]
  %v7475 = vld [vmem:[%s9 + $0x1290] sm:$0xff]
  %v7476 = vld [vmem:[%s9 + $0x1298] sm:$0xff]
  %v7477 = vld [vmem:[%s9 + $0x12a0] sm:$0xff]
  %v7478 = vld [vmem:[%s9 + $0x12a8] sm:$0xff]
  %v7479 = vld [vmem:[%s9 + $0x12b0] sm:$0xff]
  %v7480 = vld [vmem:[%s9 + $0x12b8] sm:$0xff]
  %v7481 = vld [vmem:[%s9 + $0x12c0] sm:$0xff]
  %v7482 = vld [vmem:[%s9 + $0x12c8] sm:$0xff]
  %v7483 = vld [vmem:[%s9 + $0x12d0] sm:$0xff]
  %v7484 = vld [vmem:[%s9 + $0x12d8] sm:$0xff]
  %v7485 = vld [vmem:[%s9 + $0x12e0] sm:$0xff]
  %v7486 = vld [vmem:[%s9 + $0x12e8] sm:$0xff]
  %v7487 = vld [vmem:[%s9 + $0x12f0] sm:$0xff]
  %v7488 = vld [vmem:[%s9 + $0x12f8] sm:$0xff]
  %v7489 = vld [vmem:[%s9 + $0x1300] sm:$0xff]
  %v7490 = vld [vmem:[%s9 + $0x1308] sm:$0xff]
  %v7491 = vld [vmem:[%s9 + $0x1310] sm:$0xff]
  %v7492 = vld [vmem:[%s9 + $0x1318] sm:$0xff]
  %v7493 = vld [vmem:[%s9 + $0x1320] sm:$0xff]
  %v7494 = vld [vmem:[%s9 + $0x1328] sm:$0xff]
  %v7495 = vld [vmem:[%s9 + $0x1330] sm:$0xff]
  %v7496 = vld [vmem:[%s9 + $0x1338] sm:$0xff]
  %v7497 = vld [vmem:[%s9 + $0x1340] sm:$0xff]
  %v7498 = vld [vmem:[%s9 + $0x1348] sm:$0xff]
  %v7499 = vld [vmem:[%s9 + $0x1350] sm:$0xff]
  %v7500 = vld [vmem:[%s9 + $0x1358] sm:$0xff]
  %v7501 = vld [vmem:[%s9 + $0x1360] sm:$0xff]
  %v7502 = vld [vmem:[%s9 + $0x1368] sm:$0xff]
  %v7503 = vld [vmem:[%s9 + $0x1370] sm:$0xff]
  %v7504 = vld [vmem:[%s9 + $0x1378] sm:$0xff]
  %v7505 = vld [vmem:[%s9 + $0x1380] sm:$0xff]
  %v7506 = vld [vmem:[%s9 + $0x1388] sm:$0xff]
  %v7507 = vld [vmem:[%s9 + $0x1390] sm:$0xff]
  %v7508 = vld [vmem:[%s9 + $0x1398] sm:$0xff]
  %v7509 = vld [vmem:[%s9 + $0x13a0] sm:$0xff]
  %v7510 = vld [vmem:[%s9 + $0x13a8] sm:$0xff]
  %v7511 = vld [vmem:[%s9 + $0x13b0] sm:$0xff]
  %v7512 = vld [vmem:[%s9 + $0x13b8] sm:$0xff]
  %v7513 = vld [vmem:[%s9 + $0x13c0] sm:$0xff]
  %v7514 = vld [vmem:[%s9 + $0x13c8] sm:$0xff]
  %v7515 = vld [vmem:[%s9 + $0x13d0] sm:$0xff]
  %v7516 = vld [vmem:[%s9 + $0x13d8] sm:$0xff]
  %v7517 = vld [vmem:[%s9 + $0x13e0] sm:$0xff]
  %v7518 = vld [vmem:[%s9 + $0x13e8] sm:$0xff]
  %v7519 = vld [vmem:[%s9 + $0x13f0] sm:$0xff]
  %v7520 = vld [vmem:[%s9 + $0x13f8] sm:$0xff]
  %v7521 = vld [vmem:[%s9 + $0x1400] sm:$0xff]
  %v7522 = vld [vmem:[%s9 + $0x1408] sm:$0xff]
  %v7523 = vld [vmem:[%s9 + $0x1410] sm:$0xff]
  %v7524 = vld [vmem:[%s9 + $0x1418] sm:$0xff]
  %v7525 = vld [vmem:[%s9 + $0x1420] sm:$0xff]
  %v7526 = vld [vmem:[%s9 + $0x1428] sm:$0xff]
  %v7527 = vld [vmem:[%s9 + $0x1430] sm:$0xff]
  %v7528 = vld [vmem:[%s9 + $0x1438] sm:$0xff]
  %v7529 = vld [vmem:[%s9 + $0x1440] sm:$0xff]
  %v7530 = vld [vmem:[%s9 + $0x1448] sm:$0xff]
  %v7531 = vld [vmem:[%s9 + $0x1450] sm:$0xff]
  %v7532 = vld [vmem:[%s9 + $0x1458] sm:$0xff]
  %v7533 = vld [vmem:[%s9 + $0x1460] sm:$0xff]
  %v7534 = vld [vmem:[%s9 + $0x1468] sm:$0xff]
  %v7535 = vld [vmem:[%s9 + $0x1470] sm:$0xff]
  %v7536 = vld [vmem:[%s9 + $0x1478] sm:$0xff]
  %v7537 = vld [vmem:[%s9 + $0x1480] sm:$0xff]
  %v7538 = vld [vmem:[%s9 + $0x1488] sm:$0xff]
  %v7539 = vld [vmem:[%s9 + $0x1490] sm:$0xff]
  %v7540 = vld [vmem:[%s9 + $0x1498] sm:$0xff]
  %v7541 = vld [vmem:[%s9 + $0x14a0] sm:$0xff]
  %v7542 = vld [vmem:[%s9 + $0x14a8] sm:$0xff]
  %v7543 = vld [vmem:[%s9 + $0x14b0] sm:$0xff]
  %v7544 = vld [vmem:[%s9 + $0x14b8] sm:$0xff]
  %v7545 = vld [vmem:[%s9 + $0x14c0] sm:$0xff]
  %v7546 = vld [vmem:[%s9 + $0x14c8] sm:$0xff]
  %v7547 = vld [vmem:[%s9 + $0x14d0] sm:$0xff]
  %v7548 = vld [vmem:[%s9 + $0x14d8] sm:$0xff]
  %v7549 = vld [vmem:[%s9 + $0x14e0] sm:$0xff]
  %v7550 = vld [vmem:[%s9 + $0x14e8] sm:$0xff]
  %v7551 = vld [vmem:[%s9 + $0x14f0] sm:$0xff]
  %v7552 = vld [vmem:[%s9 + $0x14f8] sm:$0xff]
  %v7553 = vld [vmem:[%s9 + $0x1500] sm:$0xff]
  %v7554 = vld [vmem:[%s9 + $0x1508] sm:$0xff]
  %v7555 = vld [vmem:[%s9 + $0x1510] sm:$0xff]
  %v7556 = vld [vmem:[%s9 + $0x1518] sm:$0xff]
  %v7557 = vld [vmem:[%s9 + $0x1520] sm:$0xff]
  %v7558 = vld [vmem:[%s9 + $0x1528] sm:$0xff]
  %v7559 = vld [vmem:[%s9 + $0x1530] sm:$0xff]
  %v7560 = vld [vmem:[%s9 + $0x1538] sm:$0xff]
  %v7561 = vld [vmem:[%s9 + $0x1540] sm:$0xff]
  %v7562 = vld [vmem:[%s9 + $0x1548] sm:$0xff]
  %v7563 = vld [vmem:[%s9 + $0x1550] sm:$0xff]
  %v7564 = vld [vmem:[%s9 + $0x1558] sm:$0xff]
  %v7565 = vld [vmem:[%s9 + $0x1560] sm:$0xff]
  %v7566 = vld [vmem:[%s9 + $0x1568] sm:$0xff]
  %v7567 = vld [vmem:[%s9 + $0x1570] sm:$0xff]
  %v7568 = vld [vmem:[%s9 + $0x1578] sm:$0xff]
  %v7569 = vld [vmem:[%s9 + $0x1580] sm:$0xff]
  %v7570 = vld [vmem:[%s9 + $0x1588] sm:$0xff]
  %v7571 = vld [vmem:[%s9 + $0x1590] sm:$0xff]
  %v7572 = vld [vmem:[%s9 + $0x1598] sm:$0xff]
  %v7573 = vld [vmem:[%s9 + $0x15a0] sm:$0xff]
  %v7574 = vld [vmem:[%s9 + $0x15a8] sm:$0xff]
  %v7575 = vld [vmem:[%s9 + $0x15b0] sm:$0xff]
  %v7576 = vld [vmem:[%s9 + $0x15b8] sm:$0xff]
  %v7577 = vld [vmem:[%s9 + $0x15c0] sm:$0xff]
  %v7578 = vld [vmem:[%s9 + $0x15c8] sm:$0xff]
  %v7579 = vld [vmem:[%s9 + $0x15d0] sm:$0xff]
  %v7580 = vld [vmem:[%s9 + $0x15d8] sm:$0xff]
  %v7581 = vld [vmem:[%s9 + $0x15e0] sm:$0xff]
  %v7582 = vld [vmem:[%s9 + $0x15e8] sm:$0xff]
  %v7583 = vld [vmem:[%s9 + $0x15f0] sm:$0xff]
  %v7584 = vld [vmem:[%s9 + $0x15f8] sm:$0xff]
  %v7585 = vld [vmem:[%s9 + $0x1600] sm:$0xff]
  %v7586 = vld [vmem:[%s9 + $0x1608] sm:$0xff]
  %v7587 = vld [vmem:[%s9 + $0x1610] sm:$0xff]
  %v7588 = vld [vmem:[%s9 + $0x1618] sm:$0xff]
  %v7589 = vld [vmem:[%s9 + $0x1620] sm:$0xff]
  %v7590 = vld [vmem:[%s9 + $0x1628] sm:$0xff]
  %v7591 = vld [vmem:[%s9 + $0x1630] sm:$0xff]
  %v7592 = vld [vmem:[%s9 + $0x1638] sm:$0xff]
  %v7593 = vld [vmem:[%s9 + $0x1640] sm:$0xff]
  %v7594 = vld [vmem:[%s9 + $0x1648] sm:$0xff]
  %v7595 = vld [vmem:[%s9 + $0x1650] sm:$0xff]
  %v7596 = vld [vmem:[%s9 + $0x1658] sm:$0xff]
  %v7597 = vld [vmem:[%s9 + $0x1660] sm:$0xff]
  %v7598 = vld [vmem:[%s9 + $0x1668] sm:$0xff]
  %v7599 = vld [vmem:[%s9 + $0x1670] sm:$0xff]
  %v7600 = vld [vmem:[%s9 + $0x1678] sm:$0xff]
  %v7601 = vld [vmem:[%s9 + $0x1680] sm:$0xff]
  %v7602 = vld [vmem:[%s9 + $0x1688] sm:$0xff]
  %v7603 = vld [vmem:[%s9 + $0x1690] sm:$0xff]
  %v7604 = vld [vmem:[%s9 + $0x1698] sm:$0xff]
  %v7605 = vld [vmem:[%s9 + $0x16a0] sm:$0xff]
  %v7606 = vld [vmem:[%s9 + $0x16a8] sm:$0xff]
  %v7607 = vld [vmem:[%s9 + $0x16b0] sm:$0xff]
  %v7608 = vld [vmem:[%s9 + $0x16b8] sm:$0xff]
  %v7609 = vld [vmem:[%s9 + $0x16c0] sm:$0xff]
  %v7610 = vld [vmem:[%s9 + $0x16c8] sm:$0xff]
  %v7611 = vld [vmem:[%s9 + $0x16d0] sm:$0xff]
  %v7612 = vld [vmem:[%s9 + $0x16d8] sm:$0xff]
  %v7613 = vld [vmem:[%s9 + $0x16e0] sm:$0xff]
  %v7614 = vld [vmem:[%s9 + $0x16e8] sm:$0xff]
  %v7615 = vld [vmem:[%s9 + $0x16f0] sm:$0xff]
  %v7616 = vld [vmem:[%s9 + $0x16f8] sm:$0xff]
  %v7617 = vld [vmem:[%s9 + $0x1700] sm:$0xff]
  %v7618 = vld [vmem:[%s9 + $0x1708] sm:$0xff]
  %v7619 = vld [vmem:[%s9 + $0x1710] sm:$0xff]
  %v7620 = vld [vmem:[%s9 + $0x1718] sm:$0xff]
  %v7621 = vld [vmem:[%s9 + $0x1720] sm:$0xff]
  %v7622 = vld [vmem:[%s9 + $0x1728] sm:$0xff]
  %v7623 = vld [vmem:[%s9 + $0x1730] sm:$0xff]
  %v7624 = vld [vmem:[%s9 + $0x1738] sm:$0xff]
  %v7625 = vld [vmem:[%s9 + $0x1740] sm:$0xff]
  %v7626 = vld [vmem:[%s9 + $0x1748] sm:$0xff]
  %v7627 = vld [vmem:[%s9 + $0x1750] sm:$0xff]
  %v7628 = vld [vmem:[%s9 + $0x1758] sm:$0xff]
  %v7629 = vld [vmem:[%s9 + $0x1760] sm:$0xff]
  %v7630 = vld [vmem:[%s9 + $0x1768] sm:$0xff]
  %v7631 = vld [vmem:[%s9 + $0x1770] sm:$0xff]
  %v7632 = vld [vmem:[%s9 + $0x1778] sm:$0xff]
  %v7633 = vld [vmem:[%s9 + $0x1780] sm:$0xff]
  %v7634 = vld [vmem:[%s9 + $0x1788] sm:$0xff]
  %v7635 = vld [vmem:[%s9 + $0x1790] sm:$0xff]
  %v7636 = vld [vmem:[%s9 + $0x1798] sm:$0xff]
  %v7637 = vld [vmem:[%s9 + $0x17a0] sm:$0xff]
  %v7638 = vld [vmem:[%s9 + $0x17a8] sm:$0xff]
  %v7639 = vld [vmem:[%s9 + $0x17b0] sm:$0xff]
  %v7640 = vld [vmem:[%s9 + $0x17b8] sm:$0xff]
  %v7641 = vld [vmem:[%s9 + $0x17c0] sm:$0xff]
  %v7642 = vld [vmem:[%s9 + $0x17c8] sm:$0xff]
  %v7643 = vld [vmem:[%s9 + $0x17d0] sm:$0xff]
  %v7644 = vld [vmem:[%s9 + $0x17d8] sm:$0xff]
  %v7645 = vld [vmem:[%s9 + $0x17e0] sm:$0xff]
  %v7646 = vld [vmem:[%s9 + $0x17e8] sm:$0xff]
  %v7647 = vld [vmem:[%s9 + $0x17f0] sm:$0xff]
  %v7648 = vld [vmem:[%s9 + $0x17f8] sm:$0xff]
  %v7649 = vld [vmem:[%s9 + $0x1800] sm:$0xff]
  %v7650 = vld [vmem:[%s9 + $0x1808] sm:$0xff]
  %v7651 = vld [vmem:[%s9 + $0x1810] sm:$0xff]
  %v7652 = vld [vmem:[%s9 + $0x1818] sm:$0xff]
  %v7653 = vld [vmem:[%s9 + $0x1820] sm:$0xff]
  %v7654 = vld [vmem:[%s9 + $0x1828] sm:$0xff]
  %v7655 = vld [vmem:[%s9 + $0x1830] sm:$0xff]
  %v7656 = vld [vmem:[%s9 + $0x1838] sm:$0xff]
  %v7657 = vld [vmem:[%s9 + $0x1840] sm:$0xff]
  %v7658 = vld [vmem:[%s9 + $0x1848] sm:$0xff]
  %v7659 = vld [vmem:[%s9 + $0x1850] sm:$0xff]
  %v7660 = vld [vmem:[%s9 + $0x1858] sm:$0xff]
  %v7661 = vld [vmem:[%s9 + $0x1860] sm:$0xff]
  %v7662 = vld [vmem:[%s9 + $0x1868] sm:$0xff]
  %v7663 = vld [vmem:[%s9 + $0x1870] sm:$0xff]
  %v7664 = vld [vmem:[%s9 + $0x1878] sm:$0xff]
  %v7665 = vld [vmem:[%s9 + $0x1880] sm:$0xff]
  %v7666 = vld [vmem:[%s9 + $0x1888] sm:$0xff]
  %v7667 = vld [vmem:[%s9 + $0x1890] sm:$0xff]
  %v7668 = vld [vmem:[%s9 + $0x1898] sm:$0xff]
  %v7669 = vld [vmem:[%s9 + $0x18a0] sm:$0xff]
  %v7670 = vld [vmem:[%s9 + $0x18a8] sm:$0xff]
  %v7671 = vld [vmem:[%s9 + $0x18b0] sm:$0xff]
  %v7672 = vld [vmem:[%s9 + $0x18b8] sm:$0xff]
  %v7673 = vld [vmem:[%s9 + $0x18c0] sm:$0xff]
  %v7674 = vld [vmem:[%s9 + $0x18c8] sm:$0xff]
  %v7675 = vld [vmem:[%s9 + $0x18d0] sm:$0xff]
  %v7676 = vld [vmem:[%s9 + $0x18d8] sm:$0xff]
  %v7677 = vld [vmem:[%s9 + $0x18e0] sm:$0xff]
  %v7678 = vld [vmem:[%s9 + $0x18e8] sm:$0xff]
  %v7679 = vld [vmem:[%s9 + $0x18f0] sm:$0xff]
  %v7680 = vld [vmem:[%s9 + $0x18f8] sm:$0xff]
  %v7681 = vld [vmem:[%s9 + $0x1900] sm:$0xff]
  %v7682 = vld [vmem:[%s9 + $0x1908] sm:$0xff]
  %v7683 = vld [vmem:[%s9 + $0x1910] sm:$0xff]
  %v7684 = vld [vmem:[%s9 + $0x1918] sm:$0xff]
  %v7685 = vld [vmem:[%s9 + $0x1920] sm:$0xff]
  %v7686 = vld [vmem:[%s9 + $0x1928] sm:$0xff]
  %v7687 = vld [vmem:[%s9 + $0x1930] sm:$0xff]
  %v7688 = vld [vmem:[%s9 + $0x1938] sm:$0xff]
  %v7689 = vld [vmem:[%s9 + $0x1940] sm:$0xff]
  %v7690 = vld [vmem:[%s9 + $0x1948] sm:$0xff]
  %v7691 = vld [vmem:[%s9 + $0x1950] sm:$0xff]
  %v7692 = vld [vmem:[%s9 + $0x1958] sm:$0xff]
  %v7693 = vld [vmem:[%s9 + $0x1960] sm:$0xff]
  %v7694 = vld [vmem:[%s9 + $0x1968] sm:$0xff]
  %v7695 = vld [vmem:[%s9 + $0x1970] sm:$0xff]
  %v7696 = vld [vmem:[%s9 + $0x1978] sm:$0xff]
  %v7697 = vld [vmem:[%s9 + $0x1980] sm:$0xff]
  %v7698 = vld [vmem:[%s9 + $0x1988] sm:$0xff]
  %v7699 = vld [vmem:[%s9 + $0x1990] sm:$0xff]
  %v7700 = vld [vmem:[%s9 + $0x1998] sm:$0xff]
  %v7701 = vld [vmem:[%s9 + $0x19a0] sm:$0xff]
  %v7702 = vld [vmem:[%s9 + $0x19a8] sm:$0xff]
  %v7703 = vld [vmem:[%s9 + $0x19b0] sm:$0xff]
  %v7704 = vld [vmem:[%s9 + $0x19b8] sm:$0xff]
  %v7705 = vld [vmem:[%s9 + $0x19c0] sm:$0xff]
  %v7706 = vld [vmem:[%s9 + $0x19c8] sm:$0xff]
  %v7707 = vld [vmem:[%s9 + $0x19d0] sm:$0xff]
  %v7708 = vld [vmem:[%s9 + $0x19d8] sm:$0xff]
  %v7709 = vld [vmem:[%s9 + $0x19e0] sm:$0xff]
  %v7710 = vld [vmem:[%s9 + $0x19e8] sm:$0xff]
  %v7711 = vld [vmem:[%s9 + $0x19f0] sm:$0xff]
  %v7712 = vld [vmem:[%s9 + $0x19f8] sm:$0xff]
  %v7713 = vld [vmem:[%s9 + $0x1a00] sm:$0xff]
  %v7714 = vld [vmem:[%s9 + $0x1a08] sm:$0xff]
  %v7715 = vld [vmem:[%s9 + $0x1a10] sm:$0xff]
  %v7716 = vld [vmem:[%s9 + $0x1a18] sm:$0xff]
  %v7717 = vld [vmem:[%s9 + $0x1a20] sm:$0xff]
  %v7718 = vld [vmem:[%s9 + $0x1a28] sm:$0xff]
  %v7719 = vld [vmem:[%s9 + $0x1a30] sm:$0xff]
  %v7720 = vld [vmem:[%s9 + $0x1a38] sm:$0xff]
  %v7721 = vld [vmem:[%s9 + $0x1a40] sm:$0xff]
  %v7722 = vld [vmem:[%s9 + $0x1a48] sm:$0xff]
  %v7723 = vld [vmem:[%s9 + $0x1a50] sm:$0xff]
  %v7724 = vld [vmem:[%s9 + $0x1a58] sm:$0xff]
  %v7725 = vld [vmem:[%s9 + $0x1a60] sm:$0xff]
  %v7726 = vld [vmem:[%s9 + $0x1a68] sm:$0xff]
  %v7727 = vld [vmem:[%s9 + $0x1a70] sm:$0xff]
  %v7728 = vld [vmem:[%s9 + $0x1a78] sm:$0xff]
  %v7729 = vld [vmem:[%s9 + $0x1a80] sm:$0xff]
  %v7730 = vld [vmem:[%s9 + $0x1a88] sm:$0xff]
  %v7731 = vld [vmem:[%s9 + $0x1a90] sm:$0xff]
  %v7732 = vld [vmem:[%s9 + $0x1a98] sm:$0xff]
  %v7733 = vld [vmem:[%s9 + $0x1aa0] sm:$0xff]
  %v7734 = vld [vmem:[%s9 + $0x1aa8] sm:$0xff]
  %v7735 = vld [vmem:[%s9 + $0x1ab0] sm:$0xff]
  %v7736 = vld [vmem:[%s9 + $0x1ab8] sm:$0xff]
  %v7737 = vld [vmem:[%s9 + $0x1ac0] sm:$0xff]
  %v7738 = vld [vmem:[%s9 + $0x1ac8] sm:$0xff]
  %v7739 = vld [vmem:[%s9 + $0x1ad0] sm:$0xff]
  %v7740 = vld [vmem:[%s9 + $0x1ad8] sm:$0xff]
  %v7741 = vld [vmem:[%s9 + $0x1ae0] sm:$0xff]
  %v7742 = vld [vmem:[%s9 + $0x1ae8] sm:$0xff]
  %v7743 = vld [vmem:[%s9 + $0x1af0] sm:$0xff]
  %v7744 = vld [vmem:[%s9 + $0x1af8] sm:$0xff]
  %v7745 = vld [vmem:[%s9 + $0x1b00] sm:$0xff]
  %v7746 = vld [vmem:[%s9 + $0x1b08] sm:$0xff]
  %v7747 = vld [vmem:[%s9 + $0x1b10] sm:$0xff]
  %v7748 = vld [vmem:[%s9 + $0x1b18] sm:$0xff]
  %v7749 = vld [vmem:[%s9 + $0x1b20] sm:$0xff]
  %v7750 = vld [vmem:[%s9 + $0x1b28] sm:$0xff]
  %v7751 = vld [vmem:[%s9 + $0x1b30] sm:$0xff]
  %v7752 = vld [vmem:[%s9 + $0x1b38] sm:$0xff]
  %v7753 = vld [vmem:[%s9 + $0x1b40] sm:$0xff]
  %v7754 = vld [vmem:[%s9 + $0x1b48] sm:$0xff]
  %v7755 = vld [vmem:[%s9 + $0x1b50] sm:$0xff]
  %v7756 = vld [vmem:[%s9 + $0x1b58] sm:$0xff]
  %v7757 = vld [vmem:[%s9 + $0x1b60] sm:$0xff]
  %v7758 = vld [vmem:[%s9 + $0x1b68] sm:$0xff]
  %v7759 = vld [vmem:[%s9 + $0x1b70] sm:$0xff]
  %v7760 = vld [vmem:[%s9 + $0x1b78] sm:$0xff]
  %v7761 = vld [vmem:[%s9 + $0x1b80] sm:$0xff]
  %v7762 = vld [vmem:[%s9 + $0x1b88] sm:$0xff]
  %v7763 = vld [vmem:[%s9 + $0x1b90] sm:$0xff]
  %v7764 = vld [vmem:[%s9 + $0x1b98] sm:$0xff]
  %v7765 = vld [vmem:[%s9 + $0x1ba0] sm:$0xff]
  %v7766 = vld [vmem:[%s9 + $0x1ba8] sm:$0xff]
  %v7767 = vld [vmem:[%s9 + $0x1bb0] sm:$0xff]
  %v7768 = vld [vmem:[%s9 + $0x1bb8] sm:$0xff]
  %v7769 = vld [vmem:[%s9 + $0x1bc0] sm:$0xff]
  %v7770 = vld [vmem:[%s9 + $0x1bc8] sm:$0xff]
  %v7771 = vld [vmem:[%s9 + $0x1bd0] sm:$0xff]
  %v7772 = vld [vmem:[%s9 + $0x1bd8] sm:$0xff]
  %v7773 = vld [vmem:[%s9 + $0x1be0] sm:$0xff]
  %v7774 = vld [vmem:[%s9 + $0x1be8] sm:$0xff]
  %v7775 = vld [vmem:[%s9 + $0x1bf0] sm:$0xff]
  %v7776 = vld [vmem:[%s9 + $0x1bf8] sm:$0xff]
  %v7777 = vld [vmem:[%s9 + $0x1c00] sm:$0xff]
  %v7778 = vld [vmem:[%s9 + $0x1c08] sm:$0xff]
  %v7779 = vld [vmem:[%s9 + $0x1c10] sm:$0xff]
  %v7780 = vld [vmem:[%s9 + $0x1c18] sm:$0xff]
  %v7781 = vld [vmem:[%s9 + $0x1c20] sm:$0xff]
  %v7782 = vld [vmem:[%s9 + $0x1c28] sm:$0xff]
  %v7783 = vld [vmem:[%s9 + $0x1c30] sm:$0xff]
  %v7784 = vld [vmem:[%s9 + $0x1c38] sm:$0xff]
  %v7785 = vld [vmem:[%s9 + $0x1c40] sm:$0xff]
  %v7786 = vld [vmem:[%s9 + $0x1c48] sm:$0xff]
  %v7787 = vld [vmem:[%s9 + $0x1c50] sm:$0xff]
  %v7788 = vld [vmem:[%s9 + $0x1c58] sm:$0xff]
  %v7789 = vld [vmem:[%s9 + $0x1c60] sm:$0xff]
  %v7790 = vld [vmem:[%s9 + $0x1c68] sm:$0xff]
  %v7791 = vld [vmem:[%s9 + $0x1c70] sm:$0xff]
  %v7792 = vld [vmem:[%s9 + $0x1c78] sm:$0xff]
  %v7793 = vld [vmem:[%s9 + $0x1c80] sm:$0xff]
  %v7794 = vld [vmem:[%s9 + $0x1c88] sm:$0xff]
  %v7795 = vld [vmem:[%s9 + $0x1c90] sm:$0xff]
  %v7796 = vld [vmem:[%s9 + $0x1c98] sm:$0xff]
  %v7797 = vld [vmem:[%s9 + $0x1ca0] sm:$0xff]
  %v7798 = vld [vmem:[%s9 + $0x1ca8] sm:$0xff]
  %v7799 = vld [vmem:[%s9 + $0x1cb0] sm:$0xff]
  %v7800 = vld [vmem:[%s9 + $0x1cb8] sm:$0xff]
  %v7801 = vld [vmem:[%s9 + $0x1cc0] sm:$0xff]
  %v7802 = vld [vmem:[%s9 + $0x1cc8] sm:$0xff]
  %v7803 = vld [vmem:[%s9 + $0x1cd0] sm:$0xff]
  %v7804 = vld [vmem:[%s9 + $0x1cd8] sm:$0xff]
  %v7805 = vld [vmem:[%s9 + $0x1ce0] sm:$0xff]
  %v7806 = vld [vmem:[%s9 + $0x1ce8] sm:$0xff]
  %v7807 = vld [vmem:[%s9 + $0x1cf0] sm:$0xff]
  %v7808 = vld [vmem:[%s9 + $0x1cf8] sm:$0xff]
  %v7809 = vld [vmem:[%s9 + $0x1d00] sm:$0xff]
  %v7810 = vld [vmem:[%s9 + $0x1d08] sm:$0xff]
  %v7811 = vld [vmem:[%s9 + $0x1d10] sm:$0xff]
  %v7812 = vld [vmem:[%s9 + $0x1d18] sm:$0xff]
  %v7813 = vld [vmem:[%s9 + $0x1d20] sm:$0xff]
  %v7814 = vld [vmem:[%s9 + $0x1d28] sm:$0xff]
  %v7815 = vld [vmem:[%s9 + $0x1d30] sm:$0xff]
  %v7816 = vld [vmem:[%s9 + $0x1d38] sm:$0xff]
  %v7817 = vld [vmem:[%s9 + $0x1d40] sm:$0xff]
  %v7818 = vld [vmem:[%s9 + $0x1d48] sm:$0xff]
  %v7819 = vld [vmem:[%s9 + $0x1d50] sm:$0xff]
  %v7820 = vld [vmem:[%s9 + $0x1d58] sm:$0xff]
  %v7821 = vld [vmem:[%s9 + $0x1d60] sm:$0xff]
  %v7822 = vld [vmem:[%s9 + $0x1d68] sm:$0xff]
  %v7823 = vld [vmem:[%s9 + $0x1d70] sm:$0xff]
  %v7824 = vld [vmem:[%s9 + $0x1d78] sm:$0xff]
  %v7825 = vld [vmem:[%s9 + $0x1d80] sm:$0xff]
  %v7826 = vld [vmem:[%s9 + $0x1d88] sm:$0xff]
  %v7827 = vld [vmem:[%s9 + $0x1d90] sm:$0xff]
  %v7828 = vld [vmem:[%s9 + $0x1d98] sm:$0xff]
  %v7829 = vld [vmem:[%s9 + $0x1da0] sm:$0xff]
  %v7830 = vld [vmem:[%s9 + $0x1da8] sm:$0xff]
  %v7831 = vld [vmem:[%s9 + $0x1db0] sm:$0xff]
  %v7832 = vld [vmem:[%s9 + $0x1db8] sm:$0xff]
  %v7833 = vld [vmem:[%s9 + $0x1dc0] sm:$0xff]
  %v7834 = vld [vmem:[%s9 + $0x1dc8] sm:$0xff]
  %v7835 = vld [vmem:[%s9 + $0x1dd0] sm:$0xff]
  %v7836 = vld [vmem:[%s9 + $0x1dd8] sm:$0xff]
  %v7837 = vld [vmem:[%s9 + $0x1de0] sm:$0xff]
  %v7838 = vld [vmem:[%s9 + $0x1de8] sm:$0xff]
  %v7839 = vld [vmem:[%s9 + $0x1df0] sm:$0xff]
  %v7840 = vld [vmem:[%s9 + $0x1df8] sm:$0xff]
  %v7841 = vld [vmem:[%s9 + $0x1e00] sm:$0xff]
  %v7842 = vld [vmem:[%s9 + $0x1e08] sm:$0xff]
  %v7843 = vld [vmem:[%s9 + $0x1e10] sm:$0xff]
  %v7844 = vld [vmem:[%s9 + $0x1e18] sm:$0xff]
  %v7845 = vld [vmem:[%s9 + $0x1e20] sm:$0xff]
  %v7846 = vld [vmem:[%s9 + $0x1e28] sm:$0xff]
  %v7847 = vld [vmem:[%s9 + $0x1e30] sm:$0xff]
  %v7848 = vld [vmem:[%s9 + $0x1e38] sm:$0xff]
  %v7849 = vld [vmem:[%s9 + $0x1e40] sm:$0xff]
  %v7850 = vld [vmem:[%s9 + $0x1e48] sm:$0xff]
  %v7851 = vld [vmem:[%s9 + $0x1e50] sm:$0xff]
  %v7852 = vld [vmem:[%s9 + $0x1e58] sm:$0xff]
  %v7853 = vld [vmem:[%s9 + $0x1e60] sm:$0xff]
  %v7854 = vld [vmem:[%s9 + $0x1e68] sm:$0xff]
  %v7855 = vld [vmem:[%s9 + $0x1e70] sm:$0xff]
  %v7856 = vld [vmem:[%s9 + $0x1e78] sm:$0xff]
  %v7857 = vld [vmem:[%s9 + $0x1e80] sm:$0xff]
  %v7858 = vld [vmem:[%s9 + $0x1e88] sm:$0xff]
  %v7859 = vld [vmem:[%s9 + $0x1e90] sm:$0xff]
  %v7860 = vld [vmem:[%s9 + $0x1e98] sm:$0xff]
  %v7861 = vld [vmem:[%s9 + $0x1ea0] sm:$0xff]
  %v7862 = vld [vmem:[%s9 + $0x1ea8] sm:$0xff]
  %v7863 = vld [vmem:[%s9 + $0x1eb0] sm:$0xff]
  %v7864 = vld [vmem:[%s9 + $0x1eb8] sm:$0xff]
  %v7865 = vld [vmem:[%s9 + $0x1ec0] sm:$0xff]
  %v7866 = vld [vmem:[%s9 + $0x1ec8] sm:$0xff]
  %v7867 = vld [vmem:[%s9 + $0x1ed0] sm:$0xff]
  %v7868 = vld [vmem:[%s9 + $0x1ed8] sm:$0xff]
  %v7869 = vld [vmem:[%s9 + $0x1ee0] sm:$0xff]
  %v7870 = vld [vmem:[%s9 + $0x1ee8] sm:$0xff]
  %v7871 = vld [vmem:[%s9 + $0x1ef0] sm:$0xff]
  %v7872 = vld [vmem:[%s9 + $0x1ef8] sm:$0xff]
  %v7873 = vld [vmem:[%s9 + $0x1f00] sm:$0xff]
  %v7874 = vld [vmem:[%s9 + $0x1f08] sm:$0xff]
  %v7875 = vld [vmem:[%s9 + $0x1f10] sm:$0xff]
  %v7876 = vld [vmem:[%s9 + $0x1f18] sm:$0xff]
  %v7877 = vld [vmem:[%s9 + $0x1f20] sm:$0xff]
  %v7878 = vld [vmem:[%s9 + $0x1f28] sm:$0xff]
  %v7879 = vld [vmem:[%s9 + $0x1f30] sm:$0xff]
  %v7880 = vld [vmem:[%s9 + $0x1f38] sm:$0xff]
  %v7881 = vld [vmem:[%s9 + $0x1f40] sm:$0xff]
  %v7882 = vld [vmem:[%s9 + $0x1f48] sm:$0xff]
  %v7883 = vld [vmem:[%s9 + $0x1f50] sm:$0xff]
  %v7884 = vld [vmem:[%s9 + $0x1f58] sm:$0xff]
  %v7885 = vld [vmem:[%s9 + $0x1f60] sm:$0xff]
  %v7886 = vld [vmem:[%s9 + $0x1f68] sm:$0xff]
  %v7887 = vld [vmem:[%s9 + $0x1f70] sm:$0xff]
  %v7888 = vld [vmem:[%s9 + $0x1f78] sm:$0xff]
  %v7889 = vld [vmem:[%s9 + $0x1f80] sm:$0xff]
  %v7890 = vld [vmem:[%s9 + $0x1f88] sm:$0xff]
  %v7891 = vld [vmem:[%s9 + $0x1f90] sm:$0xff]
  %v7892 = vld [vmem:[%s9 + $0x1f98] sm:$0xff]
  %v7893 = vld [vmem:[%s9 + $0x1fa0] sm:$0xff]
  %v7894 = vld [vmem:[%s9 + $0x1fa8] sm:$0xff]
  %v7895 = vld [vmem:[%s9 + $0x1fb0] sm:$0xff]
  %v7896 = vld [vmem:[%s9 + $0x1fb8] sm:$0xff]
  %v7897 = vld [vmem:[%s9 + $0x1fc0] sm:$0xff]
  %v7898 = vld [vmem:[%s9 + $0x1fc8] sm:$0xff]
  %v7899 = vld [vmem:[%s9 + $0x1fd0] sm:$0xff]
  %v7900 = vld [vmem:[%s9 + $0x1fd8] sm:$0xff]
  %v7901 = vld [vmem:[%s9 + $0x1fe0] sm:$0xff]
  %v7902 = vld [vmem:[%s9 + $0x1fe8] sm:$0xff]
  %v7903 = vld [vmem:[%s9 + $0x1ff0] sm:$0xff]
  %v7904 = vld [vmem:[%s9 + $0x1ff8] sm:$0xff]
  %v7905 = vld [vmem:[%s9 + $0x2000] sm:$0xff]
  %v7906 = vld [vmem:[%s9 + $0x2008] sm:$0xff]
  %v7907 = vld [vmem:[%s9 + $0x2010] sm:$0xff]
  %v7908 = vld [vmem:[%s9 + $0x2018] sm:$0xff]
  %v7909 = vld [vmem:[%s9 + $0x2020] sm:$0xff]
  %v7910 = vld [vmem:[%s9 + $0x2028] sm:$0xff]
  %v7911 = vld [vmem:[%s9 + $0x2030] sm:$0xff]
  %v7912 = vld [vmem:[%s9 + $0x2038] sm:$0xff]
  %v7913 = vld [vmem:[%s9 + $0x2040] sm:$0xff]
  %v7914 = vld [vmem:[%s9 + $0x2048] sm:$0xff]
  %v7915 = vld [vmem:[%s9 + $0x2050] sm:$0xff]
  %v7916 = vld [vmem:[%s9 + $0x2058] sm:$0xff]
  %v7917 = vld [vmem:[%s9 + $0x2060] sm:$0xff]
  %v7918 = vld [vmem:[%s9 + $0x2068] sm:$0xff]
  %v7919 = vld [vmem:[%s9 + $0x2070] sm:$0xff]
  %v7920 = vld [vmem:[%s9 + $0x2078] sm:$0xff]
  %v7921 = vld [vmem:[%s9 + $0x2080] sm:$0xff]
  %v7922 = vld [vmem:[%s9 + $0x2088] sm:$0xff]
  %v7923 = vld [vmem:[%s9 + $0x2090] sm:$0xff]
  %v7924 = vld [vmem:[%s9 + $0x2098] sm:$0xff]
  %v7925 = vld [vmem:[%s9 + $0x20a0] sm:$0xff]
  %v7926 = vld [vmem:[%s9 + $0x20a8] sm:$0xff]
  %v7927 = vld [vmem:[%s9 + $0x20b0] sm:$0xff]
  %v7928 = vld [vmem:[%s9 + $0x20b8] sm:$0xff]
  %v7929 = vld [vmem:[%s9 + $0x20c0] sm:$0xff]
  %v7930 = vld [vmem:[%s9 + $0x20c8] sm:$0xff]
  %v7931 = vld [vmem:[%s9 + $0x20d0] sm:$0xff]
  %v7932 = vld [vmem:[%s9 + $0x20d8] sm:$0xff]
  %v7933 = vld [vmem:[%s9 + $0x20e0] sm:$0xff]
  %v7934 = vld [vmem:[%s9 + $0x20e8] sm:$0xff]
  %v7935 = vld [vmem:[%s9 + $0x20f0] sm:$0xff]
  %v7936 = vld [vmem:[%s9 + $0x20f8] sm:$0xff]
  %v7937 = vld [vmem:[%s9 + $0x2100] sm:$0xff]
  %v7938 = vld [vmem:[%s9 + $0x2108] sm:$0xff]
  %v7939 = vld [vmem:[%s9 + $0x2110] sm:$0xff]
  %v7940 = vld [vmem:[%s9 + $0x2118] sm:$0xff]
  %v7941 = vld [vmem:[%s9 + $0x2120] sm:$0xff]
  %v7942 = vld [vmem:[%s9 + $0x2128] sm:$0xff]
  %v7943 = vld [vmem:[%s9 + $0x2130] sm:$0xff]
  %v7944 = vld [vmem:[%s9 + $0x2138] sm:$0xff]
  %v7945 = vld [vmem:[%s9 + $0x2140] sm:$0xff]
  %v7946 = vld [vmem:[%s9 + $0x2148] sm:$0xff]
  %v7947 = vld [vmem:[%s9 + $0x2150] sm:$0xff]
  %v7948 = vld [vmem:[%s9 + $0x2158] sm:$0xff]
  %v7949 = vld [vmem:[%s9 + $0x2160] sm:$0xff]
  %v7950 = vld [vmem:[%s9 + $0x2168] sm:$0xff]
  %v7951 = vld [vmem:[%s9 + $0x2170] sm:$0xff]
  %v7952 = vld [vmem:[%s9 + $0x2178] sm:$0xff]
  %v7953 = vld [vmem:[%s9 + $0x2180] sm:$0xff]
  %v7954 = vld [vmem:[%s9 + $0x2188] sm:$0xff]
  %v7955 = vld [vmem:[%s9 + $0x2190] sm:$0xff]
  %v7956 = vld [vmem:[%s9 + $0x2198] sm:$0xff]
  %v7957 = vld [vmem:[%s9 + $0x21a0] sm:$0xff]
  %v7958 = vld [vmem:[%s9 + $0x21a8] sm:$0xff]
  %v7959 = vld [vmem:[%s9 + $0x21b0] sm:$0xff]
  %v7960 = vld [vmem:[%s9 + $0x21b8] sm:$0xff]
  %v7961 = vld [vmem:[%s9 + $0x21c0] sm:$0xff]
  %v7962 = vld [vmem:[%s9 + $0x21c8] sm:$0xff]
  %v7963 = vld [vmem:[%s9 + $0x21d0] sm:$0xff]
  %v7964 = vld [vmem:[%s9 + $0x21d8] sm:$0xff]
  %v7965 = vld [vmem:[%s9 + $0x21e0] sm:$0xff]
  %v7966 = vld [vmem:[%s9 + $0x21e8] sm:$0xff]
  %v7967 = vld [vmem:[%s9 + $0x21f0] sm:$0xff]
  %v7968 = vld [vmem:[%s9 + $0x21f8] sm:$0xff]
  %v7969 = vld [vmem:[%s9 + $0x2200] sm:$0xff]
  %v7970 = vld [vmem:[%s9 + $0x2208] sm:$0xff]
  %v7971 = vld [vmem:[%s9 + $0x2210] sm:$0xff]
  %v7972 = vld [vmem:[%s9 + $0x2218] sm:$0xff]
  %v7973 = vld [vmem:[%s9 + $0x2220] sm:$0xff]
  %v7974 = vld [vmem:[%s9 + $0x2228] sm:$0xff]
  %v7975 = vld [vmem:[%s9 + $0x2230] sm:$0xff]
  %v7976 = vld [vmem:[%s9 + $0x2238] sm:$0xff]
  %v7977 = vld [vmem:[%s9 + $0x2240] sm:$0xff]
  %v7978 = vld [vmem:[%s9 + $0x2248] sm:$0xff]
  %v7979 = vld [vmem:[%s9 + $0x2250] sm:$0xff]
  %v7980 = vld [vmem:[%s9 + $0x2258] sm:$0xff]
  %v7981 = vld [vmem:[%s9 + $0x2260] sm:$0xff]
  %v7982 = vld [vmem:[%s9 + $0x2268] sm:$0xff]
  %v7983 = vld [vmem:[%s9 + $0x2270] sm:$0xff]
  %v7984 = vld [vmem:[%s9 + $0x2278] sm:$0xff]
  %v7985 = vld [vmem:[%s9 + $0x2280] sm:$0xff]
  %v7986 = vld [vmem:[%s9 + $0x2288] sm:$0xff]
  %v7987 = vld [vmem:[%s9 + $0x2290] sm:$0xff]
  %v7988 = vld [vmem:[%s9 + $0x2298] sm:$0xff]
  %v7989 = vld [vmem:[%s9 + $0x22a0] sm:$0xff]
  %v7990 = vld [vmem:[%s9 + $0x22a8] sm:$0xff]
  %v7991 = vld [vmem:[%s9 + $0x22b0] sm:$0xff]
  %v7992 = vld [vmem:[%s9 + $0x22b8] sm:$0xff]
  %v7993 = vld [vmem:[%s9 + $0x22c0] sm:$0xff]
  %v7994 = vld [vmem:[%s9 + $0x22c8] sm:$0xff]
  %v7995 = vld [vmem:[%s9 + $0x22d0] sm:$0xff]
  %v7996 = vld [vmem:[%s9 + $0x22d8] sm:$0xff]
  %v7997 = vld [vmem:[%s9 + $0x22e0] sm:$0xff]
  %v7998 = vld [vmem:[%s9 + $0x22e8] sm:$0xff]
  %v7999 = vld [vmem:[%s9 + $0x22f0] sm:$0xff]
  %v8000 = vld [vmem:[%s9 + $0x22f8] sm:$0xff]
  %v8001 = vld [vmem:[%s9 + $0x2300] sm:$0xff]
  %v8002 = vld [vmem:[%s9 + $0x2308] sm:$0xff]
  %v8003 = vld [vmem:[%s9 + $0x2310] sm:$0xff]
  %v8004 = vld [vmem:[%s9 + $0x2318] sm:$0xff]
  %v8005 = vld [vmem:[%s9 + $0x2320] sm:$0xff]
  %v8006 = vld [vmem:[%s9 + $0x2328] sm:$0xff]
  %v8007 = vld [vmem:[%s9 + $0x2330] sm:$0xff]
  %v8008 = vld [vmem:[%s9 + $0x2338] sm:$0xff]
  %v8009 = vld [vmem:[%s9 + $0x2340] sm:$0xff]
  %v8010 = vld [vmem:[%s9 + $0x2348] sm:$0xff]
  %v8011 = vld [vmem:[%s9 + $0x2350] sm:$0xff]
  %v8012 = vld [vmem:[%s9 + $0x2358] sm:$0xff]
  %v8013 = vld [vmem:[%s9 + $0x2360] sm:$0xff]
  %v8014 = vld [vmem:[%s9 + $0x2368] sm:$0xff]
  %v8015 = vld [vmem:[%s9 + $0x2370] sm:$0xff]
  %v8016 = vld [vmem:[%s9 + $0x2378] sm:$0xff]
  %v8017 = vld [vmem:[%s9 + $0x2380] sm:$0xff]
  %v8018 = vld [vmem:[%s9 + $0x2388] sm:$0xff]
  %v8019 = vld [vmem:[%s9 + $0x2390] sm:$0xff]
  %v8020 = vld [vmem:[%s9 + $0x2398] sm:$0xff]
  %v8021 = vld [vmem:[%s9 + $0x23a0] sm:$0xff]
  %v8022 = vld [vmem:[%s9 + $0x23a8] sm:$0xff]
  %v8023 = vld [vmem:[%s9 + $0x23b0] sm:$0xff]
  %v8024 = vld [vmem:[%s9 + $0x23b8] sm:$0xff]
  %v8025 = vld [vmem:[%s9 + $0x23c0] sm:$0xff]
  %v8026 = vld [vmem:[%s9 + $0x23c8] sm:$0xff]
  %v8027 = vld [vmem:[%s9 + $0x23d0] sm:$0xff]
  %v8028 = vld [vmem:[%s9 + $0x23d8] sm:$0xff]
  %v8029 = vld [vmem:[%s9 + $0x23e0] sm:$0xff]
  %v8030 = vld [vmem:[%s9 + $0x23e8] sm:$0xff]
  %v8031 = vld [vmem:[%s9 + $0x23f0] sm:$0xff]
  %v8032 = vld [vmem:[%s9 + $0x23f8] sm:$0xff]
  %v8033 = vld [vmem:[%s9 + $0x2400] sm:$0xff]
  %v8034 = vld [vmem:[%s9 + $0x2408] sm:$0xff]
  %v8035 = vld [vmem:[%s9 + $0x2410] sm:$0xff]
  %v8036 = vld [vmem:[%s9 + $0x2418] sm:$0xff]
  %v8037 = vld [vmem:[%s9 + $0x2420] sm:$0xff]
  %v8038 = vld [vmem:[%s9 + $0x2428] sm:$0xff]
  %v8039 = vld [vmem:[%s9 + $0x2430] sm:$0xff]
  %v8040 = vld [vmem:[%s9 + $0x2438] sm:$0xff]
  %v8041 = vld [vmem:[%s9 + $0x2440] sm:$0xff]
  %v8042 = vld [vmem:[%s9 + $0x2448] sm:$0xff]
  %v8043 = vld [vmem:[%s9 + $0x2450] sm:$0xff]
  %v8044 = vld [vmem:[%s9 + $0x2458] sm:$0xff]
  %v8045 = vld [vmem:[%s9 + $0x2460] sm:$0xff]
  %v8046 = vld [vmem:[%s9 + $0x2468] sm:$0xff]
  %v8047 = vld [vmem:[%s9 + $0x2470] sm:$0xff]
  %v8048 = vld [vmem:[%s9 + $0x2478] sm:$0xff]
  %v8049 = vld [vmem:[%s9 + $0x2480] sm:$0xff]
  %v8050 = vld [vmem:[%s9 + $0x2488] sm:$0xff]
  %v8051 = vld [vmem:[%s9 + $0x2490] sm:$0xff]
  %v8052 = vld [vmem:[%s9 + $0x2498] sm:$0xff]
  %v8053 = vld [vmem:[%s9 + $0x24a0] sm:$0xff]
  %v8054 = vld [vmem:[%s9 + $0x24a8] sm:$0xff]
  %v8055 = vld [vmem:[%s9 + $0x24b0] sm:$0xff]
  %v8056 = vld [vmem:[%s9 + $0x24b8] sm:$0xff]
  %v8057 = vld [vmem:[%s9 + $0x24c0] sm:$0xff]
  %v8058 = vld [vmem:[%s9 + $0x24c8] sm:$0xff]
  %v8059 = vld [vmem:[%s9 + $0x24d0] sm:$0xff]
  %v8060 = vld [vmem:[%s9 + $0x24d8] sm:$0xff]
  %v8061 = vld [vmem:[%s9 + $0x24e0] sm:$0xff]
  %v8062 = vld [vmem:[%s9 + $0x24e8] sm:$0xff]
  %v8063 = vld [vmem:[%s9 + $0x24f0] sm:$0xff]
  %v8064 = vld [vmem:[%s9 + $0x24f8] sm:$0xff]
  %v8065 = vld [vmem:[%s9 + $0x2500] sm:$0xff]
  %v8066 = vld [vmem:[%s9 + $0x2508] sm:$0xff]
  %v8067 = vld [vmem:[%s9 + $0x2510] sm:$0xff]
  %v8068 = vld [vmem:[%s9 + $0x2518] sm:$0xff]
  %v8069 = vld [vmem:[%s9 + $0x2520] sm:$0xff]
  %v8070 = vld [vmem:[%s9 + $0x2528] sm:$0xff]
  %v8071 = vld [vmem:[%s9 + $0x2530] sm:$0xff]
  %v8072 = vld [vmem:[%s9 + $0x2538] sm:$0xff]
  %v8073 = vld [vmem:[%s9 + $0x2540] sm:$0xff]
  %v8074 = vld [vmem:[%s9 + $0x2548] sm:$0xff]
  %v8075 = vld [vmem:[%s9 + $0x2550] sm:$0xff]
  %v8076 = vld [vmem:[%s9 + $0x2558] sm:$0xff]
  %v8077 = vld [vmem:[%s9 + $0x2560] sm:$0xff]
  %v8078 = vld [vmem:[%s9 + $0x2568] sm:$0xff]
  %v8079 = vld [vmem:[%s9 + $0x2570] sm:$0xff]
  %v8080 = vld [vmem:[%s9 + $0x2578] sm:$0xff]
  %v8081 = vld [vmem:[%s9 + $0x2580] sm:$0xff]
  %v8082 = vld [vmem:[%s9 + $0x2588] sm:$0xff]
  %v8083 = vld [vmem:[%s9 + $0x2590] sm:$0xff]
  %v8084 = vld [vmem:[%s9 + $0x2598] sm:$0xff]
  %v8085 = vld [vmem:[%s9 + $0x25a0] sm:$0xff]
  %v8086 = vld [vmem:[%s9 + $0x25a8] sm:$0xff]
  %v8087 = vld [vmem:[%s9 + $0x25b0] sm:$0xff]
  %v8088 = vld [vmem:[%s9 + $0x25b8] sm:$0xff]
  %v8089 = vld [vmem:[%s9 + $0x25c0] sm:$0xff]
  %v8090 = vld [vmem:[%s9 + $0x25c8] sm:$0xff]
  %v8091 = vld [vmem:[%s9 + $0x25d0] sm:$0xff]
  %v8092 = vld [vmem:[%s9 + $0x25d8] sm:$0xff]
  %v8093 = vld [vmem:[%s9 + $0x25e0] sm:$0xff]
  %v8094 = vld [vmem:[%s9 + $0x25e8] sm:$0xff]
  %v8095 = vld [vmem:[%s9 + $0x25f0] sm:$0xff]
  %v8096 = vld [vmem:[%s9 + $0x25f8] sm:$0xff]
  %v8097 = vld [vmem:[%s9 + $0x2600] sm:$0xff]
  %v8098 = vld [vmem:[%s9 + $0x2608] sm:$0xff]
  %v8099 = vld [vmem:[%s9 + $0x2610] sm:$0xff]
  %v8100 = vld [vmem:[%s9 + $0x2618] sm:$0xff]
  %v8101 = vld [vmem:[%s9 + $0x2620] sm:$0xff]
  %v8102 = vld [vmem:[%s9 + $0x2628] sm:$0xff]
  %v8103 = vld [vmem:[%s9 + $0x2630] sm:$0xff]
  %v8104 = vld [vmem:[%s9 + $0x2638] sm:$0xff]
  %v8105 = vld [vmem:[%s9 + $0x2640] sm:$0xff]
  %v8106 = vld [vmem:[%s9 + $0x2648] sm:$0xff]
  %v8107 = vld [vmem:[%s9 + $0x2650] sm:$0xff]
  %v8108 = vld [vmem:[%s9 + $0x2658] sm:$0xff]
  %v8109 = vld [vmem:[%s9 + $0x2660] sm:$0xff]
  %v8110 = vld [vmem:[%s9 + $0x2668] sm:$0xff]
  %v8111 = vld [vmem:[%s9 + $0x2670] sm:$0xff]
  %v8112 = vld [vmem:[%s9 + $0x2678] sm:$0xff]
  %v8113 = vld [vmem:[%s9 + $0x2680] sm:$0xff]
  %v8114 = vld [vmem:[%s9 + $0x2688] sm:$0xff]
  %v8115 = vld [vmem:[%s9 + $0x2690] sm:$0xff]
  %v8116 = vld [vmem:[%s9 + $0x2698] sm:$0xff]
  %v8117 = vld [vmem:[%s9 + $0x26a0] sm:$0xff]
  %v8118 = vld [vmem:[%s9 + $0x26a8] sm:$0xff]
  %v8119 = vld [vmem:[%s9 + $0x26b0] sm:$0xff]
  %v8120 = vld [vmem:[%s9 + $0x26b8] sm:$0xff]
  %v8121 = vld [vmem:[%s9 + $0x26c0] sm:$0xff]
  %v8122 = vld [vmem:[%s9 + $0x26c8] sm:$0xff]
  %v8123 = vld [vmem:[%s9 + $0x26d0] sm:$0xff]
  %v8124 = vld [vmem:[%s9 + $0x26d8] sm:$0xff]
  %v8125 = vld [vmem:[%s9 + $0x26e0] sm:$0xff]
  %v8126 = vld [vmem:[%s9 + $0x26e8] sm:$0xff]
  %v8127 = vld [vmem:[%s9 + $0x26f0] sm:$0xff]
  %v8128 = vld [vmem:[%s9 + $0x26f8] sm:$0xff]
  %v8129 = vld [vmem:[%s9 + $0x2700] sm:$0xff]
  %v8130 = vld [vmem:[%s9 + $0x2708] sm:$0xff]
  %v8131 = vld [vmem:[%s9 + $0x2710] sm:$0xff]
  %v8132 = vld [vmem:[%s9 + $0x2718] sm:$0xff]
  %v8133 = vld [vmem:[%s9 + $0x2720] sm:$0xff]
  %v8134 = vld [vmem:[%s9 + $0x2728] sm:$0xff]
  %v8135 = vld [vmem:[%s9 + $0x2730] sm:$0xff]
  %v8136 = vld [vmem:[%s9 + $0x2738] sm:$0xff]
  %v8137 = vld [vmem:[%s9 + $0x2740] sm:$0xff]
  %v8138 = vld [vmem:[%s9 + $0x2748] sm:$0xff]
  %v8139 = vld [vmem:[%s9 + $0x2750] sm:$0xff]
  %v8140 = vld [vmem:[%s9 + $0x2758] sm:$0xff]
  %v8141 = vld [vmem:[%s9 + $0x2760] sm:$0xff]
  %v8142 = vld [vmem:[%s9 + $0x2768] sm:$0xff]
  %v8143 = vld [vmem:[%s9 + $0x2770] sm:$0xff]
  %v8144 = vld [vmem:[%s9 + $0x2778] sm:$0xff]
  %v8145 = vld [vmem:[%s9 + $0x2780] sm:$0xff]
  %v8146 = vld [vmem:[%s9 + $0x2788] sm:$0xff]
  %v8147 = vld [vmem:[%s9 + $0x2790] sm:$0xff]
  %v8148 = vld [vmem:[%s9 + $0x2798] sm:$0xff]
  %v8149 = vld [vmem:[%s9 + $0x27a0] sm:$0xff]
  %v8150 = vld [vmem:[%s9 + $0x27a8] sm:$0xff]
  %v8151 = vld [vmem:[%s9 + $0x27b0] sm:$0xff]
  %v8152 = vld [vmem:[%s9 + $0x27b8] sm:$0xff]
  %v8153 = vld [vmem:[%s9 + $0x27c0] sm:$0xff]
  %v8154 = vld [vmem:[%s9 + $0x27c8] sm:$0xff]
  %v8155 = vld [vmem:[%s9 + $0x27d0] sm:$0xff]
  %v8156 = vld [vmem:[%s9 + $0x27d8] sm:$0xff]
  %v8157 = vld [vmem:[%s9 + $0x27e0] sm:$0xff]
  %v8158 = vld [vmem:[%s9 + $0x27e8] sm:$0xff]
  %v8159 = vld [vmem:[%s9 + $0x27f0] sm:$0xff]
  %v8160 = vld [vmem:[%s9 + $0x27f8] sm:$0xff]
  %v8161 = vld [vmem:[%s9 + $0x2800] sm:$0xff]
  %v8162 = vld [vmem:[%s9 + $0x2808] sm:$0xff]
  %v8163 = vld [vmem:[%s9 + $0x2810] sm:$0xff]
  %v8164 = vld [vmem:[%s9 + $0x2818] sm:$0xff]
  %v8165 = vld [vmem:[%s9 + $0x2820] sm:$0xff]
  %v8166 = vld [vmem:[%s9 + $0x2828] sm:$0xff]
  %v8167 = vld [vmem:[%s9 + $0x2830] sm:$0xff]
  %v8168 = vld [vmem:[%s9 + $0x2838] sm:$0xff]
  %v8169 = vld [vmem:[%s9 + $0x2840] sm:$0xff]
  %v8170 = vld [vmem:[%s9 + $0x2848] sm:$0xff]
  %v8171 = vld [vmem:[%s9 + $0x2850] sm:$0xff]
  %v8172 = vld [vmem:[%s9 + $0x2858] sm:$0xff]
  %v8173 = vld [vmem:[%s9 + $0x2860] sm:$0xff]
  %v8174 = vld [vmem:[%s9 + $0x2868] sm:$0xff]
  %v8175 = vld [vmem:[%s9 + $0x2870] sm:$0xff]
  %v8176 = vld [vmem:[%s9 + $0x2878] sm:$0xff]
  %v8177 = vld [vmem:[%s9 + $0x2880] sm:$0xff]
  %v8178 = vld [vmem:[%s9 + $0x2888] sm:$0xff]
  %v8179 = vld [vmem:[%s9 + $0x2890] sm:$0xff]
  %v8180 = vld [vmem:[%s9 + $0x2898] sm:$0xff]
  %v8181 = vld [vmem:[%s9 + $0x28a0] sm:$0xff]
  %v8182 = vld [vmem:[%s9 + $0x28a8] sm:$0xff]
  %v8183 = vld [vmem:[%s9 + $0x28b0] sm:$0xff]
  %v8184 = vld [vmem:[%s9 + $0x28b8] sm:$0xff]
  %v8185 = vld [vmem:[%s9 + $0x28c0] sm:$0xff]
  %v8186 = vld [vmem:[%s9 + $0x28c8] sm:$0xff]
  %v8187 = vld [vmem:[%s9 + $0x28d0] sm:$0xff]
  %v8188 = vld [vmem:[%s9 + $0x28d8] sm:$0xff]
  %v8189 = vld [vmem:[%s9 + $0x28e0] sm:$0xff]
  %v8190 = vld [vmem:[%s9 + $0x28e8] sm:$0xff]
  %v8191 = vld [vmem:[%s9 + $0x28f0] sm:$0xff]
  %v8192 = vld [vmem:[%s9 + $0x28f8] sm:$0xff]
  %v8193 = vld [vmem:[%s9 + $0x2900] sm:$0xff]
  %v8194 = vld [vmem:[%s9 + $0x2908] sm:$0xff]
  %v8195 = vld [vmem:[%s9 + $0x2910] sm:$0xff]
  %v8196 = vld [vmem:[%s9 + $0x2918] sm:$0xff]
  %v8197 = vld [vmem:[%s9 + $0x2920] sm:$0xff]
  %v8198 = vld [vmem:[%s9 + $0x2928] sm:$0xff]
  %v8199 = vld [vmem:[%s9 + $0x2930] sm:$0xff]
  %v8200 = vld [vmem:[%s9 + $0x2938] sm:$0xff]
  %v8201 = vld [vmem:[%s9 + $0x2940] sm:$0xff]
  %v8202 = vld [vmem:[%s9 + $0x2948] sm:$0xff]
  %v8203 = vld [vmem:[%s9 + $0x2950] sm:$0xff]
  %v8204 = vld [vmem:[%s9 + $0x2958] sm:$0xff]
  %v8205 = vld [vmem:[%s9 + $0x2960] sm:$0xff]
  %v8206 = vld [vmem:[%s9 + $0x2968] sm:$0xff]
  %v8207 = vld [vmem:[%s9 + $0x2970] sm:$0xff]
  %v8208 = vld [vmem:[%s9 + $0x2978] sm:$0xff]
  %v8209 = vld [vmem:[%s9 + $0x2980] sm:$0xff]
  %v8210 = vld [vmem:[%s9 + $0x2988] sm:$0xff]
  %v8211 = vld [vmem:[%s9 + $0x2990] sm:$0xff]
  %v8212 = vld [vmem:[%s9 + $0x2998] sm:$0xff]
  %v8213 = vld [vmem:[%s9 + $0x29a0] sm:$0xff]
  %v8214 = vld [vmem:[%s9 + $0x29a8] sm:$0xff]
  %v8215 = vld [vmem:[%s9 + $0x29b0] sm:$0xff]
  %v8216 = vld [vmem:[%s9 + $0x29b8] sm:$0xff]
  %v8217 = vld [vmem:[%s9 + $0x29c0] sm:$0xff]
  %v8218 = vld [vmem:[%s9 + $0x29c8] sm:$0xff]
  %v8219 = vld [vmem:[%s9 + $0x29d0] sm:$0xff]
  %v8220 = vld [vmem:[%s9 + $0x29d8] sm:$0xff]
  %v8221 = vld [vmem:[%s9 + $0x29e0] sm:$0xff]
  %v8222 = vld [vmem:[%s9 + $0x29e8] sm:$0xff]
  %v8223 = vld [vmem:[%s9 + $0x29f0] sm:$0xff]
  %v8224 = vld [vmem:[%s9 + $0x29f8] sm:$0xff]
  %v8225 = vld [vmem:[%s9 + $0x2a00] sm:$0xff]
  %v8226 = vld [vmem:[%s9 + $0x2a08] sm:$0xff]
  %v8227 = vld [vmem:[%s9 + $0x2a10] sm:$0xff]
  %v8228 = vld [vmem:[%s9 + $0x2a18] sm:$0xff]
  %v8229 = vld [vmem:[%s9 + $0x2a20] sm:$0xff]
  %v8230 = vld [vmem:[%s9 + $0x2a28] sm:$0xff]
  %v8231 = vld [vmem:[%s9 + $0x2a30] sm:$0xff]
  %v8232 = vld [vmem:[%s9 + $0x2a38] sm:$0xff]
  %v8233 = vld [vmem:[%s9 + $0x2a40] sm:$0xff]
  %v8234 = vld [vmem:[%s9 + $0x2a48] sm:$0xff]
  %v8235 = vld [vmem:[%s9 + $0x2a50] sm:$0xff]
  %v8236 = vld [vmem:[%s9 + $0x2a58] sm:$0xff]
  %v8237 = vld [vmem:[%s9 + $0x2a60] sm:$0xff]
  %v8238 = vld [vmem:[%s9 + $0x2a68] sm:$0xff]
  %v8239 = vld [vmem:[%s9 + $0x2a70] sm:$0xff]
  %v8240 = vld [vmem:[%s9 + $0x2a78] sm:$0xff]
  %v8241 = vld [vmem:[%s9 + $0x2a80] sm:$0xff]
  %v8242 = vld [vmem:[%s9 + $0x2a88] sm:$0xff]
  %v8243 = vld [vmem:[%s9 + $0x2a90] sm:$0xff]
  %v8244 = vld [vmem:[%s9 + $0x2a98] sm:$0xff]
  %v8245 = vld [vmem:[%s9 + $0x2aa0] sm:$0xff]
  %v8246 = vld [vmem:[%s9 + $0x2aa8] sm:$0xff]
  %v8247 = vld [vmem:[%s9 + $0x2ab0] sm:$0xff]
  %v8248 = vld [vmem:[%s9 + $0x2ab8] sm:$0xff]
  %v8249 = vld [vmem:[%s9 + $0x2ac0] sm:$0xff]
  %v8250 = vld [vmem:[%s9 + $0x2ac8] sm:$0xff]
  %v8251 = vld [vmem:[%s9 + $0x2ad0] sm:$0xff]
  %v8252 = vld [vmem:[%s9 + $0x2ad8] sm:$0xff]
  %v8253 = vld [vmem:[%s9 + $0x2ae0] sm:$0xff]
  %v8254 = vld [vmem:[%s9 + $0x2ae8] sm:$0xff]
  %v8255 = vld [vmem:[%s9 + $0x2af0] sm:$0xff]
  %v8256 = vld [vmem:[%s9 + $0x2af8] sm:$0xff]
  %v8257 = vld [vmem:[%s9 + $0x2b00] sm:$0xff]
  %v8258 = vld [vmem:[%s9 + $0x2b08] sm:$0xff]
  %v8259 = vld [vmem:[%s9 + $0x2b10] sm:$0xff]
  %v8260 = vld [vmem:[%s9 + $0x2b18] sm:$0xff]
  %v8261 = vld [vmem:[%s9 + $0x2b20] sm:$0xff]
  %v8262 = vld [vmem:[%s9 + $0x2b28] sm:$0xff]
  %v8263 = vld [vmem:[%s9 + $0x2b30] sm:$0xff]
  %v8264 = vld [vmem:[%s9 + $0x2b38] sm:$0xff]
  %v8265 = vld [vmem:[%s9 + $0x2b40] sm:$0xff]
  %v8266 = vld [vmem:[%s9 + $0x2b48] sm:$0xff]
  %v8267 = vld [vmem:[%s9 + $0x2b50] sm:$0xff]
  %v8268 = vld [vmem:[%s9 + $0x2b58] sm:$0xff]
  %v8269 = vld [vmem:[%s9 + $0x2b60] sm:$0xff]
  %v8270 = vld [vmem:[%s9 + $0x2b68] sm:$0xff]
  %v8271 = vld [vmem:[%s9 + $0x2b70] sm:$0xff]
  %v8272 = vld [vmem:[%s9 + $0x2b78] sm:$0xff]
  %v8273 = vld [vmem:[%s9 + $0x2b80] sm:$0xff]
  %v8274 = vld [vmem:[%s9 + $0x2b88] sm:$0xff]
  %v8275 = vld [vmem:[%s9 + $0x2b90] sm:$0xff]
  %v8276 = vld [vmem:[%s9 + $0x2b98] sm:$0xff]
  %v8277 = vld [vmem:[%s9 + $0x2ba0] sm:$0xff]
  %v8278 = vld [vmem:[%s9 + $0x2ba8] sm:$0xff]
  %v8279 = vld [vmem:[%s9 + $0x2bb0] sm:$0xff]
  %v8280 = vld [vmem:[%s9 + $0x2bb8] sm:$0xff]
  %v8281 = vld [vmem:[%s9 + $0x2bc0] sm:$0xff]
  %v8282 = vld [vmem:[%s9 + $0x2bc8] sm:$0xff]
  %v8283 = vld [vmem:[%s9 + $0x2bd0] sm:$0xff]
  %v8284 = vld [vmem:[%s9 + $0x2bd8] sm:$0xff]
  %v8285 = vld [vmem:[%s9 + $0x2be0] sm:$0xff]
  %v8286 = vld [vmem:[%s9 + $0x2be8] sm:$0xff]
  %v8287 = vld [vmem:[%s9 + $0x2bf0] sm:$0xff]
  %v8288 = vld [vmem:[%s9 + $0x2bf8] sm:$0xff]
  %v8289 = vld [vmem:[%s9 + $0x2c00] sm:$0xff]
  %v8290 = vld [vmem:[%s9 + $0x2c08] sm:$0xff]
  %v8291 = vld [vmem:[%s9 + $0x2c10] sm:$0xff]
  %v8292 = vld [vmem:[%s9 + $0x2c18] sm:$0xff]
  %v8293 = vld [vmem:[%s9 + $0x2c20] sm:$0xff]
  %v8294 = vld [vmem:[%s9 + $0x2c28] sm:$0xff]
  %v8295 = vld [vmem:[%s9 + $0x2c30] sm:$0xff]
  %v8296 = vld [vmem:[%s9 + $0x2c38] sm:$0xff]
  %v8297 = vld [vmem:[%s9 + $0x2c40] sm:$0xff]
  %v8298 = vld [vmem:[%s9 + $0x2c48] sm:$0xff]
  %v8299 = vld [vmem:[%s9 + $0x2c50] sm:$0xff]
  %v8300 = vld [vmem:[%s9 + $0x2c58] sm:$0xff]
  %v8301 = vld [vmem:[%s9 + $0x2c60] sm:$0xff]
  %v8302 = vld [vmem:[%s9 + $0x2c68] sm:$0xff]
  %v8303 = vld [vmem:[%s9 + $0x2c70] sm:$0xff]
  %v8304 = vld [vmem:[%s9 + $0x2c78] sm:$0xff]
  %v8305 = vld [vmem:[%s9 + $0x2c80] sm:$0xff]
  %v8306 = vld [vmem:[%s9 + $0x2c88] sm:$0xff]
  %v8307 = vld [vmem:[%s9 + $0x2c90] sm:$0xff]
  %v8308 = vld [vmem:[%s9 + $0x2c98] sm:$0xff]
  %v8309 = vld [vmem:[%s9 + $0x2ca0] sm:$0xff]
  %v8310 = vld [vmem:[%s9 + $0x2ca8] sm:$0xff]
  %v8311 = vld [vmem:[%s9 + $0x2cb0] sm:$0xff]
  %v8312 = vld [vmem:[%s9 + $0x2cb8] sm:$0xff]
  %v8313 = vld [vmem:[%s9 + $0x2cc0] sm:$0xff]
  %v8314 = vld [vmem:[%s9 + $0x2cc8] sm:$0xff]
  %v8315 = vld [vmem:[%s9 + $0x2cd0] sm:$0xff]
  %v8316 = vld [vmem:[%s9 + $0x2cd8] sm:$0xff]
  %v8317 = vld [vmem:[%s9 + $0x2ce0] sm:$0xff]
  %v8318 = vld [vmem:[%s9 + $0x2ce8] sm:$0xff]
  %v8319 = vld [vmem:[%s9 + $0x2cf0] sm:$0xff]
  %v8320 = vld [vmem:[%s9 + $0x2cf8] sm:$0xff]
  %v8321 = vld [vmem:[%s9 + $0x2d00] sm:$0xff]
  %v8322 = vld [vmem:[%s9 + $0x2d08] sm:$0xff]
  %v8323 = vld [vmem:[%s9 + $0x2d10] sm:$0xff]
  %v8324 = vld [vmem:[%s9 + $0x2d18] sm:$0xff]
  %v8325 = vld [vmem:[%s9 + $0x2d20] sm:$0xff]
  %v8326 = vld [vmem:[%s9 + $0x2d28] sm:$0xff]
  %v8327 = vld [vmem:[%s9 + $0x2d30] sm:$0xff]
  %v8328 = vld [vmem:[%s9 + $0x2d38] sm:$0xff]
  %v8329 = vld [vmem:[%s9 + $0x2d40] sm:$0xff]
  %v8330 = vld [vmem:[%s9 + $0x2d48] sm:$0xff]
  %v8331 = vld [vmem:[%s9 + $0x2d50] sm:$0xff]
  %v8332 = vld [vmem:[%s9 + $0x2d58] sm:$0xff]
  %v8333 = vld [vmem:[%s9 + $0x2d60] sm:$0xff]
  %v8334 = vld [vmem:[%s9 + $0x2d68] sm:$0xff]
  %v8335 = vld [vmem:[%s9 + $0x2d70] sm:$0xff]
  %v8336 = vld [vmem:[%s9 + $0x2d78] sm:$0xff]
  %v8337 = vld [vmem:[%s9 + $0x2d80] sm:$0xff]
  %v8338 = vld [vmem:[%s9 + $0x2d88] sm:$0xff]
  %v8339 = vld [vmem:[%s9 + $0x2d90] sm:$0xff]
  %v8340 = vld [vmem:[%s9 + $0x2d98] sm:$0xff]
  %v8341 = vld [vmem:[%s9 + $0x2da0] sm:$0xff]
  %v8342 = vld [vmem:[%s9 + $0x2da8] sm:$0xff]
  %v8343 = vld [vmem:[%s9 + $0x2db0] sm:$0xff]
  %v8344 = vld [vmem:[%s9 + $0x2db8] sm:$0xff]
  %v8345 = vld [vmem:[%s9 + $0x2dc0] sm:$0xff]
  %v8346 = vld [vmem:[%s9 + $0x2dc8] sm:$0xff]
  %v8347 = vld [vmem:[%s9 + $0x2dd0] sm:$0xff]
  %v8348 = vld [vmem:[%s9 + $0x2dd8] sm:$0xff]
  %v8349 = vld [vmem:[%s9 + $0x2de0] sm:$0xff]
  %v8350 = vld [vmem:[%s9 + $0x2de8] sm:$0xff]
  %v8351 = vld [vmem:[%s9 + $0x2df0] sm:$0xff]
  %v8352 = vld [vmem:[%s9 + $0x2df8] sm:$0xff]
  %v8353 = vld [vmem:[%s9 + $0x2e00] sm:$0xff]
  %v8354 = vld [vmem:[%s9 + $0x2e08] sm:$0xff]
  %v8355 = vld [vmem:[%s9 + $0x2e10] sm:$0xff]
  %v8356 = vld [vmem:[%s9 + $0x2e18] sm:$0xff]
  %v8357 = vld [vmem:[%s9 + $0x2e20] sm:$0xff]
  %v8358 = vld [vmem:[%s9 + $0x2e28] sm:$0xff]
  %v8359 = vld [vmem:[%s9 + $0x2e30] sm:$0xff]
  %v8360 = vld [vmem:[%s9 + $0x2e38] sm:$0xff]
  %v8361 = vld [vmem:[%s9 + $0x2e40] sm:$0xff]
  %v8362 = vld [vmem:[%s9 + $0x2e48] sm:$0xff]
  %v8363 = vld [vmem:[%s9 + $0x2e50] sm:$0xff]
  %v8364 = vld [vmem:[%s9 + $0x2e58] sm:$0xff]
  %v8365 = vld [vmem:[%s9 + $0x2e60] sm:$0xff]
  %v8366 = vld [vmem:[%s9 + $0x2e68] sm:$0xff]
  %v8367 = vld [vmem:[%s9 + $0x2e70] sm:$0xff]
  %v8368 = vld [vmem:[%s9 + $0x2e78] sm:$0xff]
  %v8369 = vld [vmem:[%s9 + $0x2e80] sm:$0xff]
  %v8370 = vld [vmem:[%s9 + $0x2e88] sm:$0xff]
  %v8371 = vld [vmem:[%s9 + $0x2e90] sm:$0xff]
  %v8372 = vld [vmem:[%s9 + $0x2e98] sm:$0xff]
  %v8373 = vld [vmem:[%s9 + $0x2ea0] sm:$0xff]
  %v8374 = vld [vmem:[%s9 + $0x2ea8] sm:$0xff]
  %v8375 = vld [vmem:[%s9 + $0x2eb0] sm:$0xff]
  %v8376 = vld [vmem:[%s9 + $0x2eb8] sm:$0xff]
  %v8377 = vld [vmem:[%s9 + $0x2ec0] sm:$0xff]
  %v8378 = vld [vmem:[%s9 + $0x2ec8] sm:$0xff]
  %v8379 = vld [vmem:[%s9 + $0x2ed0] sm:$0xff]
  %v8380 = vld [vmem:[%s9 + $0x2ed8] sm:$0xff]
  %v8381 = vld [vmem:[%s9 + $0x2ee0] sm:$0xff]
  %v8382 = vld [vmem:[%s9 + $0x2ee8] sm:$0xff]
  %v8383 = vld [vmem:[%s9 + $0x2ef0] sm:$0xff]
  %v8384 = vld [vmem:[%s9 + $0x2ef8] sm:$0xff]
  %v8385 = vld [vmem:[%s9 + $0x2f00] sm:$0xff]
  %v8386 = vld [vmem:[%s9 + $0x2f08] sm:$0xff]
  %v8387 = vld [vmem:[%s9 + $0x2f10] sm:$0xff]
  %v8388 = vld [vmem:[%s9 + $0x2f18] sm:$0xff]
  %v8389 = vld [vmem:[%s9 + $0x2f20] sm:$0xff]
  %v8390 = vld [vmem:[%s9 + $0x2f28] sm:$0xff]
  %v8391 = vld [vmem:[%s9 + $0x2f30] sm:$0xff]
  %v8392 = vld [vmem:[%s9 + $0x2f38] sm:$0xff]
  %v8393 = vld [vmem:[%s9 + $0x2f40] sm:$0xff]
  %v8394 = vld [vmem:[%s9 + $0x2f48] sm:$0xff]
  %v8395 = vld [vmem:[%s9 + $0x2f50] sm:$0xff]
  %v8396 = vld [vmem:[%s9 + $0x2f58] sm:$0xff]
  %v8397 = vld [vmem:[%s9 + $0x2f60] sm:$0xff]
  %v8398 = vld [vmem:[%s9 + $0x2f68] sm:$0xff]
  %v8399 = vld [vmem:[%s9 + $0x2f70] sm:$0xff]
  %v8400 = vld [vmem:[%s9 + $0x2f78] sm:$0xff]
  %v8401 = vld [vmem:[%s9 + $0x2f80] sm:$0xff]
  %v8402 = vld [vmem:[%s9 + $0x2f88] sm:$0xff]
  %v8403 = vld [vmem:[%s9 + $0x2f90] sm:$0xff]
  %v8404 = vld [vmem:[%s9 + $0x2f98] sm:$0xff]
  %v8405 = vld [vmem:[%s9 + $0x2fa0] sm:$0xff]
  %v8406 = vld [vmem:[%s9 + $0x2fa8] sm:$0xff]
  %v8407 = vld [vmem:[%s9 + $0x2fb0] sm:$0xff]
  %v8408 = vld [vmem:[%s9 + $0x2fb8] sm:$0xff]
  %v8409 = vld [vmem:[%s9 + $0x2fc0] sm:$0xff]
  %v8410 = vld [vmem:[%s9 + $0x2fc8] sm:$0xff]
  %v8411 = vld [vmem:[%s9 + $0x2fd0] sm:$0xff]
  %v8412 = vld [vmem:[%s9 + $0x2fd8] sm:$0xff]
  %v8413 = vld [vmem:[%s9 + $0x2fe0] sm:$0xff]
  %v8414 = vld [vmem:[%s9 + $0x2fe8] sm:$0xff]
  %v8415 = vld [vmem:[%s9 + $0x2ff0] sm:$0xff]
  %v8416 = vld [vmem:[%s9 + $0x2ff8] sm:$0xff]
  %v8417 = vld [vmem:[%s9 + $0x3000] sm:$0xff]
  %v8418 = vld [vmem:[%s9 + $0x3008] sm:$0xff]
  %v8419 = vld [vmem:[%s9 + $0x3010] sm:$0xff]
  %v8420 = vld [vmem:[%s9 + $0x3018] sm:$0xff]
  %v8421 = vld [vmem:[%s9 + $0x3020] sm:$0xff]
  %v8422 = vld [vmem:[%s9 + $0x3028] sm:$0xff]
  %v8423 = vld [vmem:[%s9 + $0x3030] sm:$0xff]
  %v8424 = vld [vmem:[%s9 + $0x3038] sm:$0xff]
  %v8425 = vld [vmem:[%s9 + $0x3040] sm:$0xff]
  %v8426 = vld [vmem:[%s9 + $0x3048] sm:$0xff]
  %v8427 = vld [vmem:[%s9 + $0x3050] sm:$0xff]
  %v8428 = vld [vmem:[%s9 + $0x3058] sm:$0xff]
  %v8429 = vld [vmem:[%s9 + $0x3060] sm:$0xff]
  %v8430 = vld [vmem:[%s9 + $0x3068] sm:$0xff]
  %v8431 = vld [vmem:[%s9 + $0x3070] sm:$0xff]
  %v8432 = vld [vmem:[%s9 + $0x3078] sm:$0xff]
  %v8433 = vld [vmem:[%s9 + $0x3080] sm:$0xff]
  %v8434 = vld [vmem:[%s9 + $0x3088] sm:$0xff]
  %v8435 = vld [vmem:[%s9 + $0x3090] sm:$0xff]
  %v8436 = vld [vmem:[%s9 + $0x3098] sm:$0xff]
  %v8437 = vld [vmem:[%s9 + $0x30a0] sm:$0xff]
  %v8438 = vld [vmem:[%s9 + $0x30a8] sm:$0xff]
  %v8439 = vld [vmem:[%s9 + $0x30b0] sm:$0xff]
  %v8440 = vld [vmem:[%s9 + $0x30b8] sm:$0xff]
  %v8441 = vld [vmem:[%s9 + $0x30c0] sm:$0xff]
  %v8442 = vld [vmem:[%s9 + $0x30c8] sm:$0xff]
  %v8443 = vld [vmem:[%s9 + $0x30d0] sm:$0xff]
  %v8444 = vld [vmem:[%s9 + $0x30d8] sm:$0xff]
  %v8445 = vld [vmem:[%s9 + $0x30e0] sm:$0xff]
  %v8446 = vld [vmem:[%s9 + $0x30e8] sm:$0xff]
  %v8447 = vld [vmem:[%s9 + $0x30f0] sm:$0xff]
  %v8448 = vld [vmem:[%s9 + $0x30f8] sm:$0xff]
  %v8449 = vld [vmem:[%s9 + $0x3100] sm:$0xff]
  %v8450 = vld [vmem:[%s9 + $0x3108] sm:$0xff]
  %v8451 = vld [vmem:[%s9 + $0x3110] sm:$0xff]
  %v8452 = vld [vmem:[%s9 + $0x3118] sm:$0xff]
  %v8453 = vld [vmem:[%s9 + $0x3120] sm:$0xff]
  %v8454 = vld [vmem:[%s9 + $0x3128] sm:$0xff]
  %v8455 = vld [vmem:[%s9 + $0x3130] sm:$0xff]
  %v8456 = vld [vmem:[%s10] sm:$0x7f]
  %v8458 = vlaneseq
  %v8459 = vshrl.u32 %v8458, 7
  %v8460 = vsub.s32 0, %v8459
  %v8461 = vrot.slane %v8456, %v8460
  %v8462 = vlaneseq
  %v8463 = vshrl.u32 %v8462, 7
  %v8464 = vsub.s32 1, %v8463
  %v8465 = vrot.slane %v8456, %v8464
  %v8466 = vlaneseq
  %v8467 = vshrl.u32 %v8466, 7
  %v8468 = vsub.s32 2, %v8467
  %v8469 = vrot.slane %v8456, %v8468
  %v8470 = vlaneseq
  %v8471 = vshrl.u32 %v8470, 7
  %v8472 = vsub.s32 3, %v8471
  %v8473 = vrot.slane %v8456, %v8472
  %v8474 = vlaneseq
  %v8475 = vshrl.u32 %v8474, 7
  %v8476 = vsub.s32 4, %v8475
  %v8477 = vrot.slane %v8456, %v8476
  %v8478 = vlaneseq
  %v8479 = vshrl.u32 %v8478, 7
  %v8480 = vsub.s32 5, %v8479
  %v8481 = vrot.slane %v8456, %v8480
  %v8482 = vlaneseq
  %v8483 = vshrl.u32 %v8482, 7
  %v8484 = vsub.s32 6, %v8483
  %v8485 = vrot.slane %v8456, %v8484
  %vm8493 = vcmask 64512
  %v8495 = vsel %vm8493, %v6880, 0
  %8497 = vmatprep.subr.mxu0 %v6882
  %8498 = vmatpush1.msra.mxu0 %v6881
  %8499 = vmatprep.subr.mxu0 %v6889
  %8500 = vmatpush1.msra.mxu0 %v6888
  %8501 = vmatprep.subr.mxu0 %v6896
  %8502 = vmatpush1.msra.mxu0 %v6895
  %8503 = vmatprep.subr.mxu0 %v6903
  %8504 = vmatpush1.msra.mxu0 %v6902
  %8505 = vmatprep.subr.mxu0 %v6910
  %8506 = vmatpush1.msra.mxu0 %v6909
  %8507 = vmatprep.subr.mxu0 %v6917
  %8508 = vmatpush1.msra.mxu0 %v6916
  %8509 = vmatprep.subr.mxu0 %v6924
  %8510 = vmatpush1.msra.mxu0 %v6923
  %8511 = vmatprep.subr.mxu0 %v6931
  %8512 = vmatpush1.msra.mxu0 %v6930
  %8513 = vmatprep.subr.mxu0 %v6938
  %8514 = vmatpush1.msra.mxu0 %v6937
  %8515 = vmatprep.subr.mxu0 %v6945
  %8516 = vmatpush1.msra.mxu0 %v6944
  %8517 = vmatprep.subr.mxu0 %v6952
  %8518 = vmatpush1.msra.mxu0 %v6951
  %8519 = vmatprep.subr.mxu0 %v6959
  %8520 = vmatpush1.msra.mxu0 %v6958
  %8521 = vmatprep.subr.mxu0 %v6966
  %8522 = vmatpush1.msra.mxu0 %v6965
  %8523 = vmatprep.subr.mxu0 %v6973
  %8524 = vmatpush1.msra.mxu0 %v6972
  %8525 = vmatprep.subr.mxu0 %v6980
  %8526 = vmatpush1.msra.mxu0 %v6979
  %8527 = vmatprep.subr.mxu0 %v6987
  %8528 = vmatpush1.msra.mxu0 %v6986
  %8529 = vmatprep.subr.mxu0 %v6994
  %8530 = vmatpush1.msra.mxu0 %v6993
  %8531 = vmatprep.subr.mxu0 %v7001
  %8532 = vmatpush1.msra.mxu0 %v7000
  %8533 = vmatprep.subr.mxu0 %v7008
  %8534 = vmatpush1.msra.mxu0 %v7007
  %8535 = vmatprep.subr.mxu0 %v7015
  %8536 = vmatpush1.msra.mxu0 %v7014
  %8537 = vmatprep.subr.mxu0 %v7022
  %8538 = vmatpush1.msra.mxu0 %v7021
  %8539 = vmatprep.subr.mxu0 %v7029
  %8540 = vmatpush1.msra.mxu0 %v7028
  %8541 = vmatprep.subr.mxu0 %v7036
  %8542 = vmatpush1.msra.mxu0 %v7035
  %8543 = vmatprep.subr.mxu0 %v7043
  %8544 = vmatpush1.msra.mxu0 %v7042
  %8545 = vmatprep.subr.mxu0 %v7050
  %8546 = vmatpush1.msra.mxu0 %v7049
  %8547 = vmatprep.subr.mxu0 %v7057
  %8548 = vmatpush1.msra.mxu0 %v7056
  %8549 = vmatprep.subr.mxu0 %v7064
  %8550 = vmatpush1.msra.mxu0 %v7063
  %8551 = vmatprep.subr.mxu0 %v7071
  %8552 = vmatpush1.msra.mxu0 %v7070
  %8553 = vmatprep.subr.mxu0 %v7078
  %8554 = vmatpush1.msra.mxu0 %v7077
  %8555 = vmatprep.subr.mxu0 %v7085
  %8556 = vmatpush1.msra.mxu0 %v7084
  %8557 = vmatprep.subr.mxu0 %v7092
  %8558 = vmatpush1.msra.mxu0 %v7091
  %8559 = vmatprep.subr.mxu0 %v7099
  %8560 = vmatpush1.msra.mxu0 %v7098
  %8561 = vmatprep.mubr.f32.mxu0 %v6867
  %8562 = vmatmul.mubr.f32.gmra.mrb[0].mxu0 %v6866
  %v8563 = vpop.f32.mrb[0].mxu0
  %v8564 = vadd.f32 %v8461, %v8563
  %v8565 = vpop.f32.mrb[0].mxu0
  %v8566 = vadd.f32 %v8465, %v8565
  %8567 = vdwg.mxu0
  %8568 = vmatprep.subr.mxu0 %v7106
  %8569 = vmatpush1.msra.mxu0 %v7105
  %8570 = vmatprep.subr.mxu0 %v7113
  %8571 = vmatpush1.msra.mxu0 %v7112
  %8572 = vmatprep.subr.mxu0 %v7120
  %8573 = vmatpush1.msra.mxu0 %v7119
  %8574 = vmatprep.subr.mxu0 %v7127
  %8575 = vmatpush1.msra.mxu0 %v7126
  %8576 = vmatprep.subr.mxu0 %v7134
  %8577 = vmatpush1.msra.mxu0 %v7133
  %8578 = vmatprep.subr.mxu0 %v7141
  %8579 = vmatpush1.msra.mxu0 %v7140
  %8580 = vmatprep.subr.mxu0 %v7148
  %8581 = vmatpush1.msra.mxu0 %v7147
  %8582 = vmatprep.subr.mxu0 %v7155
  %8583 = vmatpush1.msra.mxu0 %v7154
  %8584 = vmatprep.subr.mxu0 %v7162
  %8585 = vmatpush1.msra.mxu0 %v7161
  %8586 = vmatprep.subr.mxu0 %v7169
  %8587 = vmatpush1.msra.mxu0 %v7168
  %8588 = vmatprep.subr.mxu0 %v7176
  %8589 = vmatpush1.msra.mxu0 %v7175
  %8590 = vmatprep.subr.mxu0 %v7183
  %8591 = vmatpush1.msra.mxu0 %v7182
  %8592 = vmatprep.subr.mxu0 %v7190
  %8593 = vmatpush1.msra.mxu0 %v7189
  %8594 = vmatprep.subr.mxu0 %v7197
  %8595 = vmatpush1.msra.mxu0 %v7196
  %8596 = vmatprep.subr.mxu0 %v7204
  %8597 = vmatpush1.msra.mxu0 %v7203
  %8598 = vmatprep.subr.mxu0 %v7211
  %8599 = vmatpush1.msra.mxu0 %v7210
  %8600 = vmatprep.subr.mxu0 %v7218
  %8601 = vmatpush1.msra.mxu0 %v7217
  %8602 = vmatprep.subr.mxu0 %v7225
  %8603 = vmatpush1.msra.mxu0 %v7224
  %8604 = vmatprep.subr.mxu0 %v7232
  %8605 = vmatpush1.msra.mxu0 %v7231
  %8606 = vmatprep.subr.mxu0 %v7239
  %8607 = vmatpush1.msra.mxu0 %v7238
  %8608 = vmatprep.subr.mxu0 %v7246
  %8609 = vmatpush1.msra.mxu0 %v7245
  %8610 = vmatprep.subr.mxu0 %v7253
  %8611 = vmatpush1.msra.mxu0 %v7252
  %8612 = vmatprep.subr.mxu0 %v7260
  %8613 = vmatpush1.msra.mxu0 %v7259
  %8614 = vmatprep.subr.mxu0 %v7267
  %8615 = vmatpush1.msra.mxu0 %v7266
  %8616 = vmatprep.subr.mxu0 %v7274
  %8617 = vmatpush1.msra.mxu0 %v7273
  %8618 = vmatprep.subr.mxu0 %v7281
  %8619 = vmatpush1.msra.mxu0 %v7280
  %8620 = vmatprep.subr.mxu0 %v7288
  %8621 = vmatpush1.msra.mxu0 %v7287
  %8622 = vmatprep.subr.mxu0 %v7295
  %8623 = vmatpush1.msra.mxu0 %v7294
  %8624 = vmatprep.subr.mxu0 %v7302
  %8625 = vmatpush1.msra.mxu0 %v7301
  %8626 = vmatprep.subr.mxu0 %v7309
  %8627 = vmatpush1.msra.mxu0 %v7308
  %8628 = vmatprep.subr.mxu0 %v7316
  %8629 = vmatpush1.msra.mxu0 %v7315
  %8630 = vmatprep.subr.mxu0 %v7323
  %8631 = vmatpush1.msra.mxu0 %v7322
  %8632 = vmatprep.mubr.f32.mxu0 %v6869
  %8633 = vmatmul.mubr.f32.gmra.mrb[0].mxu0 %v6868
  %v8634 = vpop.f32.mrb[0].mxu0
  %v8635 = vadd.f32 %v8564, %v8634
  %v8636 = vpop.f32.mrb[0].mxu0
  %v8637 = vadd.f32 %v8566, %v8636
  %8638 = vdwg.mxu0
  %8639 = vmatprep.subr.mxu0 %v7330
  %8640 = vmatpush1.msra.mxu0 %v7329
  %8641 = vmatprep.subr.mxu0 %v7337
  %8642 = vmatpush1.msra.mxu0 %v7336
  %8643 = vmatprep.subr.mxu0 %v7344
  %8644 = vmatpush1.msra.mxu0 %v7343
  %8645 = vmatprep.subr.mxu0 %v7351
  %8646 = vmatpush1.msra.mxu0 %v7350
  %8647 = vmatprep.subr.mxu0 %v7358
  %8648 = vmatpush1.msra.mxu0 %v7357
  %8649 = vmatprep.subr.mxu0 %v7365
  %8650 = vmatpush1.msra.mxu0 %v7364
  %8651 = vmatprep.subr.mxu0 %v7372
  %8652 = vmatpush1.msra.mxu0 %v7371
  %8653 = vmatprep.subr.mxu0 %v7379
  %8654 = vmatpush1.msra.mxu0 %v7378
  %8655 = vmatprep.subr.mxu0 %v7386
  %8656 = vmatpush1.msra.mxu0 %v7385
  %8657 = vmatprep.subr.mxu0 %v7393
  %8658 = vmatpush1.msra.mxu0 %v7392
  %8659 = vmatprep.subr.mxu0 %v7400
  %8660 = vmatpush1.msra.mxu0 %v7399
  %8661 = vmatprep.subr.mxu0 %v7407
  %8662 = vmatpush1.msra.mxu0 %v7406
  %8663 = vmatprep.subr.mxu0 %v7414
  %8664 = vmatpush1.msra.mxu0 %v7413
  %8665 = vmatprep.subr.mxu0 %v7421
  %8666 = vmatpush1.msra.mxu0 %v7420
  %8667 = vmatprep.subr.mxu0 %v7428
  %8668 = vmatpush1.msra.mxu0 %v7427
  %8669 = vmatprep.subr.mxu0 %v7435
  %8670 = vmatpush1.msra.mxu0 %v7434
  %8671 = vmatprep.subr.mxu0 %v7442
  %8672 = vmatpush1.msra.mxu0 %v7441
  %8673 = vmatprep.subr.mxu0 %v7449
  %8674 = vmatpush1.msra.mxu0 %v7448
  %8675 = vmatprep.subr.mxu0 %v7456
  %8676 = vmatpush1.msra.mxu0 %v7455
  %8677 = vmatprep.subr.mxu0 %v7463
  %8678 = vmatpush1.msra.mxu0 %v7462
  %8679 = vmatprep.subr.mxu0 %v7470
  %8680 = vmatpush1.msra.mxu0 %v7469
  %8681 = vmatprep.subr.mxu0 %v7477
  %8682 = vmatpush1.msra.mxu0 %v7476
  %8683 = vmatprep.subr.mxu0 %v7484
  %8684 = vmatpush1.msra.mxu0 %v7483
  %8685 = vmatprep.subr.mxu0 %v7491
  %8686 = vmatpush1.msra.mxu0 %v7490
  %8687 = vmatprep.subr.mxu0 %v7498
  %8688 = vmatpush1.msra.mxu0 %v7497
  %8689 = vmatprep.subr.mxu0 %v7505
  %8690 = vmatpush1.msra.mxu0 %v7504
  %8691 = vmatprep.subr.mxu0 %v7512
  %8692 = vmatpush1.msra.mxu0 %v7511
  %8693 = vmatprep.subr.mxu0 %v7519
  %8694 = vmatpush1.msra.mxu0 %v7518
  %8695 = vmatprep.subr.mxu0 %v7526
  %8696 = vmatpush1.msra.mxu0 %v7525
  %8697 = vmatprep.subr.mxu0 %v7533
  %8698 = vmatpush1.msra.mxu0 %v7532
  %8699 = vmatprep.subr.mxu0 %v7540
  %8700 = vmatpush1.msra.mxu0 %v7539
  %8701 = vmatprep.subr.mxu0 %v7547
  %8702 = vmatpush1.msra.mxu0 %v7546
  %8703 = vmatprep.mubr.f32.mxu0 %v6871
  %8704 = vmatmul.mubr.f32.gmra.mrb[0].mxu0 %v6870
  %v8705 = vpop.f32.mrb[0].mxu0
  %v8706 = vadd.f32 %v8635, %v8705
  %v8707 = vpop.f32.mrb[0].mxu0
  %v8708 = vadd.f32 %v8637, %v8707
  %8709 = vdwg.mxu0
  %8710 = vmatprep.subr.mxu0 %v7554
  %8711 = vmatpush1.msra.mxu0 %v7553
  %8712 = vmatprep.subr.mxu0 %v7561
  %8713 = vmatpush1.msra.mxu0 %v7560
  %8714 = vmatprep.subr.mxu0 %v7568
  %8715 = vmatpush1.msra.mxu0 %v7567
  %8716 = vmatprep.subr.mxu0 %v7575
  %8717 = vmatpush1.msra.mxu0 %v7574
  %8718 = vmatprep.subr.mxu0 %v7582
  %8719 = vmatpush1.msra.mxu0 %v7581
  %8720 = vmatprep.subr.mxu0 %v7589
  %8721 = vmatpush1.msra.mxu0 %v7588
  %8722 = vmatprep.subr.mxu0 %v7596
  %8723 = vmatpush1.msra.mxu0 %v7595
  %8724 = vmatprep.subr.mxu0 %v7603
  %8725 = vmatpush1.msra.mxu0 %v7602
  %8726 = vmatprep.subr.mxu0 %v7610
  %8727 = vmatpush1.msra.mxu0 %v7609
  %8728 = vmatprep.subr.mxu0 %v7617
  %8729 = vmatpush1.msra.mxu0 %v7616
  %8730 = vmatprep.subr.mxu0 %v7624
  %8731 = vmatpush1.msra.mxu0 %v7623
  %8732 = vmatprep.subr.mxu0 %v7631
  %8733 = vmatpush1.msra.mxu0 %v7630
  %8734 = vmatprep.subr.mxu0 %v7638
  %8735 = vmatpush1.msra.mxu0 %v7637
  %8736 = vmatprep.subr.mxu0 %v7645
  %8737 = vmatpush1.msra.mxu0 %v7644
  %8738 = vmatprep.subr.mxu0 %v7652
  %8739 = vmatpush1.msra.mxu0 %v7651
  %8740 = vmatprep.subr.mxu0 %v7659
  %8741 = vmatpush1.msra.mxu0 %v7658
  %8742 = vmatprep.subr.mxu0 %v7666
  %8743 = vmatpush1.msra.mxu0 %v7665
  %8744 = vmatprep.subr.mxu0 %v7673
  %8745 = vmatpush1.msra.mxu0 %v7672
  %8746 = vmatprep.subr.mxu0 %v7680
  %8747 = vmatpush1.msra.mxu0 %v7679
  %8748 = vmatprep.subr.mxu0 %v7687
  %8749 = vmatpush1.msra.mxu0 %v7686
  %8750 = vmatprep.subr.mxu0 %v7694
  %8751 = vmatpush1.msra.mxu0 %v7693
  %8752 = vmatprep.subr.mxu0 %v7701
  %8753 = vmatpush1.msra.mxu0 %v7700
  %8754 = vmatprep.subr.mxu0 %v7708
  %8755 = vmatpush1.msra.mxu0 %v7707
  %8756 = vmatprep.subr.mxu0 %v7715
  %8757 = vmatpush1.msra.mxu0 %v7714
  %8758 = vmatprep.subr.mxu0 %v7722
  %8759 = vmatpush1.msra.mxu0 %v7721
  %8760 = vmatprep.subr.mxu0 %v7729
  %8761 = vmatpush1.msra.mxu0 %v7728
  %8762 = vmatprep.subr.mxu0 %v7736
  %8763 = vmatpush1.msra.mxu0 %v7735
  %8764 = vmatprep.subr.mxu0 %v7743
  %8765 = vmatpush1.msra.mxu0 %v7742
  %8766 = vmatprep.subr.mxu0 %v7750
  %8767 = vmatpush1.msra.mxu0 %v7749
  %8768 = vmatprep.subr.mxu0 %v7757
  %8769 = vmatpush1.msra.mxu0 %v7756
  %8770 = vmatprep.subr.mxu0 %v7764
  %8771 = vmatpush1.msra.mxu0 %v7763
  %8772 = vmatprep.subr.mxu0 %v7771
  %8773 = vmatpush1.msra.mxu0 %v7770
  %8774 = vmatprep.mubr.f32.mxu0 %v6873
  %8775 = vmatmul.mubr.f32.gmra.mrb[0].mxu0 %v6872
  %v8776 = vpop.f32.mrb[0].mxu0
  %v8777 = vadd.f32 %v8706, %v8776
  %v8778 = vpop.f32.mrb[0].mxu0
  %v8779 = vadd.f32 %v8708, %v8778
  %8780 = vdwg.mxu0
  %8781 = vmatprep.subr.mxu0 %v7778
  %8782 = vmatpush1.msra.mxu0 %v7777
  %8783 = vmatprep.subr.mxu0 %v7785
  %8784 = vmatpush1.msra.mxu0 %v7784
  %8785 = vmatprep.subr.mxu0 %v7792
  %8786 = vmatpush1.msra.mxu0 %v7791
  %8787 = vmatprep.subr.mxu0 %v7799
  %8788 = vmatpush1.msra.mxu0 %v7798
  %8789 = vmatprep.subr.mxu0 %v7806
  %8790 = vmatpush1.msra.mxu0 %v7805
  %8791 = vmatprep.subr.mxu0 %v7813
  %8792 = vmatpush1.msra.mxu0 %v7812
  %8793 = vmatprep.subr.mxu0 %v7820
  %8794 = vmatpush1.msra.mxu0 %v7819
  %8795 = vmatprep.subr.mxu0 %v7827
  %8796 = vmatpush1.msra.mxu0 %v7826
  %8797 = vmatprep.subr.mxu0 %v7834
  %8798 = vmatpush1.msra.mxu0 %v7833
  %8799 = vmatprep.subr.mxu0 %v7841
  %8800 = vmatpush1.msra.mxu0 %v7840
  %8801 = vmatprep.subr.mxu0 %v7848
  %8802 = vmatpush1.msra.mxu0 %v7847
  %8803 = vmatprep.subr.mxu0 %v7855
  %8804 = vmatpush1.msra.mxu0 %v7854
  %8805 = vmatprep.subr.mxu0 %v7862
  %8806 = vmatpush1.msra.mxu0 %v7861
  %8807 = vmatprep.subr.mxu0 %v7869
  %8808 = vmatpush1.msra.mxu0 %v7868
  %8809 = vmatprep.subr.mxu0 %v7876
  %8810 = vmatpush1.msra.mxu0 %v7875
  %8811 = vmatprep.subr.mxu0 %v7883
  %8812 = vmatpush1.msra.mxu0 %v7882
  %8813 = vmatprep.subr.mxu0 %v7890
  %8814 = vmatpush1.msra.mxu0 %v7889
  %8815 = vmatprep.subr.mxu0 %v7897
  %8816 = vmatpush1.msra.mxu0 %v7896
  %8817 = vmatprep.subr.mxu0 %v7904
  %8818 = vmatpush1.msra.mxu0 %v7903
  %8819 = vmatprep.subr.mxu0 %v7911
  %8820 = vmatpush1.msra.mxu0 %v7910
  %8821 = vmatprep.subr.mxu0 %v7918
  %8822 = vmatpush1.msra.mxu0 %v7917
  %8823 = vmatprep.subr.mxu0 %v7925
  %8824 = vmatpush1.msra.mxu0 %v7924
  %8825 = vmatprep.subr.mxu0 %v7932
  %8826 = vmatpush1.msra.mxu0 %v7931
  %8827 = vmatprep.subr.mxu0 %v7939
  %8828 = vmatpush1.msra.mxu0 %v7938
  %8829 = vmatprep.subr.mxu0 %v7946
  %8830 = vmatpush1.msra.mxu0 %v7945
  %8831 = vmatprep.subr.mxu0 %v7953
  %8832 = vmatpush1.msra.mxu0 %v7952
  %8833 = vmatprep.subr.mxu0 %v7960
  %8834 = vmatpush1.msra.mxu0 %v7959
  %8835 = vmatprep.subr.mxu0 %v7967
  %8836 = vmatpush1.msra.mxu0 %v7966
  %8837 = vmatprep.subr.mxu0 %v7974
  %8838 = vmatpush1.msra.mxu0 %v7973
  %8839 = vmatprep.subr.mxu0 %v7981
  %8840 = vmatpush1.msra.mxu0 %v7980
  %8841 = vmatprep.subr.mxu0 %v7988
  %8842 = vmatpush1.msra.mxu0 %v7987
  %8843 = vmatprep.subr.mxu0 %v7995
  %8844 = vmatpush1.msra.mxu0 %v7994
  %8845 = vmatprep.mubr.f32.mxu0 %v6875
  %8846 = vmatmul.mubr.f32.gmra.mrb[0].mxu0 %v6874
  %v8847 = vpop.f32.mrb[0].mxu0
  %v8848 = vadd.f32 %v8777, %v8847
  %v8849 = vpop.f32.mrb[0].mxu0
  %v8850 = vadd.f32 %v8779, %v8849
  %8851 = vdwg.mxu0
  %8852 = vmatprep.subr.mxu0 %v8002
  %8853 = vmatpush1.msra.mxu0 %v8001
  %8854 = vmatprep.subr.mxu0 %v8009
  %8855 = vmatpush1.msra.mxu0 %v8008
  %8856 = vmatprep.subr.mxu0 %v8016
  %8857 = vmatpush1.msra.mxu0 %v8015
  %8858 = vmatprep.subr.mxu0 %v8023
  %8859 = vmatpush1.msra.mxu0 %v8022
  %8860 = vmatprep.subr.mxu0 %v8030
  %8861 = vmatpush1.msra.mxu0 %v8029
  %8862 = vmatprep.subr.mxu0 %v8037
  %8863 = vmatpush1.msra.mxu0 %v8036
  %8864 = vmatprep.subr.mxu0 %v8044
  %8865 = vmatpush1.msra.mxu0 %v8043
  %8866 = vmatprep.subr.mxu0 %v8051
  %8867 = vmatpush1.msra.mxu0 %v8050
  %8868 = vmatprep.subr.mxu0 %v8058
  %8869 = vmatpush1.msra.mxu0 %v8057
  %8870 = vmatprep.subr.mxu0 %v8065
  %8871 = vmatpush1.msra.mxu0 %v8064
  %8872 = vmatprep.subr.mxu0 %v8072
  %8873 = vmatpush1.msra.mxu0 %v8071
  %8874 = vmatprep.subr.mxu0 %v8079
  %8875 = vmatpush1.msra.mxu0 %v8078
  %8876 = vmatprep.subr.mxu0 %v8086
  %8877 = vmatpush1.msra.mxu0 %v8085
  %8878 = vmatprep.subr.mxu0 %v8093
  %8879 = vmatpush1.msra.mxu0 %v8092
  %8880 = vmatprep.subr.mxu0 %v8100
  %8881 = vmatpush1.msra.mxu0 %v8099
  %8882 = vmatprep.subr.mxu0 %v8107
  %8883 = vmatpush1.msra.mxu0 %v8106
  %8884 = vmatprep.subr.mxu0 %v8114
  %8885 = vmatpush1.msra.mxu0 %v8113
  %8886 = vmatprep.subr.mxu0 %v8121
  %8887 = vmatpush1.msra.mxu0 %v8120
  %8888 = vmatprep.subr.mxu0 %v8128
  %8889 = vmatpush1.msra.mxu0 %v8127
  %8890 = vmatprep.subr.mxu0 %v8135
  %8891 = vmatpush1.msra.mxu0 %v8134
  %8892 = vmatprep.subr.mxu0 %v8142
  %8893 = vmatpush1.msra.mxu0 %v8141
  %8894 = vmatprep.subr.mxu0 %v8149
  %8895 = vmatpush1.msra.mxu0 %v8148
  %8896 = vmatprep.subr.mxu0 %v8156
  %8897 = vmatpush1.msra.mxu0 %v8155
  %8898 = vmatprep.subr.mxu0 %v8163
  %8899 = vmatpush1.msra.mxu0 %v8162
  %8900 = vmatprep.subr.mxu0 %v8170
  %8901 = vmatpush1.msra.mxu0 %v8169
  %8902 = vmatprep.subr.mxu0 %v8177
  %8903 = vmatpush1.msra.mxu0 %v8176
  %8904 = vmatprep.subr.mxu0 %v8184
  %8905 = vmatpush1.msra.mxu0 %v8183
  %8906 = vmatprep.subr.mxu0 %v8191
  %8907 = vmatpush1.msra.mxu0 %v8190
  %8908 = vmatprep.subr.mxu0 %v8198
  %8909 = vmatpush1.msra.mxu0 %v8197
  %8910 = vmatprep.subr.mxu0 %v8205
  %8911 = vmatpush1.msra.mxu0 %v8204
  %8912 = vmatprep.subr.mxu0 %v8212
  %8913 = vmatpush1.msra.mxu0 %v8211
  %8914 = vmatprep.subr.mxu0 %v8219
  %8915 = vmatpush1.msra.mxu0 %v8218
  %8916 = vmatprep.mubr.f32.mxu0 %v6877
  %8917 = vmatmul.mubr.f32.gmra.mrb[0].mxu0 %v6876
  %v8918 = vpop.f32.mrb[0].mxu0
  %v8919 = vadd.f32 %v8848, %v8918
  %v8920 = vpop.f32.mrb[0].mxu0
  %v8921 = vadd.f32 %v8850, %v8920
  %8922 = vdwg.mxu0
  %8923 = vmatprep.subr.mxu0 %v8226
  %8924 = vmatpush1.msra.mxu0 %v8225
  %8925 = vmatprep.subr.mxu0 %v8233
  %8926 = vmatpush1.msra.mxu0 %v8232
  %8927 = vmatprep.subr.mxu0 %v8240
  %8928 = vmatpush1.msra.mxu0 %v8239
  %8929 = vmatprep.subr.mxu0 %v8247
  %8930 = vmatpush1.msra.mxu0 %v8246
  %8931 = vmatprep.subr.mxu0 %v8254
  %8932 = vmatpush1.msra.mxu0 %v8253
  %8933 = vmatprep.subr.mxu0 %v8261
  %8934 = vmatpush1.msra.mxu0 %v8260
  %8935 = vmatprep.subr.mxu0 %v8268
  %8936 = vmatpush1.msra.mxu0 %v8267
  %8937 = vmatprep.subr.mxu0 %v8275
  %8938 = vmatpush1.msra.mxu0 %v8274
  %8939 = vmatprep.subr.mxu0 %v8282
  %8940 = vmatpush1.msra.mxu0 %v8281
  %8941 = vmatprep.subr.mxu0 %v8289
  %8942 = vmatpush1.msra.mxu0 %v8288
  %8943 = vmatprep.subr.mxu0 %v8296
  %8944 = vmatpush1.msra.mxu0 %v8295
  %8945 = vmatprep.subr.mxu0 %v8303
  %8946 = vmatpush1.msra.mxu0 %v8302
  %8947 = vmatprep.subr.mxu0 %v8310
  %8948 = vmatpush1.msra.mxu0 %v8309
  %8949 = vmatprep.subr.mxu0 %v8317
  %8950 = vmatpush1.msra.mxu0 %v8316
  %8951 = vmatprep.subr.mxu0 %v8324
  %8952 = vmatpush1.msra.mxu0 %v8323
  %8953 = vmatprep.subr.mxu0 %v8331
  %8954 = vmatpush1.msra.mxu0 %v8330
  %8955 = vmatprep.subr.mxu0 %v8338
  %8956 = vmatpush1.msra.mxu0 %v8337
  %8957 = vmatprep.subr.mxu0 %v8345
  %8958 = vmatpush1.msra.mxu0 %v8344
  %8959 = vmatprep.subr.mxu0 %v8352
  %8960 = vmatpush1.msra.mxu0 %v8351
  %8961 = vmatprep.subr.mxu0 %v8359
  %8962 = vmatpush1.msra.mxu0 %v8358
  %8963 = vmatprep.subr.mxu0 %v8366
  %8964 = vmatpush1.msra.mxu0 %v8365
  %8965 = vmatprep.subr.mxu0 %v8373
  %8966 = vmatpush1.msra.mxu0 %v8372
  %8967 = vmatprep.subr.mxu0 %v8380
  %8968 = vmatpush1.msra.mxu0 %v8379
  %8969 = vmatprep.subr.mxu0 %v8387
  %8970 = vmatpush1.msra.mxu0 %v8386
  %8971 = vmatprep.subr.mxu0 %v8394
  %8972 = vmatpush1.msra.mxu0 %v8393
  %8973 = vmatprep.subr.mxu0 %v8401
  %8974 = vmatpush1.msra.mxu0 %v8400
  %8975 = vmatprep.subr.mxu0 %v8408
  %8976 = vmatpush1.msra.mxu0 %v8407
  %8977 = vmatprep.subr.mxu0 %v8415
  %8978 = vmatpush1.msra.mxu0 %v8414
  %8979 = vmatprep.subr.mxu0 %v8422
  %8980 = vmatpush1.msra.mxu0 %v8421
  %8981 = vmatprep.subr.mxu0 %v8429
  %8982 = vmatpush1.msra.mxu0 %v8428
  %8983 = vmatprep.subr.mxu0 %v8436
  %8984 = vmatpush1.msra.mxu0 %v8435
  %8985 = vmatprep.subr.mxu0 %v8443
  %8986 = vmatpush1.msra.mxu0 %v8442
  %8987 = vmatprep.mubr.f32.mxu0 %v6879
  %8988 = vmatmul.mubr.f32.gmra.mrb[0].mxu0 %v6878
  %v8989 = vpop.f32.mrb[0].mxu0
  %v8990 = vadd.f32 %v8919, %v8989
  %v8991 = vpop.f32.mrb[0].mxu0
  %v8992 = vadd.f32 %v8921, %v8991
  %8993 = vdwg.mxu0
  %8994 = vmatprep.subr.mxu0 %v8450
  %8995 = vmatpush1.msra.mxu0 %v8449
  %8996 = vmatprep.subr.mxu0 0.0
  %8997 = vmatpush1.msra.mxu0 0.0
  %8998 = vmatprep.subr.mxu0 0.0
  %8999 = vmatpush1.msra.mxu0 0.0
  %9000 = vmatprep.subr.mxu0 0.0
  %9001 = vmatpush1.msra.mxu0 0.0
  %9002 = vmatprep.subr.mxu0 0.0
  %9003 = vmatpush1.msra.mxu0 0.0
  %9004 = vmatprep.subr.mxu0 0.0
  %9005 = vmatpush1.msra.mxu0 0.0
  %9006 = vmatprep.subr.mxu0 0.0
  %9007 = vmatpush1.msra.mxu0 0.0
  %9008 = vmatprep.subr.mxu0 0.0
  %9009 = vmatpush1.msra.mxu0 0.0
  %9010 = vmatprep.subr.mxu0 0.0
  %9011 = vmatpush1.msra.mxu0 0.0
  %9012 = vmatprep.subr.mxu0 0.0
  %9013 = vmatpush1.msra.mxu0 0.0
  %9014 = vmatprep.subr.mxu0 0.0
  %9015 = vmatpush1.msra.mxu0 0.0
  %9016 = vmatprep.subr.mxu0 0.0
  %9017 = vmatpush1.msra.mxu0 0.0
  %9018 = vmatprep.subr.mxu0 0.0
  %9019 = vmatpush1.msra.mxu0 0.0
  %9020 = vmatprep.subr.mxu0 0.0
  %9021 = vmatpush1.msra.mxu0 0.0
  %9022 = vmatprep.subr.mxu0 0.0
  %9023 = vmatpush1.msra.mxu0 0.0
  %9024 = vmatprep.subr.mxu0 0.0
  %9025 = vmatpush1.msra.mxu0 0.0
  %9026 = vmatprep.subr.mxu0 0.0
  %9027 = vmatpush1.msra.mxu0 0.0
  %9028 = vmatprep.subr.mxu0 0.0
  %9029 = vmatpush1.msra.mxu0 0.0
  %9030 = vmatprep.subr.mxu0 0.0
  %9031 = vmatpush1.msra.mxu0 0.0
  %9032 = vmatprep.subr.mxu0 0.0
  %9033 = vmatpush1.msra.mxu0 0.0
  %9034 = vmatprep.subr.mxu0 0.0
  %9035 = vmatpush1.msra.mxu0 0.0
  %9036 = vmatprep.subr.mxu0 0.0
  %9037 = vmatpush1.msra.mxu0 0.0
  %9038 = vmatprep.subr.mxu0 0.0
  %9039 = vmatpush1.msra.mxu0 0.0
  %9040 = vmatprep.subr.mxu0 0.0
  %9041 = vmatpush1.msra.mxu0 0.0
  %9042 = vmatprep.subr.mxu0 0.0
  %9043 = vmatpush1.msra.mxu0 0.0
  %9044 = vmatprep.subr.mxu0 0.0
  %9045 = vmatpush1.msra.mxu0 0.0
  %9046 = vmatprep.subr.mxu0 0.0
  %9047 = vmatpush1.msra.mxu0 0.0
  %9048 = vmatprep.subr.mxu0 0.0
  %9049 = vmatpush1.msra.mxu0 0.0
  %9050 = vmatprep.subr.mxu0 0.0
  %9051 = vmatpush1.msra.mxu0 0.0
  %9052 = vmatprep.subr.mxu0 0.0
  %9053 = vmatpush1.msra.mxu0 0.0
  %9054 = vmatprep.subr.mxu0 0.0
  %9055 = vmatpush1.msra.mxu0 0.0
  %9056 = vmatprep.subr.mxu0 0.0
  %9057 = vmatpush1.msra.mxu0 0.0
  %9058 = vmatprep.mubr.f32.mxu0 0.0
  %9059 = vmatmul.mubr.f32.gmra.mrb[0].mxu0 %v8495
  %v9060 = vpop.f32.mrb[0].mxu0
  %v9061 = vadd.f32 %v8990, %v9060
  %v9062 = vpop.f32.mrb[0].mxu0
  %v9063 = vadd.f32 %v8992, %v9062
  %9064 = vdwg.mxu0
  %9065 = vmatprep.subr.mxu0 %v6884
  %9066 = vmatpush1.msra.mxu0 %v6883
  %9067 = vmatprep.subr.mxu0 %v6891
  %9068 = vmatpush1.msra.mxu0 %v6890
  %9069 = vmatprep.subr.mxu0 %v6898
  %9070 = vmatpush1.msra.mxu0 %v6897
  %9071 = vmatprep.subr.mxu0 %v6905
  %9072 = vmatpush1.msra.mxu0 %v6904
  %9073 = vmatprep.subr.mxu0 %v6912
  %9074 = vmatpush1.msra.mxu0 %v6911
  %9075 = vmatprep.subr.mxu0 %v6919
  %9076 = vmatpush1.msra.mxu0 %v6918
  %9077 = vmatprep.subr.mxu0 %v6926
  %9078 = vmatpush1.msra.mxu0 %v6925
  %9079 = vmatprep.subr.mxu0 %v6933
  %9080 = vmatpush1.msra.mxu0 %v6932
  %9081 = vmatprep.subr.mxu0 %v6940
  %9082 = vmatpush1.msra.mxu0 %v6939
  %9083 = vmatprep.subr.mxu0 %v6947
  %9084 = vmatpush1.msra.mxu0 %v6946
  %9085 = vmatprep.subr.mxu0 %v6954
  %9086 = vmatpush1.msra.mxu0 %v6953
  %9087 = vmatprep.subr.mxu0 %v6961
  %9088 = vmatpush1.msra.mxu0 %v6960
  %9089 = vmatprep.subr.mxu0 %v6968
  %9090 = vmatpush1.msra.mxu0 %v6967
  %9091 = vmatprep.subr.mxu0 %v6975
  %9092 = vmatpush1.msra.mxu0 %v6974
  %9093 = vmatprep.subr.mxu0 %v6982
  %9094 = vmatpush1.msra.mxu0 %v6981
  %9095 = vmatprep.subr.mxu0 %v6989
  %9096 = vmatpush1.msra.mxu0 %v6988
  %9097 = vmatprep.subr.mxu0 %v6996
  %9098 = vmatpush1.msra.mxu0 %v6995
  %9099 = vmatprep.subr.mxu0 %v7003
  %9100 = vmatpush1.msra.mxu0 %v7002
  %9101 = vmatprep.subr.mxu0 %v7010
  %9102 = vmatpush1.msra.mxu0 %v7009
  %9103 = vmatprep.subr.mxu0 %v7017
  %9104 = vmatpush1.msra.mxu0 %v7016
  %9105 = vmatprep.subr.mxu0 %v7024
  %9106 = vmatpush1.msra.mxu0 %v7023
  %9107 = vmatprep.subr.mxu0 %v7031
  %9108 = vmatpush1.msra.mxu0 %v7030
  %9109 = vmatprep.subr.mxu0 %v7038
  %9110 = vmatpush1.msra.mxu0 %v7037
  %9111 = vmatprep.subr.mxu0 %v7045
  %9112 = vmatpush1.msra.mxu0 %v7044
  %9113 = vmatprep.subr.mxu0 %v7052
  %9114 = vmatpush1.msra.mxu0 %v7051
  %9115 = vmatprep.subr.mxu0 %v7059
  %9116 = vmatpush1.msra.mxu0 %v7058
  %9117 = vmatprep.subr.mxu0 %v7066
  %9118 = vmatpush1.msra.mxu0 %v7065
  %9119 = vmatprep.subr.mxu0 %v7073
  %9120 = vmatpush1.msra.mxu0 %v7072
  %9121 = vmatprep.subr.mxu0 %v7080
  %9122 = vmatpush1.msra.mxu0 %v7079
  %9123 = vmatprep.subr.mxu0 %v7087
  %9124 = vmatpush1.msra.mxu0 %v7086
  %9125 = vmatprep.subr.mxu0 %v7094
  %9126 = vmatpush1.msra.mxu0 %v7093
  %9127 = vmatprep.subr.mxu0 %v7101
  %9128 = vmatpush1.msra.mxu0 %v7100
  %9129 = vmatprep.mubr.f32.mxu0 %v6867
  %9130 = vmatmul.mubr.f32.gmra.mrb[0].mxu0 %v6866
  %v9131 = vpop.f32.mrb[0].mxu0
  %v9132 = vadd.f32 %v8469, %v9131
  %v9133 = vpop.f32.mrb[0].mxu0
  %v9134 = vadd.f32 %v8473, %v9133
  %9135 = vdwg.mxu0
  %9136 = vmatprep.subr.mxu0 %v7108
  %9137 = vmatpush1.msra.mxu0 %v7107
  %9138 = vmatprep.subr.mxu0 %v7115
  %9139 = vmatpush1.msra.mxu0 %v7114
  %9140 = vmatprep.subr.mxu0 %v7122
  %9141 = vmatpush1.msra.mxu0 %v7121
  %9142 = vmatprep.subr.mxu0 %v7129
  %9143 = vmatpush1.msra.mxu0 %v7128
  %9144 = vmatprep.subr.mxu0 %v7136
  %9145 = vmatpush1.msra.mxu0 %v7135
  %9146 = vmatprep.subr.mxu0 %v7143
  %9147 = vmatpush1.msra.mxu0 %v7142
  %9148 = vmatprep.subr.mxu0 %v7150
  %9149 = vmatpush1.msra.mxu0 %v7149
  %9150 = vmatprep.subr.mxu0 %v7157
  %9151 = vmatpush1.msra.mxu0 %v7156
  %9152 = vmatprep.subr.mxu0 %v7164
  %9153 = vmatpush1.msra.mxu0 %v7163
  %9154 = vmatprep.subr.mxu0 %v7171
  %9155 = vmatpush1.msra.mxu0 %v7170
  %9156 = vmatprep.subr.mxu0 %v7178
  %9157 = vmatpush1.msra.mxu0 %v7177
  %9158 = vmatprep.subr.mxu0 %v7185
  %9159 = vmatpush1.msra.mxu0 %v7184
  %9160 = vmatprep.subr.mxu0 %v7192
  %9161 = vmatpush1.msra.mxu0 %v7191
  %9162 = vmatprep.subr.mxu0 %v7199
  %9163 = vmatpush1.msra.mxu0 %v7198
  %9164 = vmatprep.subr.mxu0 %v7206
  %9165 = vmatpush1.msra.mxu0 %v7205
  %9166 = vmatprep.subr.mxu0 %v7213
  %9167 = vmatpush1.msra.mxu0 %v7212
  %9168 = vmatprep.subr.mxu0 %v7220
  %9169 = vmatpush1.msra.mxu0 %v7219
  %9170 = vmatprep.subr.mxu0 %v7227
  %9171 = vmatpush1.msra.mxu0 %v7226
  %9172 = vmatprep.subr.mxu0 %v7234
  %9173 = vmatpush1.msra.mxu0 %v7233
  %9174 = vmatprep.subr.mxu0 %v7241
  %9175 = vmatpush1.msra.mxu0 %v7240
  %9176 = vmatprep.subr.mxu0 %v7248
  %9177 = vmatpush1.msra.mxu0 %v7247
  %9178 = vmatprep.subr.mxu0 %v7255
  %9179 = vmatpush1.msra.mxu0 %v7254
  %9180 = vmatprep.subr.mxu0 %v7262
  %9181 = vmatpush1.msra.mxu0 %v7261
  %9182 = vmatprep.subr.mxu0 %v7269
  %9183 = vmatpush1.msra.mxu0 %v7268
  %9184 = vmatprep.subr.mxu0 %v7276
  %9185 = vmatpush1.msra.mxu0 %v7275
  %9186 = vmatprep.subr.mxu0 %v7283
  %9187 = vmatpush1.msra.mxu0 %v7282
  %9188 = vmatprep.subr.mxu0 %v7290
  %9189 = vmatpush1.msra.mxu0 %v7289
  %9190 = vmatprep.subr.mxu0 %v7297
  %9191 = vmatpush1.msra.mxu0 %v7296
  %9192 = vmatprep.subr.mxu0 %v7304
  %9193 = vmatpush1.msra.mxu0 %v7303
  %9194 = vmatprep.subr.mxu0 %v7311
  %9195 = vmatpush1.msra.mxu0 %v7310
  %9196 = vmatprep.subr.mxu0 %v7318
  %9197 = vmatpush1.msra.mxu0 %v7317
  %9198 = vmatprep.subr.mxu0 %v7325
  %9199 = vmatpush1.msra.mxu0 %v7324
  %9200 = vmatprep.mubr.f32.mxu0 %v6869
  %9201 = vmatmul.mubr.f32.gmra.mrb[0].mxu0 %v6868
  %v9202 = vpop.f32.mrb[0].mxu0
  %v9203 = vadd.f32 %v9132, %v9202
  %v9204 = vpop.f32.mrb[0].mxu0
  %v9205 = vadd.f32 %v9134, %v9204
  %9206 = vdwg.mxu0
  %9207 = vmatprep.subr.mxu0 %v7332
  %9208 = vmatpush1.msra.mxu0 %v7331
  %9209 = vmatprep.subr.mxu0 %v7339
  %9210 = vmatpush1.msra.mxu0 %v7338
  %9211 = vmatprep.subr.mxu0 %v7346
  %9212 = vmatpush1.msra.mxu0 %v7345
  %9213 = vmatprep.subr.mxu0 %v7353
  %9214 = vmatpush1.msra.mxu0 %v7352
  %9215 = vmatprep.subr.mxu0 %v7360
  %9216 = vmatpush1.msra.mxu0 %v7359
  %9217 = vmatprep.subr.mxu0 %v7367
  %9218 = vmatpush1.msra.mxu0 %v7366
  %9219 = vmatprep.subr.mxu0 %v7374
  %9220 = vmatpush1.msra.mxu0 %v7373
  %9221 = vmatprep.subr.mxu0 %v7381
  %9222 = vmatpush1.msra.mxu0 %v7380
  %9223 = vmatprep.subr.mxu0 %v7388
  %9224 = vmatpush1.msra.mxu0 %v7387
  %9225 = vmatprep.subr.mxu0 %v7395
  %9226 = vmatpush1.msra.mxu0 %v7394
  %9227 = vmatprep.subr.mxu0 %v7402
  %9228 = vmatpush1.msra.mxu0 %v7401
  %9229 = vmatprep.subr.mxu0 %v7409
  %9230 = vmatpush1.msra.mxu0 %v7408
  %9231 = vmatprep.subr.mxu0 %v7416
  %9232 = vmatpush1.msra.mxu0 %v7415
  %9233 = vmatprep.subr.mxu0 %v7423
  %9234 = vmatpush1.msra.mxu0 %v7422
  %9235 = vmatprep.subr.mxu0 %v7430
  %9236 = vmatpush1.msra.mxu0 %v7429
  %9237 = vmatprep.subr.mxu0 %v7437
  %9238 = vmatpush1.msra.mxu0 %v7436
  %9239 = vmatprep.subr.mxu0 %v7444
  %9240 = vmatpush1.msra.mxu0 %v7443
  %9241 = vmatprep.subr.mxu0 %v7451
  %9242 = vmatpush1.msra.mxu0 %v7450
  %9243 = vmatprep.subr.mxu0 %v7458
  %9244 = vmatpush1.msra.mxu0 %v7457
  %9245 = vmatprep.subr.mxu0 %v7465
  %9246 = vmatpush1.msra.mxu0 %v7464
  %9247 = vmatprep.subr.mxu0 %v7472
  %9248 = vmatpush1.msra.mxu0 %v7471
  %9249 = vmatprep.subr.mxu0 %v7479
  %9250 = vmatpush1.msra.mxu0 %v7478
  %9251 = vmatprep.subr.mxu0 %v7486
  %9252 = vmatpush1.msra.mxu0 %v7485
  %9253 = vmatprep.subr.mxu0 %v7493
  %9254 = vmatpush1.msra.mxu0 %v7492
  %9255 = vmatprep.subr.mxu0 %v7500
  %9256 = vmatpush1.msra.mxu0 %v7499
  %9257 = vmatprep.subr.mxu0 %v7507
  %9258 = vmatpush1.msra.mxu0 %v7506
  %9259 = vmatprep.subr.mxu0 %v7514
  %9260 = vmatpush1.msra.mxu0 %v7513
  %9261 = vmatprep.subr.mxu0 %v7521
  %9262 = vmatpush1.msra.mxu0 %v7520
  %9263 = vmatprep.subr.mxu0 %v7528
  %9264 = vmatpush1.msra.mxu0 %v7527
  %9265 = vmatprep.subr.mxu0 %v7535
  %9266 = vmatpush1.msra.mxu0 %v7534
  %9267 = vmatprep.subr.mxu0 %v7542
  %9268 = vmatpush1.msra.mxu0 %v7541
  %9269 = vmatprep.subr.mxu0 %v7549
  %9270 = vmatpush1.msra.mxu0 %v7548
  %9271 = vmatprep.mubr.f32.mxu0 %v6871
  %9272 = vmatmul.mubr.f32.gmra.mrb[0].mxu0 %v6870
  %v9273 = vpop.f32.mrb[0].mxu0
  %v9274 = vadd.f32 %v9203, %v9273
  %v9275 = vpop.f32.mrb[0].mxu0
  %v9276 = vadd.f32 %v9205, %v9275
  %9277 = vdwg.mxu0
  %9278 = vmatprep.subr.mxu0 %v7556
  %9279 = vmatpush1.msra.mxu0 %v7555
  %9280 = vmatprep.subr.mxu0 %v7563
  %9281 = vmatpush1.msra.mxu0 %v7562
  %9282 = vmatprep.subr.mxu0 %v7570
  %9283 = vmatpush1.msra.mxu0 %v7569
  %9284 = vmatprep.subr.mxu0 %v7577
  %9285 = vmatpush1.msra.mxu0 %v7576
  %9286 = vmatprep.subr.mxu0 %v7584
  %9287 = vmatpush1.msra.mxu0 %v7583
  %9288 = vmatprep.subr.mxu0 %v7591
  %9289 = vmatpush1.msra.mxu0 %v7590
  %9290 = vmatprep.subr.mxu0 %v7598
  %9291 = vmatpush1.msra.mxu0 %v7597
  %9292 = vmatprep.subr.mxu0 %v7605
  %9293 = vmatpush1.msra.mxu0 %v7604
  %9294 = vmatprep.subr.mxu0 %v7612
  %9295 = vmatpush1.msra.mxu0 %v7611
  %9296 = vmatprep.subr.mxu0 %v7619
  %9297 = vmatpush1.msra.mxu0 %v7618
  %9298 = vmatprep.subr.mxu0 %v7626
  %9299 = vmatpush1.msra.mxu0 %v7625
  %9300 = vmatprep.subr.mxu0 %v7633
  %9301 = vmatpush1.msra.mxu0 %v7632
  %9302 = vmatprep.subr.mxu0 %v7640
  %9303 = vmatpush1.msra.mxu0 %v7639
  %9304 = vmatprep.subr.mxu0 %v7647
  %9305 = vmatpush1.msra.mxu0 %v7646
  %9306 = vmatprep.subr.mxu0 %v7654
  %9307 = vmatpush1.msra.mxu0 %v7653
  %9308 = vmatprep.subr.mxu0 %v7661
  %9309 = vmatpush1.msra.mxu0 %v7660
  %9310 = vmatprep.subr.mxu0 %v7668
  %9311 = vmatpush1.msra.mxu0 %v7667
  %9312 = vmatprep.subr.mxu0 %v7675
  %9313 = vmatpush1.msra.mxu0 %v7674
  %9314 = vmatprep.subr.mxu0 %v7682
  %9315 = vmatpush1.msra.mxu0 %v7681
  %9316 = vmatprep.subr.mxu0 %v7689
  %9317 = vmatpush1.msra.mxu0 %v7688
  %9318 = vmatprep.subr.mxu0 %v7696
  %9319 = vmatpush1.msra.mxu0 %v7695
  %9320 = vmatprep.subr.mxu0 %v7703
  %9321 = vmatpush1.msra.mxu0 %v7702
  %9322 = vmatprep.subr.mxu0 %v7710
  %9323 = vmatpush1.msra.mxu0 %v7709
  %9324 = vmatprep.subr.mxu0 %v7717
  %9325 = vmatpush1.msra.mxu0 %v7716
  %9326 = vmatprep.subr.mxu0 %v7724
  %9327 = vmatpush1.msra.mxu0 %v7723
  %9328 = vmatprep.subr.mxu0 %v7731
  %9329 = vmatpush1.msra.mxu0 %v7730
  %9330 = vmatprep.subr.mxu0 %v7738
  %9331 = vmatpush1.msra.mxu0 %v7737
  %9332 = vmatprep.subr.mxu0 %v7745
  %9333 = vmatpush1.msra.mxu0 %v7744
  %9334 = vmatprep.subr.mxu0 %v7752
  %9335 = vmatpush1.msra.mxu0 %v7751
  %9336 = vmatprep.subr.mxu0 %v7759
  %9337 = vmatpush1.msra.mxu0 %v7758
  %9338 = vmatprep.subr.mxu0 %v7766
  %9339 = vmatpush1.msra.mxu0 %v7765
  %9340 = vmatprep.subr.mxu0 %v7773
  %9341 = vmatpush1.msra.mxu0 %v7772
  %9342 = vmatprep.mubr.f32.mxu0 %v6873
  %9343 = vmatmul.mubr.f32.gmra.mrb[0].mxu0 %v6872
  %v9344 = vpop.f32.mrb[0].mxu0
  %v9345 = vadd.f32 %v9274, %v9344
  %v9346 = vpop.f32.mrb[0].mxu0
  %v9347 = vadd.f32 %v9276, %v9346
  %9348 = vdwg.mxu0
  %9349 = vmatprep.subr.mxu0 %v7780
  %9350 = vmatpush1.msra.mxu0 %v7779
  %9351 = vmatprep.subr.mxu0 %v7787
  %9352 = vmatpush1.msra.mxu0 %v7786
  %9353 = vmatprep.subr.mxu0 %v7794
  %9354 = vmatpush1.msra.mxu0 %v7793
  %9355 = vmatprep.subr.mxu0 %v7801
  %9356 = vmatpush1.msra.mxu0 %v7800
  %9357 = vmatprep.subr.mxu0 %v7808
  %9358 = vmatpush1.msra.mxu0 %v7807
  %9359 = vmatprep.subr.mxu0 %v7815
  %9360 = vmatpush1.msra.mxu0 %v7814
  %9361 = vmatprep.subr.mxu0 %v7822
  %9362 = vmatpush1.msra.mxu0 %v7821
  %9363 = vmatprep.subr.mxu0 %v7829
  %9364 = vmatpush1.msra.mxu0 %v7828
  %9365 = vmatprep.subr.mxu0 %v7836
  %9366 = vmatpush1.msra.mxu0 %v7835
  %9367 = vmatprep.subr.mxu0 %v7843
  %9368 = vmatpush1.msra.mxu0 %v7842
  %9369 = vmatprep.subr.mxu0 %v7850
  %9370 = vmatpush1.msra.mxu0 %v7849
  %9371 = vmatprep.subr.mxu0 %v7857
  %9372 = vmatpush1.msra.mxu0 %v7856
  %9373 = vmatprep.subr.mxu0 %v7864
  %9374 = vmatpush1.msra.mxu0 %v7863
  %9375 = vmatprep.subr.mxu0 %v7871
  %9376 = vmatpush1.msra.mxu0 %v7870
  %9377 = vmatprep.subr.mxu0 %v7878
  %9378 = vmatpush1.msra.mxu0 %v7877
  %9379 = vmatprep.subr.mxu0 %v7885
  %9380 = vmatpush1.msra.mxu0 %v7884
  %9381 = vmatprep.subr.mxu0 %v7892
  %9382 = vmatpush1.msra.mxu0 %v7891
  %9383 = vmatprep.subr.mxu0 %v7899
  %9384 = vmatpush1.msra.mxu0 %v7898
  %9385 = vmatprep.subr.mxu0 %v7906
  %9386 = vmatpush1.msra.mxu0 %v7905
  %9387 = vmatprep.subr.mxu0 %v7913
  %9388 = vmatpush1.msra.mxu0 %v7912
  %9389 = vmatprep.subr.mxu0 %v7920
  %9390 = vmatpush1.msra.mxu0 %v7919
  %9391 = vmatprep.subr.mxu0 %v7927
  %9392 = vmatpush1.msra.mxu0 %v7926
  %9393 = vmatprep.subr.mxu0 %v7934
  %9394 = vmatpush1.msra.mxu0 %v7933
  %9395 = vmatprep.subr.mxu0 %v7941
  %9396 = vmatpush1.msra.mxu0 %v7940
  %9397 = vmatprep.subr.mxu0 %v7948
  %9398 = vmatpush1.msra.mxu0 %v7947
  %9399 = vmatprep.subr.mxu0 %v7955
  %9400 = vmatpush1.msra.mxu0 %v7954
  %9401 = vmatprep.subr.mxu0 %v7962
  %9402 = vmatpush1.msra.mxu0 %v7961
  %9403 = vmatprep.subr.mxu0 %v7969
  %9404 = vmatpush1.msra.mxu0 %v7968
  %9405 = vmatprep.subr.mxu0 %v7976
  %9406 = vmatpush1.msra.mxu0 %v7975
  %9407 = vmatprep.subr.mxu0 %v7983
  %9408 = vmatpush1.msra.mxu0 %v7982
  %9409 = vmatprep.subr.mxu0 %v7990
  %9410 = vmatpush1.msra.mxu0 %v7989
  %9411 = vmatprep.subr.mxu0 %v7997
  %9412 = vmatpush1.msra.mxu0 %v7996
  %9413 = vmatprep.mubr.f32.mxu0 %v6875
  %9414 = vmatmul.mubr.f32.gmra.mrb[0].mxu0 %v6874
  %v9415 = vpop.f32.mrb[0].mxu0
  %v9416 = vadd.f32 %v9345, %v9415
  %v9417 = vpop.f32.mrb[0].mxu0
  %v9418 = vadd.f32 %v9347, %v9417
  %9419 = vdwg.mxu0
  %9420 = vmatprep.subr.mxu0 %v8004
  %9421 = vmatpush1.msra.mxu0 %v8003
  %9422 = vmatprep.subr.mxu0 %v8011
  %9423 = vmatpush1.msra.mxu0 %v8010
  %9424 = vmatprep.subr.mxu0 %v8018
  %9425 = vmatpush1.msra.mxu0 %v8017
  %9426 = vmatprep.subr.mxu0 %v8025
  %9427 = vmatpush1.msra.mxu0 %v8024
  %9428 = vmatprep.subr.mxu0 %v8032
  %9429 = vmatpush1.msra.mxu0 %v8031
  %9430 = vmatprep.subr.mxu0 %v8039
  %9431 = vmatpush1.msra.mxu0 %v8038
  %9432 = vmatprep.subr.mxu0 %v8046
  %9433 = vmatpush1.msra.mxu0 %v8045
  %9434 = vmatprep.subr.mxu0 %v8053
  %9435 = vmatpush1.msra.mxu0 %v8052
  %9436 = vmatprep.subr.mxu0 %v8060
  %9437 = vmatpush1.msra.mxu0 %v8059
  %9438 = vmatprep.subr.mxu0 %v8067
  %9439 = vmatpush1.msra.mxu0 %v8066
  %9440 = vmatprep.subr.mxu0 %v8074
  %9441 = vmatpush1.msra.mxu0 %v8073
  %9442 = vmatprep.subr.mxu0 %v8081
  %9443 = vmatpush1.msra.mxu0 %v8080
  %9444 = vmatprep.subr.mxu0 %v8088
  %9445 = vmatpush1.msra.mxu0 %v8087
  %9446 = vmatprep.subr.mxu0 %v8095
  %9447 = vmatpush1.msra.mxu0 %v8094
  %9448 = vmatprep.subr.mxu0 %v8102
  %9449 = vmatpush1.msra.mxu0 %v8101
  %9450 = vmatprep.subr.mxu0 %v8109
  %9451 = vmatpush1.msra.mxu0 %v8108
  %9452 = vmatprep.subr.mxu0 %v8116
  %9453 = vmatpush1.msra.mxu0 %v8115
  %9454 = vmatprep.subr.mxu0 %v8123
  %9455 = vmatpush1.msra.mxu0 %v8122
  %9456 = vmatprep.subr.mxu0 %v8130
  %9457 = vmatpush1.msra.mxu0 %v8129
  %9458 = vmatprep.subr.mxu0 %v8137
  %9459 = vmatpush1.msra.mxu0 %v8136
  %9460 = vmatprep.subr.mxu0 %v8144
  %9461 = vmatpush1.msra.mxu0 %v8143
  %9462 = vmatprep.subr.mxu0 %v8151
  %9463 = vmatpush1.msra.mxu0 %v8150
  %9464 = vmatprep.subr.mxu0 %v8158
  %9465 = vmatpush1.msra.mxu0 %v8157
  %9466 = vmatprep.subr.mxu0 %v8165
  %9467 = vmatpush1.msra.mxu0 %v8164
  %9468 = vmatprep.subr.mxu0 %v8172
  %9469 = vmatpush1.msra.mxu0 %v8171
  %9470 = vmatprep.subr.mxu0 %v8179
  %9471 = vmatpush1.msra.mxu0 %v8178
  %9472 = vmatprep.subr.mxu0 %v8186
  %9473 = vmatpush1.msra.mxu0 %v8185
  %9474 = vmatprep.subr.mxu0 %v8193
  %9475 = vmatpush1.msra.mxu0 %v8192
  %9476 = vmatprep.subr.mxu0 %v8200
  %9477 = vmatpush1.msra.mxu0 %v8199
  %9478 = vmatprep.subr.mxu0 %v8207
  %9479 = vmatpush1.msra.mxu0 %v8206
  %9480 = vmatprep.subr.mxu0 %v8214
  %9481 = vmatpush1.msra.mxu0 %v8213
  %9482 = vmatprep.subr.mxu0 %v8221
  %9483 = vmatpush1.msra.mxu0 %v8220
  %9484 = vmatprep.mubr.f32.mxu0 %v6877
  %9485 = vmatmul.mubr.f32.gmra.mrb[0].mxu0 %v6876
  %v9486 = vpop.f32.mrb[0].mxu0
  %v9487 = vadd.f32 %v9416, %v9486
  %v9488 = vpop.f32.mrb[0].mxu0
  %v9489 = vadd.f32 %v9418, %v9488
  %9490 = vdwg.mxu0
  %9491 = vmatprep.subr.mxu0 %v8228
  %9492 = vmatpush1.msra.mxu0 %v8227
  %9493 = vmatprep.subr.mxu0 %v8235
  %9494 = vmatpush1.msra.mxu0 %v8234
  %9495 = vmatprep.subr.mxu0 %v8242
  %9496 = vmatpush1.msra.mxu0 %v8241
  %9497 = vmatprep.subr.mxu0 %v8249
  %9498 = vmatpush1.msra.mxu0 %v8248
  %9499 = vmatprep.subr.mxu0 %v8256
  %9500 = vmatpush1.msra.mxu0 %v8255
  %9501 = vmatprep.subr.mxu0 %v8263
  %9502 = vmatpush1.msra.mxu0 %v8262
  %9503 = vmatprep.subr.mxu0 %v8270
  %9504 = vmatpush1.msra.mxu0 %v8269
  %9505 = vmatprep.subr.mxu0 %v8277
  %9506 = vmatpush1.msra.mxu0 %v8276
  %9507 = vmatprep.subr.mxu0 %v8284
  %9508 = vmatpush1.msra.mxu0 %v8283
  %9509 = vmatprep.subr.mxu0 %v8291
  %9510 = vmatpush1.msra.mxu0 %v8290
  %9511 = vmatprep.subr.mxu0 %v8298
  %9512 = vmatpush1.msra.mxu0 %v8297
  %9513 = vmatprep.subr.mxu0 %v8305
  %9514 = vmatpush1.msra.mxu0 %v8304
  %9515 = vmatprep.subr.mxu0 %v8312
  %9516 = vmatpush1.msra.mxu0 %v8311
  %9517 = vmatprep.subr.mxu0 %v8319
  %9518 = vmatpush1.msra.mxu0 %v8318
  %9519 = vmatprep.subr.mxu0 %v8326
  %9520 = vmatpush1.msra.mxu0 %v8325
  %9521 = vmatprep.subr.mxu0 %v8333
  %9522 = vmatpush1.msra.mxu0 %v8332
  %9523 = vmatprep.subr.mxu0 %v8340
  %9524 = vmatpush1.msra.mxu0 %v8339
  %9525 = vmatprep.subr.mxu0 %v8347
  %9526 = vmatpush1.msra.mxu0 %v8346
  %9527 = vmatprep.subr.mxu0 %v8354
  %9528 = vmatpush1.msra.mxu0 %v8353
  %9529 = vmatprep.subr.mxu0 %v8361
  %9530 = vmatpush1.msra.mxu0 %v8360
  %9531 = vmatprep.subr.mxu0 %v8368
  %9532 = vmatpush1.msra.mxu0 %v8367
  %9533 = vmatprep.subr.mxu0 %v8375
  %9534 = vmatpush1.msra.mxu0 %v8374
  %9535 = vmatprep.subr.mxu0 %v8382
  %9536 = vmatpush1.msra.mxu0 %v8381
  %9537 = vmatprep.subr.mxu0 %v8389
  %9538 = vmatpush1.msra.mxu0 %v8388
  %9539 = vmatprep.subr.mxu0 %v8396
  %9540 = vmatpush1.msra.mxu0 %v8395
  %9541 = vmatprep.subr.mxu0 %v8403
  %9542 = vmatpush1.msra.mxu0 %v8402
  %9543 = vmatprep.subr.mxu0 %v8410
  %9544 = vmatpush1.msra.mxu0 %v8409
  %9545 = vmatprep.subr.mxu0 %v8417
  %9546 = vmatpush1.msra.mxu0 %v8416
  %9547 = vmatprep.subr.mxu0 %v8424
  %9548 = vmatpush1.msra.mxu0 %v8423
  %9549 = vmatprep.subr.mxu0 %v8431
  %9550 = vmatpush1.msra.mxu0 %v8430
  %9551 = vmatprep.subr.mxu0 %v8438
  %9552 = vmatpush1.msra.mxu0 %v8437
  %9553 = vmatprep.subr.mxu0 %v8445
  %9554 = vmatpush1.msra.mxu0 %v8444
  %9555 = vmatprep.mubr.f32.mxu0 %v6879
  %9556 = vmatmul.mubr.f32.gmra.mrb[0].mxu0 %v6878
  %v9557 = vpop.f32.mrb[0].mxu0
  %v9558 = vadd.f32 %v9487, %v9557
  %v9559 = vpop.f32.mrb[0].mxu0
  %v9560 = vadd.f32 %v9489, %v9559
  %9561 = vdwg.mxu0
  %9562 = vmatprep.subr.mxu0 %v8452
  %9563 = vmatpush1.msra.mxu0 %v8451
  %9564 = vmatprep.subr.mxu0 0.0
  %9565 = vmatpush1.msra.mxu0 0.0
  %9566 = vmatprep.subr.mxu0 0.0
  %9567 = vmatpush1.msra.mxu0 0.0
  %9568 = vmatprep.subr.mxu0 0.0
  %9569 = vmatpush1.msra.mxu0 0.0
  %9570 = vmatprep.subr.mxu0 0.0
  %9571 = vmatpush1.msra.mxu0 0.0
  %9572 = vmatprep.subr.mxu0 0.0
  %9573 = vmatpush1.msra.mxu0 0.0
  %9574 = vmatprep.subr.mxu0 0.0
  %9575 = vmatpush1.msra.mxu0 0.0
  %9576 = vmatprep.subr.mxu0 0.0
  %9577 = vmatpush1.msra.mxu0 0.0
  %9578 = vmatprep.subr.mxu0 0.0
  %9579 = vmatpush1.msra.mxu0 0.0
  %9580 = vmatprep.subr.mxu0 0.0
  %9581 = vmatpush1.msra.mxu0 0.0
  %9582 = vmatprep.subr.mxu0 0.0
  %9583 = vmatpush1.msra.mxu0 0.0
  %9584 = vmatprep.subr.mxu0 0.0
  %9585 = vmatpush1.msra.mxu0 0.0
  %9586 = vmatprep.subr.mxu0 0.0
  %9587 = vmatpush1.msra.mxu0 0.0
  %9588 = vmatprep.subr.mxu0 0.0
  %9589 = vmatpush1.msra.mxu0 0.0
  %9590 = vmatprep.subr.mxu0 0.0
  %9591 = vmatpush1.msra.mxu0 0.0
  %9592 = vmatprep.subr.mxu0 0.0
  %9593 = vmatpush1.msra.mxu0 0.0
  %9594 = vmatprep.subr.mxu0 0.0
  %9595 = vmatpush1.msra.mxu0 0.0
  %9596 = vmatprep.subr.mxu0 0.0
  %9597 = vmatpush1.msra.mxu0 0.0
  %9598 = vmatprep.subr.mxu0 0.0
  %9599 = vmatpush1.msra.mxu0 0.0
  %9600 = vmatprep.subr.mxu0 0.0
  %9601 = vmatpush1.msra.mxu0 0.0
  %9602 = vmatprep.subr.mxu0 0.0
  %9603 = vmatpush1.msra.mxu0 0.0
  %9604 = vmatprep.subr.mxu0 0.0
  %9605 = vmatpush1.msra.mxu0 0.0
  %9606 = vmatprep.subr.mxu0 0.0
  %9607 = vmatpush1.msra.mxu0 0.0
  %9608 = vmatprep.subr.mxu0 0.0
  %9609 = vmatpush1.msra.mxu0 0.0
  %9610 = vmatprep.subr.mxu0 0.0
  %9611 = vmatpush1.msra.mxu0 0.0
  %9612 = vmatprep.subr.mxu0 0.0
  %9613 = vmatpush1.msra.mxu0 0.0
  %9614 = vmatprep.subr.mxu0 0.0
  %9615 = vmatpush1.msra.mxu0 0.0
  %9616 = vmatprep.subr.mxu0 0.0
  %9617 = vmatpush1.msra.mxu0 0.0
  %9618 = vmatprep.subr.mxu0 0.0
  %9619 = vmatpush1.msra.mxu0 0.0
  %9620 = vmatprep.subr.mxu0 0.0
  %9621 = vmatpush1.msra.mxu0 0.0
  %9622 = vmatprep.subr.mxu0 0.0
  %9623 = vmatpush1.msra.mxu0 0.0
  %9624 = vmatprep.subr.mxu0 0.0
  %9625 = vmatpush1.msra.mxu0 0.0
  %9626 = vmatprep.mubr.f32.mxu0 0.0
  %9627 = vmatmul.mubr.f32.gmra.mrb[0].mxu0 %v8495
  %v9628 = vpop.f32.mrb[0].mxu0
  %v9629 = vadd.f32 %v9558, %v9628
  %v9630 = vpop.f32.mrb[0].mxu0
  %v9631 = vadd.f32 %v9560, %v9630
  %9632 = vdwg.mxu0
  %9633 = vmatprep.subr.mxu0 %v6886
  %9634 = vmatpush1.msra.mxu0 %v6885
  %9635 = vmatprep.subr.mxu0 %v6893
  %9636 = vmatpush1.msra.mxu0 %v6892
  %9637 = vmatprep.subr.mxu0 %v6900
  %9638 = vmatpush1.msra.mxu0 %v6899
  %9639 = vmatprep.subr.mxu0 %v6907
  %9640 = vmatpush1.msra.mxu0 %v6906
  %9641 = vmatprep.subr.mxu0 %v6914
  %9642 = vmatpush1.msra.mxu0 %v6913
  %9643 = vmatprep.subr.mxu0 %v6921
  %9644 = vmatpush1.msra.mxu0 %v6920
  %9645 = vmatprep.subr.mxu0 %v6928
  %9646 = vmatpush1.msra.mxu0 %v6927
  %9647 = vmatprep.subr.mxu0 %v6935
  %9648 = vmatpush1.msra.mxu0 %v6934
  %9649 = vmatprep.subr.mxu0 %v6942
  %9650 = vmatpush1.msra.mxu0 %v6941
  %9651 = vmatprep.subr.mxu0 %v6949
  %9652 = vmatpush1.msra.mxu0 %v6948
  %9653 = vmatprep.subr.mxu0 %v6956
  %9654 = vmatpush1.msra.mxu0 %v6955
  %9655 = vmatprep.subr.mxu0 %v6963
  %9656 = vmatpush1.msra.mxu0 %v6962
  %9657 = vmatprep.subr.mxu0 %v6970
  %9658 = vmatpush1.msra.mxu0 %v6969
  %9659 = vmatprep.subr.mxu0 %v6977
  %9660 = vmatpush1.msra.mxu0 %v6976
  %9661 = vmatprep.subr.mxu0 %v6984
  %9662 = vmatpush1.msra.mxu0 %v6983
  %9663 = vmatprep.subr.mxu0 %v6991
  %9664 = vmatpush1.msra.mxu0 %v6990
  %9665 = vmatprep.subr.mxu0 %v6998
  %9666 = vmatpush1.msra.mxu0 %v6997
  %9667 = vmatprep.subr.mxu0 %v7005
  %9668 = vmatpush1.msra.mxu0 %v7004
  %9669 = vmatprep.subr.mxu0 %v7012
  %9670 = vmatpush1.msra.mxu0 %v7011
  %9671 = vmatprep.subr.mxu0 %v7019
  %9672 = vmatpush1.msra.mxu0 %v7018
  %9673 = vmatprep.subr.mxu0 %v7026
  %9674 = vmatpush1.msra.mxu0 %v7025
  %9675 = vmatprep.subr.mxu0 %v7033
  %9676 = vmatpush1.msra.mxu0 %v7032
  %9677 = vmatprep.subr.mxu0 %v7040
  %9678 = vmatpush1.msra.mxu0 %v7039
  %9679 = vmatprep.subr.mxu0 %v7047
  %9680 = vmatpush1.msra.mxu0 %v7046
  %9681 = vmatprep.subr.mxu0 %v7054
  %9682 = vmatpush1.msra.mxu0 %v7053
  %9683 = vmatprep.subr.mxu0 %v7061
  %9684 = vmatpush1.msra.mxu0 %v7060
  %9685 = vmatprep.subr.mxu0 %v7068
  %9686 = vmatpush1.msra.mxu0 %v7067
  %9687 = vmatprep.subr.mxu0 %v7075
  %9688 = vmatpush1.msra.mxu0 %v7074
  %9689 = vmatprep.subr.mxu0 %v7082
  %9690 = vmatpush1.msra.mxu0 %v7081
  %9691 = vmatprep.subr.mxu0 %v7089
  %9692 = vmatpush1.msra.mxu0 %v7088
  %9693 = vmatprep.subr.mxu0 %v7096
  %9694 = vmatpush1.msra.mxu0 %v7095
  %9695 = vmatprep.subr.mxu0 %v7103
  %9696 = vmatpush1.msra.mxu0 %v7102
  %9697 = vmatprep.mubr.f32.mxu0 %v6867
  %9698 = vmatmul.mubr.f32.gmra.mrb[0].mxu0 %v6866
  %v9699 = vpop.f32.mrb[0].mxu0
  %v9700 = vadd.f32 %v8477, %v9699
  %v9701 = vpop.f32.mrb[0].mxu0
  %v9702 = vadd.f32 %v8481, %v9701
  %9703 = vdwg.mxu0
  %9704 = vmatprep.subr.mxu0 %v7110
  %9705 = vmatpush1.msra.mxu0 %v7109
  %9706 = vmatprep.subr.mxu0 %v7117
  %9707 = vmatpush1.msra.mxu0 %v7116
  %9708 = vmatprep.subr.mxu0 %v7124
  %9709 = vmatpush1.msra.mxu0 %v7123
  %9710 = vmatprep.subr.mxu0 %v7131
  %9711 = vmatpush1.msra.mxu0 %v7130
  %9712 = vmatprep.subr.mxu0 %v7138
  %9713 = vmatpush1.msra.mxu0 %v7137
  %9714 = vmatprep.subr.mxu0 %v7145
  %9715 = vmatpush1.msra.mxu0 %v7144
  %9716 = vmatprep.subr.mxu0 %v7152
  %9717 = vmatpush1.msra.mxu0 %v7151
  %9718 = vmatprep.subr.mxu0 %v7159
  %9719 = vmatpush1.msra.mxu0 %v7158
  %9720 = vmatprep.subr.mxu0 %v7166
  %9721 = vmatpush1.msra.mxu0 %v7165
  %9722 = vmatprep.subr.mxu0 %v7173
  %9723 = vmatpush1.msra.mxu0 %v7172
  %9724 = vmatprep.subr.mxu0 %v7180
  %9725 = vmatpush1.msra.mxu0 %v7179
  %9726 = vmatprep.subr.mxu0 %v7187
  %9727 = vmatpush1.msra.mxu0 %v7186
  %9728 = vmatprep.subr.mxu0 %v7194
  %9729 = vmatpush1.msra.mxu0 %v7193
  %9730 = vmatprep.subr.mxu0 %v7201
  %9731 = vmatpush1.msra.mxu0 %v7200
  %9732 = vmatprep.subr.mxu0 %v7208
  %9733 = vmatpush1.msra.mxu0 %v7207
  %9734 = vmatprep.subr.mxu0 %v7215
  %9735 = vmatpush1.msra.mxu0 %v7214
  %9736 = vmatprep.subr.mxu0 %v7222
  %9737 = vmatpush1.msra.mxu0 %v7221
  %9738 = vmatprep.subr.mxu0 %v7229
  %9739 = vmatpush1.msra.mxu0 %v7228
  %9740 = vmatprep.subr.mxu0 %v7236
  %9741 = vmatpush1.msra.mxu0 %v7235
  %9742 = vmatprep.subr.mxu0 %v7243
  %9743 = vmatpush1.msra.mxu0 %v7242
  %9744 = vmatprep.subr.mxu0 %v7250
  %9745 = vmatpush1.msra.mxu0 %v7249
  %9746 = vmatprep.subr.mxu0 %v7257
  %9747 = vmatpush1.msra.mxu0 %v7256
  %9748 = vmatprep.subr.mxu0 %v7264
  %9749 = vmatpush1.msra.mxu0 %v7263
  %9750 = vmatprep.subr.mxu0 %v7271
  %9751 = vmatpush1.msra.mxu0 %v7270
  %9752 = vmatprep.subr.mxu0 %v7278
  %9753 = vmatpush1.msra.mxu0 %v7277
  %9754 = vmatprep.subr.mxu0 %v7285
  %9755 = vmatpush1.msra.mxu0 %v7284
  %9756 = vmatprep.subr.mxu0 %v7292
  %9757 = vmatpush1.msra.mxu0 %v7291
  %9758 = vmatprep.subr.mxu0 %v7299
  %9759 = vmatpush1.msra.mxu0 %v7298
  %9760 = vmatprep.subr.mxu0 %v7306
  %9761 = vmatpush1.msra.mxu0 %v7305
  %9762 = vmatprep.subr.mxu0 %v7313
  %9763 = vmatpush1.msra.mxu0 %v7312
  %9764 = vmatprep.subr.mxu0 %v7320
  %9765 = vmatpush1.msra.mxu0 %v7319
  %9766 = vmatprep.subr.mxu0 %v7327
  %9767 = vmatpush1.msra.mxu0 %v7326
  %9768 = vmatprep.mubr.f32.mxu0 %v6869
  %9769 = vmatmul.mubr.f32.gmra.mrb[0].mxu0 %v6868
  %v9770 = vpop.f32.mrb[0].mxu0
  %v9771 = vadd.f32 %v9700, %v9770
  %v9772 = vpop.f32.mrb[0].mxu0
  %v9773 = vadd.f32 %v9702, %v9772
  %9774 = vdwg.mxu0
  %9775 = vmatprep.subr.mxu0 %v7334
  %9776 = vmatpush1.msra.mxu0 %v7333
  %9777 = vmatprep.subr.mxu0 %v7341
  %9778 = vmatpush1.msra.mxu0 %v7340
  %9779 = vmatprep.subr.mxu0 %v7348
  %9780 = vmatpush1.msra.mxu0 %v7347
  %9781 = vmatprep.subr.mxu0 %v7355
  %9782 = vmatpush1.msra.mxu0 %v7354
  %9783 = vmatprep.subr.mxu0 %v7362
  %9784 = vmatpush1.msra.mxu0 %v7361
  %9785 = vmatprep.subr.mxu0 %v7369
  %9786 = vmatpush1.msra.mxu0 %v7368
  %9787 = vmatprep.subr.mxu0 %v7376
  %9788 = vmatpush1.msra.mxu0 %v7375
  %9789 = vmatprep.subr.mxu0 %v7383
  %9790 = vmatpush1.msra.mxu0 %v7382
  %9791 = vmatprep.subr.mxu0 %v7390
  %9792 = vmatpush1.msra.mxu0 %v7389
  %9793 = vmatprep.subr.mxu0 %v7397
  %9794 = vmatpush1.msra.mxu0 %v7396
  %9795 = vmatprep.subr.mxu0 %v7404
  %9796 = vmatpush1.msra.mxu0 %v7403
  %9797 = vmatprep.subr.mxu0 %v7411
  %9798 = vmatpush1.msra.mxu0 %v7410
  %9799 = vmatprep.subr.mxu0 %v7418
  %9800 = vmatpush1.msra.mxu0 %v7417
  %9801 = vmatprep.subr.mxu0 %v7425
  %9802 = vmatpush1.msra.mxu0 %v7424
  %9803 = vmatprep.subr.mxu0 %v7432
  %9804 = vmatpush1.msra.mxu0 %v7431
  %9805 = vmatprep.subr.mxu0 %v7439
  %9806 = vmatpush1.msra.mxu0 %v7438
  %9807 = vmatprep.subr.mxu0 %v7446
  %9808 = vmatpush1.msra.mxu0 %v7445
  %9809 = vmatprep.subr.mxu0 %v7453
  %9810 = vmatpush1.msra.mxu0 %v7452
  %9811 = vmatprep.subr.mxu0 %v7460
  %9812 = vmatpush1.msra.mxu0 %v7459
  %9813 = vmatprep.subr.mxu0 %v7467
  %9814 = vmatpush1.msra.mxu0 %v7466
  %9815 = vmatprep.subr.mxu0 %v7474
  %9816 = vmatpush1.msra.mxu0 %v7473
  %9817 = vmatprep.subr.mxu0 %v7481
  %9818 = vmatpush1.msra.mxu0 %v7480
  %9819 = vmatprep.subr.mxu0 %v7488
  %9820 = vmatpush1.msra.mxu0 %v7487
  %9821 = vmatprep.subr.mxu0 %v7495
  %9822 = vmatpush1.msra.mxu0 %v7494
  %9823 = vmatprep.subr.mxu0 %v7502
  %9824 = vmatpush1.msra.mxu0 %v7501
  %9825 = vmatprep.subr.mxu0 %v7509
  %9826 = vmatpush1.msra.mxu0 %v7508
  %9827 = vmatprep.subr.mxu0 %v7516
  %9828 = vmatpush1.msra.mxu0 %v7515
  %9829 = vmatprep.subr.mxu0 %v7523
  %9830 = vmatpush1.msra.mxu0 %v7522
  %9831 = vmatprep.subr.mxu0 %v7530
  %9832 = vmatpush1.msra.mxu0 %v7529
  %9833 = vmatprep.subr.mxu0 %v7537
  %9834 = vmatpush1.msra.mxu0 %v7536
  %9835 = vmatprep.subr.mxu0 %v7544
  %9836 = vmatpush1.msra.mxu0 %v7543
  %9837 = vmatprep.subr.mxu0 %v7551
  %9838 = vmatpush1.msra.mxu0 %v7550
  %9839 = vmatprep.mubr.f32.mxu0 %v6871
  %9840 = vmatmul.mubr.f32.gmra.mrb[0].mxu0 %v6870
  %v9841 = vpop.f32.mrb[0].mxu0
  %v9842 = vadd.f32 %v9771, %v9841
  %v9843 = vpop.f32.mrb[0].mxu0
  %v9844 = vadd.f32 %v9773, %v9843
  %9845 = vdwg.mxu0
  %9846 = vmatprep.subr.mxu0 %v7558
  %9847 = vmatpush1.msra.mxu0 %v7557
  %9848 = vmatprep.subr.mxu0 %v7565
  %9849 = vmatpush1.msra.mxu0 %v7564
  %9850 = vmatprep.subr.mxu0 %v7572
  %9851 = vmatpush1.msra.mxu0 %v7571
  %9852 = vmatprep.subr.mxu0 %v7579
  %9853 = vmatpush1.msra.mxu0 %v7578
  %9854 = vmatprep.subr.mxu0 %v7586
  %9855 = vmatpush1.msra.mxu0 %v7585
  %9856 = vmatprep.subr.mxu0 %v7593
  %9857 = vmatpush1.msra.mxu0 %v7592
  %9858 = vmatprep.subr.mxu0 %v7600
  %9859 = vmatpush1.msra.mxu0 %v7599
  %9860 = vmatprep.subr.mxu0 %v7607
  %9861 = vmatpush1.msra.mxu0 %v7606
  %9862 = vmatprep.subr.mxu0 %v7614
  %9863 = vmatpush1.msra.mxu0 %v7613
  %9864 = vmatprep.subr.mxu0 %v7621
  %9865 = vmatpush1.msra.mxu0 %v7620
  %9866 = vmatprep.subr.mxu0 %v7628
  %9867 = vmatpush1.msra.mxu0 %v7627
  %9868 = vmatprep.subr.mxu0 %v7635
  %9869 = vmatpush1.msra.mxu0 %v7634
  %9870 = vmatprep.subr.mxu0 %v7642
  %9871 = vmatpush1.msra.mxu0 %v7641
  %9872 = vmatprep.subr.mxu0 %v7649
  %9873 = vmatpush1.msra.mxu0 %v7648
  %9874 = vmatprep.subr.mxu0 %v7656
  %9875 = vmatpush1.msra.mxu0 %v7655
  %9876 = vmatprep.subr.mxu0 %v7663
  %9877 = vmatpush1.msra.mxu0 %v7662
  %9878 = vmatprep.subr.mxu0 %v7670
  %9879 = vmatpush1.msra.mxu0 %v7669
  %9880 = vmatprep.subr.mxu0 %v7677
  %9881 = vmatpush1.msra.mxu0 %v7676
  %9882 = vmatprep.subr.mxu0 %v7684
  %9883 = vmatpush1.msra.mxu0 %v7683
  %9884 = vmatprep.subr.mxu0 %v7691
  %9885 = vmatpush1.msra.mxu0 %v7690
  %9886 = vmatprep.subr.mxu0 %v7698
  %9887 = vmatpush1.msra.mxu0 %v7697
  %9888 = vmatprep.subr.mxu0 %v7705
  %9889 = vmatpush1.msra.mxu0 %v7704
  %9890 = vmatprep.subr.mxu0 %v7712
  %9891 = vmatpush1.msra.mxu0 %v7711
  %9892 = vmatprep.subr.mxu0 %v7719
  %9893 = vmatpush1.msra.mxu0 %v7718
  %9894 = vmatprep.subr.mxu0 %v7726
  %9895 = vmatpush1.msra.mxu0 %v7725
  %9896 = vmatprep.subr.mxu0 %v7733
  %9897 = vmatpush1.msra.mxu0 %v7732
  %9898 = vmatprep.subr.mxu0 %v7740
  %9899 = vmatpush1.msra.mxu0 %v7739
  %9900 = vmatprep.subr.mxu0 %v7747
  %9901 = vmatpush1.msra.mxu0 %v7746
  %9902 = vmatprep.subr.mxu0 %v7754
  %9903 = vmatpush1.msra.mxu0 %v7753
  %9904 = vmatprep.subr.mxu0 %v7761
  %9905 = vmatpush1.msra.mxu0 %v7760
  %9906 = vmatprep.subr.mxu0 %v7768
  %9907 = vmatpush1.msra.mxu0 %v7767
  %9908 = vmatprep.subr.mxu0 %v7775
  %9909 = vmatpush1.msra.mxu0 %v7774
  %9910 = vmatprep.mubr.f32.mxu0 %v6873
  %9911 = vmatmul.mubr.f32.gmra.mrb[0].mxu0 %v6872
  %v9912 = vpop.f32.mrb[0].mxu0
  %v9913 = vadd.f32 %v9842, %v9912
  %v9914 = vpop.f32.mrb[0].mxu0
  %v9915 = vadd.f32 %v9844, %v9914
  %9916 = vdwg.mxu0
  %9917 = vmatprep.subr.mxu0 %v7782
  %9918 = vmatpush1.msra.mxu0 %v7781
  %9919 = vmatprep.subr.mxu0 %v7789
  %9920 = vmatpush1.msra.mxu0 %v7788
  %9921 = vmatprep.subr.mxu0 %v7796
  %9922 = vmatpush1.msra.mxu0 %v7795
  %9923 = vmatprep.subr.mxu0 %v7803
  %9924 = vmatpush1.msra.mxu0 %v7802
  %9925 = vmatprep.subr.mxu0 %v7810
  %9926 = vmatpush1.msra.mxu0 %v7809
  %9927 = vmatprep.subr.mxu0 %v7817
  %9928 = vmatpush1.msra.mxu0 %v7816
  %9929 = vmatprep.subr.mxu0 %v7824
  %9930 = vmatpush1.msra.mxu0 %v7823
  %9931 = vmatprep.subr.mxu0 %v7831
  %9932 = vmatpush1.msra.mxu0 %v7830
  %9933 = vmatprep.subr.mxu0 %v7838
  %9934 = vmatpush1.msra.mxu0 %v7837
  %9935 = vmatprep.subr.mxu0 %v7845
  %9936 = vmatpush1.msra.mxu0 %v7844
  %9937 = vmatprep.subr.mxu0 %v7852
  %9938 = vmatpush1.msra.mxu0 %v7851
  %9939 = vmatprep.subr.mxu0 %v7859
  %9940 = vmatpush1.msra.mxu0 %v7858
  %9941 = vmatprep.subr.mxu0 %v7866
  %9942 = vmatpush1.msra.mxu0 %v7865
  %9943 = vmatprep.subr.mxu0 %v7873
  %9944 = vmatpush1.msra.mxu0 %v7872
  %9945 = vmatprep.subr.mxu0 %v7880
  %9946 = vmatpush1.msra.mxu0 %v7879
  %9947 = vmatprep.subr.mxu0 %v7887
  %9948 = vmatpush1.msra.mxu0 %v7886
  %9949 = vmatprep.subr.mxu0 %v7894
  %9950 = vmatpush1.msra.mxu0 %v7893
  %9951 = vmatprep.subr.mxu0 %v7901
  %9952 = vmatpush1.msra.mxu0 %v7900
  %9953 = vmatprep.subr.mxu0 %v7908
  %9954 = vmatpush1.msra.mxu0 %v7907
  %9955 = vmatprep.subr.mxu0 %v7915
  %9956 = vmatpush1.msra.mxu0 %v7914
  %9957 = vmatprep.subr.mxu0 %v7922
  %9958 = vmatpush1.msra.mxu0 %v7921
  %9959 = vmatprep.subr.mxu0 %v7929
  %9960 = vmatpush1.msra.mxu0 %v7928
  %9961 = vmatprep.subr.mxu0 %v7936
  %9962 = vmatpush1.msra.mxu0 %v7935
  %9963 = vmatprep.subr.mxu0 %v7943
  %9964 = vmatpush1.msra.mxu0 %v7942
  %9965 = vmatprep.subr.mxu0 %v7950
  %9966 = vmatpush1.msra.mxu0 %v7949
  %9967 = vmatprep.subr.mxu0 %v7957
  %9968 = vmatpush1.msra.mxu0 %v7956
  %9969 = vmatprep.subr.mxu0 %v7964
  %9970 = vmatpush1.msra.mxu0 %v7963
  %9971 = vmatprep.subr.mxu0 %v7971
  %9972 = vmatpush1.msra.mxu0 %v7970
  %9973 = vmatprep.subr.mxu0 %v7978
  %9974 = vmatpush1.msra.mxu0 %v7977
  %9975 = vmatprep.subr.mxu0 %v7985
  %9976 = vmatpush1.msra.mxu0 %v7984
  %9977 = vmatprep.subr.mxu0 %v7992
  %9978 = vmatpush1.msra.mxu0 %v7991
  %9979 = vmatprep.subr.mxu0 %v7999
  %9980 = vmatpush1.msra.mxu0 %v7998
  %9981 = vmatprep.mubr.f32.mxu0 %v6875
  %9982 = vmatmul.mubr.f32.gmra.mrb[0].mxu0 %v6874
  %v9983 = vpop.f32.mrb[0].mxu0
  %v9984 = vadd.f32 %v9913, %v9983
  %v9985 = vpop.f32.mrb[0].mxu0
  %v9986 = vadd.f32 %v9915, %v9985
  %9987 = vdwg.mxu0
  %9988 = vmatprep.subr.mxu0 %v8006
  %9989 = vmatpush1.msra.mxu0 %v8005
  %9990 = vmatprep.subr.mxu0 %v8013
  %9991 = vmatpush1.msra.mxu0 %v8012
  %9992 = vmatprep.subr.mxu0 %v8020
  %9993 = vmatpush1.msra.mxu0 %v8019
  %9994 = vmatprep.subr.mxu0 %v8027
  %9995 = vmatpush1.msra.mxu0 %v8026
  %9996 = vmatprep.subr.mxu0 %v8034
  %9997 = vmatpush1.msra.mxu0 %v8033
  %9998 = vmatprep.subr.mxu0 %v8041
  %9999 = vmatpush1.msra.mxu0 %v8040
  %10000 = vmatprep.subr.mxu0 %v8048
  %10001 = vmatpush1.msra.mxu0 %v8047
  %10002 = vmatprep.subr.mxu0 %v8055
  %10003 = vmatpush1.msra.mxu0 %v8054
  %10004 = vmatprep.subr.mxu0 %v8062
  %10005 = vmatpush1.msra.mxu0 %v8061
  %10006 = vmatprep.subr.mxu0 %v8069
  %10007 = vmatpush1.msra.mxu0 %v8068
  %10008 = vmatprep.subr.mxu0 %v8076
  %10009 = vmatpush1.msra.mxu0 %v8075
  %10010 = vmatprep.subr.mxu0 %v8083
  %10011 = vmatpush1.msra.mxu0 %v8082
  %10012 = vmatprep.subr.mxu0 %v8090
  %10013 = vmatpush1.msra.mxu0 %v8089
  %10014 = vmatprep.subr.mxu0 %v8097
  %10015 = vmatpush1.msra.mxu0 %v8096
  %10016 = vmatprep.subr.mxu0 %v8104
  %10017 = vmatpush1.msra.mxu0 %v8103
  %10018 = vmatprep.subr.mxu0 %v8111
  %10019 = vmatpush1.msra.mxu0 %v8110
  %10020 = vmatprep.subr.mxu0 %v8118
  %10021 = vmatpush1.msra.mxu0 %v8117
  %10022 = vmatprep.subr.mxu0 %v8125
  %10023 = vmatpush1.msra.mxu0 %v8124
  %10024 = vmatprep.subr.mxu0 %v8132
  %10025 = vmatpush1.msra.mxu0 %v8131
  %10026 = vmatprep.subr.mxu0 %v8139
  %10027 = vmatpush1.msra.mxu0 %v8138
  %10028 = vmatprep.subr.mxu0 %v8146
  %10029 = vmatpush1.msra.mxu0 %v8145
  %10030 = vmatprep.subr.mxu0 %v8153
  %10031 = vmatpush1.msra.mxu0 %v8152
  %10032 = vmatprep.subr.mxu0 %v8160
  %10033 = vmatpush1.msra.mxu0 %v8159
  %10034 = vmatprep.subr.mxu0 %v8167
  %10035 = vmatpush1.msra.mxu0 %v8166
  %10036 = vmatprep.subr.mxu0 %v8174
  %10037 = vmatpush1.msra.mxu0 %v8173
  %10038 = vmatprep.subr.mxu0 %v8181
  %10039 = vmatpush1.msra.mxu0 %v8180
  %10040 = vmatprep.subr.mxu0 %v8188
  %10041 = vmatpush1.msra.mxu0 %v8187
  %10042 = vmatprep.subr.mxu0 %v8195
  %10043 = vmatpush1.msra.mxu0 %v8194
  %10044 = vmatprep.subr.mxu0 %v8202
  %10045 = vmatpush1.msra.mxu0 %v8201
  %10046 = vmatprep.subr.mxu0 %v8209
  %10047 = vmatpush1.msra.mxu0 %v8208
  %10048 = vmatprep.subr.mxu0 %v8216
  %10049 = vmatpush1.msra.mxu0 %v8215
  %10050 = vmatprep.subr.mxu0 %v8223
  %10051 = vmatpush1.msra.mxu0 %v8222
  %10052 = vmatprep.mubr.f32.mxu0 %v6877
  %10053 = vmatmul.mubr.f32.gmra.mrb[0].mxu0 %v6876
  %v10054 = vpop.f32.mrb[0].mxu0
  %v10055 = vadd.f32 %v9984, %v10054
  %v10056 = vpop.f32.mrb[0].mxu0
  %v10057 = vadd.f32 %v9986, %v10056
  %10058 = vdwg.mxu0
  %10059 = vmatprep.subr.mxu0 %v8230
  %10060 = vmatpush1.msra.mxu0 %v8229
  %10061 = vmatprep.subr.mxu0 %v8237
  %10062 = vmatpush1.msra.mxu0 %v8236
  %10063 = vmatprep.subr.mxu0 %v8244
  %10064 = vmatpush1.msra.mxu0 %v8243
  %10065 = vmatprep.subr.mxu0 %v8251
  %10066 = vmatpush1.msra.mxu0 %v8250
  %10067 = vmatprep.subr.mxu0 %v8258
  %10068 = vmatpush1.msra.mxu0 %v8257
  %10069 = vmatprep.subr.mxu0 %v8265
  %10070 = vmatpush1.msra.mxu0 %v8264
  %10071 = vmatprep.subr.mxu0 %v8272
  %10072 = vmatpush1.msra.mxu0 %v8271
  %10073 = vmatprep.subr.mxu0 %v8279
  %10074 = vmatpush1.msra.mxu0 %v8278
  %10075 = vmatprep.subr.mxu0 %v8286
  %10076 = vmatpush1.msra.mxu0 %v8285
  %10077 = vmatprep.subr.mxu0 %v8293
  %10078 = vmatpush1.msra.mxu0 %v8292
  %10079 = vmatprep.subr.mxu0 %v8300
  %10080 = vmatpush1.msra.mxu0 %v8299
  %10081 = vmatprep.subr.mxu0 %v8307
  %10082 = vmatpush1.msra.mxu0 %v8306
  %10083 = vmatprep.subr.mxu0 %v8314
  %10084 = vmatpush1.msra.mxu0 %v8313
  %10085 = vmatprep.subr.mxu0 %v8321
  %10086 = vmatpush1.msra.mxu0 %v8320
  %10087 = vmatprep.subr.mxu0 %v8328
  %10088 = vmatpush1.msra.mxu0 %v8327
  %10089 = vmatprep.subr.mxu0 %v8335
  %10090 = vmatpush1.msra.mxu0 %v8334
  %10091 = vmatprep.subr.mxu0 %v8342
  %10092 = vmatpush1.msra.mxu0 %v8341
  %10093 = vmatprep.subr.mxu0 %v8349
  %10094 = vmatpush1.msra.mxu0 %v8348
  %10095 = vmatprep.subr.mxu0 %v8356
  %10096 = vmatpush1.msra.mxu0 %v8355
  %10097 = vmatprep.subr.mxu0 %v8363
  %10098 = vmatpush1.msra.mxu0 %v8362
  %10099 = vmatprep.subr.mxu0 %v8370
  %10100 = vmatpush1.msra.mxu0 %v8369
  %10101 = vmatprep.subr.mxu0 %v8377
  %10102 = vmatpush1.msra.mxu0 %v8376
  %10103 = vmatprep.subr.mxu0 %v8384
  %10104 = vmatpush1.msra.mxu0 %v8383
  %10105 = vmatprep.subr.mxu0 %v8391
  %10106 = vmatpush1.msra.mxu0 %v8390
  %10107 = vmatprep.subr.mxu0 %v8398
  %10108 = vmatpush1.msra.mxu0 %v8397
  %10109 = vmatprep.subr.mxu0 %v8405
  %10110 = vmatpush1.msra.mxu0 %v8404
  %10111 = vmatprep.subr.mxu0 %v8412
  %10112 = vmatpush1.msra.mxu0 %v8411
  %10113 = vmatprep.subr.mxu0 %v8419
  %10114 = vmatpush1.msra.mxu0 %v8418
  %10115 = vmatprep.subr.mxu0 %v8426
  %10116 = vmatpush1.msra.mxu0 %v8425
  %10117 = vmatprep.subr.mxu0 %v8433
  %10118 = vmatpush1.msra.mxu0 %v8432
  %10119 = vmatprep.subr.mxu0 %v8440
  %10120 = vmatpush1.msra.mxu0 %v8439
  %10121 = vmatprep.subr.mxu0 %v8447
  %10122 = vmatpush1.msra.mxu0 %v8446
  %10123 = vmatprep.mubr.f32.mxu0 %v6879
  %10124 = vmatmul.mubr.f32.gmra.mrb[0].mxu0 %v6878
  %v10125 = vpop.f32.mrb[0].mxu0
  %v10126 = vadd.f32 %v10055, %v10125
  %v10127 = vpop.f32.mrb[0].mxu0
  %v10128 = vadd.f32 %v10057, %v10127
  %10129 = vdwg.mxu0
  %10130 = vmatprep.subr.mxu0 %v8454
  %10131 = vmatpush1.msra.mxu0 %v8453
  %10132 = vmatprep.subr.mxu0 0.0
  %10133 = vmatpush1.msra.mxu0 0.0
  %10134 = vmatprep.subr.mxu0 0.0
  %10135 = vmatpush1.msra.mxu0 0.0
  %10136 = vmatprep.subr.mxu0 0.0
  %10137 = vmatpush1.msra.mxu0 0.0
  %10138 = vmatprep.subr.mxu0 0.0
  %10139 = vmatpush1.msra.mxu0 0.0
  %10140 = vmatprep.subr.mxu0 0.0
  %10141 = vmatpush1.msra.mxu0 0.0
  %10142 = vmatprep.subr.mxu0 0.0
  %10143 = vmatpush1.msra.mxu0 0.0
  %10144 = vmatprep.subr.mxu0 0.0
  %10145 = vmatpush1.msra.mxu0 0.0
  %10146 = vmatprep.subr.mxu0 0.0
  %10147 = vmatpush1.msra.mxu0 0.0
  %10148 = vmatprep.subr.mxu0 0.0
  %10149 = vmatpush1.msra.mxu0 0.0
  %10150 = vmatprep.subr.mxu0 0.0
  %10151 = vmatpush1.msra.mxu0 0.0
  %10152 = vmatprep.subr.mxu0 0.0
  %10153 = vmatpush1.msra.mxu0 0.0
  %10154 = vmatprep.subr.mxu0 0.0
  %10155 = vmatpush1.msra.mxu0 0.0
  %10156 = vmatprep.subr.mxu0 0.0
  %10157 = vmatpush1.msra.mxu0 0.0
  %10158 = vmatprep.subr.mxu0 0.0
  %10159 = vmatpush1.msra.mxu0 0.0
  %10160 = vmatprep.subr.mxu0 0.0
  %10161 = vmatpush1.msra.mxu0 0.0
  %10162 = vmatprep.subr.mxu0 0.0
  %10163 = vmatpush1.msra.mxu0 0.0
  %10164 = vmatprep.subr.mxu0 0.0
  %10165 = vmatpush1.msra.mxu0 0.0
  %10166 = vmatprep.subr.mxu0 0.0
  %10167 = vmatpush1.msra.mxu0 0.0
  %10168 = vmatprep.subr.mxu0 0.0
  %10169 = vmatpush1.msra.mxu0 0.0
  %10170 = vmatprep.subr.mxu0 0.0
  %10171 = vmatpush1.msra.mxu0 0.0
  %10172 = vmatprep.subr.mxu0 0.0
  %10173 = vmatpush1.msra.mxu0 0.0
  %10174 = vmatprep.subr.mxu0 0.0
  %10175 = vmatpush1.msra.mxu0 0.0
  %10176 = vmatprep.subr.mxu0 0.0
  %10177 = vmatpush1.msra.mxu0 0.0
  %10178 = vmatprep.subr.mxu0 0.0
  %10179 = vmatpush1.msra.mxu0 0.0
  %10180 = vmatprep.subr.mxu0 0.0
  %10181 = vmatpush1.msra.mxu0 0.0
  %10182 = vmatprep.subr.mxu0 0.0
  %10183 = vmatpush1.msra.mxu0 0.0
  %10184 = vmatprep.subr.mxu0 0.0
  %10185 = vmatpush1.msra.mxu0 0.0
  %10186 = vmatprep.subr.mxu0 0.0
  %10187 = vmatpush1.msra.mxu0 0.0
  %10188 = vmatprep.subr.mxu0 0.0
  %10189 = vmatpush1.msra.mxu0 0.0
  %10190 = vmatprep.subr.mxu0 0.0
  %10191 = vmatpush1.msra.mxu0 0.0
  %10192 = vmatprep.subr.mxu0 0.0
  %10193 = vmatpush1.msra.mxu0 0.0
  %10194 = vmatprep.mubr.f32.mxu0 0.0
  %10195 = vmatmul.mubr.f32.gmra.mrb[0].mxu0 %v8495
  %v10196 = vpop.f32.mrb[0].mxu0
  %v10197 = vadd.f32 %v10126, %v10196
  %v10198 = vpop.f32.mrb[0].mxu0
  %v10199 = vadd.f32 %v10128, %v10198
  %10200 = vdwg.mxu0
  %10201 = vmatprep.subr.mxu0 0.0
  %10202 = vmatpush1.msra.mxu0 %v6887
  %10203 = vmatprep.subr.mxu0 0.0
  %10204 = vmatpush1.msra.mxu0 %v6894
  %10205 = vmatprep.subr.mxu0 0.0
  %10206 = vmatpush1.msra.mxu0 %v6901
  %10207 = vmatprep.subr.mxu0 0.0
  %10208 = vmatpush1.msra.mxu0 %v6908
  %10209 = vmatprep.subr.mxu0 0.0
  %10210 = vmatpush1.msra.mxu0 %v6915
  %10211 = vmatprep.subr.mxu0 0.0
  %10212 = vmatpush1.msra.mxu0 %v6922
  %10213 = vmatprep.subr.mxu0 0.0
  %10214 = vmatpush1.msra.mxu0 %v6929
  %10215 = vmatprep.subr.mxu0 0.0
  %10216 = vmatpush1.msra.mxu0 %v6936
  %10217 = vmatprep.subr.mxu0 0.0
  %10218 = vmatpush1.msra.mxu0 %v6943
  %10219 = vmatprep.subr.mxu0 0.0
  %10220 = vmatpush1.msra.mxu0 %v6950
  %10221 = vmatprep.subr.mxu0 0.0
  %10222 = vmatpush1.msra.mxu0 %v6957
  %10223 = vmatprep.subr.mxu0 0.0
  %10224 = vmatpush1.msra.mxu0 %v6964
  %10225 = vmatprep.subr.mxu0 0.0
  %10226 = vmatpush1.msra.mxu0 %v6971
  %10227 = vmatprep.subr.mxu0 0.0
  %10228 = vmatpush1.msra.mxu0 %v6978
  %10229 = vmatprep.subr.mxu0 0.0
  %10230 = vmatpush1.msra.mxu0 %v6985
  %10231 = vmatprep.subr.mxu0 0.0
  %10232 = vmatpush1.msra.mxu0 %v6992
  %10233 = vmatprep.subr.mxu0 0.0
  %10234 = vmatpush1.msra.mxu0 %v6999
  %10235 = vmatprep.subr.mxu0 0.0
  %10236 = vmatpush1.msra.mxu0 %v7006
  %10237 = vmatprep.subr.mxu0 0.0
  %10238 = vmatpush1.msra.mxu0 %v7013
  %10239 = vmatprep.subr.mxu0 0.0
  %10240 = vmatpush1.msra.mxu0 %v7020
  %10241 = vmatprep.subr.mxu0 0.0
  %10242 = vmatpush1.msra.mxu0 %v7027
  %10243 = vmatprep.subr.mxu0 0.0
  %10244 = vmatpush1.msra.mxu0 %v7034
  %10245 = vmatprep.subr.mxu0 0.0
  %10246 = vmatpush1.msra.mxu0 %v7041
  %10247 = vmatprep.subr.mxu0 0.0
  %10248 = vmatpush1.msra.mxu0 %v7048
  %10249 = vmatprep.subr.mxu0 0.0
  %10250 = vmatpush1.msra.mxu0 %v7055
  %10251 = vmatprep.subr.mxu0 0.0
  %10252 = vmatpush1.msra.mxu0 %v7062
  %10253 = vmatprep.subr.mxu0 0.0
  %10254 = vmatpush1.msra.mxu0 %v7069
  %10255 = vmatprep.subr.mxu0 0.0
  %10256 = vmatpush1.msra.mxu0 %v7076
  %10257 = vmatprep.subr.mxu0 0.0
  %10258 = vmatpush1.msra.mxu0 %v7083
  %10259 = vmatprep.subr.mxu0 0.0
  %10260 = vmatpush1.msra.mxu0 %v7090
  %10261 = vmatprep.subr.mxu0 0.0
  %10262 = vmatpush1.msra.mxu0 %v7097
  %10263 = vmatprep.subr.mxu0 0.0
  %10264 = vmatpush1.msra.mxu0 %v7104
  %10265 = vmatprep.mubr.f32.mxu0 %v6867
  %10266 = vmatmul.mubr.f32.gmra.mrb[0].mxu0 %v6866
  %v10267 = vpop.f32.mrb[0].mxu0
  %v10268 = vadd.f32 %v8485, %v10267
  %v10269 = vpop.f32.mrb[0].mxu0
  %10270 = vdwg.mxu0
  %10271 = vmatprep.subr.mxu0 0.0
  %10272 = vmatpush1.msra.mxu0 %v7111
  %10273 = vmatprep.subr.mxu0 0.0
  %10274 = vmatpush1.msra.mxu0 %v7118
  %10275 = vmatprep.subr.mxu0 0.0
  %10276 = vmatpush1.msra.mxu0 %v7125
  %10277 = vmatprep.subr.mxu0 0.0
  %10278 = vmatpush1.msra.mxu0 %v7132
  %10279 = vmatprep.subr.mxu0 0.0
  %10280 = vmatpush1.msra.mxu0 %v7139
  %10281 = vmatprep.subr.mxu0 0.0
  %10282 = vmatpush1.msra.mxu0 %v7146
  %10283 = vmatprep.subr.mxu0 0.0
  %10284 = vmatpush1.msra.mxu0 %v7153
  %10285 = vmatprep.subr.mxu0 0.0
  %10286 = vmatpush1.msra.mxu0 %v7160
  %10287 = vmatprep.subr.mxu0 0.0
  %10288 = vmatpush1.msra.mxu0 %v7167
  %10289 = vmatprep.subr.mxu0 0.0
  %10290 = vmatpush1.msra.mxu0 %v7174
  %10291 = vmatprep.subr.mxu0 0.0
  %10292 = vmatpush1.msra.mxu0 %v7181
  %10293 = vmatprep.subr.mxu0 0.0
  %10294 = vmatpush1.msra.mxu0 %v7188
  %10295 = vmatprep.subr.mxu0 0.0
  %10296 = vmatpush1.msra.mxu0 %v7195
  %10297 = vmatprep.subr.mxu0 0.0
  %10298 = vmatpush1.msra.mxu0 %v7202
  %10299 = vmatprep.subr.mxu0 0.0
  %10300 = vmatpush1.msra.mxu0 %v7209
  %10301 = vmatprep.subr.mxu0 0.0
  %10302 = vmatpush1.msra.mxu0 %v7216
  %10303 = vmatprep.subr.mxu0 0.0
  %10304 = vmatpush1.msra.mxu0 %v7223
  %10305 = vmatprep.subr.mxu0 0.0
  %10306 = vmatpush1.msra.mxu0 %v7230
  %10307 = vmatprep.subr.mxu0 0.0
  %10308 = vmatpush1.msra.mxu0 %v7237
  %10309 = vmatprep.subr.mxu0 0.0
  %10310 = vmatpush1.msra.mxu0 %v7244
  %10311 = vmatprep.subr.mxu0 0.0
  %10312 = vmatpush1.msra.mxu0 %v7251
  %10313 = vmatprep.subr.mxu0 0.0
  %10314 = vmatpush1.msra.mxu0 %v7258
  %10315 = vmatprep.subr.mxu0 0.0
  %10316 = vmatpush1.msra.mxu0 %v7265
  %10317 = vmatprep.subr.mxu0 0.0
  %10318 = vmatpush1.msra.mxu0 %v7272
  %10319 = vmatprep.subr.mxu0 0.0
  %10320 = vmatpush1.msra.mxu0 %v7279
  %10321 = vmatprep.subr.mxu0 0.0
  %10322 = vmatpush1.msra.mxu0 %v7286
  %10323 = vmatprep.subr.mxu0 0.0
  %10324 = vmatpush1.msra.mxu0 %v7293
  %10325 = vmatprep.subr.mxu0 0.0
  %10326 = vmatpush1.msra.mxu0 %v7300
  %10327 = vmatprep.subr.mxu0 0.0
  %10328 = vmatpush1.msra.mxu0 %v7307
  %10329 = vmatprep.subr.mxu0 0.0
  %10330 = vmatpush1.msra.mxu0 %v7314
  %10331 = vmatprep.subr.mxu0 0.0
  %10332 = vmatpush1.msra.mxu0 %v7321
  %10333 = vmatprep.subr.mxu0 0.0
  %10334 = vmatpush1.msra.mxu0 %v7328
  %10335 = vmatprep.mubr.f32.mxu0 %v6869
  %10336 = vmatmul.mubr.f32.gmra.mrb[0].mxu0 %v6868
  %v10337 = vpop.f32.mrb[0].mxu0
  %v10338 = vadd.f32 %v10268, %v10337
  %v10339 = vpop.f32.mrb[0].mxu0
  %10340 = vdwg.mxu0
  %10341 = vmatprep.subr.mxu0 0.0
  %10342 = vmatpush1.msra.mxu0 %v7335
  %10343 = vmatprep.subr.mxu0 0.0
  %10344 = vmatpush1.msra.mxu0 %v7342
  %10345 = vmatprep.subr.mxu0 0.0
  %10346 = vmatpush1.msra.mxu0 %v7349
  %10347 = vmatprep.subr.mxu0 0.0
  %10348 = vmatpush1.msra.mxu0 %v7356
  %10349 = vmatprep.subr.mxu0 0.0
  %10350 = vmatpush1.msra.mxu0 %v7363
  %10351 = vmatprep.subr.mxu0 0.0
  %10352 = vmatpush1.msra.mxu0 %v7370
  %10353 = vmatprep.subr.mxu0 0.0
  %10354 = vmatpush1.msra.mxu0 %v7377
  %10355 = vmatprep.subr.mxu0 0.0
  %10356 = vmatpush1.msra.mxu0 %v7384
  %10357 = vmatprep.subr.mxu0 0.0
  %10358 = vmatpush1.msra.mxu0 %v7391
  %10359 = vmatprep.subr.mxu0 0.0
  %10360 = vmatpush1.msra.mxu0 %v7398
  %10361 = vmatprep.subr.mxu0 0.0
  %10362 = vmatpush1.msra.mxu0 %v7405
  %10363 = vmatprep.subr.mxu0 0.0
  %10364 = vmatpush1.msra.mxu0 %v7412
  %10365 = vmatprep.subr.mxu0 0.0
  %10366 = vmatpush1.msra.mxu0 %v7419
  %10367 = vmatprep.subr.mxu0 0.0
  %10368 = vmatpush1.msra.mxu0 %v7426
  %10369 = vmatprep.subr.mxu0 0.0
  %10370 = vmatpush1.msra.mxu0 %v7433
  %10371 = vmatprep.subr.mxu0 0.0
  %10372 = vmatpush1.msra.mxu0 %v7440
  %10373 = vmatprep.subr.mxu0 0.0
  %10374 = vmatpush1.msra.mxu0 %v7447
  %10375 = vmatprep.subr.mxu0 0.0
  %10376 = vmatpush1.msra.mxu0 %v7454
  %10377 = vmatprep.subr.mxu0 0.0
  %10378 = vmatpush1.msra.mxu0 %v7461
  %10379 = vmatprep.subr.mxu0 0.0
  %10380 = vmatpush1.msra.mxu0 %v7468
  %10381 = vmatprep.subr.mxu0 0.0
  %10382 = vmatpush1.msra.mxu0 %v7475
  %10383 = vmatprep.subr.mxu0 0.0
  %10384 = vmatpush1.msra.mxu0 %v7482
  %10385 = vmatprep.subr.mxu0 0.0
  %10386 = vmatpush1.msra.mxu0 %v7489
  %10387 = vmatprep.subr.mxu0 0.0
  %10388 = vmatpush1.msra.mxu0 %v7496
  %10389 = vmatprep.subr.mxu0 0.0
  %10390 = vmatpush1.msra.mxu0 %v7503
  %10391 = vmatprep.subr.mxu0 0.0
  %10392 = vmatpush1.msra.mxu0 %v7510
  %10393 = vmatprep.subr.mxu0 0.0
  %10394 = vmatpush1.msra.mxu0 %v7517
  %10395 = vmatprep.subr.mxu0 0.0
  %10396 = vmatpush1.msra.mxu0 %v7524
  %10397 = vmatprep.subr.mxu0 0.0
  %10398 = vmatpush1.msra.mxu0 %v7531
  %10399 = vmatprep.subr.mxu0 0.0
  %10400 = vmatpush1.msra.mxu0 %v7538
  %10401 = vmatprep.subr.mxu0 0.0
  %10402 = vmatpush1.msra.mxu0 %v7545
  %10403 = vmatprep.subr.mxu0 0.0
  %10404 = vmatpush1.msra.mxu0 %v7552
  %10405 = vmatprep.mubr.f32.mxu0 %v6871
  %10406 = vmatmul.mubr.f32.gmra.mrb[0].mxu0 %v6870
  %v10407 = vpop.f32.mrb[0].mxu0
  %v10408 = vadd.f32 %v10338, %v10407
  %v10409 = vpop.f32.mrb[0].mxu0
  %10410 = vdwg.mxu0
  %10411 = vmatprep.subr.mxu0 0.0
  %10412 = vmatpush1.msra.mxu0 %v7559
  %10413 = vmatprep.subr.mxu0 0.0
  %10414 = vmatpush1.msra.mxu0 %v7566
  %10415 = vmatprep.subr.mxu0 0.0
  %10416 = vmatpush1.msra.mxu0 %v7573
  %10417 = vmatprep.subr.mxu0 0.0
  %10418 = vmatpush1.msra.mxu0 %v7580
  %10419 = vmatprep.subr.mxu0 0.0
  %10420 = vmatpush1.msra.mxu0 %v7587
  %10421 = vmatprep.subr.mxu0 0.0
  %10422 = vmatpush1.msra.mxu0 %v7594
  %10423 = vmatprep.subr.mxu0 0.0
  %10424 = vmatpush1.msra.mxu0 %v7601
  %10425 = vmatprep.subr.mxu0 0.0
  %10426 = vmatpush1.msra.mxu0 %v7608
  %10427 = vmatprep.subr.mxu0 0.0
  %10428 = vmatpush1.msra.mxu0 %v7615
  %10429 = vmatprep.subr.mxu0 0.0
  %10430 = vmatpush1.msra.mxu0 %v7622
  %10431 = vmatprep.subr.mxu0 0.0
  %10432 = vmatpush1.msra.mxu0 %v7629
  %10433 = vmatprep.subr.mxu0 0.0
  %10434 = vmatpush1.msra.mxu0 %v7636
  %10435 = vmatprep.subr.mxu0 0.0
  %10436 = vmatpush1.msra.mxu0 %v7643
  %10437 = vmatprep.subr.mxu0 0.0
  %10438 = vmatpush1.msra.mxu0 %v7650
  %10439 = vmatprep.subr.mxu0 0.0
  %10440 = vmatpush1.msra.mxu0 %v7657
  %10441 = vmatprep.subr.mxu0 0.0
  %10442 = vmatpush1.msra.mxu0 %v7664
  %10443 = vmatprep.subr.mxu0 0.0
  %10444 = vmatpush1.msra.mxu0 %v7671
  %10445 = vmatprep.subr.mxu0 0.0
  %10446 = vmatpush1.msra.mxu0 %v7678
  %10447 = vmatprep.subr.mxu0 0.0
  %10448 = vmatpush1.msra.mxu0 %v7685
  %10449 = vmatprep.subr.mxu0 0.0
  %10450 = vmatpush1.msra.mxu0 %v7692
  %10451 = vmatprep.subr.mxu0 0.0
  %10452 = vmatpush1.msra.mxu0 %v7699
  %10453 = vmatprep.subr.mxu0 0.0
  %10454 = vmatpush1.msra.mxu0 %v7706
  %10455 = vmatprep.subr.mxu0 0.0
  %10456 = vmatpush1.msra.mxu0 %v7713
  %10457 = vmatprep.subr.mxu0 0.0
  %10458 = vmatpush1.msra.mxu0 %v7720
  %10459 = vmatprep.subr.mxu0 0.0
  %10460 = vmatpush1.msra.mxu0 %v7727
  %10461 = vmatprep.subr.mxu0 0.0
  %10462 = vmatpush1.msra.mxu0 %v7734
  %10463 = vmatprep.subr.mxu0 0.0
  %10464 = vmatpush1.msra.mxu0 %v7741
  %10465 = vmatprep.subr.mxu0 0.0
  %10466 = vmatpush1.msra.mxu0 %v7748
  %10467 = vmatprep.subr.mxu0 0.0
  %10468 = vmatpush1.msra.mxu0 %v7755
  %10469 = vmatprep.subr.mxu0 0.0
  %10470 = vmatpush1.msra.mxu0 %v7762
  %10471 = vmatprep.subr.mxu0 0.0
  %10472 = vmatpush1.msra.mxu0 %v7769
  %10473 = vmatprep.subr.mxu0 0.0
  %10474 = vmatpush1.msra.mxu0 %v7776
  %10475 = vmatprep.mubr.f32.mxu0 %v6873
  %10476 = vmatmul.mubr.f32.gmra.mrb[0].mxu0 %v6872
  %v10477 = vpop.f32.mrb[0].mxu0
  %v10478 = vadd.f32 %v10408, %v10477
  %v10479 = vpop.f32.mrb[0].mxu0
  %10480 = vdwg.mxu0
  %10481 = vmatprep.subr.mxu0 0.0
  %10482 = vmatpush1.msra.mxu0 %v7783
  %10483 = vmatprep.subr.mxu0 0.0
  %10484 = vmatpush1.msra.mxu0 %v7790
  %10485 = vmatprep.subr.mxu0 0.0
  %10486 = vmatpush1.msra.mxu0 %v7797
  %10487 = vmatprep.subr.mxu0 0.0
  %10488 = vmatpush1.msra.mxu0 %v7804
  %10489 = vmatprep.subr.mxu0 0.0
  %10490 = vmatpush1.msra.mxu0 %v7811
  %10491 = vmatprep.subr.mxu0 0.0
  %10492 = vmatpush1.msra.mxu0 %v7818
  %10493 = vmatprep.subr.mxu0 0.0
  %10494 = vmatpush1.msra.mxu0 %v7825
  %10495 = vmatprep.subr.mxu0 0.0
  %10496 = vmatpush1.msra.mxu0 %v7832
  %10497 = vmatprep.subr.mxu0 0.0
  %10498 = vmatpush1.msra.mxu0 %v7839
  %10499 = vmatprep.subr.mxu0 0.0
  %10500 = vmatpush1.msra.mxu0 %v7846
  %10501 = vmatprep.subr.mxu0 0.0
  %10502 = vmatpush1.msra.mxu0 %v7853
  %10503 = vmatprep.subr.mxu0 0.0
  %10504 = vmatpush1.msra.mxu0 %v7860
  %10505 = vmatprep.subr.mxu0 0.0
  %10506 = vmatpush1.msra.mxu0 %v7867
  %10507 = vmatprep.subr.mxu0 0.0
  %10508 = vmatpush1.msra.mxu0 %v7874
  %10509 = vmatprep.subr.mxu0 0.0
  %10510 = vmatpush1.msra.mxu0 %v7881
  %10511 = vmatprep.subr.mxu0 0.0
  %10512 = vmatpush1.msra.mxu0 %v7888
  %10513 = vmatprep.subr.mxu0 0.0
  %10514 = vmatpush1.msra.mxu0 %v7895
  %10515 = vmatprep.subr.mxu0 0.0
  %10516 = vmatpush1.msra.mxu0 %v7902
  %10517 = vmatprep.subr.mxu0 0.0
  %10518 = vmatpush1.msra.mxu0 %v7909
  %10519 = vmatprep.subr.mxu0 0.0
  %10520 = vmatpush1.msra.mxu0 %v7916
  %10521 = vmatprep.subr.mxu0 0.0
  %10522 = vmatpush1.msra.mxu0 %v7923
  %10523 = vmatprep.subr.mxu0 0.0
  %10524 = vmatpush1.msra.mxu0 %v7930
  %10525 = vmatprep.subr.mxu0 0.0
  %10526 = vmatpush1.msra.mxu0 %v7937
  %10527 = vmatprep.subr.mxu0 0.0
  %10528 = vmatpush1.msra.mxu0 %v7944
  %10529 = vmatprep.subr.mxu0 0.0
  %10530 = vmatpush1.msra.mxu0 %v7951
  %10531 = vmatprep.subr.mxu0 0.0
  %10532 = vmatpush1.msra.mxu0 %v7958
  %10533 = vmatprep.subr.mxu0 0.0
  %10534 = vmatpush1.msra.mxu0 %v7965
  %10535 = vmatprep.subr.mxu0 0.0
  %10536 = vmatpush1.msra.mxu0 %v7972
  %10537 = vmatprep.subr.mxu0 0.0
  %10538 = vmatpush1.msra.mxu0 %v7979
  %10539 = vmatprep.subr.mxu0 0.0
  %10540 = vmatpush1.msra.mxu0 %v7986
  %10541 = vmatprep.subr.mxu0 0.0
  %10542 = vmatpush1.msra.mxu0 %v7993
  %10543 = vmatprep.subr.mxu0 0.0
  %10544 = vmatpush1.msra.mxu0 %v8000
  %10545 = vmatprep.mubr.f32.mxu0 %v6875
  %10546 = vmatmul.mubr.f32.gmra.mrb[0].mxu0 %v6874
  %v10547 = vpop.f32.mrb[0].mxu0
  %v10548 = vadd.f32 %v10478, %v10547
  %v10549 = vpop.f32.mrb[0].mxu0
  %10550 = vdwg.mxu0
  %10551 = vmatprep.subr.mxu0 0.0
  %10552 = vmatpush1.msra.mxu0 %v8007
  %10553 = vmatprep.subr.mxu0 0.0
  %10554 = vmatpush1.msra.mxu0 %v8014
  %10555 = vmatprep.subr.mxu0 0.0
  %10556 = vmatpush1.msra.mxu0 %v8021
  %10557 = vmatprep.subr.mxu0 0.0
  %10558 = vmatpush1.msra.mxu0 %v8028
  %10559 = vmatprep.subr.mxu0 0.0
  %10560 = vmatpush1.msra.mxu0 %v8035
  %10561 = vmatprep.subr.mxu0 0.0
  %10562 = vmatpush1.msra.mxu0 %v8042
  %10563 = vmatprep.subr.mxu0 0.0
  %10564 = vmatpush1.msra.mxu0 %v8049
  %10565 = vmatprep.subr.mxu0 0.0
  %10566 = vmatpush1.msra.mxu0 %v8056
  %10567 = vmatprep.subr.mxu0 0.0
  %10568 = vmatpush1.msra.mxu0 %v8063
  %10569 = vmatprep.subr.mxu0 0.0
  %10570 = vmatpush1.msra.mxu0 %v8070
  %10571 = vmatprep.subr.mxu0 0.0
  %10572 = vmatpush1.msra.mxu0 %v8077
  %10573 = vmatprep.subr.mxu0 0.0
  %10574 = vmatpush1.msra.mxu0 %v8084
  %10575 = vmatprep.subr.mxu0 0.0
  %10576 = vmatpush1.msra.mxu0 %v8091
  %10577 = vmatprep.subr.mxu0 0.0
  %10578 = vmatpush1.msra.mxu0 %v8098
  %10579 = vmatprep.subr.mxu0 0.0
  %10580 = vmatpush1.msra.mxu0 %v8105
  %10581 = vmatprep.subr.mxu0 0.0
  %10582 = vmatpush1.msra.mxu0 %v8112
  %10583 = vmatprep.subr.mxu0 0.0
  %10584 = vmatpush1.msra.mxu0 %v8119
  %10585 = vmatprep.subr.mxu0 0.0
  %10586 = vmatpush1.msra.mxu0 %v8126
  %10587 = vmatprep.subr.mxu0 0.0
  %10588 = vmatpush1.msra.mxu0 %v8133
  %10589 = vmatprep.subr.mxu0 0.0
  %10590 = vmatpush1.msra.mxu0 %v8140
  %10591 = vmatprep.subr.mxu0 0.0
  %10592 = vmatpush1.msra.mxu0 %v8147
  %10593 = vmatprep.subr.mxu0 0.0
  %10594 = vmatpush1.msra.mxu0 %v8154
  %10595 = vmatprep.subr.mxu0 0.0
  %10596 = vmatpush1.msra.mxu0 %v8161
  %10597 = vmatprep.subr.mxu0 0.0
  %10598 = vmatpush1.msra.mxu0 %v8168
  %10599 = vmatprep.subr.mxu0 0.0
  %10600 = vmatpush1.msra.mxu0 %v8175
  %10601 = vmatprep.subr.mxu0 0.0
  %10602 = vmatpush1.msra.mxu0 %v8182
  %10603 = vmatprep.subr.mxu0 0.0
  %10604 = vmatpush1.msra.mxu0 %v8189
  %10605 = vmatprep.subr.mxu0 0.0
  %10606 = vmatpush1.msra.mxu0 %v8196
  %10607 = vmatprep.subr.mxu0 0.0
  %10608 = vmatpush1.msra.mxu0 %v8203
  %10609 = vmatprep.subr.mxu0 0.0
  %10610 = vmatpush1.msra.mxu0 %v8210
  %10611 = vmatprep.subr.mxu0 0.0
  %10612 = vmatpush1.msra.mxu0 %v8217
  %10613 = vmatprep.subr.mxu0 0.0
  %10614 = vmatpush1.msra.mxu0 %v8224
  %10615 = vmatprep.mubr.f32.mxu0 %v6877
  %10616 = vmatmul.mubr.f32.gmra.mrb[0].mxu0 %v6876
  %v10617 = vpop.f32.mrb[0].mxu0
  %v10618 = vadd.f32 %v10548, %v10617
  %v10619 = vpop.f32.mrb[0].mxu0
  %10620 = vdwg.mxu0
  %10621 = vmatprep.subr.mxu0 0.0
  %10622 = vmatpush1.msra.mxu0 %v8231
  %10623 = vmatprep.subr.mxu0 0.0
  %10624 = vmatpush1.msra.mxu0 %v8238
  %10625 = vmatprep.subr.mxu0 0.0
  %10626 = vmatpush1.msra.mxu0 %v8245
  %10627 = vmatprep.subr.mxu0 0.0
  %10628 = vmatpush1.msra.mxu0 %v8252
  %10629 = vmatprep.subr.mxu0 0.0
  %10630 = vmatpush1.msra.mxu0 %v8259
  %10631 = vmatprep.subr.mxu0 0.0
  %10632 = vmatpush1.msra.mxu0 %v8266
  %10633 = vmatprep.subr.mxu0 0.0
  %10634 = vmatpush1.msra.mxu0 %v8273
  %10635 = vmatprep.subr.mxu0 0.0
  %10636 = vmatpush1.msra.mxu0 %v8280
  %10637 = vmatprep.subr.mxu0 0.0
  %10638 = vmatpush1.msra.mxu0 %v8287
  %10639 = vmatprep.subr.mxu0 0.0
  %10640 = vmatpush1.msra.mxu0 %v8294
  %10641 = vmatprep.subr.mxu0 0.0
  %10642 = vmatpush1.msra.mxu0 %v8301
  %10643 = vmatprep.subr.mxu0 0.0
  %10644 = vmatpush1.msra.mxu0 %v8308
  %10645 = vmatprep.subr.mxu0 0.0
  %10646 = vmatpush1.msra.mxu0 %v8315
  %10647 = vmatprep.subr.mxu0 0.0
  %10648 = vmatpush1.msra.mxu0 %v8322
  %10649 = vmatprep.subr.mxu0 0.0
  %10650 = vmatpush1.msra.mxu0 %v8329
  %10651 = vmatprep.subr.mxu0 0.0
  %10652 = vmatpush1.msra.mxu0 %v8336
  %10653 = vmatprep.subr.mxu0 0.0
  %10654 = vmatpush1.msra.mxu0 %v8343
  %10655 = vmatprep.subr.mxu0 0.0
  %10656 = vmatpush1.msra.mxu0 %v8350
  %10657 = vmatprep.subr.mxu0 0.0
  %10658 = vmatpush1.msra.mxu0 %v8357
  %10659 = vmatprep.subr.mxu0 0.0
  %10660 = vmatpush1.msra.mxu0 %v8364
  %10661 = vmatprep.subr.mxu0 0.0
  %10662 = vmatpush1.msra.mxu0 %v8371
  %10663 = vmatprep.subr.mxu0 0.0
  %10664 = vmatpush1.msra.mxu0 %v8378
  %10665 = vmatprep.subr.mxu0 0.0
  %10666 = vmatpush1.msra.mxu0 %v8385
  %10667 = vmatprep.subr.mxu0 0.0
  %10668 = vmatpush1.msra.mxu0 %v8392
  %10669 = vmatprep.subr.mxu0 0.0
  %10670 = vmatpush1.msra.mxu0 %v8399
  %10671 = vmatprep.subr.mxu0 0.0
  %10672 = vmatpush1.msra.mxu0 %v8406
  %10673 = vmatprep.subr.mxu0 0.0
  %10674 = vmatpush1.msra.mxu0 %v8413
  %10675 = vmatprep.subr.mxu0 0.0
  %10676 = vmatpush1.msra.mxu0 %v8420
  %10677 = vmatprep.subr.mxu0 0.0
  %10678 = vmatpush1.msra.mxu0 %v8427
  %10679 = vmatprep.subr.mxu0 0.0
  %10680 = vmatpush1.msra.mxu0 %v8434
  %10681 = vmatprep.subr.mxu0 0.0
  %10682 = vmatpush1.msra.mxu0 %v8441
  %10683 = vmatprep.subr.mxu0 0.0
  %10684 = vmatpush1.msra.mxu0 %v8448
  %10685 = vmatprep.mubr.f32.mxu0 %v6879
  %10686 = vmatmul.mubr.f32.gmra.mrb[0].mxu0 %v6878
  %v10687 = vpop.f32.mrb[0].mxu0
  %v10688 = vadd.f32 %v10618, %v10687
  %v10689 = vpop.f32.mrb[0].mxu0
  %10690 = vdwg.mxu0
  %10691 = vmatprep.subr.mxu0 0.0
  %10692 = vmatpush1.msra.mxu0 %v8455
  %10693 = vmatprep.subr.mxu0 0.0
  %10694 = vmatpush1.msra.mxu0 0.0
  %10695 = vmatprep.subr.mxu0 0.0
  %10696 = vmatpush1.msra.mxu0 0.0
  %10697 = vmatprep.subr.mxu0 0.0
  %10698 = vmatpush1.msra.mxu0 0.0
  %10699 = vmatprep.subr.mxu0 0.0
  %10700 = vmatpush1.msra.mxu0 0.0
  %10701 = vmatprep.subr.mxu0 0.0
  %10702 = vmatpush1.msra.mxu0 0.0
  %10703 = vmatprep.subr.mxu0 0.0
  %10704 = vmatpush1.msra.mxu0 0.0
  %10705 = vmatprep.subr.mxu0 0.0
  %10706 = vmatpush1.msra.mxu0 0.0
  %10707 = vmatprep.subr.mxu0 0.0
  %10708 = vmatpush1.msra.mxu0 0.0
  %10709 = vmatprep.subr.mxu0 0.0
  %10710 = vmatpush1.msra.mxu0 0.0
  %10711 = vmatprep.subr.mxu0 0.0
  %10712 = vmatpush1.msra.mxu0 0.0
  %10713 = vmatprep.subr.mxu0 0.0
  %10714 = vmatpush1.msra.mxu0 0.0
  %10715 = vmatprep.subr.mxu0 0.0
  %10716 = vmatpush1.msra.mxu0 0.0
  %10717 = vmatprep.subr.mxu0 0.0
  %10718 = vmatpush1.msra.mxu0 0.0
  %10719 = vmatprep.subr.mxu0 0.0
  %10720 = vmatpush1.msra.mxu0 0.0
  %10721 = vmatprep.subr.mxu0 0.0
  %10722 = vmatpush1.msra.mxu0 0.0
  %10723 = vmatprep.subr.mxu0 0.0
  %10724 = vmatpush1.msra.mxu0 0.0
  %10725 = vmatprep.subr.mxu0 0.0
  %10726 = vmatpush1.msra.mxu0 0.0
  %10727 = vmatprep.subr.mxu0 0.0
  %10728 = vmatpush1.msra.mxu0 0.0
  %10729 = vmatprep.subr.mxu0 0.0
  %10730 = vmatpush1.msra.mxu0 0.0
  %10731 = vmatprep.subr.mxu0 0.0
  %10732 = vmatpush1.msra.mxu0 0.0
  %10733 = vmatprep.subr.mxu0 0.0
  %10734 = vmatpush1.msra.mxu0 0.0
  %10735 = vmatprep.subr.mxu0 0.0
  %10736 = vmatpush1.msra.mxu0 0.0
  %10737 = vmatprep.subr.mxu0 0.0
  %10738 = vmatpush1.msra.mxu0 0.0
  %10739 = vmatprep.subr.mxu0 0.0
  %10740 = vmatpush1.msra.mxu0 0.0
  %10741 = vmatprep.subr.mxu0 0.0
  %10742 = vmatpush1.msra.mxu0 0.0
  %10743 = vmatprep.subr.mxu0 0.0
  %10744 = vmatpush1.msra.mxu0 0.0
  %10745 = vmatprep.subr.mxu0 0.0
  %10746 = vmatpush1.msra.mxu0 0.0
  %10747 = vmatprep.subr.mxu0 0.0
  %10748 = vmatpush1.msra.mxu0 0.0
  %10749 = vmatprep.subr.mxu0 0.0
  %10750 = vmatpush1.msra.mxu0 0.0
  %10751 = vmatprep.subr.mxu0 0.0
  %10752 = vmatpush1.msra.mxu0 0.0
  %10753 = vmatprep.subr.mxu0 0.0
  %10754 = vmatpush1.msra.mxu0 0.0
  %10755 = vmatprep.mubr.f32.mxu0 0.0
  %10756 = vmatmul.mubr.f32.gmra.mrb[0].mxu0 %v8495
  %v10757 = vpop.f32.mrb[0].mxu0
  %v10758 = vadd.f32 %v10688, %v10757
  %v10759 = vpop.f32.mrb[0].mxu0
  %10760 = vdwg.mxu0
  %v10761 = vtanh.pop %v9061
  %v10762 = vtanh.pop %v9063
  %v10763 = vtanh.pop %v9629
  %v10764 = vtanh.pop %v9631
  %v10765 = vtanh.pop %v10197
  %v10766 = vtanh.pop %v10199
  %v10767 = vtanh.pop %v10758
  %10768 = vst [vmem:[%s11] sm:$0xff] %v10761
  %10769 = vst [vmem:[%s11 + $0x8] sm:$0xff] %v10762
  %10770 = vst [vmem:[%s11 + $0x10] sm:$0xff] %v10763
  %10771 = vst [vmem:[%s11 + $0x18] sm:$0xff] %v10764
  %10772 = vst [vmem:[%s11 + $0x20] sm:$0xff] %v10765
  %10773 = vst [vmem:[%s11 + $0x28] sm:$0xff] %v10766
  %10774 = vst.msk [vmem:[%s11 + $0x30] sm:$0xff] %vm437, %v10767
  // Predicated region
  $region46: #{autoencoder_forward.1} parent=0 // pred_check
    _
  $region47: #{autoencoder_forward.1} parent=0 // pred_check_branch
    %10776 = sbr.rel (0) target = $region49
  $region48: #{autoencoder_forward.1} parent=0 // pred_region
    _
  $region49: #{autoencoder_forward.1} parent=0 // pred_fallthru
    _
  // Predicated region
  $region50: #{autoencoder_forward.1} parent=0 // pred_check
    _
  $region51: #{autoencoder_forward.1} parent=0 // pred_check_branch
    %10778 = sbr.rel (0) target = $region53
  $region52: #{autoencoder_forward.1} parent=0 // pred_region
    _
  $region53: #{autoencoder_forward.1} parent=0 // pred_fallthru
    _

</llo_original>
